<compile_context>
chip_gen: v5e
topology: v5e:2x2
jax: 0.10.0
libtpu: 0.0.40
codegen_flags: <defaults>
</compile_context>

<pallas_src>
import jax
import jax.numpy as jnp
from jax.experimental import pallas as pl
from jax.experimental.pallas import tpu as pltpu

_VMEM = pltpu.MemorySpace.VMEM
_CIN0 = 128          # input channels are zero-padded 3 -> 128 (lane-dense K)
_CONV_TL = 512       # in-kernel row-chunk for the conv matmul


def _round_up(x, m):
    return ((x + m - 1) // m) * m


# ----------------------------------------------------------------------------
# Tiled matmul kernels (bf16 operands, f32 accumulation) with fused bias + act
# ----------------------------------------------------------------------------
def _apply_act(r, act):
    if act == "relu":
        return jnp.maximum(r, 0.0)
    if act == "sigmoid":
        return jax.nn.sigmoid(r)
    return r


def _mm_kernel_single(act):
    # K fits in one tile: no accumulator scratch, write the output directly.
    def kernel(a_ref, b_ref, bias_ref, o_ref):
        r = jnp.dot(a_ref[...], b_ref[...], preferred_element_type=jnp.float32)
        o_ref[...] = _apply_act(r + bias_ref[...], act).astype(o_ref.dtype)
    return kernel


def _mm_kernel_multi(act):
    def kernel(a_ref, b_ref, bias_ref, o_ref, acc_ref):
        @pl.when(pl.program_id(2) == 0)
        def _init():
            acc_ref[...] = jnp.zeros_like(acc_ref)

        acc_ref[...] += jnp.dot(a_ref[...], b_ref[...],
                                preferred_element_type=jnp.float32)

        @pl.when(pl.program_id(2) == pl.num_programs(2) - 1)
        def _finalize():
            r = _apply_act(acc_ref[...] + bias_ref[...], act)
            o_ref[...] = r.astype(o_ref.dtype)
    return kernel


def _kn_plan(K, N):
    """Tile plan: Npad % tn == 0, Kpad % tk == 0 (K padded UP to a tk multiple)."""
    Npad = _round_up(N, 128)
    tn = Npad
    for t in (1024, 512, 256, 128):
        if Npad % t == 0 and Npad // t >= 2:     # keep an N-grid >= 2 for v7x's 2 TCs
            tn = t
            break
    tn = min(tn, 1024)

    Kpad128 = _round_up(K, 128)
    if Kpad128 > 2048:
        tk = 2048                                # 4 MB bf16 weight block (x2 buffers)
        Kpad = _round_up(Kpad128, tk)
    else:
        tk = Kpad128                             # single K step
        Kpad = Kpad128
    return Kpad, Npad, tk, tn


def prep_linear(w, b):
    """Pre-pad / pre-cast an FC layer once at init. w: (K, N) f32, b: (N,) f32."""
    K, N = w.shape
    Kpad, Npad, tk, tn = _kn_plan(K, N)
    return {
        'w': jnp.pad(w, ((0, Kpad - K), (0, Npad - N))).astype(jnp.bfloat16),
        'b': jnp.pad(b, (0, Npad - N)).astype(jnp.float32).reshape(1, Npad),
        'K': K, 'N': N, 'tk': tk, 'tn': tn,
    }


def pallas_linear(a, lin, act="none", out_dtype=jnp.float32, trim=True):
    """a: (M, Kin) with Kin in [K, Kpad]; returns (Mpad, Npad) (or trimmed (M, N))."""
    M, Kin = a.shape
    Kpad, Npad = lin['w'].shape
    assert Kin <= Kpad
    tk, tn = lin['tk'], lin['tn']

    Mpad = _round_up(M, 128) if M >= 128 else _round_up(M, 16)
    tm = min(128, Mpad)

    if a.dtype != jnp.bfloat16:                   # no-ops when chained (already bf16 /
        a = a.astype(jnp.bfloat16)                # already padded): no glue launched
    if (Mpad != M) or (Kpad != Kin):
        a = jnp.pad(a, ((0, Mpad - M), (0, Kpad - Kin)))

    nm, nn, nk = Mpad // tm, Npad // tn, Kpad // tk
    cparams = pltpu.CompilerParams(
        dimension_semantics=("parallel", "parallel") + (("arbitrary",) if nk > 1 else ()),
        vmem_limit_bytes=40 * 1024 * 1024)

    if nk == 1:
        out = pl.pallas_call(
            _mm_kernel_single(act),
            out_shape=jax.ShapeDtypeStruct((Mpad, Npad), out_dtype),
            grid=(nm, nn),
            in_specs=[
                pl.BlockSpec((tm, Kpad), lambda i, j: (i, 0)),
                pl.BlockSpec((Kpad, tn), lambda i, j: (0, j)),
                pl.BlockSpec((1, tn), lambda i, j: (0, j)),
            ],
            out_specs=pl.BlockSpec((tm, tn), lambda i, j: (i, j)),
            compiler_params=cparams,
        )(a, lin['w'], lin['b'])
    else:
        out = pl.pallas_call(
            _mm_kernel_multi(act),
            out_shape=jax.ShapeDtypeStruct((Mpad, Npad), out_dtype),
            grid=(nm, nn, nk),
            in_specs=[
                pl.BlockSpec((tm, tk), lambda i, j, k: (i, k)),
                pl.BlockSpec((tk, tn), lambda i, j, k: (k, j)),
                pl.BlockSpec((1, tn), lambda i, j, k: (0, j)),
            ],
            out_specs=pl.BlockSpec((tm, tn), lambda i, j, k: (i, j)),
            scratch_shapes=[pltpu.VMEM((tm, tn), jnp.float32)],
            compiler_params=cparams,
        )(a, lin['w'], lin['b'])

    if trim:
        out = out[:M, :lin['N']]
    return out


# ----------------------------------------------------------------------------
# Direct 3x3 conv (pad 1, stride 1) + ReLU.
# Grid over images (parallel, pipelined); inside the kernel the 9 shifted taps are
# concatenated along K so the tap-sum happens inside the MXU's f32 accumulator.
# ----------------------------------------------------------------------------
def _conv_kernel_factory(Lout, Wp):
    offsets = [dh * Wp + dw for dh in range(3) for dw in range(3)]

    def kernel(x_ref, w_ref, b_ref, o_ref):
        w = w_ref[...]
        b = b_ref[...]
        for c0 in range(0, Lout, _CONV_TL):
            rows = min(_CONV_TL, Lout - c0)
            xt = jnp.concatenate(
                [x_ref[0, c0 + s: c0 + s + rows, :] for s in offsets], axis=-1)
            r = jnp.dot(xt, w, preferred_element_type=jnp.float32) + b
            o_ref[0, c0:c0 + rows, :] = jnp.maximum(r, 0.0).astype(o_ref.dtype)

    return kernel


def conv3x3_relu(x, conv):
    """x: (N, H, W, Cin) bf16 NHWC; conv: {'w': (9*Cin, Cout) bf16, 'b': (1, Cout) f32}."""
    N, H, W, Cin = x.shape
    wf, b = conv['w'], conv['b']
    assert wf.shape[0] == 9 * Cin
    Cout = wf.shape[-1]
    Wp, Hp = W + 2, H + 3                  # 1 row top / 2 bottom, 1 col left / right
    R = Hp * Wp                            # padded rows per image (covers max tap shift)
    Lout = H * Wp                          # computed output rows per image

    xp = jnp.pad(x, ((0, 0), (1, 2), (1, 1), (0, 0)))     # zero-pad spatially
    xf = xp.reshape(N, R, Cin)                            # free reshape

    out = pl.pallas_call(
        _conv_kernel_factory(Lout, Wp),
        out_shape=jax.ShapeDtypeStruct((N, Lout, Cout), jnp.bfloat16),
        grid=(N,),
        in_specs=[
            pl.BlockSpec((1, R, Cin), lambda n: (n, 0, 0)),
            pl.BlockSpec((9 * Cin, Cout), lambda n: (0, 0)),   # weights stay resident
            pl.BlockSpec((1, Cout), lambda n: (0, 0)),
        ],
        out_specs=pl.BlockSpec((1, Lout, Cout), lambda n: (n, 0, 0)),
        compiler_params=pltpu.CompilerParams(
            dimension_semantics=("parallel",),
            vmem_limit_bytes=48 * 1024 * 1024),
    )(xf, wf, b)

    # valid output (n, h, w) lives at row h*Wp + w of image n; crop the pad columns
    return out.reshape(N, H, Wp, Cout)[:, :, :W, :]


# ----------------------------------------------------------------------------
# Fused 2x2 max-pool (stride 2), gridded over images, NHWC
# ----------------------------------------------------------------------------
def _maxpool_kernel(x_ref, o_ref):
    C = o_ref.shape[-1]
    m = jnp.maximum(x_ref[0, :, 0, :, :], x_ref[0, :, 1, :, :])   # H-pair max
    o_ref[0] = jnp.maximum(m[..., :C], m[..., C:])                # W-pair max


def pallas_maxpool2x2(x):
    N, H, W, C = x.shape
    H2, W2 = H // 2, W // 2
    xr = x.reshape(N, H2, 2, W2, 2 * C)            # free reshape (no transpose)
    return pl.pallas_call(
        _maxpool_kernel,
        out_shape=jax.ShapeDtypeStruct((N, H2, W2, C), x.dtype),
        grid=(N,),
        in_specs=[pl.BlockSpec((1, H2, 2, W2, 2 * C), lambda n: (n, 0, 0, 0, 0))],
        out_specs=pl.BlockSpec((1, H2, W2, C), lambda n: (n, 0, 0, 0)),
        compiler_params=pltpu.CompilerParams(
            dimension_semantics=("parallel",),
            vmem_limit_bytes=48 * 1024 * 1024),
    )(xr)


# ----------------------------------------------------------------------------
# Adaptive average pool to 7x7 (general / large-image path)
# ----------------------------------------------------------------------------
def adaptive_avg_pool_nhwc(x, out_hw=7):
    N, H, W, C = x.shape
    if H % out_hw == 0 and W % out_hw == 0:
        kh, kw = H // out_hw, W // out_hw
        s = jax.lax.reduce_window(x, 0.0, jax.lax.add,
                                  (1, kh, kw, 1), (1, kh, kw, 1), 'VALID')
        return s / float(kh * kw)

    # TODO(synk): fallback for non-divisible sizes stays as small XLA glue ops.
    def edges(size):
        starts = [(i * size) // out_hw for i in range(out_hw)]
        ends = [-(-((i + 1) * size) // out_hw) for i in range(out_hw)]
        return starts, ends

    hs, he = edges(H)
    ws, we = edges(W)
    rows = []
    for i in range(out_hw):
        cols = []
        for j in range(out_hw):
            patch = x[:, hs[i]:he[i], ws[j]:we[j], :]
            cols.append(patch.mean(axis=(1, 2)))
        rows.append(jnp.stack(cols, axis=1))
    return jnp.stack(rows, axis=1)  # (N, 7, 7, C)


# ----------------------------------------------------------------------------
# LSTM recurrence kernel: consumes precomputed x-projections, returns last hidden
# ----------------------------------------------------------------------------
def pallas_lstm_last(xproj_tbg, w_hh_t):
    # xproj_tbg: (T, B, 4H) f32 = x @ W_ih^T + b_ih + b_hh ; w_hh_t: (H, 4H) bf16
    T, B, G = xproj_tbg.shape
    H = G // 4

    def kernel(xp_ref, whh_ref, hout_ref):
        whh = whh_ref[...]

        def step(t, carry):
            h, c = carry
            gates = xp_ref[t] + jnp.dot(h.astype(jnp.bfloat16), whh,
                                        preferred_element_type=jnp.float32)
            i = jax.nn.sigmoid(gates[:, 0:H])
            f = jax.nn.sigmoid(gates[:, H:2 * H])
            g = jnp.tanh(gates[:, 2 * H:3 * H])
            o = jax.nn.sigmoid(gates[:, 3 * H:4 * H])
            c_new = f * c + i * g
            h_new = o * jnp.tanh(c_new)
            return (h_new, c_new)

        h0 = jnp.zeros((B, H), jnp.float32)
        c0 = jnp.zeros((B, H), jnp.float32)
        h_last, _ = jax.lax.fori_loop(0, T, step, (h0, c0), unroll=True)
        hout_ref[...] = h_last

    return pl.pallas_call(
        kernel,
        out_shape=jax.ShapeDtypeStruct((B, H), jnp.float32),
        in_specs=[pl.BlockSpec(memory_space=_VMEM)] * 2,
        out_specs=pl.BlockSpec(memory_space=_VMEM),
    )(xproj_tbg, w_hh_t)


# ----------------------------------------------------------------------------
# Deterministic parameter init (VGG16-D + LSTM(1000,256) + Linear(256,1));
# all weight pre-transforms / padding / bf16 casts happen once here.
# ----------------------------------------------------------------------------
VGG_CFG = [64, 64, 'M', 128, 128, 'M', 256, 256, 256, 'M',
           512, 512, 512, 'M', 512, 512, 512, 'M']


def prep_conv(w, b, cin_pad, cout_pad):
    # w: (Cout, Cin, 3, 3) torch layout -> (9*cin_pad, cout_pad) bf16
    Cout, Cin = w.shape[0], w.shape[1]
    w9 = jnp.transpose(w, (2, 3, 1, 0)).reshape(9, Cin, Cout)
    w9 = jnp.pad(w9, ((0, 0), (0, cin_pad - Cin), (0, cout_pad - Cout)))
    return {'w': w9.reshape(9 * cin_pad, cout_pad).astype(jnp.bfloat16),
            'b': jnp.pad(b, (0, cout_pad - Cout)).astype(jnp.float32).reshape(1, cout_pad)}


def init_params(key):
    keys = iter(jax.random.split(key, 64))
    params = {}

    convs = []
    cin, cin_pad = 3, _CIN0
    for v in VGG_CFG:
        if v == 'M':
            convs.append('M')
            continue
        fan_in = cin * 9
        w = jax.random.normal(next(keys), (v, cin, 3, 3), jnp.float32) \
            * (2.0 / fan_in) ** 0.5
        b = jnp.zeros((v,), jnp.float32)
        cout_pad = max(v, 128)                 # lane-dense channel counts
        convs.append(prep_conv(w, b, cin_pad, cout_pad))
        cin, cin_pad = v, cout_pad
    params['convs'] = convs

    def lin(k, fin, fout):
        w = jax.random.normal(k, (fin, fout), jnp.float32) * (2.0 / fin) ** 0.5
        b = jnp.zeros((fout,), jnp.float32)
        return w, b

    w1, b1 = lin(next(keys), 512 * 7 * 7, 4096)
    params['fc1'] = prep_linear(w1, b1)
    # Exact fold: when the pooled map is 1x1 the adaptive pool replicates it to 7x7,
    # so fc1 collapses to a 512-wide weight (sum over the 49 position groups; NCHW
    # flatten order: row index = c*49 + p).
    params['fc1_folded'] = prep_linear(w1.reshape(512, 49, 4096).sum(axis=1), b1)
    w2, b2 = lin(next(keys), 4096, 4096)
    params['fc2'] = prep_linear(w2, b2)
    w3, b3 = lin(next(keys), 4096, 1000)
    params['fc3'] = prep_linear(w3, b3)

    Hh, I = 256, 1000
    s = 1.0 / (Hh ** 0.5)
    w_ih = jax.random.uniform(next(keys), (I, 4 * Hh), jnp.float32, -s, s)
    w_hh = jax.random.uniform(next(keys), (Hh, 4 * Hh), jnp.float32, -s, s)
    b_ih = jax.random.uniform(next(keys), (4 * Hh,), jnp.float32, -s, s)
    b_hh = jax.random.uniform(next(keys), (4 * Hh,), jnp.float32, -s, s)
    params['lstm_ih'] = prep_linear(w_ih, b_ih + b_hh)      # b_ih + b_hh folded in
    params['w_hh'] = w_hh.astype(jnp.bfloat16)

    wc, bc = lin(next(keys), 256, 1)
    params['clf'] = prep_linear(wc, bc)
    return params


# ----------------------------------------------------------------------------
# Full Chen forward
# ----------------------------------------------------------------------------
def chen_forward(params, x):
    # x: (B, T, C, H, W)  -- matches the PyTorch module's input
    Bsz, T, C, H, W = x.shape
    BT = Bsz * T
    frames = x.reshape(BT, C, H, W).transpose(0, 2, 3, 1).astype(jnp.bfloat16)
    if frames.shape[-1] < _CIN0:                       # zero-pad input channels
        frames = jnp.pad(frames,
                         ((0, 0), (0, 0), (0, 0), (0, _CIN0 - frames.shape[-1])))

    h = frames
    for layer in params['convs']:
        if layer == 'M':
            h = pallas_maxpool2x2(h)
        else:
            h = conv3x3_relu(h, layer)

    _, Hf, Wf, Cf = h.shape
    if Hf == 1 and Wf == 1:
        # Adaptive avg-pool to 7x7 just replicates the 1x1 feature; use folded fc1.
        feat = h.reshape(BT, Cf)
        h = pallas_linear(feat, params['fc1_folded'], act="relu",
                          out_dtype=jnp.bfloat16, trim=False)
    else:
        hp = adaptive_avg_pool_nhwc(h.astype(jnp.float32), 7)        # (BT, 7, 7, Cf)
        hp = jnp.transpose(hp, (0, 3, 1, 2)).reshape(BT, Cf * 49)    # NCHW flatten
        h = pallas_linear(hp, params['fc1'], act="relu",
                          out_dtype=jnp.bfloat16, trim=False)

    # chained padded bf16 activations -> no pad/cast/slice glue between FC layers
    h = pallas_linear(h, params['fc2'], act="relu", out_dtype=jnp.bfloat16, trim=False)
    h = pallas_linear(h, params['fc3'], act="none", out_dtype=jnp.bfloat16, trim=False)

    # LSTM(1000 -> 256), batch_first; take last timestep's hidden state
    xg = pallas_linear(h, params['lstm_ih'], act="none",
                       out_dtype=jnp.float32, trim=False)             # (Mpad, 1024)
    xproj = xg[:BT].reshape(Bsz, T, 4 * 256).transpose(1, 0, 2)       # (T, B, 1024)
    h_last = pallas_lstm_last(xproj, params['w_hh'])                  # (B, 256)

    # Classifier head + sigmoid (fused in the matmul kernel epilogue)
    return pallas_linear(h_last, params['clf'], act="sigmoid")        # (B, 1)


if __name__ == "__main__":
    key = jax.random.PRNGKey(0)
    pkey, xkey = jax.random.split(key)
    params = init_params(pkey)

    # Small shapes consistent with the module: batch=2, seq=3 frames, 3x32x32 images.
    x = jax.random.normal(xkey, (2, 3, 3, 32, 32), jnp.float32)

    out = chen_forward(params, x)
    out = jax.block_until_ready(out)
    assert out.shape == (2, 1)
    assert bool(jnp.all(jnp.isfinite(out)))
    assert bool(jnp.all((out >= 0.0) & (out <= 1.0)))
    print("KERNEL_OK")
</pallas_src>

<mosaic_0001>
module attributes {stable_mosaic.version = 11 : i64} {
  func.func @kernel(%arg0: i32, %arg1: memref<1x1190x128xbf16, #tpu.memory_space<vmem>>, %arg2: memref<1152x128xbf16, #tpu.memory_space<vmem>>, %arg3: memref<1x128xf32, #tpu.memory_space<vmem>>, %arg4: memref<1x1088x128xbf16, #tpu.memory_space<vmem>>) attributes {dimension_semantics = [#tpu.dimension_semantics<parallel>], iteration_bounds = array<i64: 6>, scalar_prefetch = 0 : i64, scratch_operands = 0 : i64, tpu.core_type = #tpu.core_type<tc>, window_params = [{transform_indices = @transform_0, window_bounds = array<i64: 1, 1190, 128>}, {pipeline_mode = #tpu.pipeline_mode<synchronous>, transform_indices = @transform_1, window_bounds = array<i64: 1152, 128>}, {pipeline_mode = #tpu.pipeline_mode<synchronous>, transform_indices = @transform_2, window_bounds = array<i64: 1, 128>}, {transform_indices = @transform_3, window_bounds = array<i64: 1, 1088, 128>}]} {
    %c0 = arith.constant 0 : index
    %c0_0 = arith.constant 0 : index
    %0 = vector.load %arg2[%c0, %c0_0] : memref<1152x128xbf16, #tpu.memory_space<vmem>>, vector<1152x128xbf16>
    %c0_1 = arith.constant 0 : index
    %c0_2 = arith.constant 0 : index
    %1 = vector.load %arg3[%c0_1, %c0_2] : memref<1x128xf32, #tpu.memory_space<vmem>>, vector<1x128xf32>
    %c0_3 = arith.constant 0 : index
    %c0_4 = arith.constant 0 : index
    %c0_5 = arith.constant 0 : index
    %2 = vector.load %arg1[%c0_3, %c0_4, %c0_5] : memref<1x1190x128xbf16, #tpu.memory_space<vmem>>, vector<1x512x128xbf16>
    %3 = vector.shape_cast %2 : vector<1x512x128xbf16> to vector<512x128xbf16>
    %c0_6 = arith.constant 0 : index
    %c1 = arith.constant 1 : index
    %c0_7 = arith.constant 0 : index
    %4 = vector.load %arg1[%c0_6, %c1, %c0_7] : memref<1x1190x128xbf16, #tpu.memory_space<vmem>>, vector<1x512x128xbf16>
    %5 = vector.shape_cast %4 : vector<1x512x128xbf16> to vector<512x128xbf16>
    %c0_8 = arith.constant 0 : index
    %c2 = arith.constant 2 : index
    %c0_9 = arith.constant 0 : index
    %6 = vector.load %arg1[%c0_8, %c2, %c0_9] : memref<1x1190x128xbf16, #tpu.memory_space<vmem>>, vector<1x512x128xbf16>
    %7 = vector.shape_cast %6 : vector<1x512x128xbf16> to vector<512x128xbf16>
    %c0_10 = arith.constant 0 : index
    %c34 = arith.constant 34 : index
    %c0_11 = arith.constant 0 : index
    %8 = vector.load %arg1[%c0_10, %c34, %c0_11] : memref<1x1190x128xbf16, #tpu.memory_space<vmem>>, vector<1x512x128xbf16>
    %9 = vector.shape_cast %8 : vector<1x512x128xbf16> to vector<512x128xbf16>
    %c0_12 = arith.constant 0 : index
    %c35 = arith.constant 35 : index
    %c0_13 = arith.constant 0 : index
    %10 = vector.load %arg1[%c0_12, %c35, %c0_13] : memref<1x1190x128xbf16, #tpu.memory_space<vmem>>, vector<1x512x128xbf16>
    %11 = vector.shape_cast %10 : vector<1x512x128xbf16> to vector<512x128xbf16>
    %c0_14 = arith.constant 0 : index
    %c36 = arith.constant 36 : index
    %c0_15 = arith.constant 0 : index
    %12 = vector.load %arg1[%c0_14, %c36, %c0_15] : memref<1x1190x128xbf16, #tpu.memory_space<vmem>>, vector<1x512x128xbf16>
    %13 = vector.shape_cast %12 : vector<1x512x128xbf16> to vector<512x128xbf16>
    %c0_16 = arith.constant 0 : index
    %c68 = arith.constant 68 : index
    %c0_17 = arith.constant 0 : index
    %14 = vector.load %arg1[%c0_16, %c68, %c0_17] : memref<1x1190x128xbf16, #tpu.memory_space<vmem>>, vector<1x512x128xbf16>
    %15 = vector.shape_cast %14 : vector<1x512x128xbf16> to vector<512x128xbf16>
    %c0_18 = arith.constant 0 : index
    %c69 = arith.constant 69 : index
    %c0_19 = arith.constant 0 : index
    %16 = vector.load %arg1[%c0_18, %c69, %c0_19] : memref<1x1190x128xbf16, #tpu.memory_space<vmem>>, vector<1x512x128xbf16>
    %17 = vector.shape_cast %16 : vector<1x512x128xbf16> to vector<512x128xbf16>
    %c0_20 = arith.constant 0 : index
    %c70 = arith.constant 70 : index
    %c0_21 = arith.constant 0 : index
    %18 = vector.load %arg1[%c0_20, %c70, %c0_21] : memref<1x1190x128xbf16, #tpu.memory_space<vmem>>, vector<1x512x128xbf16>
    %19 = vector.shape_cast %18 : vector<1x512x128xbf16> to vector<512x128xbf16>
    %20 = tpu.concatenate %3, %5, %7, %9, %11, %13, %15, %17, %19 in 1 : vector<512x128xbf16>, vector<512x128xbf16>, vector<512x128xbf16>, vector<512x128xbf16>, vector<512x128xbf16>, vector<512x128xbf16>, vector<512x128xbf16>, vector<512x128xbf16>, vector<512x128xbf16> -> vector<512x1152xbf16>
    %cst = arith.constant dense<0.000000e+00> : vector<512x128xf32>
    %21 = tpu.matmul %20, %0, %cst {dimension_numbers = #tpu.dot_dimension_numbers<[1], [0], [0], [1], [0, 0, 1, 1], [], []>} : vector<512x1152xbf16>, vector<1152x128xbf16>, vector<512x128xf32> -> vector<512x128xf32>
    %22 = vector.broadcast %1 : vector<1x128xf32> to vector<512x128xf32>
    %23 = arith.addf %21, %22 : vector<512x128xf32>
    %cst_22 = arith.constant 0.000000e+00 : f32
    %24 = vector.broadcast %cst_22 : f32 to vector<512x128xf32>
    %25 = arith.maximumf %23, %24 : vector<512x128xf32>
    %26 = arith.truncf %25 : vector<512x128xf32> to vector<512x128xbf16>
    %c0_23 = arith.constant 0 : index
    %c0_24 = arith.constant 0 : index
    %c0_25 = arith.constant 0 : index
    %27 = vector.load %arg4[%c0_23, %c0_24, %c0_25] : memref<1x1088x128xbf16, #tpu.memory_space<vmem>>, vector<1x512x128xbf16>
    %28 = vector.shape_cast %27 : vector<1x512x128xbf16> to vector<512x128xbf16>
    %29 = vector.shape_cast %26 : vector<512x128xbf16> to vector<1x512x128xbf16>
    tpu.vector_store %arg4[%c0_23, %c0_24, %c0_25], %29 {strides = array<i32>} : memref<1x1088x128xbf16, #tpu.memory_space<vmem>>, vector<1x512x128xbf16>,
    %c0_26 = arith.constant 0 : index
    %c512 = arith.constant 512 : index
    %c0_27 = arith.constant 0 : index
    %30 = vector.load %arg1[%c0_26, %c512, %c0_27] : memref<1x1190x128xbf16, #tpu.memory_space<vmem>>, vector<1x512x128xbf16>
    %31 = vector.shape_cast %30 : vector<1x512x128xbf16> to vector<512x128xbf16>
    %c0_28 = arith.constant 0 : index
    %c513 = arith.constant 513 : index
    %c0_29 = arith.constant 0 : index
    %32 = vector.load %arg1[%c0_28, %c513, %c0_29] : memref<1x1190x128xbf16, #tpu.memory_space<vmem>>, vector<1x512x128xbf16>
    %33 = vector.shape_cast %32 : vector<1x512x128xbf16> to vector<512x128xbf16>
    %c0_30 = arith.constant 0 : index
    %c514 = arith.constant 514 : index
    %c0_31 = arith.constant 0 : index
    %34 = vector.load %arg1[%c0_30, %c514, %c0_31] : memref<1x1190x128xbf16, #tpu.memory_space<vmem>>, vector<1x512x128xbf16>
    %35 = vector.shape_cast %34 : vector<1x512x128xbf16> to vector<512x128xbf16>
    %c0_32 = arith.constant 0 : index
    %c546 = arith.constant 546 : index
    %c0_33 = arith.constant 0 : index
    %36 = vector.load %arg1[%c0_32, %c546, %c0_33] : memref<1x1190x128xbf16, #tpu.memory_space<vmem>>, vector<1x512x128xbf16>
    %37 = vector.shape_cast %36 : vector<1x512x128xbf16> to vector<512x128xbf16>
    %c0_34 = arith.constant 0 : index
    %c547 = arith.constant 547 : index
    %c0_35 = arith.constant 0 : index
    %38 = vector.load %arg1[%c0_34, %c547, %c0_35] : memref<1x1190x128xbf16, #tpu.memory_space<vmem>>, vector<1x512x128xbf16>
    %39 = vector.shape_cast %38 : vector<1x512x128xbf16> to vector<512x128xbf16>
    %c0_36 = arith.constant 0 : index
    %c548 = arith.constant 548 : index
    %c0_37 = arith.constant 0 : index
    %40 = vector.load %arg1[%c0_36, %c548, %c0_37] : memref<1x1190x128xbf16, #tpu.memory_space<vmem>>, vector<1x512x128xbf16>
    %41 = vector.shape_cast %40 : vector<1x512x128xbf16> to vector<512x128xbf16>
    %c0_38 = arith.constant 0 : index
    %c580 = arith.constant 580 : index
    %c0_39 = arith.constant 0 : index
    %42 = vector.load %arg1[%c0_38, %c580, %c0_39] : memref<1x1190x128xbf16, #tpu.memory_space<vmem>>, vector<1x512x128xbf16>
    %43 = vector.shape_cast %42 : vector<1x512x128xbf16> to vector<512x128xbf16>
    %c0_40 = arith.constant 0 : index
    %c581 = arith.constant 581 : index
    %c0_41 = arith.constant 0 : index
    %44 = vector.load %arg1[%c0_40, %c581, %c0_41] : memref<1x1190x128xbf16, #tpu.memory_space<vmem>>, vector<1x512x128xbf16>
    %45 = vector.shape_cast %44 : vector<1x512x128xbf16> to vector<512x128xbf16>
    %c0_42 = arith.constant 0 : index
    %c582 = arith.constant 582 : index
    %c0_43 = arith.constant 0 : index
    %46 = vector.load %arg1[%c0_42, %c582, %c0_43] : memref<1x1190x128xbf16, #tpu.memory_space<vmem>>, vector<1x512x128xbf16>
    %47 = vector.shape_cast %46 : vector<1x512x128xbf16> to vector<512x128xbf16>
    %48 = tpu.concatenate %31, %33, %35, %37, %39, %41, %43, %45, %47 in 1 : vector<512x128xbf16>, vector<512x128xbf16>, vector<512x128xbf16>, vector<512x128xbf16>, vector<512x128xbf16>, vector<512x128xbf16>, vector<512x128xbf16>, vector<512x128xbf16>, vector<512x128xbf16> -> vector<512x1152xbf16>
    %cst_44 = arith.constant dense<0.000000e+00> : vector<512x128xf32>
    %49 = tpu.matmul %48, %0, %cst_44 {dimension_numbers = #tpu.dot_dimension_numbers<[1], [0], [0], [1], [0, 0, 1, 1], [], []>} : vector<512x1152xbf16>, vector<1152x128xbf16>, vector<512x128xf32> -> vector<512x128xf32>
    %50 = vector.broadcast %1 : vector<1x128xf32> to vector<512x128xf32>
    %51 = arith.addf %49, %50 : vector<512x128xf32>
    %cst_45 = arith.constant 0.000000e+00 : f32
    %52 = vector.broadcast %cst_45 : f32 to vector<512x128xf32>
    %53 = arith.maximumf %51, %52 : vector<512x128xf32>
    %54 = arith.truncf %53 : vector<512x128xf32> to vector<512x128xbf16>
    %c0_46 = arith.constant 0 : index
    %c512_47 = arith.constant 512 : index
    %c0_48 = arith.constant 0 : index
    %55 = vector.load %arg4[%c0_46, %c512_47, %c0_48] : memref<1x1088x128xbf16, #tpu.memory_space<vmem>>, vector<1x512x128xbf16>
    %56 = vector.shape_cast %55 : vector<1x512x128xbf16> to vector<512x128xbf16>
    %57 = vector.shape_cast %54 : vector<512x128xbf16> to vector<1x512x128xbf16>
    tpu.vector_store %arg4[%c0_46, %c512_47, %c0_48], %57 {strides = array<i32>} : memref<1x1088x128xbf16, #tpu.memory_space<vmem>>, vector<1x512x128xbf16>,
    %c0_49 = arith.constant 0 : index
    %c1024 = arith.constant 1024 : index
    %c0_50 = arith.constant 0 : index
    %58 = vector.load %arg1[%c0_49, %c1024, %c0_50] : memref<1x1190x128xbf16, #tpu.memory_space<vmem>>, vector<1x64x128xbf16>
    %59 = vector.shape_cast %58 : vector<1x64x128xbf16> to vector<64x128xbf16>
    %c0_51 = arith.constant 0 : index
    %c1025 = arith.constant 1025 : index
    %c0_52 = arith.constant 0 : index
    %60 = vector.load %arg1[%c0_51, %c1025, %c0_52] : memref<1x1190x128xbf16, #tpu.memory_space<vmem>>, vector<1x64x128xbf16>
    %61 = vector.shape_cast %60 : vector<1x64x128xbf16> to vector<64x128xbf16>
    %c0_53 = arith.constant 0 : index
    %c1026 = arith.constant 1026 : index
    %c0_54 = arith.constant 0 : index
    %62 = vector.load %arg1[%c0_53, %c1026, %c0_54] : memref<1x1190x128xbf16, #tpu.memory_space<vmem>>, vector<1x64x128xbf16>
    %63 = vector.shape_cast %62 : vector<1x64x128xbf16> to vector<64x128xbf16>
    %c0_55 = arith.constant 0 : index
    %c1058 = arith.constant 1058 : index
    %c0_56 = arith.constant 0 : index
    %64 = vector.load %arg1[%c0_55, %c1058, %c0_56] : memref<1x1190x128xbf16, #tpu.memory_space<vmem>>, vector<1x64x128xbf16>
    %65 = vector.shape_cast %64 : vector<1x64x128xbf16> to vector<64x128xbf16>
    %c0_57 = arith.constant 0 : index
    %c1059 = arith.constant 1059 : index
    %c0_58 = arith.constant 0 : index
    %66 = vector.load %arg1[%c0_57, %c1059, %c0_58] : memref<1x1190x128xbf16, #tpu.memory_space<vmem>>, vector<1x64x128xbf16>
    %67 = vector.shape_cast %66 : vector<1x64x128xbf16> to vector<64x128xbf16>
    %c0_59 = arith.constant 0 : index
    %c1060 = arith.constant 1060 : index
    %c0_60 = arith.constant 0 : index
    %68 = vector.load %arg1[%c0_59, %c1060, %c0_60] : memref<1x1190x128xbf16, #tpu.memory_space<vmem>>, vector<1x64x128xbf16>
    %69 = vector.shape_cast %68 : vector<1x64x128xbf16> to vector<64x128xbf16>
    %c0_61 = arith.constant 0 : index
    %c1092 = arith.constant 1092 : index
    %c0_62 = arith.constant 0 : index
    %70 = vector.load %arg1[%c0_61, %c1092, %c0_62] : memref<1x1190x128xbf16, #tpu.memory_space<vmem>>, vector<1x64x128xbf16>
    %71 = vector.shape_cast %70 : vector<1x64x128xbf16> to vector<64x128xbf16>
    %c0_63 = arith.constant 0 : index
    %c1093 = arith.constant 1093 : index
    %c0_64 = arith.constant 0 : index
    %72 = vector.load %arg1[%c0_63, %c1093, %c0_64] : memref<1x1190x128xbf16, #tpu.memory_space<vmem>>, vector<1x64x128xbf16>
    %73 = vector.shape_cast %72 : vector<1x64x128xbf16> to vector<64x128xbf16>
    %c0_65 = arith.constant 0 : index
    %c1094 = arith.constant 1094 : index
    %c0_66 = arith.constant 0 : index
    %74 = vector.load %arg1[%c0_65, %c1094, %c0_66] : memref<1x1190x128xbf16, #tpu.memory_space<vmem>>, vector<1x64x128xbf16>
    %75 = vector.shape_cast %74 : vector<1x64x128xbf16> to vector<64x128xbf16>
    %76 = tpu.concatenate %59, %61, %63, %65, %67, %69, %71, %73, %75 in 1 : vector<64x128xbf16>, vector<64x128xbf16>, vector<64x128xbf16>, vector<64x128xbf16>, vector<64x128xbf16>, vector<64x128xbf16>, vector<64x128xbf16>, vector<64x128xbf16>, vector<64x128xbf16> -> vector<64x1152xbf16>
    %cst_67 = arith.constant dense<0.000000e+00> : vector<64x128xf32>
    %77 = tpu.matmul %76, %0, %cst_67 {dimension_numbers = #tpu.dot_dimension_numbers<[1], [0], [0], [1], [0, 0, 1, 1], [], []>} : vector<64x1152xbf16>, vector<1152x128xbf16>, vector<64x128xf32> -> vector<64x128xf32>
    %78 = vector.broadcast %1 : vector<1x128xf32> to vector<64x128xf32>
    %79 = arith.addf %77, %78 : vector<64x128xf32>
    %cst_68 = arith.constant 0.000000e+00 : f32
    %80 = vector.broadcast %cst_68 : f32 to vector<64x128xf32>
    %81 = arith.maximumf %79, %80 : vector<64x128xf32>
    %82 = arith.truncf %81 : vector<64x128xf32> to vector<64x128xbf16>
    %c0_69 = arith.constant 0 : index
    %c1024_70 = arith.constant 1024 : index
    %c0_71 = arith.constant 0 : index
    %83 = vector.load %arg4[%c0_69, %c1024_70, %c0_71] : memref<1x1088x128xbf16, #tpu.memory_space<vmem>>, vector<1x64x128xbf16>
    %84 = vector.shape_cast %83 : vector<1x64x128xbf16> to vector<64x128xbf16>
    %85 = vector.shape_cast %82 : vector<64x128xbf16> to vector<1x64x128xbf16>
    tpu.vector_store %arg4[%c0_69, %c1024_70, %c0_71], %85 {strides = array<i32>} : memref<1x1088x128xbf16, #tpu.memory_space<vmem>>, vector<1x64x128xbf16>,
    return
  }
  func.func @transform_0(%arg0: i32) -> (i32, i32, i32) {
    %c0_i32 = arith.constant 0 : i32
    %c0_i32_0 = arith.constant 0 : i32
    %c0_i32_1 = arith.constant 0 : i32
    return %arg0, %c0_i32, %c0_i32_0 : i32, i32, i32
  }
  func.func @transform_1(%arg0: i32) -> (i32, i32) {
    %c0_i32 = arith.constant 0 : i32
    %c0_i32_0 = arith.constant 0 : i32
    %c0_i32_1 = arith.constant 0 : i32
    return %c0_i32, %c0_i32_0 : i32, i32
  }
  func.func @transform_2(%arg0: i32) -> (i32, i32) {
    %c0_i32 = arith.constant 0 : i32
    %c0_i32_0 = arith.constant 0 : i32
    %c0_i32_1 = arith.constant 0 : i32
    return %c0_i32, %c0_i32_0 : i32, i32
  }
  func.func @transform_3(%arg0: i32) -> (i32, i32, i32) {
    %c0_i32 = arith.constant 0 : i32
    %c0_i32_0 = arith.constant 0 : i32
    %c0_i32_1 = arith.constant 0 : i32
    return %arg0, %c0_i32, %c0_i32_0 : i32, i32, i32
  }
}

</mosaic_0001>

<llo_original>
// kernel: tpu_custom_call.1
$region0: #{tpu_custom_call.1}
  #allocation0 [shape = 'u32[]', space=smem, size = 0x4, offset = 0x4, fixed_abs, tag = 'smem constant byte address 0x4 - core index']
  #allocation1 [shape = 'u32[72,128]{1,0:T(1,128)}', space=vmem, size = 0x9000, scoped, tag = 'internal scratch']
  %s0 = inlined_call_operand.hbm [shape: bf16[6,1190,128], index: 0, kind: input, shape index: {}]
  %s1 = inlined_call_operand.hbm [shape: bf16[1152,128], index: 1, kind: input, shape index: {}]
  %s2 = inlined_call_operand.hbm [shape: f32[1,128], index: 2, kind: input, shape index: {}]
  %s3 = inlined_call_operand.hbm [shape: bf16[6,1088,128], index: 3, kind: output, shape index: {}]
  %s4 = sld [smem:[#allocation0]]
  $region57: #{tpu_custom_call.1} parent=0
    _
  %s6 = ssub.s32 1, %s4
  %s7 = scalar_select 0, %s6, %s4
  $region1: #{tpu_custom_call.1} parent=0
    #allocation2 [shape = 'u8[610304]{0}', space=vmem, size = 0x95000, scoped, tag = 'input window, operand 0']
    #allocation3 [shape = 's32[2]{0}', space=sflag, size = 0x8, scoped, tag = 'scoped memory for tpu_custom_call.1']
    #allocation4 [shape = 's32[2]{0}', space=sflag, size = 0x8, scoped, tag = 'scoped memory for tpu_custom_call.1']
    #allocation5 [shape = 'u8[294912]{0}', space=vmem, size = 0x48000, scoped, tag = 'input window, operand 1, single buffered']
    #allocation6 [shape = 's32[1]{0}', space=sflag, size = 0x4, scoped, tag = 'scoped memory for tpu_custom_call.1']
    #allocation7 [shape = 'u8[512]{0}', space=vmem, size = 0x400, scoped, tag = 'input window, operand 2, single buffered']
    #allocation8 [shape = 'u8[557056]{0}', space=vmem, size = 0x88000, scoped, tag = 'output window, operand 0']
    %8 = vsyncpa [#allocation3], 0
    %s9 = scalar_lea.sflag [#allocation3], 1
    %10 = vsyncpa %s9, 0
    %11 = vsyncpa [#allocation6], 0
    %12 = vsyncpa [#allocation4], 0
    %s13 = scalar_lea.sflag [#allocation4], 1
    %14 = vsyncpa %s13, 0
    loop: start=0, step=1, limit=8
    $region2: #{tpu_custom_call.1} parent=1 // loop_pre_header
      _
    $region3: #{tpu_custom_call.1} parent=1 // loop_header
      %s16 = sphi 0, %s20
      %p17 = scmp.ge.s32.totalorder %s16, 8
      %s26 = sphi 0, %s28
      %s29 = sphi 0, %s26
      %s30 = sphi 0, %s29
      %s46 = sphi 0, %s30
      %s50 = sphi 0, %s50
      %s52 = sphi 0, %s50
      %s53 = sphi 0, %s52
      %s67 = sphi 0, %s53
      %s71 = sphi 0, %s71
      %s73 = sphi 0, %s71
      %s74 = sphi 0, %s73
      %s88 = sphi 0, %s74
      %s94 = sphi 0, %s96
      %s97 = sphi 0, %s94
      %s98 = sphi 0, %s97
      %s114 = sphi 0, %s98
    $region4: #{tpu_custom_call.1} parent=1 // loop_header_branch
      %19 = sbr.rel (%p17) target = $region8
    $region5: #{tpu_custom_call.1} parent=1 // loop_body
      %s21 = ssub.s32 %s16, 1
      %s22 = ssub.s32 %s16, 2
      %s23 = sadd.s32 %s16, 1
      %s24 = ssub.s32 %s16, %s23
      %p25 = scmp.eq.s32.totalorder %s24, 0
      %s27 = sadd.s32 %s26, 1
      %s28 = scalar_select %p25, %s26, %s27
      %p31 = pneg %p25
      %p32 = scmp.eq.s32.totalorder %s16, 5
      %p33 = por %p31, %p32
      %p34 = scmp.ne.s32.totalorder %s26, %s29
      %p35 = scmp.eq.s32.totalorder %s16, 0
      %p36 = por %p34, %p35
      %p37 = scmp.ne.s32.totalorder %s26, %s29
      %p38 = scmp.eq.s32.totalorder %s21, 5
      %p39 = por %p37, %p38
      %p40 = scmp.ne.s32.totalorder %s29, %s30
      %p41 = scmp.eq.s32.totalorder %s21, 0
      %p42 = por %p40, %p41
      %p43 = scmp.ne.s32.totalorder %s29, %s30
      %p44 = scmp.eq.s32.totalorder %s22, 5
      %p45 = por %p43, %p44
      %p47 = scmp.ne.s32.totalorder %s30, %s46
      %p48 = scmp.eq.s32.totalorder %s22, 0
      %p49 = por %p47, %p48
      %s51 = sadd.s32 %s50, 1
      %p54 = scmp.eq.s32.totalorder %s16, 5
      %p55 = scmp.ne.s32.totalorder %s50, %s52
      %p56 = scmp.eq.s32.totalorder %s16, 0
      %p57 = por %p55, %p56
      %p58 = scmp.ne.s32.totalorder %s50, %s52
      %p59 = scmp.eq.s32.totalorder %s21, 5
      %p60 = por %p58, %p59
      %p61 = scmp.ne.s32.totalorder %s52, %s53
      %p62 = scmp.eq.s32.totalorder %s21, 0
      %p63 = por %p61, %p62
      %p64 = scmp.ne.s32.totalorder %s52, %s53
      %p65 = scmp.eq.s32.totalorder %s22, 5
      %p66 = por %p64, %p65
      %p68 = scmp.ne.s32.totalorder %s53, %s67
      %p69 = scmp.eq.s32.totalorder %s22, 0
      %p70 = por %p68, %p69
      %s72 = sadd.s32 %s71, 1
      %p75 = scmp.eq.s32.totalorder %s16, 5
      %p76 = scmp.ne.s32.totalorder %s71, %s73
      %p77 = scmp.eq.s32.totalorder %s16, 0
      %p78 = por %p76, %p77
      %p79 = scmp.ne.s32.totalorder %s71, %s73
      %p80 = scmp.eq.s32.totalorder %s21, 5
      %p81 = por %p79, %p80
      %p82 = scmp.ne.s32.totalorder %s73, %s74
      %p83 = scmp.eq.s32.totalorder %s21, 0
      %p84 = por %p82, %p83
      %p85 = scmp.ne.s32.totalorder %s73, %s74
      %p86 = scmp.eq.s32.totalorder %s22, 5
      %p87 = por %p85, %p86
      %p89 = scmp.ne.s32.totalorder %s74, %s88
      %p90 = scmp.eq.s32.totalorder %s22, 0
      %p91 = por %p89, %p90
      %s92 = ssub.s32 %s16, %s23
      %p93 = scmp.eq.s32.totalorder %s92, 0
      %s95 = sadd.s32 %s94, 1
      %s96 = scalar_select %p93, %s94, %s95
      %p99 = pneg %p93
      %p100 = scmp.eq.s32.totalorder %s16, 5
      %p101 = por %p99, %p100
      %p102 = scmp.ne.s32.totalorder %s94, %s97
      %p103 = scmp.eq.s32.totalorder %s16, 0
      %p104 = por %p102, %p103
      %p105 = scmp.ne.s32.totalorder %s94, %s97
      %p106 = scmp.eq.s32.totalorder %s21, 5
      %p107 = por %p105, %p106
      %p108 = scmp.ne.s32.totalorder %s97, %s98
      %p109 = scmp.eq.s32.totalorder %s21, 0
      %p110 = por %p108, %p109
      %p111 = scmp.ne.s32.totalorder %s97, %s98
      %p112 = scmp.eq.s32.totalorder %s22, 5
      %p113 = por %p111, %p112
      %p115 = scmp.ne.s32.totalorder %s98, %s114
      %p116 = scmp.eq.s32.totalorder %s22, 0
      %p117 = por %p115, %p116
      %p118 = scmp.le.s32.totalorder 1, %s16
      %p119 = scmp.lt.s32.totalorder %s16, 7
      %p120 = pnand %p118, %p119
      %p121 = pneg %p120
      // Predicated region
      $region9: #{tpu_custom_call.1} parent=5 // pred_check
        _
      $region10: #{tpu_custom_call.1} parent=5 // pred_check_branch
        %123 = sbr.rel (%p120) target = $region12
      $region11: #{tpu_custom_call.1} parent=5 // pred_region
        %s124 = ssub.s32 %s16, 1
        // Predicated region
        $region13: #{tpu_custom_call.1} parent=11 // pred_check
          %p125 = pneg %p63
        $region14: #{tpu_custom_call.1} parent=11 // pred_check_branch
          %127 = sbr.rel (%p125) target = $region16
        $region15: #{tpu_custom_call.1} parent=11 // pred_region
          %129 = vsyncadd [#allocation6], 0
          %s130 = sshll.u32 %s1, 4
          %s131 = int_to_ptr.hbm [resolvable:$true] %s130
          %s132 = sshll.u32 [#allocation5], 4
          %s133 = int_to_ptr.vmem [resolvable:$true] %s132
          %138 = dma.hbm_to_vmem [thread:$0]  %s131, 9216, %s133, [#allocation6], 64, 64, 4
        $region16: #{tpu_custom_call.1} parent=11 // pred_fallthru
          _
        // Predicated region
        $region17: #{tpu_custom_call.1} parent=11 // pred_check
          %p139 = pneg %p84
        $region18: #{tpu_custom_call.1} parent=11 // pred_check_branch
          %141 = sbr.rel (%p139) target = $region20
        $region19: #{tpu_custom_call.1} parent=11 // pred_region
          %143 = vsyncadd [#allocation6], 0
          %s145 = sshll.u32 %s2, 4
          %s146 = int_to_ptr.hbm [resolvable:$true] %s145
          %s147 = sshll.u32 [#allocation7], 4
          %s148 = int_to_ptr.vmem [resolvable:$true] %s147
          %150 = dma.hbm_to_vmem [thread:$0]  %s146, 16, %s148, [#allocation6]
        $region20: #{tpu_custom_call.1} parent=11 // pred_fallthru
          _
      $region12: #{tpu_custom_call.1} parent=5 // pred_fallthru
        _
      %p151 = scmp.lt.s32.totalorder %s16, 6
      // Predicated region
      $region21: #{tpu_custom_call.1} parent=5 // pred_check
        %p152 = pneg %p151
      $region22: #{tpu_custom_call.1} parent=5 // pred_check_branch
        %154 = sbr.rel (%p152) target = $region24
      $region23: #{tpu_custom_call.1} parent=5 // pred_region
        // Predicated region
        $region25: #{tpu_custom_call.1} parent=23 // pred_check
          %p155 = pneg %p36
        $region26: #{tpu_custom_call.1} parent=23 // pred_check_branch
          %157 = sbr.rel (%p155) target = $region28
        $region27: #{tpu_custom_call.1} parent=23 // pred_region
          %s158 = sand.u32 %s26, 1
          %s159 = scalar_lea.sflag [#allocation3], %s158
          %s160 = sand.u32 %s26, 1
          %s161 = smul.addr %s160, 596
          %s162 = scalar_lea.vmem [#allocation2], %s161
          %164 = vsyncadd %s159, 0
          %s165 = smul.addr %s16, 149
          %s166 = smul.addr %s165, 4
          %s167 = scalar_lea.hbm %s0, %s166
          %s168 = sshll.u32 %s167, 4
          %s169 = int_to_ptr.hbm [resolvable:$true] %s168
          %s170 = sshll.u32 %s162, 4
          %s171 = int_to_ptr.vmem [resolvable:$true] %s170
          %176 = dma.hbm_to_vmem [thread:$0]  %s169, 9536, %s171, %s159, 64, 64, 4
        $region28: #{tpu_custom_call.1} parent=23 // pred_fallthru
          _
      $region24: #{tpu_custom_call.1} parent=5 // pred_fallthru
        _
      %p177 = scmp.le.s32.totalorder 1, %s16
      %p178 = scmp.lt.s32.totalorder %s16, 7
      %p179 = pnand %p177, %p178
      %p180 = pneg %p179
      // Predicated region
      $region29: #{tpu_custom_call.1} parent=5 // pred_check
        _
      $region30: #{tpu_custom_call.1} parent=5 // pred_check_branch
        %182 = sbr.rel (%p179) target = $region32
      $region31: #{tpu_custom_call.1} parent=5 // pred_region
        %s183 = ssub.s32 %s16, 1
        %s184 = sand.u32 %s29, 1
        %s185 = scalar_lea.sflag [#allocation3], %s184
        %s186 = sand.u32 %s29, 1
        %s187 = smul.addr %s186, 596
        %s188 = scalar_lea.vmem [#allocation2], %s187
        // Predicated region
        $region33: #{tpu_custom_call.1} parent=31 // pred_check
          %p189 = pneg %p42
        $region34: #{tpu_custom_call.1} parent=31 // pred_check_branch
          %191 = sbr.rel (%p189) target = $region36
        $region35: #{tpu_custom_call.1} parent=31 // pred_region
          %193 = dma.done %s185, 9536
        $region36: #{tpu_custom_call.1} parent=31 // pred_fallthru
          _
        // Predicated region
        $region37: #{tpu_custom_call.1} parent=31 // pred_check
          %p194 = pneg %p63
        $region38: #{tpu_custom_call.1} parent=31 // pred_check_branch
          %196 = sbr.rel (%p194) target = $region40
        $region39: #{tpu_custom_call.1} parent=31 // pred_region
          %198 = dma.done [#allocation6], 9216
        $region40: #{tpu_custom_call.1} parent=31 // pred_fallthru
          _
        // Predicated region
        $region41: #{tpu_custom_call.1} parent=31 // pred_check
          %p199 = pneg %p84
        $region42: #{tpu_custom_call.1} parent=31 // pred_check_branch
          %201 = sbr.rel (%p199) target = $region44
        $region43: #{tpu_custom_call.1} parent=31 // pred_region
          %203 = dma.done [#allocation6], 16
        $region44: #{tpu_custom_call.1} parent=31 // pred_fallthru
          _
        %s204 = sand.u32 %s29, 1
        %s205 = scalar_lea.sflag [#allocation3], %s204
        %s206 = sand.u32 %s29, 1
        %s207 = smul.addr %s206, 596
        %s208 = scalar_lea.vmem [#allocation2], %s207
        %p209 = pneg %p42
        %p210 = pneg %p39
        %p211 = pneg %p63
        %p212 = pneg %p60
        %p213 = pneg %p84
        %p214 = pneg %p81
        %p215 = pneg %p110
        %p216 = pneg %p107
        %s217 = sand.u32 %s97, 1
        %s218 = scalar_lea.sflag [#allocation4], %s217
        %s219 = sand.u32 %s97, 1
        %s220 = smul.addr %s219, 544
        %s221 = scalar_lea.vmem [#allocation8], %s220
        %v222 = vld [vmem:[#allocation5] sm:$0xf]
        %v223 = vld [vmem:[#allocation5 + $0x4] sm:$0xf]
        %v224 = vld [vmem:[#allocation5 + $0x8] sm:$0xf]
        %v225 = vld [vmem:[#allocation5 + $0xc] sm:$0xf]
        %v226 = vld [vmem:[#allocation5 + $0x10] sm:$0xf]
        %v227 = vld [vmem:[#allocation5 + $0x14] sm:$0xf]
        %v228 = vld [vmem:[#allocation5 + $0x18] sm:$0xf]
        %v229 = vld [vmem:[#allocation5 + $0x1c] sm:$0xf]
        %v230 = vld [vmem:[#allocation5 + $0x20] sm:$0xf]
        %v231 = vld [vmem:[#allocation5 + $0x24] sm:$0xf]
        %v232 = vld [vmem:[#allocation5 + $0x28] sm:$0xf]
        %v233 = vld [vmem:[#allocation5 + $0x2c] sm:$0xf]
        %v234 = vld [vmem:[#allocation5 + $0x30] sm:$0xf]
        %v235 = vld [vmem:[#allocation5 + $0x34] sm:$0xf]
        %v236 = vld [vmem:[#allocation5 + $0x38] sm:$0xf]
        %v237 = vld [vmem:[#allocation5 + $0x3c] sm:$0xf]
        %v238 = vld [vmem:[#allocation5 + $0x40] sm:$0xf]
        %v239 = vld [vmem:[#allocation5 + $0x44] sm:$0xf]
        %v240 = vld [vmem:[#allocation5 + $0x48] sm:$0xf]
        %v241 = vld [vmem:[#allocation5 + $0x4c] sm:$0xf]
        %v242 = vld [vmem:[#allocation5 + $0x50] sm:$0xf]
        %v243 = vld [vmem:[#allocation5 + $0x54] sm:$0xf]
        %v244 = vld [vmem:[#allocation5 + $0x58] sm:$0xf]
        %v245 = vld [vmem:[#allocation5 + $0x5c] sm:$0xf]
        %v246 = vld [vmem:[#allocation5 + $0x60] sm:$0xf]
        %v247 = vld [vmem:[#allocation5 + $0x64] sm:$0xf]
        %v248 = vld [vmem:[#allocation5 + $0x68] sm:$0xf]
        %v249 = vld [vmem:[#allocation5 + $0x6c] sm:$0xf]
        %v250 = vld [vmem:[#allocation5 + $0x70] sm:$0xf]
        %v251 = vld [vmem:[#allocation5 + $0x74] sm:$0xf]
        %v252 = vld [vmem:[#allocation5 + $0x78] sm:$0xf]
        %v253 = vld [vmem:[#allocation5 + $0x7c] sm:$0xf]
        %v254 = vld [vmem:[#allocation5 + $0x80] sm:$0xf]
        %v255 = vld [vmem:[#allocation5 + $0x84] sm:$0xf]
        %v256 = vld [vmem:[#allocation5 + $0x88] sm:$0xf]
        %v257 = vld [vmem:[#allocation5 + $0x8c] sm:$0xf]
        %v258 = vld [vmem:[#allocation5 + $0x90] sm:$0xf]
        %v259 = vld [vmem:[#allocation5 + $0x94] sm:$0xf]
        %v260 = vld [vmem:[#allocation5 + $0x98] sm:$0xf]
        %v261 = vld [vmem:[#allocation5 + $0x9c] sm:$0xf]
        %v262 = vld [vmem:[#allocation5 + $0xa0] sm:$0xf]
        %v263 = vld [vmem:[#allocation5 + $0xa4] sm:$0xf]
        %v264 = vld [vmem:[#allocation5 + $0xa8] sm:$0xf]
        %v265 = vld [vmem:[#allocation5 + $0xac] sm:$0xf]
        %v266 = vld [vmem:[#allocation5 + $0xb0] sm:$0xf]
        %v267 = vld [vmem:[#allocation5 + $0xb4] sm:$0xf]
        %v268 = vld [vmem:[#allocation5 + $0xb8] sm:$0xf]
        %v269 = vld [vmem:[#allocation5 + $0xbc] sm:$0xf]
        %v270 = vld [vmem:[#allocation5 + $0xc0] sm:$0xf]
        %v271 = vld [vmem:[#allocation5 + $0xc4] sm:$0xf]
        %v272 = vld [vmem:[#allocation5 + $0xc8] sm:$0xf]
        %v273 = vld [vmem:[#allocation5 + $0xcc] sm:$0xf]
        %v274 = vld [vmem:[#allocation5 + $0xd0] sm:$0xf]
        %v275 = vld [vmem:[#allocation5 + $0xd4] sm:$0xf]
        %v276 = vld [vmem:[#allocation5 + $0xd8] sm:$0xf]
        %v277 = vld [vmem:[#allocation5 + $0xdc] sm:$0xf]
        %v278 = vld [vmem:[#allocation5 + $0xe0] sm:$0xf]
        %v279 = vld [vmem:[#allocation5 + $0xe4] sm:$0xf]
        %v280 = vld [vmem:[#allocation5 + $0xe8] sm:$0xf]
        %v281 = vld [vmem:[#allocation5 + $0xec] sm:$0xf]
        %v282 = vld [vmem:[#allocation5 + $0xf0] sm:$0xf]
        %v283 = vld [vmem:[#allocation5 + $0xf4] sm:$0xf]
        %v284 = vld [vmem:[#allocation5 + $0xf8] sm:$0xf]
        %v285 = vld [vmem:[#allocation5 + $0xfc] sm:$0xf]
        %v286 = vld [vmem:[#allocation5 + $0x100] sm:$0xf]
        %v287 = vld [vmem:[#allocation5 + $0x104] sm:$0xf]
        %v288 = vld [vmem:[#allocation5 + $0x108] sm:$0xf]
        %v289 = vld [vmem:[#allocation5 + $0x10c] sm:$0xf]
        %v290 = vld [vmem:[#allocation5 + $0x110] sm:$0xf]
        %v291 = vld [vmem:[#allocation5 + $0x114] sm:$0xf]
        %v292 = vld [vmem:[#allocation5 + $0x118] sm:$0xf]
        %v293 = vld [vmem:[#allocation5 + $0x11c] sm:$0xf]
        %v294 = vld [vmem:[#allocation5 + $0x120] sm:$0xf]
        %v295 = vld [vmem:[#allocation5 + $0x124] sm:$0xf]
        %v296 = vld [vmem:[#allocation5 + $0x128] sm:$0xf]
        %v297 = vld [vmem:[#allocation5 + $0x12c] sm:$0xf]
        %v298 = vld [vmem:[#allocation5 + $0x130] sm:$0xf]
        %v299 = vld [vmem:[#allocation5 + $0x134] sm:$0xf]
        %v300 = vld [vmem:[#allocation5 + $0x138] sm:$0xf]
        %v301 = vld [vmem:[#allocation5 + $0x13c] sm:$0xf]
        %v302 = vld [vmem:[#allocation5 + $0x140] sm:$0xf]
        %v303 = vld [vmem:[#allocation5 + $0x144] sm:$0xf]
        %v304 = vld [vmem:[#allocation5 + $0x148] sm:$0xf]
        %v305 = vld [vmem:[#allocation5 + $0x14c] sm:$0xf]
        %v306 = vld [vmem:[#allocation5 + $0x150] sm:$0xf]
        %v307 = vld [vmem:[#allocation5 + $0x154] sm:$0xf]
        %v308 = vld [vmem:[#allocation5 + $0x158] sm:$0xf]
        %v309 = vld [vmem:[#allocation5 + $0x15c] sm:$0xf]
        %v310 = vld [vmem:[#allocation5 + $0x160] sm:$0xf]
        %v311 = vld [vmem:[#allocation5 + $0x164] sm:$0xf]
        %v312 = vld [vmem:[#allocation5 + $0x168] sm:$0xf]
        %v313 = vld [vmem:[#allocation5 + $0x16c] sm:$0xf]
        %v314 = vld [vmem:[#allocation5 + $0x170] sm:$0xf]
        %v315 = vld [vmem:[#allocation5 + $0x174] sm:$0xf]
        %v316 = vld [vmem:[#allocation5 + $0x178] sm:$0xf]
        %v317 = vld [vmem:[#allocation5 + $0x17c] sm:$0xf]
        %v318 = vld [vmem:[#allocation5 + $0x180] sm:$0xf]
        %v319 = vld [vmem:[#allocation5 + $0x184] sm:$0xf]
        %v320 = vld [vmem:[#allocation5 + $0x188] sm:$0xf]
        %v321 = vld [vmem:[#allocation5 + $0x18c] sm:$0xf]
        %v322 = vld [vmem:[#allocation5 + $0x190] sm:$0xf]
        %v323 = vld [vmem:[#allocation5 + $0x194] sm:$0xf]
        %v324 = vld [vmem:[#allocation5 + $0x198] sm:$0xf]
        %v325 = vld [vmem:[#allocation5 + $0x19c] sm:$0xf]
        %v326 = vld [vmem:[#allocation5 + $0x1a0] sm:$0xf]
        %v327 = vld [vmem:[#allocation5 + $0x1a4] sm:$0xf]
        %v328 = vld [vmem:[#allocation5 + $0x1a8] sm:$0xf]
        %v329 = vld [vmem:[#allocation5 + $0x1ac] sm:$0xf]
        %v330 = vld [vmem:[#allocation5 + $0x1b0] sm:$0xf]
        %v331 = vld [vmem:[#allocation5 + $0x1b4] sm:$0xf]
        %v332 = vld [vmem:[#allocation5 + $0x1b8] sm:$0xf]
        %v333 = vld [vmem:[#allocation5 + $0x1bc] sm:$0xf]
        %v334 = vld [vmem:[#allocation5 + $0x1c0] sm:$0xf]
        %v335 = vld [vmem:[#allocation5 + $0x1c4] sm:$0xf]
        %v336 = vld [vmem:[#allocation5 + $0x1c8] sm:$0xf]
        %v337 = vld [vmem:[#allocation5 + $0x1cc] sm:$0xf]
        %v338 = vld [vmem:[#allocation5 + $0x1d0] sm:$0xf]
        %v339 = vld [vmem:[#allocation5 + $0x1d4] sm:$0xf]
        %v340 = vld [vmem:[#allocation5 + $0x1d8] sm:$0xf]
        %v341 = vld [vmem:[#allocation5 + $0x1dc] sm:$0xf]
        %v342 = vld [vmem:[#allocation5 + $0x1e0] sm:$0xf]
        %v343 = vld [vmem:[#allocation5 + $0x1e4] sm:$0xf]
        %v344 = vld [vmem:[#allocation5 + $0x1e8] sm:$0xf]
        %v345 = vld [vmem:[#allocation5 + $0x1ec] sm:$0xf]
        %v346 = vld [vmem:[#allocation5 + $0x1f0] sm:$0xf]
        %v347 = vld [vmem:[#allocation5 + $0x1f4] sm:$0xf]
        %v348 = vld [vmem:[#allocation5 + $0x1f8] sm:$0xf]
        %v349 = vld [vmem:[#allocation5 + $0x1fc] sm:$0xf]
        %v350 = vld [vmem:[#allocation5 + $0x200] sm:$0xf]
        %v351 = vld [vmem:[#allocation5 + $0x204] sm:$0xf]
        %v352 = vld [vmem:[#allocation5 + $0x208] sm:$0xf]
        %v353 = vld [vmem:[#allocation5 + $0x20c] sm:$0xf]
        %v354 = vld [vmem:[#allocation5 + $0x210] sm:$0xf]
        %v355 = vld [vmem:[#allocation5 + $0x214] sm:$0xf]
        %v356 = vld [vmem:[#allocation5 + $0x218] sm:$0xf]
        %v357 = vld [vmem:[#allocation5 + $0x21c] sm:$0xf]
        %v358 = vld [vmem:[#allocation5 + $0x220] sm:$0xf]
        %v359 = vld [vmem:[#allocation5 + $0x224] sm:$0xf]
        %v360 = vld [vmem:[#allocation5 + $0x228] sm:$0xf]
        %v361 = vld [vmem:[#allocation5 + $0x22c] sm:$0xf]
        %v362 = vld [vmem:[#allocation5 + $0x230] sm:$0xf]
        %v363 = vld [vmem:[#allocation5 + $0x234] sm:$0xf]
        %v364 = vld [vmem:[#allocation5 + $0x238] sm:$0xf]
        %v365 = vld [vmem:[#allocation5 + $0x23c] sm:$0xf]
        %v366 = vld [vmem:[#allocation7] sm:$0x1]
        %v367 = vld [vmem:[%s188] sm:$0xf]
        %v368 = vld [vmem:[%s188 + $0x4] sm:$0xf]
        %v369 = vld [vmem:[%s188 + $0x8] sm:$0xf]
        %v370 = vld [vmem:[%s188 + $0xc] sm:$0xf]
        %v371 = vld [vmem:[%s188 + $0x10] sm:$0xf]
        %v372 = vld [vmem:[%s188 + $0x14] sm:$0xf]
        %v373 = vld [vmem:[%s188 + $0x18] sm:$0xf]
        %v374 = vld [vmem:[%s188 + $0x1c] sm:$0xf]
        %v375 = vld [vmem:[%s188 + $0x20] sm:$0xf]
        %v376 = vld [vmem:[%s188 + $0x24] sm:$0xf]
        %v377 = vld [vmem:[%s188 + $0x28] sm:$0xf]
        %v378 = vld [vmem:[%s188 + $0x2c] sm:$0xf]
        %v379 = vld [vmem:[%s188 + $0x30] sm:$0xf]
        %v380 = vld [vmem:[%s188 + $0x34] sm:$0xf]
        %v381 = vld [vmem:[%s188 + $0x38] sm:$0xf]
        %v382 = vld [vmem:[%s188 + $0x3c] sm:$0xf]
        %v383 = vld [vmem:[%s188 + $0x40] sm:$0xf]
        %v384 = vld [vmem:[%s188 + $0x44] sm:$0xf]
        %v385 = vld [vmem:[%s188 + $0x48] sm:$0xf]
        %v386 = vld [vmem:[%s188 + $0x4c] sm:$0xf]
        %v387 = vld [vmem:[%s188 + $0x50] sm:$0xf]
        %v388 = vld [vmem:[%s188 + $0x54] sm:$0xf]
        %v389 = vld [vmem:[%s188 + $0x58] sm:$0xf]
        %v390 = vld [vmem:[%s188 + $0x5c] sm:$0xf]
        %v391 = vld [vmem:[%s188 + $0x60] sm:$0xf]
        %v392 = vld [vmem:[%s188 + $0x64] sm:$0xf]
        %v393 = vld [vmem:[%s188 + $0x68] sm:$0xf]
        %v394 = vld [vmem:[%s188 + $0x6c] sm:$0xf]
        %v395 = vld [vmem:[%s188 + $0x70] sm:$0xf]
        %v396 = vld [vmem:[%s188 + $0x74] sm:$0xf]
        %v397 = vld [vmem:[%s188 + $0x78] sm:$0xf]
        %v398 = vld [vmem:[%s188 + $0x7c] sm:$0xf]
        %v399 = vld [vmem:[%s188 + $0x80] sm:$0xf]
        %v400 = vld [vmem:[%s188 + $0x84] sm:$0xf]
        %v401 = vld [vmem:[%s188 + $0x88] sm:$0xf]
        %v402 = vld [vmem:[%s188 + $0x8c] sm:$0xf]
        %v403 = vld [vmem:[%s188 + $0x90] sm:$0xf]
        %v404 = vld [vmem:[%s188 + $0x94] sm:$0xf]
        %v405 = vld [vmem:[%s188 + $0x98] sm:$0xf]
        %v406 = vld [vmem:[%s188 + $0x9c] sm:$0xf]
        %v407 = vld [vmem:[%s188 + $0xa0] sm:$0xf]
        %v408 = vld [vmem:[%s188 + $0xa4] sm:$0xf]
        %v409 = vld [vmem:[%s188 + $0xa8] sm:$0xf]
        %v410 = vld [vmem:[%s188 + $0xac] sm:$0xf]
        %v411 = vld [vmem:[%s188 + $0xb0] sm:$0xf]
        %v412 = vld [vmem:[%s188 + $0xb4] sm:$0xf]
        %v413 = vld [vmem:[%s188 + $0xb8] sm:$0xf]
        %v414 = vld [vmem:[%s188 + $0xbc] sm:$0xf]
        %v415 = vld [vmem:[%s188 + $0xc0] sm:$0xf]
        %v416 = vld [vmem:[%s188 + $0xc4] sm:$0xf]
        %v417 = vld [vmem:[%s188 + $0xc8] sm:$0xf]
        %v418 = vld [vmem:[%s188 + $0xcc] sm:$0xf]
        %v419 = vld [vmem:[%s188 + $0xd0] sm:$0xf]
        %v420 = vld [vmem:[%s188 + $0xd4] sm:$0xf]
        %v421 = vld [vmem:[%s188 + $0xd8] sm:$0xf]
        %v422 = vld [vmem:[%s188 + $0xdc] sm:$0xf]
        %v423 = vld [vmem:[%s188 + $0xe0] sm:$0xf]
        %v424 = vld [vmem:[%s188 + $0xe4] sm:$0xf]
        %v425 = vld [vmem:[%s188 + $0xe8] sm:$0xf]
        %v426 = vld [vmem:[%s188 + $0xec] sm:$0xf]
        %v427 = vld [vmem:[%s188 + $0xf0] sm:$0xf]
        %v428 = vld [vmem:[%s188 + $0xf4] sm:$0xf]
        %v429 = vld [vmem:[%s188 + $0xf8] sm:$0xf]
        %v430 = vld [vmem:[%s188 + $0xfc] sm:$0xf]
        %v431 = vld [vmem:[%s188 + $0x100] sm:$0x1]
        %v432 = vld [vmem:[%s188] sm:$0xe]
        %v433 = vld [vmem:[%s188 + $0x10] sm:$0xe]
        %v434 = vld [vmem:[%s188 + $0x100] sm:$0xf]
        %v435 = vld [vmem:[%s188 + $0x104] sm:$0xf]
        %v436 = vld [vmem:[%s188 + $0x108] sm:$0xf]
        %v437 = vld [vmem:[%s188 + $0x10c] sm:$0xf]
        %v438 = vld [vmem:[%s188 + $0x110] sm:$0x1]
        %v439 = vld [vmem:[%s188 + $0x110] sm:$0x3]
        %v440 = vld [vmem:[%s188 + $0x10] sm:$0xc]
        %v441 = vld [vmem:[%s188 + $0x20] sm:$0xc]
        %v442 = vld [vmem:[%s188 + $0x110] sm:$0xf]
        %v443 = vld [vmem:[%s188 + $0x114] sm:$0xf]
        %v444 = vld [vmem:[%s188 + $0x118] sm:$0xf]
        %v445 = vld [vmem:[%s188 + $0x11c] sm:$0xf]
        %v446 = vld [vmem:[%s188 + $0x120] sm:$0x3]
        %v447 = vld [vmem:[%s188 + $0x120] sm:$0x7]
        %v448 = vld [vmem:[%s188 + $0x20] sm:$0x8]
        %v513 = vunpack.c.l.b16 %v367
        %v514 = vunpack.c.l.b16 %v368
        %v515 = vunpack.c.l.b16 %v369
        %v516 = vunpack.c.l.b16 %v370
        %v517 = vunpack.c.l.b16 %v371
        %v518 = vunpack.c.l.b16 %v372
        %v519 = vunpack.c.l.b16 %v373
        %v520 = vunpack.c.l.b16 %v374
        %v521 = vunpack.c.l.b16 %v375
        %v522 = vunpack.c.l.b16 %v376
        %v523 = vunpack.c.l.b16 %v377
        %v524 = vunpack.c.l.b16 %v378
        %v525 = vunpack.c.l.b16 %v379
        %v526 = vunpack.c.l.b16 %v380
        %v527 = vunpack.c.l.b16 %v381
        %v528 = vunpack.c.l.b16 %v382
        %v529 = vunpack.c.l.b16 %v383
        %v530 = vunpack.c.l.b16 %v384
        %v531 = vunpack.c.l.b16 %v385
        %v532 = vunpack.c.l.b16 %v386
        %v533 = vunpack.c.l.b16 %v387
        %v534 = vunpack.c.l.b16 %v388
        %v535 = vunpack.c.l.b16 %v389
        %v536 = vunpack.c.l.b16 %v390
        %v537 = vunpack.c.l.b16 %v391
        %v538 = vunpack.c.l.b16 %v392
        %v539 = vunpack.c.l.b16 %v393
        %v540 = vunpack.c.l.b16 %v394
        %v541 = vunpack.c.l.b16 %v395
        %v542 = vunpack.c.l.b16 %v396
        %v543 = vunpack.c.l.b16 %v397
        %v544 = vunpack.c.l.b16 %v398
        %v545 = vunpack.c.l.b16 %v399
        %v546 = vunpack.c.l.b16 %v400
        %v547 = vunpack.c.l.b16 %v401
        %v548 = vunpack.c.l.b16 %v402
        %v549 = vunpack.c.l.b16 %v403
        %v550 = vunpack.c.l.b16 %v404
        %v551 = vunpack.c.l.b16 %v405
        %v552 = vunpack.c.l.b16 %v406
        %v553 = vunpack.c.l.b16 %v407
        %v554 = vunpack.c.l.b16 %v408
        %v555 = vunpack.c.l.b16 %v409
        %v556 = vunpack.c.l.b16 %v410
        %v557 = vunpack.c.l.b16 %v411
        %v558 = vunpack.c.l.b16 %v412
        %v559 = vunpack.c.l.b16 %v413
        %v560 = vunpack.c.l.b16 %v414
        %v561 = vunpack.c.l.b16 %v415
        %v562 = vunpack.c.l.b16 %v416
        %v563 = vunpack.c.l.b16 %v417
        %v564 = vunpack.c.l.b16 %v418
        %v565 = vunpack.c.l.b16 %v419
        %v566 = vunpack.c.l.b16 %v420
        %v567 = vunpack.c.l.b16 %v421
        %v568 = vunpack.c.l.b16 %v422
        %v569 = vunpack.c.l.b16 %v423
        %v570 = vunpack.c.l.b16 %v424
        %v571 = vunpack.c.l.b16 %v425
        %v572 = vunpack.c.l.b16 %v426
        %v573 = vunpack.c.l.b16 %v427
        %v574 = vunpack.c.l.b16 %v428
        %v575 = vunpack.c.l.b16 %v429
        %v576 = vunpack.c.l.b16 %v430
        %v577 = vpack.c.b16 %v514, %v513
        %v578 = vpack.c.b16 %v516, %v515
        %v579 = vpack.c.b16 %v518, %v517
        %v580 = vpack.c.b16 %v520, %v519
        %v581 = vpack.c.b16 %v522, %v521
        %v582 = vpack.c.b16 %v524, %v523
        %v583 = vpack.c.b16 %v526, %v525
        %v584 = vpack.c.b16 %v528, %v527
        %v585 = vpack.c.b16 %v530, %v529
        %v586 = vpack.c.b16 %v532, %v531
        %v587 = vpack.c.b16 %v534, %v533
        %v588 = vpack.c.b16 %v536, %v535
        %v589 = vpack.c.b16 %v538, %v537
        %v590 = vpack.c.b16 %v540, %v539
        %v591 = vpack.c.b16 %v542, %v541
        %v592 = vpack.c.b16 %v544, %v543
        %v593 = vpack.c.b16 %v546, %v545
        %v594 = vpack.c.b16 %v548, %v547
        %v595 = vpack.c.b16 %v550, %v549
        %v596 = vpack.c.b16 %v552, %v551
        %v597 = vpack.c.b16 %v554, %v553
        %v598 = vpack.c.b16 %v556, %v555
        %v599 = vpack.c.b16 %v558, %v557
        %v600 = vpack.c.b16 %v560, %v559
        %v601 = vpack.c.b16 %v562, %v561
        %v602 = vpack.c.b16 %v564, %v563
        %v603 = vpack.c.b16 %v566, %v565
        %v604 = vpack.c.b16 %v568, %v567
        %v605 = vpack.c.b16 %v570, %v569
        %v606 = vpack.c.b16 %v572, %v571
        %v607 = vpack.c.b16 %v574, %v573
        %v608 = vpack.c.b16 %v576, %v575
        %v642 = vunpack.c.l.b16 %v431
        %v643 = vpack.c.b16 %v642, %v642
        %vm644 = vsmask.f32 7424
        %v646 = vshrl.u32 %v577, 16
        %v648 = vshll.u32 %v577, 16
        %v650 = vrot.slane %v648, 1
        %v651 = vor.u32 %v646, %v650
        %v653 = vshll.u32 %v578, 16
        %v655 = vrot.slane %v653, 1
        %v656 = vsel %vm644, %v651, %v655
        %v657 = vshrl.u32 %v578, 16
        %v659 = vor.u32 %v657, %v655
        %v661 = vshll.u32 %v579, 16
        %v663 = vrot.slane %v661, 1
        %v664 = vsel %vm644, %v659, %v663
        %v665 = vshrl.u32 %v579, 16
        %v667 = vor.u32 %v665, %v663
        %v669 = vshll.u32 %v580, 16
        %v671 = vrot.slane %v669, 1
        %v672 = vsel %vm644, %v667, %v671
        %v673 = vshrl.u32 %v580, 16
        %v675 = vor.u32 %v673, %v671
        %v677 = vshll.u32 %v581, 16
        %v679 = vrot.slane %v677, 1
        %v680 = vsel %vm644, %v675, %v679
        %v681 = vshrl.u32 %v581, 16
        %v683 = vor.u32 %v681, %v679
        %v685 = vshll.u32 %v582, 16
        %v687 = vrot.slane %v685, 1
        %v688 = vsel %vm644, %v683, %v687
        %v689 = vshrl.u32 %v582, 16
        %v691 = vor.u32 %v689, %v687
        %v693 = vshll.u32 %v583, 16
        %v695 = vrot.slane %v693, 1
        %v696 = vsel %vm644, %v691, %v695
        %v697 = vshrl.u32 %v583, 16
        %v699 = vor.u32 %v697, %v695
        %v701 = vshll.u32 %v584, 16
        %v703 = vrot.slane %v701, 1
        %v704 = vsel %vm644, %v699, %v703
        %v705 = vshrl.u32 %v584, 16
        %v707 = vor.u32 %v705, %v703
        %v709 = vshll.u32 %v585, 16
        %v711 = vrot.slane %v709, 1
        %v712 = vsel %vm644, %v707, %v711
        %v713 = vshrl.u32 %v585, 16
        %v715 = vor.u32 %v713, %v711
        %v717 = vshll.u32 %v586, 16
        %v719 = vrot.slane %v717, 1
        %v720 = vsel %vm644, %v715, %v719
        %v721 = vshrl.u32 %v586, 16
        %v723 = vor.u32 %v721, %v719
        %v725 = vshll.u32 %v587, 16
        %v727 = vrot.slane %v725, 1
        %v728 = vsel %vm644, %v723, %v727
        %v729 = vshrl.u32 %v587, 16
        %v731 = vor.u32 %v729, %v727
        %v733 = vshll.u32 %v588, 16
        %v735 = vrot.slane %v733, 1
        %v736 = vsel %vm644, %v731, %v735
        %v737 = vshrl.u32 %v588, 16
        %v739 = vor.u32 %v737, %v735
        %v741 = vshll.u32 %v589, 16
        %v743 = vrot.slane %v741, 1
        %v744 = vsel %vm644, %v739, %v743
        %v745 = vshrl.u32 %v589, 16
        %v747 = vor.u32 %v745, %v743
        %v749 = vshll.u32 %v590, 16
        %v751 = vrot.slane %v749, 1
        %v752 = vsel %vm644, %v747, %v751
        %v753 = vshrl.u32 %v590, 16
        %v755 = vor.u32 %v753, %v751
        %v757 = vshll.u32 %v591, 16
        %v759 = vrot.slane %v757, 1
        %v760 = vsel %vm644, %v755, %v759
        %v761 = vshrl.u32 %v591, 16
        %v763 = vor.u32 %v761, %v759
        %v765 = vshll.u32 %v592, 16
        %v767 = vrot.slane %v765, 1
        %v768 = vsel %vm644, %v763, %v767
        %v769 = vshrl.u32 %v592, 16
        %v771 = vor.u32 %v769, %v767
        %v773 = vshll.u32 %v593, 16
        %v775 = vrot.slane %v773, 1
        %v776 = vsel %vm644, %v771, %v775
        %v777 = vshrl.u32 %v593, 16
        %v779 = vor.u32 %v777, %v775
        %v781 = vshll.u32 %v594, 16
        %v783 = vrot.slane %v781, 1
        %v784 = vsel %vm644, %v779, %v783
        %v785 = vshrl.u32 %v594, 16
        %v787 = vor.u32 %v785, %v783
        %v789 = vshll.u32 %v595, 16
        %v791 = vrot.slane %v789, 1
        %v792 = vsel %vm644, %v787, %v791
        %v793 = vshrl.u32 %v595, 16
        %v795 = vor.u32 %v793, %v791
        %v797 = vshll.u32 %v596, 16
        %v799 = vrot.slane %v797, 1
        %v800 = vsel %vm644, %v795, %v799
        %v801 = vshrl.u32 %v596, 16
        %v803 = vor.u32 %v801, %v799
        %v805 = vshll.u32 %v597, 16
        %v807 = vrot.slane %v805, 1
        %v808 = vsel %vm644, %v803, %v807
        %v809 = vshrl.u32 %v597, 16
        %v811 = vor.u32 %v809, %v807
        %v813 = vshll.u32 %v598, 16
        %v815 = vrot.slane %v813, 1
        %v816 = vsel %vm644, %v811, %v815
        %v817 = vshrl.u32 %v598, 16
        %v819 = vor.u32 %v817, %v815
        %v821 = vshll.u32 %v599, 16
        %v823 = vrot.slane %v821, 1
        %v824 = vsel %vm644, %v819, %v823
        %v825 = vshrl.u32 %v599, 16
        %v827 = vor.u32 %v825, %v823
        %v829 = vshll.u32 %v600, 16
        %v831 = vrot.slane %v829, 1
        %v832 = vsel %vm644, %v827, %v831
        %v833 = vshrl.u32 %v600, 16
        %v835 = vor.u32 %v833, %v831
        %v837 = vshll.u32 %v601, 16
        %v839 = vrot.slane %v837, 1
        %v840 = vsel %vm644, %v835, %v839
        %v841 = vshrl.u32 %v601, 16
        %v843 = vor.u32 %v841, %v839
        %v845 = vshll.u32 %v602, 16
        %v847 = vrot.slane %v845, 1
        %v848 = vsel %vm644, %v843, %v847
        %v849 = vshrl.u32 %v602, 16
        %v851 = vor.u32 %v849, %v847
        %v853 = vshll.u32 %v603, 16
        %v855 = vrot.slane %v853, 1
        %v856 = vsel %vm644, %v851, %v855
        %v857 = vshrl.u32 %v603, 16
        %v859 = vor.u32 %v857, %v855
        %v861 = vshll.u32 %v604, 16
        %v863 = vrot.slane %v861, 1
        %v864 = vsel %vm644, %v859, %v863
        %v865 = vshrl.u32 %v604, 16
        %v867 = vor.u32 %v865, %v863
        %v869 = vshll.u32 %v605, 16
        %v871 = vrot.slane %v869, 1
        %v872 = vsel %vm644, %v867, %v871
        %v873 = vshrl.u32 %v605, 16
        %v875 = vor.u32 %v873, %v871
        %v877 = vshll.u32 %v606, 16
        %v879 = vrot.slane %v877, 1
        %v880 = vsel %vm644, %v875, %v879
        %v881 = vshrl.u32 %v606, 16
        %v883 = vor.u32 %v881, %v879
        %v885 = vshll.u32 %v607, 16
        %v887 = vrot.slane %v885, 1
        %v888 = vsel %vm644, %v883, %v887
        %v889 = vshrl.u32 %v607, 16
        %v891 = vor.u32 %v889, %v887
        %v893 = vshll.u32 %v608, 16
        %v895 = vrot.slane %v893, 1
        %v896 = vsel %vm644, %v891, %v895
        %v897 = vshrl.u32 %v608, 16
        %v899 = vor.u32 %v897, %v895
        %v901 = vshll.u32 %v643, 16
        %v903 = vrot.slane %v901, 1
        %v904 = vsel %vm644, %v899, %v903
        %v938 = vunpack.c.l.b16 %v432
        %v939 = vpack.c.b16 %v514, %v938
        %vm940 = vcmask 1046528
        %v941 = vrot.slane %v939, 1
        %v942 = vrot.slane %v578, 1
        %v943 = vsel %vm940, %v941, %v942
        %v944 = vrot.slane %v579, 1
        %v945 = vsel %vm940, %v942, %v944
        %v946 = vrot.slane %v580, 1
        %v947 = vsel %vm940, %v944, %v946
        %v948 = vrot.slane %v581, 1
        %v949 = vsel %vm940, %v946, %v948
        %v950 = vrot.slane %v582, 1
        %v951 = vsel %vm940, %v948, %v950
        %v952 = vrot.slane %v583, 1
        %v953 = vsel %vm940, %v950, %v952
        %v954 = vrot.slane %v584, 1
        %v955 = vsel %vm940, %v952, %v954
        %v956 = vrot.slane %v585, 1
        %v957 = vsel %vm940, %v954, %v956
        %v958 = vrot.slane %v586, 1
        %v959 = vsel %vm940, %v956, %v958
        %v960 = vrot.slane %v587, 1
        %v961 = vsel %vm940, %v958, %v960
        %v962 = vrot.slane %v588, 1
        %v963 = vsel %vm940, %v960, %v962
        %v964 = vrot.slane %v589, 1
        %v965 = vsel %vm940, %v962, %v964
        %v966 = vrot.slane %v590, 1
        %v967 = vsel %vm940, %v964, %v966
        %v968 = vrot.slane %v591, 1
        %v969 = vsel %vm940, %v966, %v968
        %v970 = vrot.slane %v592, 1
        %v971 = vsel %vm940, %v968, %v970
        %v972 = vrot.slane %v593, 1
        %v973 = vsel %vm940, %v970, %v972
        %v974 = vrot.slane %v594, 1
        %v975 = vsel %vm940, %v972, %v974
        %v976 = vrot.slane %v595, 1
        %v977 = vsel %vm940, %v974, %v976
        %v978 = vrot.slane %v596, 1
        %v979 = vsel %vm940, %v976, %v978
        %v980 = vrot.slane %v597, 1
        %v981 = vsel %vm940, %v978, %v980
        %v982 = vrot.slane %v598, 1
        %v983 = vsel %vm940, %v980, %v982
        %v984 = vrot.slane %v599, 1
        %v985 = vsel %vm940, %v982, %v984
        %v986 = vrot.slane %v600, 1
        %v987 = vsel %vm940, %v984, %v986
        %v988 = vrot.slane %v601, 1
        %v989 = vsel %vm940, %v986, %v988
        %v990 = vrot.slane %v602, 1
        %v991 = vsel %vm940, %v988, %v990
        %v992 = vrot.slane %v603, 1
        %v993 = vsel %vm940, %v990, %v992
        %v994 = vrot.slane %v604, 1
        %v995 = vsel %vm940, %v992, %v994
        %v996 = vrot.slane %v605, 1
        %v997 = vsel %vm940, %v994, %v996
        %v998 = vrot.slane %v606, 1
        %v999 = vsel %vm940, %v996, %v998
        %v1000 = vrot.slane %v607, 1
        %v1001 = vsel %vm940, %v998, %v1000
        %v1002 = vrot.slane %v608, 1
        %v1003 = vsel %vm940, %v1000, %v1002
        %v1004 = vrot.slane %v643, 1
        %v1005 = vsel %vm940, %v1002, %v1004
        %v1044 = vunpack.c.l.b16 %v433
        %v1045 = vunpack.c.l.b16 %v434
        %v1046 = vunpack.c.l.b16 %v435
        %v1047 = vunpack.c.l.b16 %v436
        %v1048 = vunpack.c.l.b16 %v437
        %v1049 = vunpack.c.l.b16 %v438
        %v1050 = vpack.c.b16 %v518, %v1044
        %v1051 = vpack.c.b16 %v1046, %v1045
        %v1052 = vpack.c.b16 %v1048, %v1047
        %v1053 = vpack.c.b16 %v1049, %v1049
        %v1054 = vrot.slane %v1050, 1
        %v1055 = vsel %vm940, %v1054, %v946
        %v1056 = vrot.slane %v1051, 1
        %v1057 = vsel %vm940, %v1002, %v1056
        %v1058 = vrot.slane %v1052, 1
        %v1059 = vsel %vm940, %v1056, %v1058
        %v1060 = vrot.slane %v1053, 1
        %v1061 = vsel %vm940, %v1058, %v1060
        %v1067 = vunpack.c.l.b16 %v439
        %v1068 = vpack.c.b16 %v1067, %v1067
        %vm1069 = vsmask.f32 6400
        %v1071 = vshrl.u32 %v1050, 16
        %v1073 = vrot.slane %v1071, 1
        %v1074 = vshll.u32 %v1050, 16
        %v1076 = vrot.slane %v1074, 2
        %v1077 = vor.u32 %v1073, %v1076
        %v1078 = vrot.slane %v673, 1
        %v1079 = vrot.slane %v669, 2
        %v1080 = vor.u32 %v1078, %v1079
        %v1081 = vsel %vm1069, %v1077, %v1080
        %v1082 = vrot.slane %v681, 1
        %v1083 = vrot.slane %v677, 2
        %v1084 = vor.u32 %v1082, %v1083
        %v1085 = vsel %vm1069, %v1080, %v1084
        %v1086 = vrot.slane %v689, 1
        %v1087 = vrot.slane %v685, 2
        %v1088 = vor.u32 %v1086, %v1087
        %v1089 = vsel %vm1069, %v1084, %v1088
        %v1090 = vrot.slane %v697, 1
        %v1091 = vrot.slane %v693, 2
        %v1092 = vor.u32 %v1090, %v1091
        %v1093 = vsel %vm1069, %v1088, %v1092
        %v1094 = vrot.slane %v705, 1
        %v1095 = vrot.slane %v701, 2
        %v1096 = vor.u32 %v1094, %v1095
        %v1097 = vsel %vm1069, %v1092, %v1096
        %v1098 = vrot.slane %v713, 1
        %v1099 = vrot.slane %v709, 2
        %v1100 = vor.u32 %v1098, %v1099
        %v1101 = vsel %vm1069, %v1096, %v1100
        %v1102 = vrot.slane %v721, 1
        %v1103 = vrot.slane %v717, 2
        %v1104 = vor.u32 %v1102, %v1103
        %v1105 = vsel %vm1069, %v1100, %v1104
        %v1106 = vrot.slane %v729, 1
        %v1107 = vrot.slane %v725, 2
        %v1108 = vor.u32 %v1106, %v1107
        %v1109 = vsel %vm1069, %v1104, %v1108
        %v1110 = vrot.slane %v737, 1
        %v1111 = vrot.slane %v733, 2
        %v1112 = vor.u32 %v1110, %v1111
        %v1113 = vsel %vm1069, %v1108, %v1112
        %v1114 = vrot.slane %v745, 1
        %v1115 = vrot.slane %v741, 2
        %v1116 = vor.u32 %v1114, %v1115
        %v1117 = vsel %vm1069, %v1112, %v1116
        %v1118 = vrot.slane %v753, 1
        %v1119 = vrot.slane %v749, 2
        %v1120 = vor.u32 %v1118, %v1119
        %v1121 = vsel %vm1069, %v1116, %v1120
        %v1122 = vrot.slane %v761, 1
        %v1123 = vrot.slane %v757, 2
        %v1124 = vor.u32 %v1122, %v1123
        %v1125 = vsel %vm1069, %v1120, %v1124
        %v1126 = vrot.slane %v769, 1
        %v1127 = vrot.slane %v765, 2
        %v1128 = vor.u32 %v1126, %v1127
        %v1129 = vsel %vm1069, %v1124, %v1128
        %v1130 = vrot.slane %v777, 1
        %v1131 = vrot.slane %v773, 2
        %v1132 = vor.u32 %v1130, %v1131
        %v1133 = vsel %vm1069, %v1128, %v1132
        %v1134 = vrot.slane %v785, 1
        %v1135 = vrot.slane %v781, 2
        %v1136 = vor.u32 %v1134, %v1135
        %v1137 = vsel %vm1069, %v1132, %v1136
        %v1138 = vrot.slane %v793, 1
        %v1139 = vrot.slane %v789, 2
        %v1140 = vor.u32 %v1138, %v1139
        %v1141 = vsel %vm1069, %v1136, %v1140
        %v1142 = vrot.slane %v801, 1
        %v1143 = vrot.slane %v797, 2
        %v1144 = vor.u32 %v1142, %v1143
        %v1145 = vsel %vm1069, %v1140, %v1144
        %v1146 = vrot.slane %v809, 1
        %v1147 = vrot.slane %v805, 2
        %v1148 = vor.u32 %v1146, %v1147
        %v1149 = vsel %vm1069, %v1144, %v1148
        %v1150 = vrot.slane %v817, 1
        %v1151 = vrot.slane %v813, 2
        %v1152 = vor.u32 %v1150, %v1151
        %v1153 = vsel %vm1069, %v1148, %v1152
        %v1154 = vrot.slane %v825, 1
        %v1155 = vrot.slane %v821, 2
        %v1156 = vor.u32 %v1154, %v1155
        %v1157 = vsel %vm1069, %v1152, %v1156
        %v1158 = vrot.slane %v833, 1
        %v1159 = vrot.slane %v829, 2
        %v1160 = vor.u32 %v1158, %v1159
        %v1161 = vsel %vm1069, %v1156, %v1160
        %v1162 = vrot.slane %v841, 1
        %v1163 = vrot.slane %v837, 2
        %v1164 = vor.u32 %v1162, %v1163
        %v1165 = vsel %vm1069, %v1160, %v1164
        %v1166 = vrot.slane %v849, 1
        %v1167 = vrot.slane %v845, 2
        %v1168 = vor.u32 %v1166, %v1167
        %v1169 = vsel %vm1069, %v1164, %v1168
        %v1170 = vrot.slane %v857, 1
        %v1171 = vrot.slane %v853, 2
        %v1172 = vor.u32 %v1170, %v1171
        %v1173 = vsel %vm1069, %v1168, %v1172
        %v1174 = vrot.slane %v865, 1
        %v1175 = vrot.slane %v861, 2
        %v1176 = vor.u32 %v1174, %v1175
        %v1177 = vsel %vm1069, %v1172, %v1176
        %v1178 = vrot.slane %v873, 1
        %v1179 = vrot.slane %v869, 2
        %v1180 = vor.u32 %v1178, %v1179
        %v1181 = vsel %vm1069, %v1176, %v1180
        %v1182 = vrot.slane %v881, 1
        %v1183 = vrot.slane %v877, 2
        %v1184 = vor.u32 %v1182, %v1183
        %v1185 = vsel %vm1069, %v1180, %v1184
        %v1186 = vrot.slane %v889, 1
        %v1187 = vrot.slane %v885, 2
        %v1188 = vor.u32 %v1186, %v1187
        %v1189 = vsel %vm1069, %v1184, %v1188
        %v1190 = vrot.slane %v897, 1
        %v1191 = vrot.slane %v893, 2
        %v1192 = vor.u32 %v1190, %v1191
        %v1193 = vsel %vm1069, %v1188, %v1192
        %v1195 = vshrl.u32 %v1051, 16
        %v1197 = vrot.slane %v1195, 1
        %v1198 = vshll.u32 %v1051, 16
        %v1200 = vrot.slane %v1198, 2
        %v1201 = vor.u32 %v1197, %v1200
        %v1202 = vsel %vm1069, %v1192, %v1201
        %v1204 = vshrl.u32 %v1052, 16
        %v1206 = vrot.slane %v1204, 1
        %v1207 = vshll.u32 %v1052, 16
        %v1209 = vrot.slane %v1207, 2
        %v1210 = vor.u32 %v1206, %v1209
        %v1211 = vsel %vm1069, %v1201, %v1210
        %v1213 = vshrl.u32 %v1068, 16
        %v1215 = vrot.slane %v1213, 1
        %v1216 = vshll.u32 %v1068, 16
        %v1218 = vrot.slane %v1216, 2
        %v1219 = vor.u32 %v1215, %v1218
        %v1220 = vsel %vm1069, %v1210, %v1219
        %v1254 = vunpack.c.l.b16 %v440
        %v1255 = vpack.c.b16 %v518, %v1254
        %vm1256 = vcmask 1045504
        %v1257 = vrot.slane %v1255, 2
        %v1258 = vrot.slane %v580, 2
        %v1259 = vsel %vm1256, %v1257, %v1258
        %v1260 = vrot.slane %v581, 2
        %v1261 = vsel %vm1256, %v1258, %v1260
        %v1262 = vrot.slane %v582, 2
        %v1263 = vsel %vm1256, %v1260, %v1262
        %v1264 = vrot.slane %v583, 2
        %v1265 = vsel %vm1256, %v1262, %v1264
        %v1266 = vrot.slane %v584, 2
        %v1267 = vsel %vm1256, %v1264, %v1266
        %v1268 = vrot.slane %v585, 2
        %v1269 = vsel %vm1256, %v1266, %v1268
        %v1270 = vrot.slane %v586, 2
        %v1271 = vsel %vm1256, %v1268, %v1270
        %v1272 = vrot.slane %v587, 2
        %v1273 = vsel %vm1256, %v1270, %v1272
        %v1274 = vrot.slane %v588, 2
        %v1275 = vsel %vm1256, %v1272, %v1274
        %v1276 = vrot.slane %v589, 2
        %v1277 = vsel %vm1256, %v1274, %v1276
        %v1278 = vrot.slane %v590, 2
        %v1279 = vsel %vm1256, %v1276, %v1278
        %v1280 = vrot.slane %v591, 2
        %v1281 = vsel %vm1256, %v1278, %v1280
        %v1282 = vrot.slane %v592, 2
        %v1283 = vsel %vm1256, %v1280, %v1282
        %v1284 = vrot.slane %v593, 2
        %v1285 = vsel %vm1256, %v1282, %v1284
        %v1286 = vrot.slane %v594, 2
        %v1287 = vsel %vm1256, %v1284, %v1286
        %v1288 = vrot.slane %v595, 2
        %v1289 = vsel %vm1256, %v1286, %v1288
        %v1290 = vrot.slane %v596, 2
        %v1291 = vsel %vm1256, %v1288, %v1290
        %v1292 = vrot.slane %v597, 2
        %v1293 = vsel %vm1256, %v1290, %v1292
        %v1294 = vrot.slane %v598, 2
        %v1295 = vsel %vm1256, %v1292, %v1294
        %v1296 = vrot.slane %v599, 2
        %v1297 = vsel %vm1256, %v1294, %v1296
        %v1298 = vrot.slane %v600, 2
        %v1299 = vsel %vm1256, %v1296, %v1298
        %v1300 = vrot.slane %v601, 2
        %v1301 = vsel %vm1256, %v1298, %v1300
        %v1302 = vrot.slane %v602, 2
        %v1303 = vsel %vm1256, %v1300, %v1302
        %v1304 = vrot.slane %v603, 2
        %v1305 = vsel %vm1256, %v1302, %v1304
        %v1306 = vrot.slane %v604, 2
        %v1307 = vsel %vm1256, %v1304, %v1306
        %v1308 = vrot.slane %v605, 2
        %v1309 = vsel %vm1256, %v1306, %v1308
        %v1310 = vrot.slane %v606, 2
        %v1311 = vsel %vm1256, %v1308, %v1310
        %v1312 = vrot.slane %v607, 2
        %v1313 = vsel %vm1256, %v1310, %v1312
        %v1314 = vrot.slane %v608, 2
        %v1315 = vsel %vm1256, %v1312, %v1314
        %v1316 = vrot.slane %v1051, 2
        %v1317 = vsel %vm1256, %v1314, %v1316
        %v1318 = vrot.slane %v1052, 2
        %v1319 = vsel %vm1256, %v1316, %v1318
        %v1320 = vrot.slane %v1068, 2
        %v1321 = vsel %vm1256, %v1318, %v1320
        %v1360 = vunpack.c.l.b16 %v441
        %v1361 = vunpack.c.l.b16 %v442
        %v1362 = vunpack.c.l.b16 %v443
        %v1363 = vunpack.c.l.b16 %v444
        %v1364 = vunpack.c.l.b16 %v445
        %v1365 = vunpack.c.l.b16 %v446
        %v1366 = vpack.c.b16 %v522, %v1360
        %v1367 = vpack.c.b16 %v1362, %v1361
        %v1368 = vpack.c.b16 %v1364, %v1363
        %v1369 = vpack.c.b16 %v1365, %v1365
        %v1370 = vrot.slane %v1366, 2
        %v1371 = vsel %vm1256, %v1370, %v1262
        %v1372 = vrot.slane %v1367, 2
        %v1373 = vsel %vm1256, %v1318, %v1372
        %v1374 = vrot.slane %v1368, 2
        %v1375 = vsel %vm1256, %v1372, %v1374
        %v1376 = vrot.slane %v1369, 2
        %v1377 = vsel %vm1256, %v1374, %v1376
        %v1383 = vunpack.c.l.b16 %v447
        %v1384 = vpack.c.b16 %v1383, %v1383
        %vm1385 = vsmask.f32 5376
        %v1387 = vshrl.u32 %v1366, 16
        %v1389 = vrot.slane %v1387, 2
        %v1390 = vshll.u32 %v1366, 16
        %v1392 = vrot.slane %v1390, 3
        %v1393 = vor.u32 %v1389, %v1392
        %v1394 = vrot.slane %v689, 2
        %v1395 = vrot.slane %v685, 3
        %v1396 = vor.u32 %v1394, %v1395
        %v1397 = vsel %vm1385, %v1393, %v1396
        %v1398 = vrot.slane %v697, 2
        %v1399 = vrot.slane %v693, 3
        %v1400 = vor.u32 %v1398, %v1399
        %v1401 = vsel %vm1385, %v1396, %v1400
        %v1402 = vrot.slane %v705, 2
        %v1403 = vrot.slane %v701, 3
        %v1404 = vor.u32 %v1402, %v1403
        %v1405 = vsel %vm1385, %v1400, %v1404
        %v1406 = vrot.slane %v713, 2
        %v1407 = vrot.slane %v709, 3
        %v1408 = vor.u32 %v1406, %v1407
        %v1409 = vsel %vm1385, %v1404, %v1408
        %v1410 = vrot.slane %v721, 2
        %v1411 = vrot.slane %v717, 3
        %v1412 = vor.u32 %v1410, %v1411
        %v1413 = vsel %vm1385, %v1408, %v1412
        %v1414 = vrot.slane %v729, 2
        %v1415 = vrot.slane %v725, 3
        %v1416 = vor.u32 %v1414, %v1415
        %v1417 = vsel %vm1385, %v1412, %v1416
        %v1418 = vrot.slane %v737, 2
        %v1419 = vrot.slane %v733, 3
        %v1420 = vor.u32 %v1418, %v1419
        %v1421 = vsel %vm1385, %v1416, %v1420
        %v1422 = vrot.slane %v745, 2
        %v1423 = vrot.slane %v741, 3
        %v1424 = vor.u32 %v1422, %v1423
        %v1425 = vsel %vm1385, %v1420, %v1424
        %v1426 = vrot.slane %v753, 2
        %v1427 = vrot.slane %v749, 3
        %v1428 = vor.u32 %v1426, %v1427
        %v1429 = vsel %vm1385, %v1424, %v1428
        %v1430 = vrot.slane %v761, 2
        %v1431 = vrot.slane %v757, 3
        %v1432 = vor.u32 %v1430, %v1431
        %v1433 = vsel %vm1385, %v1428, %v1432
        %v1434 = vrot.slane %v769, 2
        %v1435 = vrot.slane %v765, 3
        %v1436 = vor.u32 %v1434, %v1435
        %v1437 = vsel %vm1385, %v1432, %v1436
        %v1438 = vrot.slane %v777, 2
        %v1439 = vrot.slane %v773, 3
        %v1440 = vor.u32 %v1438, %v1439
        %v1441 = vsel %vm1385, %v1436, %v1440
        %v1442 = vrot.slane %v785, 2
        %v1443 = vrot.slane %v781, 3
        %v1444 = vor.u32 %v1442, %v1443
        %v1445 = vsel %vm1385, %v1440, %v1444
        %v1446 = vrot.slane %v793, 2
        %v1447 = vrot.slane %v789, 3
        %v1448 = vor.u32 %v1446, %v1447
        %v1449 = vsel %vm1385, %v1444, %v1448
        %v1450 = vrot.slane %v801, 2
        %v1451 = vrot.slane %v797, 3
        %v1452 = vor.u32 %v1450, %v1451
        %v1453 = vsel %vm1385, %v1448, %v1452
        %v1454 = vrot.slane %v809, 2
        %v1455 = vrot.slane %v805, 3
        %v1456 = vor.u32 %v1454, %v1455
        %v1457 = vsel %vm1385, %v1452, %v1456
        %v1458 = vrot.slane %v817, 2
        %v1459 = vrot.slane %v813, 3
        %v1460 = vor.u32 %v1458, %v1459
        %v1461 = vsel %vm1385, %v1456, %v1460
        %v1462 = vrot.slane %v825, 2
        %v1463 = vrot.slane %v821, 3
        %v1464 = vor.u32 %v1462, %v1463
        %v1465 = vsel %vm1385, %v1460, %v1464
        %v1466 = vrot.slane %v833, 2
        %v1467 = vrot.slane %v829, 3
        %v1468 = vor.u32 %v1466, %v1467
        %v1469 = vsel %vm1385, %v1464, %v1468
        %v1470 = vrot.slane %v841, 2
        %v1471 = vrot.slane %v837, 3
        %v1472 = vor.u32 %v1470, %v1471
        %v1473 = vsel %vm1385, %v1468, %v1472
        %v1474 = vrot.slane %v849, 2
        %v1475 = vrot.slane %v845, 3
        %v1476 = vor.u32 %v1474, %v1475
        %v1477 = vsel %vm1385, %v1472, %v1476
        %v1478 = vrot.slane %v857, 2
        %v1479 = vrot.slane %v853, 3
        %v1480 = vor.u32 %v1478, %v1479
        %v1481 = vsel %vm1385, %v1476, %v1480
        %v1482 = vrot.slane %v865, 2
        %v1483 = vrot.slane %v861, 3
        %v1484 = vor.u32 %v1482, %v1483
        %v1485 = vsel %vm1385, %v1480, %v1484
        %v1486 = vrot.slane %v873, 2
        %v1487 = vrot.slane %v869, 3
        %v1488 = vor.u32 %v1486, %v1487
        %v1489 = vsel %vm1385, %v1484, %v1488
        %v1490 = vrot.slane %v881, 2
        %v1491 = vrot.slane %v877, 3
        %v1492 = vor.u32 %v1490, %v1491
        %v1493 = vsel %vm1385, %v1488, %v1492
        %v1494 = vrot.slane %v889, 2
        %v1495 = vrot.slane %v885, 3
        %v1496 = vor.u32 %v1494, %v1495
        %v1497 = vsel %vm1385, %v1492, %v1496
        %v1498 = vrot.slane %v897, 2
        %v1499 = vrot.slane %v893, 3
        %v1500 = vor.u32 %v1498, %v1499
        %v1501 = vsel %vm1385, %v1496, %v1500
        %v1502 = vrot.slane %v1195, 2
        %v1503 = vrot.slane %v1198, 3
        %v1504 = vor.u32 %v1502, %v1503
        %v1505 = vsel %vm1385, %v1500, %v1504
        %v1506 = vrot.slane %v1204, 2
        %v1507 = vrot.slane %v1207, 3
        %v1508 = vor.u32 %v1506, %v1507
        %v1509 = vsel %vm1385, %v1504, %v1508
        %v1511 = vshrl.u32 %v1367, 16
        %v1513 = vrot.slane %v1511, 2
        %v1514 = vshll.u32 %v1367, 16
        %v1516 = vrot.slane %v1514, 3
        %v1517 = vor.u32 %v1513, %v1516
        %v1518 = vsel %vm1385, %v1508, %v1517
        %v1520 = vshrl.u32 %v1368, 16
        %v1522 = vrot.slane %v1520, 2
        %v1523 = vshll.u32 %v1368, 16
        %v1525 = vrot.slane %v1523, 3
        %v1526 = vor.u32 %v1522, %v1525
        %v1527 = vsel %vm1385, %v1517, %v1526
        %v1529 = vshrl.u32 %v1384, 16
        %v1531 = vrot.slane %v1529, 2
        %v1532 = vshll.u32 %v1384, 16
        %v1534 = vrot.slane %v1532, 3
        %v1535 = vor.u32 %v1531, %v1534
        %v1536 = vsel %vm1385, %v1526, %v1535
        %v1570 = vunpack.c.l.b16 %v448
        %v1571 = vpack.c.b16 %v522, %v1570
        %vm1572 = vcmask 1044480
        %v1573 = vrot.slane %v1571, 3
        %v1574 = vrot.slane %v582, 3
        %v1575 = vsel %vm1572, %v1573, %v1574
        %v1576 = vrot.slane %v583, 3
        %v1577 = vsel %vm1572, %v1574, %v1576
        %v1578 = vrot.slane %v584, 3
        %v1579 = vsel %vm1572, %v1576, %v1578
        %v1580 = vrot.slane %v585, 3
        %v1581 = vsel %vm1572, %v1578, %v1580
        %v1582 = vrot.slane %v586, 3
        %v1583 = vsel %vm1572, %v1580, %v1582
        %v1584 = vrot.slane %v587, 3
        %v1585 = vsel %vm1572, %v1582, %v1584
        %v1586 = vrot.slane %v588, 3
        %v1587 = vsel %vm1572, %v1584, %v1586
        %v1588 = vrot.slane %v589, 3
        %v1589 = vsel %vm1572, %v1586, %v1588
        %v1590 = vrot.slane %v590, 3
        %v1591 = vsel %vm1572, %v1588, %v1590
        %v1592 = vrot.slane %v591, 3
        %v1593 = vsel %vm1572, %v1590, %v1592
        %v1594 = vrot.slane %v592, 3
        %v1595 = vsel %vm1572, %v1592, %v1594
        %v1596 = vrot.slane %v593, 3
        %v1597 = vsel %vm1572, %v1594, %v1596
        %v1598 = vrot.slane %v594, 3
        %v1599 = vsel %vm1572, %v1596, %v1598
        %v1600 = vrot.slane %v595, 3
        %v1601 = vsel %vm1572, %v1598, %v1600
        %v1602 = vrot.slane %v596, 3
        %v1603 = vsel %vm1572, %v1600, %v1602
        %v1604 = vrot.slane %v597, 3
        %v1605 = vsel %vm1572, %v1602, %v1604
        %v1606 = vrot.slane %v598, 3
        %v1607 = vsel %vm1572, %v1604, %v1606
        %v1608 = vrot.slane %v599, 3
        %v1609 = vsel %vm1572, %v1606, %v1608
        %v1610 = vrot.slane %v600, 3
        %v1611 = vsel %vm1572, %v1608, %v1610
        %v1612 = vrot.slane %v601, 3
        %v1613 = vsel %vm1572, %v1610, %v1612
        %v1614 = vrot.slane %v602, 3
        %v1615 = vsel %vm1572, %v1612, %v1614
        %v1616 = vrot.slane %v603, 3
        %v1617 = vsel %vm1572, %v1614, %v1616
        %v1618 = vrot.slane %v604, 3
        %v1619 = vsel %vm1572, %v1616, %v1618
        %v1620 = vrot.slane %v605, 3
        %v1621 = vsel %vm1572, %v1618, %v1620
        %v1622 = vrot.slane %v606, 3
        %v1623 = vsel %vm1572, %v1620, %v1622
        %v1624 = vrot.slane %v607, 3
        %v1625 = vsel %vm1572, %v1622, %v1624
        %v1626 = vrot.slane %v608, 3
        %v1627 = vsel %vm1572, %v1624, %v1626
        %v1628 = vrot.slane %v1051, 3
        %v1629 = vsel %vm1572, %v1626, %v1628
        %v1630 = vrot.slane %v1052, 3
        %v1631 = vsel %vm1572, %v1628, %v1630
        %v1632 = vrot.slane %v1367, 3
        %v1633 = vsel %vm1572, %v1630, %v1632
        %v1634 = vrot.slane %v1368, 3
        %v1635 = vsel %vm1572, %v1632, %v1634
        %v1636 = vrot.slane %v1384, 3
        %v1637 = vsel %vm1572, %v1634, %v1636
        %v1671 = vperm.slane %v366, 0
        %v1817 = vunpack.c.l.b16 %v222
        %v1818 = vunpack.c.l.b16 %v223
        %v1819 = vunpack.c.l.b16 %v224
        %v1820 = vunpack.c.l.b16 %v225
        %v1821 = vunpack.c.l.b16 %v226
        %v1822 = vunpack.c.l.b16 %v227
        %v1823 = vunpack.c.l.b16 %v228
        %v1824 = vunpack.c.l.b16 %v229
        %v1825 = vunpack.c.l.b16 %v230
        %v1826 = vunpack.c.l.b16 %v231
        %v1827 = vunpack.c.l.b16 %v232
        %v1828 = vunpack.c.l.b16 %v233
        %v1829 = vunpack.c.l.b16 %v234
        %v1830 = vunpack.c.l.b16 %v235
        %v1831 = vunpack.c.l.b16 %v236
        %v1832 = vunpack.c.l.b16 %v237
        %v1833 = vunpack.c.l.b16 %v238
        %v1834 = vunpack.c.l.b16 %v239
        %v1835 = vunpack.c.l.b16 %v240
        %v1836 = vunpack.c.l.b16 %v241
        %v1837 = vunpack.c.l.b16 %v242
        %v1838 = vunpack.c.l.b16 %v243
        %v1839 = vunpack.c.l.b16 %v244
        %v1840 = vunpack.c.l.b16 %v245
        %v1841 = vunpack.c.l.b16 %v246
        %v1842 = vunpack.c.l.b16 %v247
        %v1843 = vunpack.c.l.b16 %v248
        %v1844 = vunpack.c.l.b16 %v249
        %v1845 = vunpack.c.l.b16 %v250
        %v1846 = vunpack.c.l.b16 %v251
        %v1847 = vunpack.c.l.b16 %v252
        %v1848 = vunpack.c.l.b16 %v253
        %v1849 = vunpack.c.l.b16 %v254
        %v1850 = vunpack.c.l.b16 %v255
        %v1851 = vunpack.c.l.b16 %v256
        %v1852 = vunpack.c.l.b16 %v257
        %v1853 = vunpack.c.l.b16 %v258
        %v1854 = vunpack.c.l.b16 %v259
        %v1855 = vunpack.c.l.b16 %v260
        %v1856 = vunpack.c.l.b16 %v261
        %v1857 = vunpack.c.l.b16 %v262
        %v1858 = vunpack.c.l.b16 %v263
        %v1859 = vunpack.c.l.b16 %v264
        %v1860 = vunpack.c.l.b16 %v265
        %v1861 = vunpack.c.l.b16 %v266
        %v1862 = vunpack.c.l.b16 %v267
        %v1863 = vunpack.c.l.b16 %v268
        %v1864 = vunpack.c.l.b16 %v269
        %v1865 = vunpack.c.l.b16 %v270
        %v1866 = vunpack.c.l.b16 %v271
        %v1867 = vunpack.c.l.b16 %v272
        %v1868 = vunpack.c.l.b16 %v273
        %v1869 = vunpack.c.l.b16 %v274
        %v1870 = vunpack.c.l.b16 %v275
        %v1871 = vunpack.c.l.b16 %v276
        %v1872 = vunpack.c.l.b16 %v277
        %v1873 = vunpack.c.l.b16 %v278
        %v1874 = vunpack.c.l.b16 %v279
        %v1875 = vunpack.c.l.b16 %v280
        %v1876 = vunpack.c.l.b16 %v281
        %v1877 = vunpack.c.l.b16 %v282
        %v1878 = vunpack.c.l.b16 %v283
        %v1879 = vunpack.c.l.b16 %v284
        %v1880 = vunpack.c.l.b16 %v285
        %v1881 = vunpack.c.l.b16 %v286
        %v1882 = vunpack.c.l.b16 %v287
        %v1883 = vunpack.c.l.b16 %v288
        %v1884 = vunpack.c.l.b16 %v289
        %v1885 = vunpack.c.l.b16 %v290
        %v1886 = vunpack.c.l.b16 %v291
        %v1887 = vunpack.c.l.b16 %v292
        %v1888 = vunpack.c.l.b16 %v293
        %v1889 = vunpack.c.l.b16 %v294
        %v1890 = vunpack.c.l.b16 %v295
        %v1891 = vunpack.c.l.b16 %v296
        %v1892 = vunpack.c.l.b16 %v297
        %v1893 = vunpack.c.l.b16 %v298
        %v1894 = vunpack.c.l.b16 %v299
        %v1895 = vunpack.c.l.b16 %v300
        %v1896 = vunpack.c.l.b16 %v301
        %v1897 = vunpack.c.l.b16 %v302
        %v1898 = vunpack.c.l.b16 %v303
        %v1899 = vunpack.c.l.b16 %v304
        %v1900 = vunpack.c.l.b16 %v305
        %v1901 = vunpack.c.l.b16 %v306
        %v1902 = vunpack.c.l.b16 %v307
        %v1903 = vunpack.c.l.b16 %v308
        %v1904 = vunpack.c.l.b16 %v309
        %v1905 = vunpack.c.l.b16 %v310
        %v1906 = vunpack.c.l.b16 %v311
        %v1907 = vunpack.c.l.b16 %v312
        %v1908 = vunpack.c.l.b16 %v313
        %v1909 = vunpack.c.l.b16 %v314
        %v1910 = vunpack.c.l.b16 %v315
        %v1911 = vunpack.c.l.b16 %v316
        %v1912 = vunpack.c.l.b16 %v317
        %v1913 = vunpack.c.l.b16 %v318
        %v1914 = vunpack.c.l.b16 %v319
        %v1915 = vunpack.c.l.b16 %v320
        %v1916 = vunpack.c.l.b16 %v321
        %v1917 = vunpack.c.l.b16 %v322
        %v1918 = vunpack.c.l.b16 %v323
        %v1919 = vunpack.c.l.b16 %v324
        %v1920 = vunpack.c.l.b16 %v325
        %v1921 = vunpack.c.l.b16 %v326
        %v1922 = vunpack.c.l.b16 %v327
        %v1923 = vunpack.c.l.b16 %v328
        %v1924 = vunpack.c.l.b16 %v329
        %v1925 = vunpack.c.l.b16 %v330
        %v1926 = vunpack.c.l.b16 %v331
        %v1927 = vunpack.c.l.b16 %v332
        %v1928 = vunpack.c.l.b16 %v333
        %v1929 = vunpack.c.l.b16 %v334
        %v1930 = vunpack.c.l.b16 %v335
        %v1931 = vunpack.c.l.b16 %v336
        %v1932 = vunpack.c.l.b16 %v337
        %v1933 = vunpack.c.l.b16 %v338
        %v1934 = vunpack.c.l.b16 %v339
        %v1935 = vunpack.c.l.b16 %v340
        %v1936 = vunpack.c.l.b16 %v341
        %v1937 = vunpack.c.l.b16 %v342
        %v1938 = vunpack.c.l.b16 %v343
        %v1939 = vunpack.c.l.b16 %v344
        %v1940 = vunpack.c.l.b16 %v345
        %v1941 = vunpack.c.l.b16 %v346
        %v1942 = vunpack.c.l.b16 %v347
        %v1943 = vunpack.c.l.b16 %v348
        %v1944 = vunpack.c.l.b16 %v349
        %v1945 = vunpack.c.l.b16 %v350
        %v1946 = vunpack.c.l.b16 %v351
        %v1947 = vunpack.c.l.b16 %v352
        %v1948 = vunpack.c.l.b16 %v353
        %v1949 = vunpack.c.l.b16 %v354
        %v1950 = vunpack.c.l.b16 %v355
        %v1951 = vunpack.c.l.b16 %v356
        %v1952 = vunpack.c.l.b16 %v357
        %v1953 = vunpack.c.l.b16 %v358
        %v1954 = vunpack.c.l.b16 %v359
        %v1955 = vunpack.c.l.b16 %v360
        %v1956 = vunpack.c.l.b16 %v361
        %v1957 = vunpack.c.l.b16 %v362
        %v1958 = vunpack.c.l.b16 %v363
        %v1959 = vunpack.c.l.b16 %v364
        %v1960 = vunpack.c.l.b16 %v365
        %v1961 = vpack.c.b16 %v1818, %v1817
        %v1962 = vpack.c.b16 %v1820, %v1819
        %v1963 = vpack.c.b16 %v1822, %v1821
        %v1964 = vpack.c.b16 %v1824, %v1823
        %v1965 = vpack.c.b16 %v1826, %v1825
        %v1966 = vpack.c.b16 %v1828, %v1827
        %v1967 = vpack.c.b16 %v1830, %v1829
        %v1968 = vpack.c.b16 %v1832, %v1831
        %v1969 = vpack.c.b16 %v1834, %v1833
        %v1970 = vpack.c.b16 %v1836, %v1835
        %v1971 = vpack.c.b16 %v1838, %v1837
        %v1972 = vpack.c.b16 %v1840, %v1839
        %v1973 = vpack.c.b16 %v1842, %v1841
        %v1974 = vpack.c.b16 %v1844, %v1843
        %v1975 = vpack.c.b16 %v1846, %v1845
        %v1976 = vpack.c.b16 %v1848, %v1847
        %v1977 = vpack.c.b16 %v1850, %v1849
        %v1978 = vpack.c.b16 %v1852, %v1851
        %v1979 = vpack.c.b16 %v1854, %v1853
        %v1980 = vpack.c.b16 %v1856, %v1855
        %v1981 = vpack.c.b16 %v1858, %v1857
        %v1982 = vpack.c.b16 %v1860, %v1859
        %v1983 = vpack.c.b16 %v1862, %v1861
        %v1984 = vpack.c.b16 %v1864, %v1863
        %v1985 = vpack.c.b16 %v1866, %v1865
        %v1986 = vpack.c.b16 %v1868, %v1867
        %v1987 = vpack.c.b16 %v1870, %v1869
        %v1988 = vpack.c.b16 %v1872, %v1871
        %v1989 = vpack.c.b16 %v1874, %v1873
        %v1990 = vpack.c.b16 %v1876, %v1875
        %v1991 = vpack.c.b16 %v1878, %v1877
        %v1992 = vpack.c.b16 %v1880, %v1879
        %v1993 = vpack.c.b16 %v1882, %v1881
        %v1994 = vpack.c.b16 %v1884, %v1883
        %v1995 = vpack.c.b16 %v1886, %v1885
        %v1996 = vpack.c.b16 %v1888, %v1887
        %v1997 = vpack.c.b16 %v1890, %v1889
        %v1998 = vpack.c.b16 %v1892, %v1891
        %v1999 = vpack.c.b16 %v1894, %v1893
        %v2000 = vpack.c.b16 %v1896, %v1895
        %v2001 = vpack.c.b16 %v1898, %v1897
        %v2002 = vpack.c.b16 %v1900, %v1899
        %v2003 = vpack.c.b16 %v1902, %v1901
        %v2004 = vpack.c.b16 %v1904, %v1903
        %v2005 = vpack.c.b16 %v1906, %v1905
        %v2006 = vpack.c.b16 %v1908, %v1907
        %v2007 = vpack.c.b16 %v1910, %v1909
        %v2008 = vpack.c.b16 %v1912, %v1911
        %v2009 = vpack.c.b16 %v1914, %v1913
        %v2010 = vpack.c.b16 %v1916, %v1915
        %v2011 = vpack.c.b16 %v1918, %v1917
        %v2012 = vpack.c.b16 %v1920, %v1919
        %v2013 = vpack.c.b16 %v1922, %v1921
        %v2014 = vpack.c.b16 %v1924, %v1923
        %v2015 = vpack.c.b16 %v1926, %v1925
        %v2016 = vpack.c.b16 %v1928, %v1927
        %v2017 = vpack.c.b16 %v1930, %v1929
        %v2018 = vpack.c.b16 %v1932, %v1931
        %v2019 = vpack.c.b16 %v1934, %v1933
        %v2020 = vpack.c.b16 %v1936, %v1935
        %v2021 = vpack.c.b16 %v1938, %v1937
        %v2022 = vpack.c.b16 %v1940, %v1939
        %v2023 = vpack.c.b16 %v1942, %v1941
        %v2024 = vpack.c.b16 %v1944, %v1943
        %v2025 = vpack.c.b16 %v1946, %v1945
        %v2026 = vpack.c.b16 %v1948, %v1947
        %v2027 = vpack.c.b16 %v1950, %v1949
        %v2028 = vpack.c.b16 %v1952, %v1951
        %v2029 = vpack.c.b16 %v1954, %v1953
        %v2030 = vpack.c.b16 %v1956, %v1955
        %v2031 = vpack.c.b16 %v1958, %v1957
        %v2032 = vpack.c.b16 %v1960, %v1959
        %2105 = vmatpush.bf16.msra.mxu0 %v1968
        %2106 = vmatpush.bf16.msra.mxu0 %v1967
        %2107 = vmatpush.bf16.msra.mxu0 %v1966
        %2108 = vmatpush.bf16.msra.mxu0 %v1965
        %2109 = vmatpush.bf16.msra.mxu0 %v1964
        %2110 = vmatpush.bf16.msra.mxu0 %v1963
        %2111 = vmatpush.bf16.msra.mxu0 %v1962
        %2112 = vmatpush.bf16.msra.mxu0 %v1961
        %2113 = vmatmul.bf16.gmra.mxu0 %v577
        %v2114 = vpop.f32.mrf.mxu0
        %v2115 = vadd.f32 %v1671, %v2114
        %v2116 = vpop.f32.mrf.mxu0
        %v2117 = vadd.f32 %v1671, %v2116
        %2118 = vmatmul.bf16.gmra.mxu0 %v578
        %v2119 = vpop.f32.mrf.mxu0
        %v2120 = vadd.f32 %v1671, %v2119
        %v2121 = vpop.f32.mrf.mxu0
        %v2122 = vadd.f32 %v1671, %v2121
        %2123 = vmatmul.bf16.gmra.mxu0 %v579
        %v2124 = vpop.f32.mrf.mxu0
        %v2125 = vadd.f32 %v1671, %v2124
        %v2126 = vpop.f32.mrf.mxu0
        %v2127 = vadd.f32 %v1671, %v2126
        %2128 = vmatmul.bf16.gmra.mxu0 %v580
        %v2129 = vpop.f32.mrf.mxu0
        %v2130 = vadd.f32 %v1671, %v2129
        %v2131 = vpop.f32.mrf.mxu0
        %v2132 = vadd.f32 %v1671, %v2131
        %2133 = vmatmul.bf16.gmra.mxu0 %v581
        %v2134 = vpop.f32.mrf.mxu0
        %v2135 = vadd.f32 %v1671, %v2134
        %v2136 = vpop.f32.mrf.mxu0
        %v2137 = vadd.f32 %v1671, %v2136
        %2138 = vmatmul.bf16.gmra.mxu0 %v582
        %v2139 = vpop.f32.mrf.mxu0
        %v2140 = vadd.f32 %v1671, %v2139
        %v2141 = vpop.f32.mrf.mxu0
        %v2142 = vadd.f32 %v1671, %v2141
        %2143 = vmatmul.bf16.gmra.mxu0 %v583
        %v2144 = vpop.f32.mrf.mxu0
        %v2145 = vadd.f32 %v1671, %v2144
        %v2146 = vpop.f32.mrf.mxu0
        %v2147 = vadd.f32 %v1671, %v2146
        %2148 = vmatmul.bf16.gmra.mxu0 %v584
        %v2149 = vpop.f32.mrf.mxu0
        %v2150 = vadd.f32 %v1671, %v2149
        %v2151 = vpop.f32.mrf.mxu0
        %v2152 = vadd.f32 %v1671, %v2151
        %2153 = vmatmul.bf16.gmra.mxu0 %v585
        %v2154 = vpop.f32.mrf.mxu0
        %v2155 = vadd.f32 %v1671, %v2154
        %v2156 = vpop.f32.mrf.mxu0
        %v2157 = vadd.f32 %v1671, %v2156
        %2158 = vmatmul.bf16.gmra.mxu0 %v586
        %v2159 = vpop.f32.mrf.mxu0
        %v2160 = vadd.f32 %v1671, %v2159
        %v2161 = vpop.f32.mrf.mxu0
        %v2162 = vadd.f32 %v1671, %v2161
        %2163 = vmatmul.bf16.gmra.mxu0 %v587
        %v2164 = vpop.f32.mrf.mxu0
        %v2165 = vadd.f32 %v1671, %v2164
        %v2166 = vpop.f32.mrf.mxu0
        %v2167 = vadd.f32 %v1671, %v2166
        %2168 = vmatmul.bf16.gmra.mxu0 %v588
        %v2169 = vpop.f32.mrf.mxu0
        %v2170 = vadd.f32 %v1671, %v2169
        %v2171 = vpop.f32.mrf.mxu0
        %v2172 = vadd.f32 %v1671, %v2171
        %2173 = vmatmul.bf16.gmra.mxu0 %v589
        %v2174 = vpop.f32.mrf.mxu0
        %v2175 = vadd.f32 %v1671, %v2174
        %v2176 = vpop.f32.mrf.mxu0
        %v2177 = vadd.f32 %v1671, %v2176
        %2178 = vmatmul.bf16.gmra.mxu0 %v590
        %v2179 = vpop.f32.mrf.mxu0
        %v2180 = vadd.f32 %v1671, %v2179
        %v2181 = vpop.f32.mrf.mxu0
        %v2182 = vadd.f32 %v1671, %v2181
        %2183 = vmatmul.bf16.gmra.mxu0 %v591
        %v2184 = vpop.f32.mrf.mxu0
        %v2185 = vadd.f32 %v1671, %v2184
        %v2186 = vpop.f32.mrf.mxu0
        %v2187 = vadd.f32 %v1671, %v2186
        %2188 = vmatmul.bf16.gmra.mxu0 %v592
        %v2189 = vpop.f32.mrf.mxu0
        %v2190 = vadd.f32 %v1671, %v2189
        %v2191 = vpop.f32.mrf.mxu0
        %v2192 = vadd.f32 %v1671, %v2191
        %2193 = vmatmul.bf16.gmra.mxu0 %v593
        %v2194 = vpop.f32.mrf.mxu0
        %v2195 = vadd.f32 %v1671, %v2194
        %v2196 = vpop.f32.mrf.mxu0
        %v2197 = vadd.f32 %v1671, %v2196
        %2198 = vmatmul.bf16.gmra.mxu0 %v594
        %v2199 = vpop.f32.mrf.mxu0
        %v2200 = vadd.f32 %v1671, %v2199
        %v2201 = vpop.f32.mrf.mxu0
        %v2202 = vadd.f32 %v1671, %v2201
        %2203 = vmatmul.bf16.gmra.mxu0 %v595
        %v2204 = vpop.f32.mrf.mxu0
        %v2205 = vadd.f32 %v1671, %v2204
        %v2206 = vpop.f32.mrf.mxu0
        %v2207 = vadd.f32 %v1671, %v2206
        %2208 = vmatmul.bf16.gmra.mxu0 %v596
        %v2209 = vpop.f32.mrf.mxu0
        %v2210 = vadd.f32 %v1671, %v2209
        %v2211 = vpop.f32.mrf.mxu0
        %v2212 = vadd.f32 %v1671, %v2211
        %2213 = vmatmul.bf16.gmra.mxu0 %v597
        %v2214 = vpop.f32.mrf.mxu0
        %v2215 = vadd.f32 %v1671, %v2214
        %v2216 = vpop.f32.mrf.mxu0
        %v2217 = vadd.f32 %v1671, %v2216
        %2218 = vmatmul.bf16.gmra.mxu0 %v598
        %v2219 = vpop.f32.mrf.mxu0
        %v2220 = vadd.f32 %v1671, %v2219
        %v2221 = vpop.f32.mrf.mxu0
        %v2222 = vadd.f32 %v1671, %v2221
        %2223 = vmatmul.bf16.gmra.mxu0 %v599
        %v2224 = vpop.f32.mrf.mxu0
        %v2225 = vadd.f32 %v1671, %v2224
        %v2226 = vpop.f32.mrf.mxu0
        %v2227 = vadd.f32 %v1671, %v2226
        %2228 = vmatmul.bf16.gmra.mxu0 %v600
        %v2229 = vpop.f32.mrf.mxu0
        %v2230 = vadd.f32 %v1671, %v2229
        %v2231 = vpop.f32.mrf.mxu0
        %v2232 = vadd.f32 %v1671, %v2231
        %2233 = vmatmul.bf16.gmra.mxu0 %v601
        %v2234 = vpop.f32.mrf.mxu0
        %v2235 = vadd.f32 %v1671, %v2234
        %v2236 = vpop.f32.mrf.mxu0
        %v2237 = vadd.f32 %v1671, %v2236
        %2238 = vmatmul.bf16.gmra.mxu0 %v602
        %v2239 = vpop.f32.mrf.mxu0
        %v2240 = vadd.f32 %v1671, %v2239
        %v2241 = vpop.f32.mrf.mxu0
        %v2242 = vadd.f32 %v1671, %v2241
        %2243 = vmatmul.bf16.gmra.mxu0 %v603
        %v2244 = vpop.f32.mrf.mxu0
        %v2245 = vadd.f32 %v1671, %v2244
        %v2246 = vpop.f32.mrf.mxu0
        %v2247 = vadd.f32 %v1671, %v2246
        %2248 = vmatmul.bf16.gmra.mxu0 %v604
        %v2249 = vpop.f32.mrf.mxu0
        %v2250 = vadd.f32 %v1671, %v2249
        %v2251 = vpop.f32.mrf.mxu0
        %v2252 = vadd.f32 %v1671, %v2251
        %2253 = vmatmul.bf16.gmra.mxu0 %v605
        %v2254 = vpop.f32.mrf.mxu0
        %v2255 = vadd.f32 %v1671, %v2254
        %v2256 = vpop.f32.mrf.mxu0
        %v2257 = vadd.f32 %v1671, %v2256
        %2258 = vmatmul.bf16.gmra.mxu0 %v606
        %v2259 = vpop.f32.mrf.mxu0
        %v2260 = vadd.f32 %v1671, %v2259
        %v2261 = vpop.f32.mrf.mxu0
        %v2262 = vadd.f32 %v1671, %v2261
        %2263 = vmatmul.bf16.gmra.mxu0 %v607
        %v2264 = vpop.f32.mrf.mxu0
        %v2265 = vadd.f32 %v1671, %v2264
        %v2266 = vpop.f32.mrf.mxu0
        %v2267 = vadd.f32 %v1671, %v2266
        %2268 = vmatmul.bf16.gmra.mxu0 %v608
        %v2269 = vpop.f32.mrf.mxu0
        %v2270 = vadd.f32 %v1671, %v2269
        %v2271 = vpop.f32.mrf.mxu0
        %v2272 = vadd.f32 %v1671, %v2271
        %2273 = vdwg.mxu0
        %2274 = vmatpush.bf16.msra.mxu0 %v1976
        %2275 = vmatpush.bf16.msra.mxu0 %v1975
        %2276 = vmatpush.bf16.msra.mxu0 %v1974
        %2277 = vmatpush.bf16.msra.mxu0 %v1973
        %2278 = vmatpush.bf16.msra.mxu0 %v1972
        %2279 = vmatpush.bf16.msra.mxu0 %v1971
        %2280 = vmatpush.bf16.msra.mxu0 %v1970
        %2281 = vmatpush.bf16.msra.mxu0 %v1969
        %2282 = vmatmul.bf16.gmra.mxu0 %v656
        %v2283 = vpop.f32.mrf.mxu0
        %v2284 = vadd.f32 %v2115, %v2283
        %v2285 = vpop.f32.mrf.mxu0
        %v2286 = vadd.f32 %v2117, %v2285
        %2287 = vmatmul.bf16.gmra.mxu0 %v664
        %v2288 = vpop.f32.mrf.mxu0
        %v2289 = vadd.f32 %v2120, %v2288
        %v2290 = vpop.f32.mrf.mxu0
        %v2291 = vadd.f32 %v2122, %v2290
        %2292 = vmatmul.bf16.gmra.mxu0 %v672
        %v2293 = vpop.f32.mrf.mxu0
        %v2294 = vadd.f32 %v2125, %v2293
        %v2295 = vpop.f32.mrf.mxu0
        %v2296 = vadd.f32 %v2127, %v2295
        %2297 = vmatmul.bf16.gmra.mxu0 %v680
        %v2298 = vpop.f32.mrf.mxu0
        %v2299 = vadd.f32 %v2130, %v2298
        %v2300 = vpop.f32.mrf.mxu0
        %v2301 = vadd.f32 %v2132, %v2300
        %2302 = vmatmul.bf16.gmra.mxu0 %v688
        %v2303 = vpop.f32.mrf.mxu0
        %v2304 = vadd.f32 %v2135, %v2303
        %v2305 = vpop.f32.mrf.mxu0
        %v2306 = vadd.f32 %v2137, %v2305
        %2307 = vmatmul.bf16.gmra.mxu0 %v696
        %v2308 = vpop.f32.mrf.mxu0
        %v2309 = vadd.f32 %v2140, %v2308
        %v2310 = vpop.f32.mrf.mxu0
        %v2311 = vadd.f32 %v2142, %v2310
        %2312 = vmatmul.bf16.gmra.mxu0 %v704
        %v2313 = vpop.f32.mrf.mxu0
        %v2314 = vadd.f32 %v2145, %v2313
        %v2315 = vpop.f32.mrf.mxu0
        %v2316 = vadd.f32 %v2147, %v2315
        %2317 = vmatmul.bf16.gmra.mxu0 %v712
        %v2318 = vpop.f32.mrf.mxu0
        %v2319 = vadd.f32 %v2150, %v2318
        %v2320 = vpop.f32.mrf.mxu0
        %v2321 = vadd.f32 %v2152, %v2320
        %2322 = vmatmul.bf16.gmra.mxu0 %v720
        %v2323 = vpop.f32.mrf.mxu0
        %v2324 = vadd.f32 %v2155, %v2323
        %v2325 = vpop.f32.mrf.mxu0
        %v2326 = vadd.f32 %v2157, %v2325
        %2327 = vmatmul.bf16.gmra.mxu0 %v728
        %v2328 = vpop.f32.mrf.mxu0
        %v2329 = vadd.f32 %v2160, %v2328
        %v2330 = vpop.f32.mrf.mxu0
        %v2331 = vadd.f32 %v2162, %v2330
        %2332 = vmatmul.bf16.gmra.mxu0 %v736
        %v2333 = vpop.f32.mrf.mxu0
        %v2334 = vadd.f32 %v2165, %v2333
        %v2335 = vpop.f32.mrf.mxu0
        %v2336 = vadd.f32 %v2167, %v2335
        %2337 = vmatmul.bf16.gmra.mxu0 %v744
        %v2338 = vpop.f32.mrf.mxu0
        %v2339 = vadd.f32 %v2170, %v2338
        %v2340 = vpop.f32.mrf.mxu0
        %v2341 = vadd.f32 %v2172, %v2340
        %2342 = vmatmul.bf16.gmra.mxu0 %v752
        %v2343 = vpop.f32.mrf.mxu0
        %v2344 = vadd.f32 %v2175, %v2343
        %v2345 = vpop.f32.mrf.mxu0
        %v2346 = vadd.f32 %v2177, %v2345
        %2347 = vmatmul.bf16.gmra.mxu0 %v760
        %v2348 = vpop.f32.mrf.mxu0
        %v2349 = vadd.f32 %v2180, %v2348
        %v2350 = vpop.f32.mrf.mxu0
        %v2351 = vadd.f32 %v2182, %v2350
        %2352 = vmatmul.bf16.gmra.mxu0 %v768
        %v2353 = vpop.f32.mrf.mxu0
        %v2354 = vadd.f32 %v2185, %v2353
        %v2355 = vpop.f32.mrf.mxu0
        %v2356 = vadd.f32 %v2187, %v2355
        %2357 = vmatmul.bf16.gmra.mxu0 %v776
        %v2358 = vpop.f32.mrf.mxu0
        %v2359 = vadd.f32 %v2190, %v2358
        %v2360 = vpop.f32.mrf.mxu0
        %v2361 = vadd.f32 %v2192, %v2360
        %2362 = vmatmul.bf16.gmra.mxu0 %v784
        %v2363 = vpop.f32.mrf.mxu0
        %v2364 = vadd.f32 %v2195, %v2363
        %v2365 = vpop.f32.mrf.mxu0
        %v2366 = vadd.f32 %v2197, %v2365
        %2367 = vmatmul.bf16.gmra.mxu0 %v792
        %v2368 = vpop.f32.mrf.mxu0
        %v2369 = vadd.f32 %v2200, %v2368
        %v2370 = vpop.f32.mrf.mxu0
        %v2371 = vadd.f32 %v2202, %v2370
        %2372 = vmatmul.bf16.gmra.mxu0 %v800
        %v2373 = vpop.f32.mrf.mxu0
        %v2374 = vadd.f32 %v2205, %v2373
        %v2375 = vpop.f32.mrf.mxu0
        %v2376 = vadd.f32 %v2207, %v2375
        %2377 = vmatmul.bf16.gmra.mxu0 %v808
        %v2378 = vpop.f32.mrf.mxu0
        %v2379 = vadd.f32 %v2210, %v2378
        %v2380 = vpop.f32.mrf.mxu0
        %v2381 = vadd.f32 %v2212, %v2380
        %2382 = vmatmul.bf16.gmra.mxu0 %v816
        %v2383 = vpop.f32.mrf.mxu0
        %v2384 = vadd.f32 %v2215, %v2383
        %v2385 = vpop.f32.mrf.mxu0
        %v2386 = vadd.f32 %v2217, %v2385
        %2387 = vmatmul.bf16.gmra.mxu0 %v824
        %v2388 = vpop.f32.mrf.mxu0
        %v2389 = vadd.f32 %v2220, %v2388
        %v2390 = vpop.f32.mrf.mxu0
        %v2391 = vadd.f32 %v2222, %v2390
        %2392 = vmatmul.bf16.gmra.mxu0 %v832
        %v2393 = vpop.f32.mrf.mxu0
        %v2394 = vadd.f32 %v2225, %v2393
        %v2395 = vpop.f32.mrf.mxu0
        %v2396 = vadd.f32 %v2227, %v2395
        %2397 = vmatmul.bf16.gmra.mxu0 %v840
        %v2398 = vpop.f32.mrf.mxu0
        %v2399 = vadd.f32 %v2230, %v2398
        %v2400 = vpop.f32.mrf.mxu0
        %v2401 = vadd.f32 %v2232, %v2400
        %2402 = vmatmul.bf16.gmra.mxu0 %v848
        %v2403 = vpop.f32.mrf.mxu0
        %v2404 = vadd.f32 %v2235, %v2403
        %v2405 = vpop.f32.mrf.mxu0
        %v2406 = vadd.f32 %v2237, %v2405
        %2407 = vmatmul.bf16.gmra.mxu0 %v856
        %v2408 = vpop.f32.mrf.mxu0
        %v2409 = vadd.f32 %v2240, %v2408
        %v2410 = vpop.f32.mrf.mxu0
        %v2411 = vadd.f32 %v2242, %v2410
        %2412 = vmatmul.bf16.gmra.mxu0 %v864
        %v2413 = vpop.f32.mrf.mxu0
        %v2414 = vadd.f32 %v2245, %v2413
        %v2415 = vpop.f32.mrf.mxu0
        %v2416 = vadd.f32 %v2247, %v2415
        %2417 = vmatmul.bf16.gmra.mxu0 %v872
        %v2418 = vpop.f32.mrf.mxu0
        %v2419 = vadd.f32 %v2250, %v2418
        %v2420 = vpop.f32.mrf.mxu0
        %v2421 = vadd.f32 %v2252, %v2420
        %2422 = vmatmul.bf16.gmra.mxu0 %v880
        %v2423 = vpop.f32.mrf.mxu0
        %v2424 = vadd.f32 %v2255, %v2423
        %v2425 = vpop.f32.mrf.mxu0
        %v2426 = vadd.f32 %v2257, %v2425
        %2427 = vmatmul.bf16.gmra.mxu0 %v888
        %v2428 = vpop.f32.mrf.mxu0
        %v2429 = vadd.f32 %v2260, %v2428
        %v2430 = vpop.f32.mrf.mxu0
        %v2431 = vadd.f32 %v2262, %v2430
        %2432 = vmatmul.bf16.gmra.mxu0 %v896
        %v2433 = vpop.f32.mrf.mxu0
        %v2434 = vadd.f32 %v2265, %v2433
        %v2435 = vpop.f32.mrf.mxu0
        %v2436 = vadd.f32 %v2267, %v2435
        %2437 = vmatmul.bf16.gmra.mxu0 %v904
        %v2438 = vpop.f32.mrf.mxu0
        %v2439 = vadd.f32 %v2270, %v2438
        %v2440 = vpop.f32.mrf.mxu0
        %v2441 = vadd.f32 %v2272, %v2440
        %2442 = vdwg.mxu0
        %2443 = vmatpush.bf16.msra.mxu0 %v1984
        %2444 = vmatpush.bf16.msra.mxu0 %v1983
        %2445 = vmatpush.bf16.msra.mxu0 %v1982
        %2446 = vmatpush.bf16.msra.mxu0 %v1981
        %2447 = vmatpush.bf16.msra.mxu0 %v1980
        %2448 = vmatpush.bf16.msra.mxu0 %v1979
        %2449 = vmatpush.bf16.msra.mxu0 %v1978
        %2450 = vmatpush.bf16.msra.mxu0 %v1977
        %2451 = vmatmul.bf16.gmra.mxu0 %v943
        %v2452 = vpop.f32.mrf.mxu0
        %v2453 = vadd.f32 %v2284, %v2452
        %v2454 = vpop.f32.mrf.mxu0
        %v2455 = vadd.f32 %v2286, %v2454
        %2456 = vmatmul.bf16.gmra.mxu0 %v945
        %v2457 = vpop.f32.mrf.mxu0
        %v2458 = vadd.f32 %v2289, %v2457
        %v2459 = vpop.f32.mrf.mxu0
        %v2460 = vadd.f32 %v2291, %v2459
        %2461 = vmatmul.bf16.gmra.mxu0 %v947
        %v2462 = vpop.f32.mrf.mxu0
        %v2463 = vadd.f32 %v2294, %v2462
        %v2464 = vpop.f32.mrf.mxu0
        %v2465 = vadd.f32 %v2296, %v2464
        %2466 = vmatmul.bf16.gmra.mxu0 %v949
        %v2467 = vpop.f32.mrf.mxu0
        %v2468 = vadd.f32 %v2299, %v2467
        %v2469 = vpop.f32.mrf.mxu0
        %v2470 = vadd.f32 %v2301, %v2469
        %2471 = vmatmul.bf16.gmra.mxu0 %v951
        %v2472 = vpop.f32.mrf.mxu0
        %v2473 = vadd.f32 %v2304, %v2472
        %v2474 = vpop.f32.mrf.mxu0
        %v2475 = vadd.f32 %v2306, %v2474
        %2476 = vmatmul.bf16.gmra.mxu0 %v953
        %v2477 = vpop.f32.mrf.mxu0
        %v2478 = vadd.f32 %v2309, %v2477
        %v2479 = vpop.f32.mrf.mxu0
        %v2480 = vadd.f32 %v2311, %v2479
        %2481 = vmatmul.bf16.gmra.mxu0 %v955
        %v2482 = vpop.f32.mrf.mxu0
        %v2483 = vadd.f32 %v2314, %v2482
        %v2484 = vpop.f32.mrf.mxu0
        %v2485 = vadd.f32 %v2316, %v2484
        %2486 = vmatmul.bf16.gmra.mxu0 %v957
        %v2487 = vpop.f32.mrf.mxu0
        %v2488 = vadd.f32 %v2319, %v2487
        %v2489 = vpop.f32.mrf.mxu0
        %v2490 = vadd.f32 %v2321, %v2489
        %2491 = vmatmul.bf16.gmra.mxu0 %v959
        %v2492 = vpop.f32.mrf.mxu0
        %v2493 = vadd.f32 %v2324, %v2492
        %v2494 = vpop.f32.mrf.mxu0
        %v2495 = vadd.f32 %v2326, %v2494
        %2496 = vmatmul.bf16.gmra.mxu0 %v961
        %v2497 = vpop.f32.mrf.mxu0
        %v2498 = vadd.f32 %v2329, %v2497
        %v2499 = vpop.f32.mrf.mxu0
        %v2500 = vadd.f32 %v2331, %v2499
        %2501 = vmatmul.bf16.gmra.mxu0 %v963
        %v2502 = vpop.f32.mrf.mxu0
        %v2503 = vadd.f32 %v2334, %v2502
        %v2504 = vpop.f32.mrf.mxu0
        %v2505 = vadd.f32 %v2336, %v2504
        %2506 = vmatmul.bf16.gmra.mxu0 %v965
        %v2507 = vpop.f32.mrf.mxu0
        %v2508 = vadd.f32 %v2339, %v2507
        %v2509 = vpop.f32.mrf.mxu0
        %v2510 = vadd.f32 %v2341, %v2509
        %2511 = vmatmul.bf16.gmra.mxu0 %v967
        %v2512 = vpop.f32.mrf.mxu0
        %v2513 = vadd.f32 %v2344, %v2512
        %v2514 = vpop.f32.mrf.mxu0
        %v2515 = vadd.f32 %v2346, %v2514
        %2516 = vmatmul.bf16.gmra.mxu0 %v969
        %v2517 = vpop.f32.mrf.mxu0
        %v2518 = vadd.f32 %v2349, %v2517
        %v2519 = vpop.f32.mrf.mxu0
        %v2520 = vadd.f32 %v2351, %v2519
        %2521 = vmatmul.bf16.gmra.mxu0 %v971
        %v2522 = vpop.f32.mrf.mxu0
        %v2523 = vadd.f32 %v2354, %v2522
        %v2524 = vpop.f32.mrf.mxu0
        %v2525 = vadd.f32 %v2356, %v2524
        %2526 = vmatmul.bf16.gmra.mxu0 %v973
        %v2527 = vpop.f32.mrf.mxu0
        %v2528 = vadd.f32 %v2359, %v2527
        %v2529 = vpop.f32.mrf.mxu0
        %v2530 = vadd.f32 %v2361, %v2529
        %2531 = vmatmul.bf16.gmra.mxu0 %v975
        %v2532 = vpop.f32.mrf.mxu0
        %v2533 = vadd.f32 %v2364, %v2532
        %v2534 = vpop.f32.mrf.mxu0
        %v2535 = vadd.f32 %v2366, %v2534
        %2536 = vmatmul.bf16.gmra.mxu0 %v977
        %v2537 = vpop.f32.mrf.mxu0
        %v2538 = vadd.f32 %v2369, %v2537
        %v2539 = vpop.f32.mrf.mxu0
        %v2540 = vadd.f32 %v2371, %v2539
        %2541 = vmatmul.bf16.gmra.mxu0 %v979
        %v2542 = vpop.f32.mrf.mxu0
        %v2543 = vadd.f32 %v2374, %v2542
        %v2544 = vpop.f32.mrf.mxu0
        %v2545 = vadd.f32 %v2376, %v2544
        %2546 = vmatmul.bf16.gmra.mxu0 %v981
        %v2547 = vpop.f32.mrf.mxu0
        %v2548 = vadd.f32 %v2379, %v2547
        %v2549 = vpop.f32.mrf.mxu0
        %v2550 = vadd.f32 %v2381, %v2549
        %2551 = vmatmul.bf16.gmra.mxu0 %v983
        %v2552 = vpop.f32.mrf.mxu0
        %v2553 = vadd.f32 %v2384, %v2552
        %v2554 = vpop.f32.mrf.mxu0
        %v2555 = vadd.f32 %v2386, %v2554
        %2556 = vmatmul.bf16.gmra.mxu0 %v985
        %v2557 = vpop.f32.mrf.mxu0
        %v2558 = vadd.f32 %v2389, %v2557
        %v2559 = vpop.f32.mrf.mxu0
        %v2560 = vadd.f32 %v2391, %v2559
        %2561 = vmatmul.bf16.gmra.mxu0 %v987
        %v2562 = vpop.f32.mrf.mxu0
        %v2563 = vadd.f32 %v2394, %v2562
        %v2564 = vpop.f32.mrf.mxu0
        %v2565 = vadd.f32 %v2396, %v2564
        %2566 = vmatmul.bf16.gmra.mxu0 %v989
        %v2567 = vpop.f32.mrf.mxu0
        %v2568 = vadd.f32 %v2399, %v2567
        %v2569 = vpop.f32.mrf.mxu0
        %v2570 = vadd.f32 %v2401, %v2569
        %2571 = vmatmul.bf16.gmra.mxu0 %v991
        %v2572 = vpop.f32.mrf.mxu0
        %v2573 = vadd.f32 %v2404, %v2572
        %v2574 = vpop.f32.mrf.mxu0
        %v2575 = vadd.f32 %v2406, %v2574
        %2576 = vmatmul.bf16.gmra.mxu0 %v993
        %v2577 = vpop.f32.mrf.mxu0
        %v2578 = vadd.f32 %v2409, %v2577
        %v2579 = vpop.f32.mrf.mxu0
        %v2580 = vadd.f32 %v2411, %v2579
        %2581 = vmatmul.bf16.gmra.mxu0 %v995
        %v2582 = vpop.f32.mrf.mxu0
        %v2583 = vadd.f32 %v2414, %v2582
        %v2584 = vpop.f32.mrf.mxu0
        %v2585 = vadd.f32 %v2416, %v2584
        %2586 = vmatmul.bf16.gmra.mxu0 %v997
        %v2587 = vpop.f32.mrf.mxu0
        %v2588 = vadd.f32 %v2419, %v2587
        %v2589 = vpop.f32.mrf.mxu0
        %v2590 = vadd.f32 %v2421, %v2589
        %2591 = vmatmul.bf16.gmra.mxu0 %v999
        %v2592 = vpop.f32.mrf.mxu0
        %v2593 = vadd.f32 %v2424, %v2592
        %v2594 = vpop.f32.mrf.mxu0
        %v2595 = vadd.f32 %v2426, %v2594
        %2596 = vmatmul.bf16.gmra.mxu0 %v1001
        %v2597 = vpop.f32.mrf.mxu0
        %v2598 = vadd.f32 %v2429, %v2597
        %v2599 = vpop.f32.mrf.mxu0
        %v2600 = vadd.f32 %v2431, %v2599
        %2601 = vmatmul.bf16.gmra.mxu0 %v1003
        %v2602 = vpop.f32.mrf.mxu0
        %v2603 = vadd.f32 %v2434, %v2602
        %v2604 = vpop.f32.mrf.mxu0
        %v2605 = vadd.f32 %v2436, %v2604
        %2606 = vmatmul.bf16.gmra.mxu0 %v1005
        %v2607 = vpop.f32.mrf.mxu0
        %v2608 = vadd.f32 %v2439, %v2607
        %v2609 = vpop.f32.mrf.mxu0
        %v2610 = vadd.f32 %v2441, %v2609
        %2611 = vdwg.mxu0
        %2612 = vmatpush.bf16.msra.mxu0 %v1992
        %2613 = vmatpush.bf16.msra.mxu0 %v1991
        %2614 = vmatpush.bf16.msra.mxu0 %v1990
        %2615 = vmatpush.bf16.msra.mxu0 %v1989
        %2616 = vmatpush.bf16.msra.mxu0 %v1988
        %2617 = vmatpush.bf16.msra.mxu0 %v1987
        %2618 = vmatpush.bf16.msra.mxu0 %v1986
        %2619 = vmatpush.bf16.msra.mxu0 %v1985
        %2620 = vmatmul.bf16.gmra.mxu0 %v1055
        %v2621 = vpop.f32.mrf.mxu0
        %v2622 = vadd.f32 %v2453, %v2621
        %v2623 = vpop.f32.mrf.mxu0
        %v2624 = vadd.f32 %v2455, %v2623
        %2625 = vmatmul.bf16.gmra.mxu0 %v949
        %v2626 = vpop.f32.mrf.mxu0
        %v2627 = vadd.f32 %v2458, %v2626
        %v2628 = vpop.f32.mrf.mxu0
        %v2629 = vadd.f32 %v2460, %v2628
        %2630 = vmatmul.bf16.gmra.mxu0 %v951
        %v2631 = vpop.f32.mrf.mxu0
        %v2632 = vadd.f32 %v2463, %v2631
        %v2633 = vpop.f32.mrf.mxu0
        %v2634 = vadd.f32 %v2465, %v2633
        %2635 = vmatmul.bf16.gmra.mxu0 %v953
        %v2636 = vpop.f32.mrf.mxu0
        %v2637 = vadd.f32 %v2468, %v2636
        %v2638 = vpop.f32.mrf.mxu0
        %v2639 = vadd.f32 %v2470, %v2638
        %2640 = vmatmul.bf16.gmra.mxu0 %v955
        %v2641 = vpop.f32.mrf.mxu0
        %v2642 = vadd.f32 %v2473, %v2641
        %v2643 = vpop.f32.mrf.mxu0
        %v2644 = vadd.f32 %v2475, %v2643
        %2645 = vmatmul.bf16.gmra.mxu0 %v957
        %v2646 = vpop.f32.mrf.mxu0
        %v2647 = vadd.f32 %v2478, %v2646
        %v2648 = vpop.f32.mrf.mxu0
        %v2649 = vadd.f32 %v2480, %v2648
        %2650 = vmatmul.bf16.gmra.mxu0 %v959
        %v2651 = vpop.f32.mrf.mxu0
        %v2652 = vadd.f32 %v2483, %v2651
        %v2653 = vpop.f32.mrf.mxu0
        %v2654 = vadd.f32 %v2485, %v2653
        %2655 = vmatmul.bf16.gmra.mxu0 %v961
        %v2656 = vpop.f32.mrf.mxu0
        %v2657 = vadd.f32 %v2488, %v2656
        %v2658 = vpop.f32.mrf.mxu0
        %v2659 = vadd.f32 %v2490, %v2658
        %2660 = vmatmul.bf16.gmra.mxu0 %v963
        %v2661 = vpop.f32.mrf.mxu0
        %v2662 = vadd.f32 %v2493, %v2661
        %v2663 = vpop.f32.mrf.mxu0
        %v2664 = vadd.f32 %v2495, %v2663
        %2665 = vmatmul.bf16.gmra.mxu0 %v965
        %v2666 = vpop.f32.mrf.mxu0
        %v2667 = vadd.f32 %v2498, %v2666
        %v2668 = vpop.f32.mrf.mxu0
        %v2669 = vadd.f32 %v2500, %v2668
        %2670 = vmatmul.bf16.gmra.mxu0 %v967
        %v2671 = vpop.f32.mrf.mxu0
        %v2672 = vadd.f32 %v2503, %v2671
        %v2673 = vpop.f32.mrf.mxu0
        %v2674 = vadd.f32 %v2505, %v2673
        %2675 = vmatmul.bf16.gmra.mxu0 %v969
        %v2676 = vpop.f32.mrf.mxu0
        %v2677 = vadd.f32 %v2508, %v2676
        %v2678 = vpop.f32.mrf.mxu0
        %v2679 = vadd.f32 %v2510, %v2678
        %2680 = vmatmul.bf16.gmra.mxu0 %v971
        %v2681 = vpop.f32.mrf.mxu0
        %v2682 = vadd.f32 %v2513, %v2681
        %v2683 = vpop.f32.mrf.mxu0
        %v2684 = vadd.f32 %v2515, %v2683
        %2685 = vmatmul.bf16.gmra.mxu0 %v973
        %v2686 = vpop.f32.mrf.mxu0
        %v2687 = vadd.f32 %v2518, %v2686
        %v2688 = vpop.f32.mrf.mxu0
        %v2689 = vadd.f32 %v2520, %v2688
        %2690 = vmatmul.bf16.gmra.mxu0 %v975
        %v2691 = vpop.f32.mrf.mxu0
        %v2692 = vadd.f32 %v2523, %v2691
        %v2693 = vpop.f32.mrf.mxu0
        %v2694 = vadd.f32 %v2525, %v2693
        %2695 = vmatmul.bf16.gmra.mxu0 %v977
        %v2696 = vpop.f32.mrf.mxu0
        %v2697 = vadd.f32 %v2528, %v2696
        %v2698 = vpop.f32.mrf.mxu0
        %v2699 = vadd.f32 %v2530, %v2698
        %2700 = vmatmul.bf16.gmra.mxu0 %v979
        %v2701 = vpop.f32.mrf.mxu0
        %v2702 = vadd.f32 %v2533, %v2701
        %v2703 = vpop.f32.mrf.mxu0
        %v2704 = vadd.f32 %v2535, %v2703
        %2705 = vmatmul.bf16.gmra.mxu0 %v981
        %v2706 = vpop.f32.mrf.mxu0
        %v2707 = vadd.f32 %v2538, %v2706
        %v2708 = vpop.f32.mrf.mxu0
        %v2709 = vadd.f32 %v2540, %v2708
        %2710 = vmatmul.bf16.gmra.mxu0 %v983
        %v2711 = vpop.f32.mrf.mxu0
        %v2712 = vadd.f32 %v2543, %v2711
        %v2713 = vpop.f32.mrf.mxu0
        %v2714 = vadd.f32 %v2545, %v2713
        %2715 = vmatmul.bf16.gmra.mxu0 %v985
        %v2716 = vpop.f32.mrf.mxu0
        %v2717 = vadd.f32 %v2548, %v2716
        %v2718 = vpop.f32.mrf.mxu0
        %v2719 = vadd.f32 %v2550, %v2718
        %2720 = vmatmul.bf16.gmra.mxu0 %v987
        %v2721 = vpop.f32.mrf.mxu0
        %v2722 = vadd.f32 %v2553, %v2721
        %v2723 = vpop.f32.mrf.mxu0
        %v2724 = vadd.f32 %v2555, %v2723
        %2725 = vmatmul.bf16.gmra.mxu0 %v989
        %v2726 = vpop.f32.mrf.mxu0
        %v2727 = vadd.f32 %v2558, %v2726
        %v2728 = vpop.f32.mrf.mxu0
        %v2729 = vadd.f32 %v2560, %v2728
        %2730 = vmatmul.bf16.gmra.mxu0 %v991
        %v2731 = vpop.f32.mrf.mxu0
        %v2732 = vadd.f32 %v2563, %v2731
        %v2733 = vpop.f32.mrf.mxu0
        %v2734 = vadd.f32 %v2565, %v2733
        %2735 = vmatmul.bf16.gmra.mxu0 %v993
        %v2736 = vpop.f32.mrf.mxu0
        %v2737 = vadd.f32 %v2568, %v2736
        %v2738 = vpop.f32.mrf.mxu0
        %v2739 = vadd.f32 %v2570, %v2738
        %2740 = vmatmul.bf16.gmra.mxu0 %v995
        %v2741 = vpop.f32.mrf.mxu0
        %v2742 = vadd.f32 %v2573, %v2741
        %v2743 = vpop.f32.mrf.mxu0
        %v2744 = vadd.f32 %v2575, %v2743
        %2745 = vmatmul.bf16.gmra.mxu0 %v997
        %v2746 = vpop.f32.mrf.mxu0
        %v2747 = vadd.f32 %v2578, %v2746
        %v2748 = vpop.f32.mrf.mxu0
        %v2749 = vadd.f32 %v2580, %v2748
        %2750 = vmatmul.bf16.gmra.mxu0 %v999
        %v2751 = vpop.f32.mrf.mxu0
        %v2752 = vadd.f32 %v2583, %v2751
        %v2753 = vpop.f32.mrf.mxu0
        %v2754 = vadd.f32 %v2585, %v2753
        %2755 = vmatmul.bf16.gmra.mxu0 %v1001
        %v2756 = vpop.f32.mrf.mxu0
        %v2757 = vadd.f32 %v2588, %v2756
        %v2758 = vpop.f32.mrf.mxu0
        %v2759 = vadd.f32 %v2590, %v2758
        %2760 = vmatmul.bf16.gmra.mxu0 %v1003
        %v2761 = vpop.f32.mrf.mxu0
        %v2762 = vadd.f32 %v2593, %v2761
        %v2763 = vpop.f32.mrf.mxu0
        %v2764 = vadd.f32 %v2595, %v2763
        %2765 = vmatmul.bf16.gmra.mxu0 %v1057
        %v2766 = vpop.f32.mrf.mxu0
        %v2767 = vadd.f32 %v2598, %v2766
        %v2768 = vpop.f32.mrf.mxu0
        %v2769 = vadd.f32 %v2600, %v2768
        %2770 = vmatmul.bf16.gmra.mxu0 %v1059
        %v2771 = vpop.f32.mrf.mxu0
        %v2772 = vadd.f32 %v2603, %v2771
        %v2773 = vpop.f32.mrf.mxu0
        %v2774 = vadd.f32 %v2605, %v2773
        %2775 = vmatmul.bf16.gmra.mxu0 %v1061
        %v2776 = vpop.f32.mrf.mxu0
        %v2777 = vadd.f32 %v2608, %v2776
        %v2778 = vpop.f32.mrf.mxu0
        %v2779 = vadd.f32 %v2610, %v2778
        %2780 = vdwg.mxu0
        %2781 = vmatpush.bf16.msra.mxu0 %v2000
        %2782 = vmatpush.bf16.msra.mxu0 %v1999
        %2783 = vmatpush.bf16.msra.mxu0 %v1998
        %2784 = vmatpush.bf16.msra.mxu0 %v1997
        %2785 = vmatpush.bf16.msra.mxu0 %v1996
        %2786 = vmatpush.bf16.msra.mxu0 %v1995
        %2787 = vmatpush.bf16.msra.mxu0 %v1994
        %2788 = vmatpush.bf16.msra.mxu0 %v1993
        %2789 = vmatmul.bf16.gmra.mxu0 %v1081
        %v2790 = vpop.f32.mrf.mxu0
        %v2791 = vadd.f32 %v2622, %v2790
        %v2792 = vpop.f32.mrf.mxu0
        %v2793 = vadd.f32 %v2624, %v2792
        %2794 = vmatmul.bf16.gmra.mxu0 %v1085
        %v2795 = vpop.f32.mrf.mxu0
        %v2796 = vadd.f32 %v2627, %v2795
        %v2797 = vpop.f32.mrf.mxu0
        %v2798 = vadd.f32 %v2629, %v2797
        %2799 = vmatmul.bf16.gmra.mxu0 %v1089
        %v2800 = vpop.f32.mrf.mxu0
        %v2801 = vadd.f32 %v2632, %v2800
        %v2802 = vpop.f32.mrf.mxu0
        %v2803 = vadd.f32 %v2634, %v2802
        %2804 = vmatmul.bf16.gmra.mxu0 %v1093
        %v2805 = vpop.f32.mrf.mxu0
        %v2806 = vadd.f32 %v2637, %v2805
        %v2807 = vpop.f32.mrf.mxu0
        %v2808 = vadd.f32 %v2639, %v2807
        %2809 = vmatmul.bf16.gmra.mxu0 %v1097
        %v2810 = vpop.f32.mrf.mxu0
        %v2811 = vadd.f32 %v2642, %v2810
        %v2812 = vpop.f32.mrf.mxu0
        %v2813 = vadd.f32 %v2644, %v2812
        %2814 = vmatmul.bf16.gmra.mxu0 %v1101
        %v2815 = vpop.f32.mrf.mxu0
        %v2816 = vadd.f32 %v2647, %v2815
        %v2817 = vpop.f32.mrf.mxu0
        %v2818 = vadd.f32 %v2649, %v2817
        %2819 = vmatmul.bf16.gmra.mxu0 %v1105
        %v2820 = vpop.f32.mrf.mxu0
        %v2821 = vadd.f32 %v2652, %v2820
        %v2822 = vpop.f32.mrf.mxu0
        %v2823 = vadd.f32 %v2654, %v2822
        %2824 = vmatmul.bf16.gmra.mxu0 %v1109
        %v2825 = vpop.f32.mrf.mxu0
        %v2826 = vadd.f32 %v2657, %v2825
        %v2827 = vpop.f32.mrf.mxu0
        %v2828 = vadd.f32 %v2659, %v2827
        %2829 = vmatmul.bf16.gmra.mxu0 %v1113
        %v2830 = vpop.f32.mrf.mxu0
        %v2831 = vadd.f32 %v2662, %v2830
        %v2832 = vpop.f32.mrf.mxu0
        %v2833 = vadd.f32 %v2664, %v2832
        %2834 = vmatmul.bf16.gmra.mxu0 %v1117
        %v2835 = vpop.f32.mrf.mxu0
        %v2836 = vadd.f32 %v2667, %v2835
        %v2837 = vpop.f32.mrf.mxu0
        %v2838 = vadd.f32 %v2669, %v2837
        %2839 = vmatmul.bf16.gmra.mxu0 %v1121
        %v2840 = vpop.f32.mrf.mxu0
        %v2841 = vadd.f32 %v2672, %v2840
        %v2842 = vpop.f32.mrf.mxu0
        %v2843 = vadd.f32 %v2674, %v2842
        %2844 = vmatmul.bf16.gmra.mxu0 %v1125
        %v2845 = vpop.f32.mrf.mxu0
        %v2846 = vadd.f32 %v2677, %v2845
        %v2847 = vpop.f32.mrf.mxu0
        %v2848 = vadd.f32 %v2679, %v2847
        %2849 = vmatmul.bf16.gmra.mxu0 %v1129
        %v2850 = vpop.f32.mrf.mxu0
        %v2851 = vadd.f32 %v2682, %v2850
        %v2852 = vpop.f32.mrf.mxu0
        %v2853 = vadd.f32 %v2684, %v2852
        %2854 = vmatmul.bf16.gmra.mxu0 %v1133
        %v2855 = vpop.f32.mrf.mxu0
        %v2856 = vadd.f32 %v2687, %v2855
        %v2857 = vpop.f32.mrf.mxu0
        %v2858 = vadd.f32 %v2689, %v2857
        %2859 = vmatmul.bf16.gmra.mxu0 %v1137
        %v2860 = vpop.f32.mrf.mxu0
        %v2861 = vadd.f32 %v2692, %v2860
        %v2862 = vpop.f32.mrf.mxu0
        %v2863 = vadd.f32 %v2694, %v2862
        %2864 = vmatmul.bf16.gmra.mxu0 %v1141
        %v2865 = vpop.f32.mrf.mxu0
        %v2866 = vadd.f32 %v2697, %v2865
        %v2867 = vpop.f32.mrf.mxu0
        %v2868 = vadd.f32 %v2699, %v2867
        %2869 = vmatmul.bf16.gmra.mxu0 %v1145
        %v2870 = vpop.f32.mrf.mxu0
        %v2871 = vadd.f32 %v2702, %v2870
        %v2872 = vpop.f32.mrf.mxu0
        %v2873 = vadd.f32 %v2704, %v2872
        %2874 = vmatmul.bf16.gmra.mxu0 %v1149
        %v2875 = vpop.f32.mrf.mxu0
        %v2876 = vadd.f32 %v2707, %v2875
        %v2877 = vpop.f32.mrf.mxu0
        %v2878 = vadd.f32 %v2709, %v2877
        %2879 = vmatmul.bf16.gmra.mxu0 %v1153
        %v2880 = vpop.f32.mrf.mxu0
        %v2881 = vadd.f32 %v2712, %v2880
        %v2882 = vpop.f32.mrf.mxu0
        %v2883 = vadd.f32 %v2714, %v2882
        %2884 = vmatmul.bf16.gmra.mxu0 %v1157
        %v2885 = vpop.f32.mrf.mxu0
        %v2886 = vadd.f32 %v2717, %v2885
        %v2887 = vpop.f32.mrf.mxu0
        %v2888 = vadd.f32 %v2719, %v2887
        %2889 = vmatmul.bf16.gmra.mxu0 %v1161
        %v2890 = vpop.f32.mrf.mxu0
        %v2891 = vadd.f32 %v2722, %v2890
        %v2892 = vpop.f32.mrf.mxu0
        %v2893 = vadd.f32 %v2724, %v2892
        %2894 = vmatmul.bf16.gmra.mxu0 %v1165
        %v2895 = vpop.f32.mrf.mxu0
        %v2896 = vadd.f32 %v2727, %v2895
        %v2897 = vpop.f32.mrf.mxu0
        %v2898 = vadd.f32 %v2729, %v2897
        %2899 = vmatmul.bf16.gmra.mxu0 %v1169
        %v2900 = vpop.f32.mrf.mxu0
        %v2901 = vadd.f32 %v2732, %v2900
        %v2902 = vpop.f32.mrf.mxu0
        %v2903 = vadd.f32 %v2734, %v2902
        %2904 = vmatmul.bf16.gmra.mxu0 %v1173
        %v2905 = vpop.f32.mrf.mxu0
        %v2906 = vadd.f32 %v2737, %v2905
        %v2907 = vpop.f32.mrf.mxu0
        %v2908 = vadd.f32 %v2739, %v2907
        %2909 = vmatmul.bf16.gmra.mxu0 %v1177
        %v2910 = vpop.f32.mrf.mxu0
        %v2911 = vadd.f32 %v2742, %v2910
        %v2912 = vpop.f32.mrf.mxu0
        %v2913 = vadd.f32 %v2744, %v2912
        %2914 = vmatmul.bf16.gmra.mxu0 %v1181
        %v2915 = vpop.f32.mrf.mxu0
        %v2916 = vadd.f32 %v2747, %v2915
        %v2917 = vpop.f32.mrf.mxu0
        %v2918 = vadd.f32 %v2749, %v2917
        %2919 = vmatmul.bf16.gmra.mxu0 %v1185
        %v2920 = vpop.f32.mrf.mxu0
        %v2921 = vadd.f32 %v2752, %v2920
        %v2922 = vpop.f32.mrf.mxu0
        %v2923 = vadd.f32 %v2754, %v2922
        %2924 = vmatmul.bf16.gmra.mxu0 %v1189
        %v2925 = vpop.f32.mrf.mxu0
        %v2926 = vadd.f32 %v2757, %v2925
        %v2927 = vpop.f32.mrf.mxu0
        %v2928 = vadd.f32 %v2759, %v2927
        %2929 = vmatmul.bf16.gmra.mxu0 %v1193
        %v2930 = vpop.f32.mrf.mxu0
        %v2931 = vadd.f32 %v2762, %v2930
        %v2932 = vpop.f32.mrf.mxu0
        %v2933 = vadd.f32 %v2764, %v2932
        %2934 = vmatmul.bf16.gmra.mxu0 %v1202
        %v2935 = vpop.f32.mrf.mxu0
        %v2936 = vadd.f32 %v2767, %v2935
        %v2937 = vpop.f32.mrf.mxu0
        %v2938 = vadd.f32 %v2769, %v2937
        %2939 = vmatmul.bf16.gmra.mxu0 %v1211
        %v2940 = vpop.f32.mrf.mxu0
        %v2941 = vadd.f32 %v2772, %v2940
        %v2942 = vpop.f32.mrf.mxu0
        %v2943 = vadd.f32 %v2774, %v2942
        %2944 = vmatmul.bf16.gmra.mxu0 %v1220
        %v2945 = vpop.f32.mrf.mxu0
        %v2946 = vadd.f32 %v2777, %v2945
        %v2947 = vpop.f32.mrf.mxu0
        %v2948 = vadd.f32 %v2779, %v2947
        %2949 = vdwg.mxu0
        %2950 = vmatpush.bf16.msra.mxu0 %v2008
        %2951 = vmatpush.bf16.msra.mxu0 %v2007
        %2952 = vmatpush.bf16.msra.mxu0 %v2006
        %2953 = vmatpush.bf16.msra.mxu0 %v2005
        %2954 = vmatpush.bf16.msra.mxu0 %v2004
        %2955 = vmatpush.bf16.msra.mxu0 %v2003
        %2956 = vmatpush.bf16.msra.mxu0 %v2002
        %2957 = vmatpush.bf16.msra.mxu0 %v2001
        %2958 = vmatmul.bf16.gmra.mxu0 %v1259
        %v2959 = vpop.f32.mrf.mxu0
        %v2960 = vadd.f32 %v2791, %v2959
        %v2961 = vpop.f32.mrf.mxu0
        %v2962 = vadd.f32 %v2793, %v2961
        %2963 = vmatmul.bf16.gmra.mxu0 %v1261
        %v2964 = vpop.f32.mrf.mxu0
        %v2965 = vadd.f32 %v2796, %v2964
        %v2966 = vpop.f32.mrf.mxu0
        %v2967 = vadd.f32 %v2798, %v2966
        %2968 = vmatmul.bf16.gmra.mxu0 %v1263
        %v2969 = vpop.f32.mrf.mxu0
        %v2970 = vadd.f32 %v2801, %v2969
        %v2971 = vpop.f32.mrf.mxu0
        %v2972 = vadd.f32 %v2803, %v2971
        %2973 = vmatmul.bf16.gmra.mxu0 %v1265
        %v2974 = vpop.f32.mrf.mxu0
        %v2975 = vadd.f32 %v2806, %v2974
        %v2976 = vpop.f32.mrf.mxu0
        %v2977 = vadd.f32 %v2808, %v2976
        %2978 = vmatmul.bf16.gmra.mxu0 %v1267
        %v2979 = vpop.f32.mrf.mxu0
        %v2980 = vadd.f32 %v2811, %v2979
        %v2981 = vpop.f32.mrf.mxu0
        %v2982 = vadd.f32 %v2813, %v2981
        %2983 = vmatmul.bf16.gmra.mxu0 %v1269
        %v2984 = vpop.f32.mrf.mxu0
        %v2985 = vadd.f32 %v2816, %v2984
        %v2986 = vpop.f32.mrf.mxu0
        %v2987 = vadd.f32 %v2818, %v2986
        %2988 = vmatmul.bf16.gmra.mxu0 %v1271
        %v2989 = vpop.f32.mrf.mxu0
        %v2990 = vadd.f32 %v2821, %v2989
        %v2991 = vpop.f32.mrf.mxu0
        %v2992 = vadd.f32 %v2823, %v2991
        %2993 = vmatmul.bf16.gmra.mxu0 %v1273
        %v2994 = vpop.f32.mrf.mxu0
        %v2995 = vadd.f32 %v2826, %v2994
        %v2996 = vpop.f32.mrf.mxu0
        %v2997 = vadd.f32 %v2828, %v2996
        %2998 = vmatmul.bf16.gmra.mxu0 %v1275
        %v2999 = vpop.f32.mrf.mxu0
        %v3000 = vadd.f32 %v2831, %v2999
        %v3001 = vpop.f32.mrf.mxu0
        %v3002 = vadd.f32 %v2833, %v3001
        %3003 = vmatmul.bf16.gmra.mxu0 %v1277
        %v3004 = vpop.f32.mrf.mxu0
        %v3005 = vadd.f32 %v2836, %v3004
        %v3006 = vpop.f32.mrf.mxu0
        %v3007 = vadd.f32 %v2838, %v3006
        %3008 = vmatmul.bf16.gmra.mxu0 %v1279
        %v3009 = vpop.f32.mrf.mxu0
        %v3010 = vadd.f32 %v2841, %v3009
        %v3011 = vpop.f32.mrf.mxu0
        %v3012 = vadd.f32 %v2843, %v3011
        %3013 = vmatmul.bf16.gmra.mxu0 %v1281
        %v3014 = vpop.f32.mrf.mxu0
        %v3015 = vadd.f32 %v2846, %v3014
        %v3016 = vpop.f32.mrf.mxu0
        %v3017 = vadd.f32 %v2848, %v3016
        %3018 = vmatmul.bf16.gmra.mxu0 %v1283
        %v3019 = vpop.f32.mrf.mxu0
        %v3020 = vadd.f32 %v2851, %v3019
        %v3021 = vpop.f32.mrf.mxu0
        %v3022 = vadd.f32 %v2853, %v3021
        %3023 = vmatmul.bf16.gmra.mxu0 %v1285
        %v3024 = vpop.f32.mrf.mxu0
        %v3025 = vadd.f32 %v2856, %v3024
        %v3026 = vpop.f32.mrf.mxu0
        %v3027 = vadd.f32 %v2858, %v3026
        %3028 = vmatmul.bf16.gmra.mxu0 %v1287
        %v3029 = vpop.f32.mrf.mxu0
        %v3030 = vadd.f32 %v2861, %v3029
        %v3031 = vpop.f32.mrf.mxu0
        %v3032 = vadd.f32 %v2863, %v3031
        %3033 = vmatmul.bf16.gmra.mxu0 %v1289
        %v3034 = vpop.f32.mrf.mxu0
        %v3035 = vadd.f32 %v2866, %v3034
        %v3036 = vpop.f32.mrf.mxu0
        %v3037 = vadd.f32 %v2868, %v3036
        %3038 = vmatmul.bf16.gmra.mxu0 %v1291
        %v3039 = vpop.f32.mrf.mxu0
        %v3040 = vadd.f32 %v2871, %v3039
        %v3041 = vpop.f32.mrf.mxu0
        %v3042 = vadd.f32 %v2873, %v3041
        %3043 = vmatmul.bf16.gmra.mxu0 %v1293
        %v3044 = vpop.f32.mrf.mxu0
        %v3045 = vadd.f32 %v2876, %v3044
        %v3046 = vpop.f32.mrf.mxu0
        %v3047 = vadd.f32 %v2878, %v3046
        %3048 = vmatmul.bf16.gmra.mxu0 %v1295
        %v3049 = vpop.f32.mrf.mxu0
        %v3050 = vadd.f32 %v2881, %v3049
        %v3051 = vpop.f32.mrf.mxu0
        %v3052 = vadd.f32 %v2883, %v3051
        %3053 = vmatmul.bf16.gmra.mxu0 %v1297
        %v3054 = vpop.f32.mrf.mxu0
        %v3055 = vadd.f32 %v2886, %v3054
        %v3056 = vpop.f32.mrf.mxu0
        %v3057 = vadd.f32 %v2888, %v3056
        %3058 = vmatmul.bf16.gmra.mxu0 %v1299
        %v3059 = vpop.f32.mrf.mxu0
        %v3060 = vadd.f32 %v2891, %v3059
        %v3061 = vpop.f32.mrf.mxu0
        %v3062 = vadd.f32 %v2893, %v3061
        %3063 = vmatmul.bf16.gmra.mxu0 %v1301
        %v3064 = vpop.f32.mrf.mxu0
        %v3065 = vadd.f32 %v2896, %v3064
        %v3066 = vpop.f32.mrf.mxu0
        %v3067 = vadd.f32 %v2898, %v3066
        %3068 = vmatmul.bf16.gmra.mxu0 %v1303
        %v3069 = vpop.f32.mrf.mxu0
        %v3070 = vadd.f32 %v2901, %v3069
        %v3071 = vpop.f32.mrf.mxu0
        %v3072 = vadd.f32 %v2903, %v3071
        %3073 = vmatmul.bf16.gmra.mxu0 %v1305
        %v3074 = vpop.f32.mrf.mxu0
        %v3075 = vadd.f32 %v2906, %v3074
        %v3076 = vpop.f32.mrf.mxu0
        %v3077 = vadd.f32 %v2908, %v3076
        %3078 = vmatmul.bf16.gmra.mxu0 %v1307
        %v3079 = vpop.f32.mrf.mxu0
        %v3080 = vadd.f32 %v2911, %v3079
        %v3081 = vpop.f32.mrf.mxu0
        %v3082 = vadd.f32 %v2913, %v3081
        %3083 = vmatmul.bf16.gmra.mxu0 %v1309
        %v3084 = vpop.f32.mrf.mxu0
        %v3085 = vadd.f32 %v2916, %v3084
        %v3086 = vpop.f32.mrf.mxu0
        %v3087 = vadd.f32 %v2918, %v3086
        %3088 = vmatmul.bf16.gmra.mxu0 %v1311
        %v3089 = vpop.f32.mrf.mxu0
        %v3090 = vadd.f32 %v2921, %v3089
        %v3091 = vpop.f32.mrf.mxu0
        %v3092 = vadd.f32 %v2923, %v3091
        %3093 = vmatmul.bf16.gmra.mxu0 %v1313
        %v3094 = vpop.f32.mrf.mxu0
        %v3095 = vadd.f32 %v2926, %v3094
        %v3096 = vpop.f32.mrf.mxu0
        %v3097 = vadd.f32 %v2928, %v3096
        %3098 = vmatmul.bf16.gmra.mxu0 %v1315
        %v3099 = vpop.f32.mrf.mxu0
        %v3100 = vadd.f32 %v2931, %v3099
        %v3101 = vpop.f32.mrf.mxu0
        %v3102 = vadd.f32 %v2933, %v3101
        %3103 = vmatmul.bf16.gmra.mxu0 %v1317
        %v3104 = vpop.f32.mrf.mxu0
        %v3105 = vadd.f32 %v2936, %v3104
        %v3106 = vpop.f32.mrf.mxu0
        %v3107 = vadd.f32 %v2938, %v3106
        %3108 = vmatmul.bf16.gmra.mxu0 %v1319
        %v3109 = vpop.f32.mrf.mxu0
        %v3110 = vadd.f32 %v2941, %v3109
        %v3111 = vpop.f32.mrf.mxu0
        %v3112 = vadd.f32 %v2943, %v3111
        %3113 = vmatmul.bf16.gmra.mxu0 %v1321
        %v3114 = vpop.f32.mrf.mxu0
        %v3115 = vadd.f32 %v2946, %v3114
        %v3116 = vpop.f32.mrf.mxu0
        %v3117 = vadd.f32 %v2948, %v3116
        %3118 = vdwg.mxu0
        %3119 = vmatpush.bf16.msra.mxu0 %v2016
        %3120 = vmatpush.bf16.msra.mxu0 %v2015
        %3121 = vmatpush.bf16.msra.mxu0 %v2014
        %3122 = vmatpush.bf16.msra.mxu0 %v2013
        %3123 = vmatpush.bf16.msra.mxu0 %v2012
        %3124 = vmatpush.bf16.msra.mxu0 %v2011
        %3125 = vmatpush.bf16.msra.mxu0 %v2010
        %3126 = vmatpush.bf16.msra.mxu0 %v2009
        %3127 = vmatmul.bf16.gmra.mxu0 %v1371
        %v3128 = vpop.f32.mrf.mxu0
        %v3129 = vadd.f32 %v2960, %v3128
        %v3130 = vpop.f32.mrf.mxu0
        %v3131 = vadd.f32 %v2962, %v3130
        %3132 = vmatmul.bf16.gmra.mxu0 %v1265
        %v3133 = vpop.f32.mrf.mxu0
        %v3134 = vadd.f32 %v2965, %v3133
        %v3135 = vpop.f32.mrf.mxu0
        %v3136 = vadd.f32 %v2967, %v3135
        %3137 = vmatmul.bf16.gmra.mxu0 %v1267
        %v3138 = vpop.f32.mrf.mxu0
        %v3139 = vadd.f32 %v2970, %v3138
        %v3140 = vpop.f32.mrf.mxu0
        %v3141 = vadd.f32 %v2972, %v3140
        %3142 = vmatmul.bf16.gmra.mxu0 %v1269
        %v3143 = vpop.f32.mrf.mxu0
        %v3144 = vadd.f32 %v2975, %v3143
        %v3145 = vpop.f32.mrf.mxu0
        %v3146 = vadd.f32 %v2977, %v3145
        %3147 = vmatmul.bf16.gmra.mxu0 %v1271
        %v3148 = vpop.f32.mrf.mxu0
        %v3149 = vadd.f32 %v2980, %v3148
        %v3150 = vpop.f32.mrf.mxu0
        %v3151 = vadd.f32 %v2982, %v3150
        %3152 = vmatmul.bf16.gmra.mxu0 %v1273
        %v3153 = vpop.f32.mrf.mxu0
        %v3154 = vadd.f32 %v2985, %v3153
        %v3155 = vpop.f32.mrf.mxu0
        %v3156 = vadd.f32 %v2987, %v3155
        %3157 = vmatmul.bf16.gmra.mxu0 %v1275
        %v3158 = vpop.f32.mrf.mxu0
        %v3159 = vadd.f32 %v2990, %v3158
        %v3160 = vpop.f32.mrf.mxu0
        %v3161 = vadd.f32 %v2992, %v3160
        %3162 = vmatmul.bf16.gmra.mxu0 %v1277
        %v3163 = vpop.f32.mrf.mxu0
        %v3164 = vadd.f32 %v2995, %v3163
        %v3165 = vpop.f32.mrf.mxu0
        %v3166 = vadd.f32 %v2997, %v3165
        %3167 = vmatmul.bf16.gmra.mxu0 %v1279
        %v3168 = vpop.f32.mrf.mxu0
        %v3169 = vadd.f32 %v3000, %v3168
        %v3170 = vpop.f32.mrf.mxu0
        %v3171 = vadd.f32 %v3002, %v3170
        %3172 = vmatmul.bf16.gmra.mxu0 %v1281
        %v3173 = vpop.f32.mrf.mxu0
        %v3174 = vadd.f32 %v3005, %v3173
        %v3175 = vpop.f32.mrf.mxu0
        %v3176 = vadd.f32 %v3007, %v3175
        %3177 = vmatmul.bf16.gmra.mxu0 %v1283
        %v3178 = vpop.f32.mrf.mxu0
        %v3179 = vadd.f32 %v3010, %v3178
        %v3180 = vpop.f32.mrf.mxu0
        %v3181 = vadd.f32 %v3012, %v3180
        %3182 = vmatmul.bf16.gmra.mxu0 %v1285
        %v3183 = vpop.f32.mrf.mxu0
        %v3184 = vadd.f32 %v3015, %v3183
        %v3185 = vpop.f32.mrf.mxu0
        %v3186 = vadd.f32 %v3017, %v3185
        %3187 = vmatmul.bf16.gmra.mxu0 %v1287
        %v3188 = vpop.f32.mrf.mxu0
        %v3189 = vadd.f32 %v3020, %v3188
        %v3190 = vpop.f32.mrf.mxu0
        %v3191 = vadd.f32 %v3022, %v3190
        %3192 = vmatmul.bf16.gmra.mxu0 %v1289
        %v3193 = vpop.f32.mrf.mxu0
        %v3194 = vadd.f32 %v3025, %v3193
        %v3195 = vpop.f32.mrf.mxu0
        %v3196 = vadd.f32 %v3027, %v3195
        %3197 = vmatmul.bf16.gmra.mxu0 %v1291
        %v3198 = vpop.f32.mrf.mxu0
        %v3199 = vadd.f32 %v3030, %v3198
        %v3200 = vpop.f32.mrf.mxu0
        %v3201 = vadd.f32 %v3032, %v3200
        %3202 = vmatmul.bf16.gmra.mxu0 %v1293
        %v3203 = vpop.f32.mrf.mxu0
        %v3204 = vadd.f32 %v3035, %v3203
        %v3205 = vpop.f32.mrf.mxu0
        %v3206 = vadd.f32 %v3037, %v3205
        %3207 = vmatmul.bf16.gmra.mxu0 %v1295
        %v3208 = vpop.f32.mrf.mxu0
        %v3209 = vadd.f32 %v3040, %v3208
        %v3210 = vpop.f32.mrf.mxu0
        %v3211 = vadd.f32 %v3042, %v3210
        %3212 = vmatmul.bf16.gmra.mxu0 %v1297
        %v3213 = vpop.f32.mrf.mxu0
        %v3214 = vadd.f32 %v3045, %v3213
        %v3215 = vpop.f32.mrf.mxu0
        %v3216 = vadd.f32 %v3047, %v3215
        %3217 = vmatmul.bf16.gmra.mxu0 %v1299
        %v3218 = vpop.f32.mrf.mxu0
        %v3219 = vadd.f32 %v3050, %v3218
        %v3220 = vpop.f32.mrf.mxu0
        %v3221 = vadd.f32 %v3052, %v3220
        %3222 = vmatmul.bf16.gmra.mxu0 %v1301
        %v3223 = vpop.f32.mrf.mxu0
        %v3224 = vadd.f32 %v3055, %v3223
        %v3225 = vpop.f32.mrf.mxu0
        %v3226 = vadd.f32 %v3057, %v3225
        %3227 = vmatmul.bf16.gmra.mxu0 %v1303
        %v3228 = vpop.f32.mrf.mxu0
        %v3229 = vadd.f32 %v3060, %v3228
        %v3230 = vpop.f32.mrf.mxu0
        %v3231 = vadd.f32 %v3062, %v3230
        %3232 = vmatmul.bf16.gmra.mxu0 %v1305
        %v3233 = vpop.f32.mrf.mxu0
        %v3234 = vadd.f32 %v3065, %v3233
        %v3235 = vpop.f32.mrf.mxu0
        %v3236 = vadd.f32 %v3067, %v3235
        %3237 = vmatmul.bf16.gmra.mxu0 %v1307
        %v3238 = vpop.f32.mrf.mxu0
        %v3239 = vadd.f32 %v3070, %v3238
        %v3240 = vpop.f32.mrf.mxu0
        %v3241 = vadd.f32 %v3072, %v3240
        %3242 = vmatmul.bf16.gmra.mxu0 %v1309
        %v3243 = vpop.f32.mrf.mxu0
        %v3244 = vadd.f32 %v3075, %v3243
        %v3245 = vpop.f32.mrf.mxu0
        %v3246 = vadd.f32 %v3077, %v3245
        %3247 = vmatmul.bf16.gmra.mxu0 %v1311
        %v3248 = vpop.f32.mrf.mxu0
        %v3249 = vadd.f32 %v3080, %v3248
        %v3250 = vpop.f32.mrf.mxu0
        %v3251 = vadd.f32 %v3082, %v3250
        %3252 = vmatmul.bf16.gmra.mxu0 %v1313
        %v3253 = vpop.f32.mrf.mxu0
        %v3254 = vadd.f32 %v3085, %v3253
        %v3255 = vpop.f32.mrf.mxu0
        %v3256 = vadd.f32 %v3087, %v3255
        %3257 = vmatmul.bf16.gmra.mxu0 %v1315
        %v3258 = vpop.f32.mrf.mxu0
        %v3259 = vadd.f32 %v3090, %v3258
        %v3260 = vpop.f32.mrf.mxu0
        %v3261 = vadd.f32 %v3092, %v3260
        %3262 = vmatmul.bf16.gmra.mxu0 %v1317
        %v3263 = vpop.f32.mrf.mxu0
        %v3264 = vadd.f32 %v3095, %v3263
        %v3265 = vpop.f32.mrf.mxu0
        %v3266 = vadd.f32 %v3097, %v3265
        %3267 = vmatmul.bf16.gmra.mxu0 %v1319
        %v3268 = vpop.f32.mrf.mxu0
        %v3269 = vadd.f32 %v3100, %v3268
        %v3270 = vpop.f32.mrf.mxu0
        %v3271 = vadd.f32 %v3102, %v3270
        %3272 = vmatmul.bf16.gmra.mxu0 %v1373
        %v3273 = vpop.f32.mrf.mxu0
        %v3274 = vadd.f32 %v3105, %v3273
        %v3275 = vpop.f32.mrf.mxu0
        %v3276 = vadd.f32 %v3107, %v3275
        %3277 = vmatmul.bf16.gmra.mxu0 %v1375
        %v3278 = vpop.f32.mrf.mxu0
        %v3279 = vadd.f32 %v3110, %v3278
        %v3280 = vpop.f32.mrf.mxu0
        %v3281 = vadd.f32 %v3112, %v3280
        %3282 = vmatmul.bf16.gmra.mxu0 %v1377
        %v3283 = vpop.f32.mrf.mxu0
        %v3284 = vadd.f32 %v3115, %v3283
        %v3285 = vpop.f32.mrf.mxu0
        %v3286 = vadd.f32 %v3117, %v3285
        %3287 = vdwg.mxu0
        %3288 = vmatpush.bf16.msra.mxu0 %v2024
        %3289 = vmatpush.bf16.msra.mxu0 %v2023
        %3290 = vmatpush.bf16.msra.mxu0 %v2022
        %3291 = vmatpush.bf16.msra.mxu0 %v2021
        %3292 = vmatpush.bf16.msra.mxu0 %v2020
        %3293 = vmatpush.bf16.msra.mxu0 %v2019
        %3294 = vmatpush.bf16.msra.mxu0 %v2018
        %3295 = vmatpush.bf16.msra.mxu0 %v2017
        %3296 = vmatmul.bf16.gmra.mxu0 %v1397
        %v3297 = vpop.f32.mrf.mxu0
        %v3298 = vadd.f32 %v3129, %v3297
        %v3299 = vpop.f32.mrf.mxu0
        %v3300 = vadd.f32 %v3131, %v3299
        %3301 = vmatmul.bf16.gmra.mxu0 %v1401
        %v3302 = vpop.f32.mrf.mxu0
        %v3303 = vadd.f32 %v3134, %v3302
        %v3304 = vpop.f32.mrf.mxu0
        %v3305 = vadd.f32 %v3136, %v3304
        %3306 = vmatmul.bf16.gmra.mxu0 %v1405
        %v3307 = vpop.f32.mrf.mxu0
        %v3308 = vadd.f32 %v3139, %v3307
        %v3309 = vpop.f32.mrf.mxu0
        %v3310 = vadd.f32 %v3141, %v3309
        %3311 = vmatmul.bf16.gmra.mxu0 %v1409
        %v3312 = vpop.f32.mrf.mxu0
        %v3313 = vadd.f32 %v3144, %v3312
        %v3314 = vpop.f32.mrf.mxu0
        %v3315 = vadd.f32 %v3146, %v3314
        %3316 = vmatmul.bf16.gmra.mxu0 %v1413
        %v3317 = vpop.f32.mrf.mxu0
        %v3318 = vadd.f32 %v3149, %v3317
        %v3319 = vpop.f32.mrf.mxu0
        %v3320 = vadd.f32 %v3151, %v3319
        %3321 = vmatmul.bf16.gmra.mxu0 %v1417
        %v3322 = vpop.f32.mrf.mxu0
        %v3323 = vadd.f32 %v3154, %v3322
        %v3324 = vpop.f32.mrf.mxu0
        %v3325 = vadd.f32 %v3156, %v3324
        %3326 = vmatmul.bf16.gmra.mxu0 %v1421
        %v3327 = vpop.f32.mrf.mxu0
        %v3328 = vadd.f32 %v3159, %v3327
        %v3329 = vpop.f32.mrf.mxu0
        %v3330 = vadd.f32 %v3161, %v3329
        %3331 = vmatmul.bf16.gmra.mxu0 %v1425
        %v3332 = vpop.f32.mrf.mxu0
        %v3333 = vadd.f32 %v3164, %v3332
        %v3334 = vpop.f32.mrf.mxu0
        %v3335 = vadd.f32 %v3166, %v3334
        %3336 = vmatmul.bf16.gmra.mxu0 %v1429
        %v3337 = vpop.f32.mrf.mxu0
        %v3338 = vadd.f32 %v3169, %v3337
        %v3339 = vpop.f32.mrf.mxu0
        %v3340 = vadd.f32 %v3171, %v3339
        %3341 = vmatmul.bf16.gmra.mxu0 %v1433
        %v3342 = vpop.f32.mrf.mxu0
        %v3343 = vadd.f32 %v3174, %v3342
        %v3344 = vpop.f32.mrf.mxu0
        %v3345 = vadd.f32 %v3176, %v3344
        %3346 = vmatmul.bf16.gmra.mxu0 %v1437
        %v3347 = vpop.f32.mrf.mxu0
        %v3348 = vadd.f32 %v3179, %v3347
        %v3349 = vpop.f32.mrf.mxu0
        %v3350 = vadd.f32 %v3181, %v3349
        %3351 = vmatmul.bf16.gmra.mxu0 %v1441
        %v3352 = vpop.f32.mrf.mxu0
        %v3353 = vadd.f32 %v3184, %v3352
        %v3354 = vpop.f32.mrf.mxu0
        %v3355 = vadd.f32 %v3186, %v3354
        %3356 = vmatmul.bf16.gmra.mxu0 %v1445
        %v3357 = vpop.f32.mrf.mxu0
        %v3358 = vadd.f32 %v3189, %v3357
        %v3359 = vpop.f32.mrf.mxu0
        %v3360 = vadd.f32 %v3191, %v3359
        %3361 = vmatmul.bf16.gmra.mxu0 %v1449
        %v3362 = vpop.f32.mrf.mxu0
        %v3363 = vadd.f32 %v3194, %v3362
        %v3364 = vpop.f32.mrf.mxu0
        %v3365 = vadd.f32 %v3196, %v3364
        %3366 = vmatmul.bf16.gmra.mxu0 %v1453
        %v3367 = vpop.f32.mrf.mxu0
        %v3368 = vadd.f32 %v3199, %v3367
        %v3369 = vpop.f32.mrf.mxu0
        %v3370 = vadd.f32 %v3201, %v3369
        %3371 = vmatmul.bf16.gmra.mxu0 %v1457
        %v3372 = vpop.f32.mrf.mxu0
        %v3373 = vadd.f32 %v3204, %v3372
        %v3374 = vpop.f32.mrf.mxu0
        %v3375 = vadd.f32 %v3206, %v3374
        %3376 = vmatmul.bf16.gmra.mxu0 %v1461
        %v3377 = vpop.f32.mrf.mxu0
        %v3378 = vadd.f32 %v3209, %v3377
        %v3379 = vpop.f32.mrf.mxu0
        %v3380 = vadd.f32 %v3211, %v3379
        %3381 = vmatmul.bf16.gmra.mxu0 %v1465
        %v3382 = vpop.f32.mrf.mxu0
        %v3383 = vadd.f32 %v3214, %v3382
        %v3384 = vpop.f32.mrf.mxu0
        %v3385 = vadd.f32 %v3216, %v3384
        %3386 = vmatmul.bf16.gmra.mxu0 %v1469
        %v3387 = vpop.f32.mrf.mxu0
        %v3388 = vadd.f32 %v3219, %v3387
        %v3389 = vpop.f32.mrf.mxu0
        %v3390 = vadd.f32 %v3221, %v3389
        %3391 = vmatmul.bf16.gmra.mxu0 %v1473
        %v3392 = vpop.f32.mrf.mxu0
        %v3393 = vadd.f32 %v3224, %v3392
        %v3394 = vpop.f32.mrf.mxu0
        %v3395 = vadd.f32 %v3226, %v3394
        %3396 = vmatmul.bf16.gmra.mxu0 %v1477
        %v3397 = vpop.f32.mrf.mxu0
        %v3398 = vadd.f32 %v3229, %v3397
        %v3399 = vpop.f32.mrf.mxu0
        %v3400 = vadd.f32 %v3231, %v3399
        %3401 = vmatmul.bf16.gmra.mxu0 %v1481
        %v3402 = vpop.f32.mrf.mxu0
        %v3403 = vadd.f32 %v3234, %v3402
        %v3404 = vpop.f32.mrf.mxu0
        %v3405 = vadd.f32 %v3236, %v3404
        %3406 = vmatmul.bf16.gmra.mxu0 %v1485
        %v3407 = vpop.f32.mrf.mxu0
        %v3408 = vadd.f32 %v3239, %v3407
        %v3409 = vpop.f32.mrf.mxu0
        %v3410 = vadd.f32 %v3241, %v3409
        %3411 = vmatmul.bf16.gmra.mxu0 %v1489
        %v3412 = vpop.f32.mrf.mxu0
        %v3413 = vadd.f32 %v3244, %v3412
        %v3414 = vpop.f32.mrf.mxu0
        %v3415 = vadd.f32 %v3246, %v3414
        %3416 = vmatmul.bf16.gmra.mxu0 %v1493
        %v3417 = vpop.f32.mrf.mxu0
        %v3418 = vadd.f32 %v3249, %v3417
        %v3419 = vpop.f32.mrf.mxu0
        %v3420 = vadd.f32 %v3251, %v3419
        %3421 = vmatmul.bf16.gmra.mxu0 %v1497
        %v3422 = vpop.f32.mrf.mxu0
        %v3423 = vadd.f32 %v3254, %v3422
        %v3424 = vpop.f32.mrf.mxu0
        %v3425 = vadd.f32 %v3256, %v3424
        %3426 = vmatmul.bf16.gmra.mxu0 %v1501
        %v3427 = vpop.f32.mrf.mxu0
        %v3428 = vadd.f32 %v3259, %v3427
        %v3429 = vpop.f32.mrf.mxu0
        %v3430 = vadd.f32 %v3261, %v3429
        %3431 = vmatmul.bf16.gmra.mxu0 %v1505
        %v3432 = vpop.f32.mrf.mxu0
        %v3433 = vadd.f32 %v3264, %v3432
        %v3434 = vpop.f32.mrf.mxu0
        %v3435 = vadd.f32 %v3266, %v3434
        %3436 = vmatmul.bf16.gmra.mxu0 %v1509
        %v3437 = vpop.f32.mrf.mxu0
        %v3438 = vadd.f32 %v3269, %v3437
        %v3439 = vpop.f32.mrf.mxu0
        %v3440 = vadd.f32 %v3271, %v3439
        %3441 = vmatmul.bf16.gmra.mxu0 %v1518
        %v3442 = vpop.f32.mrf.mxu0
        %v3443 = vadd.f32 %v3274, %v3442
        %v3444 = vpop.f32.mrf.mxu0
        %v3445 = vadd.f32 %v3276, %v3444
        %3446 = vmatmul.bf16.gmra.mxu0 %v1527
        %v3447 = vpop.f32.mrf.mxu0
        %v3448 = vadd.f32 %v3279, %v3447
        %v3449 = vpop.f32.mrf.mxu0
        %v3450 = vadd.f32 %v3281, %v3449
        %3451 = vmatmul.bf16.gmra.mxu0 %v1536
        %v3452 = vpop.f32.mrf.mxu0
        %v3453 = vadd.f32 %v3284, %v3452
        %v3454 = vpop.f32.mrf.mxu0
        %v3455 = vadd.f32 %v3286, %v3454
        %3456 = vdwg.mxu0
        %3457 = vmatpush.bf16.msra.mxu0 %v2032
        %3458 = vmatpush.bf16.msra.mxu0 %v2031
        %3459 = vmatpush.bf16.msra.mxu0 %v2030
        %3460 = vmatpush.bf16.msra.mxu0 %v2029
        %3461 = vmatpush.bf16.msra.mxu0 %v2028
        %3462 = vmatpush.bf16.msra.mxu0 %v2027
        %3463 = vmatpush.bf16.msra.mxu0 %v2026
        %3464 = vmatpush.bf16.msra.mxu0 %v2025
        %3465 = vmatmul.bf16.gmra.mxu0 %v1575
        %v3466 = vpop.f32.mrf.mxu0
        %v3467 = vadd.f32 %v3298, %v3466
        %v3468 = vpop.f32.mrf.mxu0
        %v3469 = vadd.f32 %v3300, %v3468
        %3470 = vmatmul.bf16.gmra.mxu0 %v1577
        %v3471 = vpop.f32.mrf.mxu0
        %v3472 = vadd.f32 %v3303, %v3471
        %v3473 = vpop.f32.mrf.mxu0
        %v3474 = vadd.f32 %v3305, %v3473
        %3475 = vmatmul.bf16.gmra.mxu0 %v1579
        %v3476 = vpop.f32.mrf.mxu0
        %v3477 = vadd.f32 %v3308, %v3476
        %v3478 = vpop.f32.mrf.mxu0
        %v3479 = vadd.f32 %v3310, %v3478
        %3480 = vmatmul.bf16.gmra.mxu0 %v1581
        %v3481 = vpop.f32.mrf.mxu0
        %v3482 = vadd.f32 %v3313, %v3481
        %v3483 = vpop.f32.mrf.mxu0
        %v3484 = vadd.f32 %v3315, %v3483
        %3485 = vmatmul.bf16.gmra.mxu0 %v1583
        %v3486 = vpop.f32.mrf.mxu0
        %v3487 = vadd.f32 %v3318, %v3486
        %v3488 = vpop.f32.mrf.mxu0
        %v3489 = vadd.f32 %v3320, %v3488
        %3490 = vmatmul.bf16.gmra.mxu0 %v1585
        %v3491 = vpop.f32.mrf.mxu0
        %v3492 = vadd.f32 %v3323, %v3491
        %v3493 = vpop.f32.mrf.mxu0
        %v3494 = vadd.f32 %v3325, %v3493
        %3495 = vmatmul.bf16.gmra.mxu0 %v1587
        %v3496 = vpop.f32.mrf.mxu0
        %v3497 = vadd.f32 %v3328, %v3496
        %v3498 = vpop.f32.mrf.mxu0
        %v3499 = vadd.f32 %v3330, %v3498
        %3500 = vmatmul.bf16.gmra.mxu0 %v1589
        %v3501 = vpop.f32.mrf.mxu0
        %v3502 = vadd.f32 %v3333, %v3501
        %v3503 = vpop.f32.mrf.mxu0
        %v3504 = vadd.f32 %v3335, %v3503
        %3505 = vmatmul.bf16.gmra.mxu0 %v1591
        %v3506 = vpop.f32.mrf.mxu0
        %v3507 = vadd.f32 %v3338, %v3506
        %v3508 = vpop.f32.mrf.mxu0
        %v3509 = vadd.f32 %v3340, %v3508
        %3510 = vmatmul.bf16.gmra.mxu0 %v1593
        %v3511 = vpop.f32.mrf.mxu0
        %v3512 = vadd.f32 %v3343, %v3511
        %v3513 = vpop.f32.mrf.mxu0
        %v3514 = vadd.f32 %v3345, %v3513
        %3515 = vmatmul.bf16.gmra.mxu0 %v1595
        %v3516 = vpop.f32.mrf.mxu0
        %v3517 = vadd.f32 %v3348, %v3516
        %v3518 = vpop.f32.mrf.mxu0
        %v3519 = vadd.f32 %v3350, %v3518
        %3520 = vmatmul.bf16.gmra.mxu0 %v1597
        %v3521 = vpop.f32.mrf.mxu0
        %v3522 = vadd.f32 %v3353, %v3521
        %v3523 = vpop.f32.mrf.mxu0
        %v3524 = vadd.f32 %v3355, %v3523
        %3525 = vmatmul.bf16.gmra.mxu0 %v1599
        %v3526 = vpop.f32.mrf.mxu0
        %v3527 = vadd.f32 %v3358, %v3526
        %v3528 = vpop.f32.mrf.mxu0
        %v3529 = vadd.f32 %v3360, %v3528
        %3530 = vmatmul.bf16.gmra.mxu0 %v1601
        %v3531 = vpop.f32.mrf.mxu0
        %v3532 = vadd.f32 %v3363, %v3531
        %v3533 = vpop.f32.mrf.mxu0
        %v3534 = vadd.f32 %v3365, %v3533
        %3535 = vmatmul.bf16.gmra.mxu0 %v1603
        %v3536 = vpop.f32.mrf.mxu0
        %v3537 = vadd.f32 %v3368, %v3536
        %v3538 = vpop.f32.mrf.mxu0
        %v3539 = vadd.f32 %v3370, %v3538
        %3540 = vmatmul.bf16.gmra.mxu0 %v1605
        %v3541 = vpop.f32.mrf.mxu0
        %v3542 = vadd.f32 %v3373, %v3541
        %v3543 = vpop.f32.mrf.mxu0
        %v3544 = vadd.f32 %v3375, %v3543
        %3545 = vmatmul.bf16.gmra.mxu0 %v1607
        %v3546 = vpop.f32.mrf.mxu0
        %v3547 = vadd.f32 %v3378, %v3546
        %v3548 = vpop.f32.mrf.mxu0
        %v3549 = vadd.f32 %v3380, %v3548
        %3550 = vmatmul.bf16.gmra.mxu0 %v1609
        %v3551 = vpop.f32.mrf.mxu0
        %v3552 = vadd.f32 %v3383, %v3551
        %v3553 = vpop.f32.mrf.mxu0
        %v3554 = vadd.f32 %v3385, %v3553
        %3555 = vmatmul.bf16.gmra.mxu0 %v1611
        %v3556 = vpop.f32.mrf.mxu0
        %v3557 = vadd.f32 %v3388, %v3556
        %v3558 = vpop.f32.mrf.mxu0
        %v3559 = vadd.f32 %v3390, %v3558
        %3560 = vmatmul.bf16.gmra.mxu0 %v1613
        %v3561 = vpop.f32.mrf.mxu0
        %v3562 = vadd.f32 %v3393, %v3561
        %v3563 = vpop.f32.mrf.mxu0
        %v3564 = vadd.f32 %v3395, %v3563
        %3565 = vmatmul.bf16.gmra.mxu0 %v1615
        %v3566 = vpop.f32.mrf.mxu0
        %v3567 = vadd.f32 %v3398, %v3566
        %v3568 = vpop.f32.mrf.mxu0
        %v3569 = vadd.f32 %v3400, %v3568
        %3570 = vmatmul.bf16.gmra.mxu0 %v1617
        %v3571 = vpop.f32.mrf.mxu0
        %v3572 = vadd.f32 %v3403, %v3571
        %v3573 = vpop.f32.mrf.mxu0
        %v3574 = vadd.f32 %v3405, %v3573
        %3575 = vmatmul.bf16.gmra.mxu0 %v1619
        %v3576 = vpop.f32.mrf.mxu0
        %v3577 = vadd.f32 %v3408, %v3576
        %v3578 = vpop.f32.mrf.mxu0
        %v3579 = vadd.f32 %v3410, %v3578
        %3580 = vmatmul.bf16.gmra.mxu0 %v1621
        %v3581 = vpop.f32.mrf.mxu0
        %v3582 = vadd.f32 %v3413, %v3581
        %v3583 = vpop.f32.mrf.mxu0
        %v3584 = vadd.f32 %v3415, %v3583
        %3585 = vmatmul.bf16.gmra.mxu0 %v1623
        %v3586 = vpop.f32.mrf.mxu0
        %v3587 = vadd.f32 %v3418, %v3586
        %v3588 = vpop.f32.mrf.mxu0
        %v3589 = vadd.f32 %v3420, %v3588
        %3590 = vmatmul.bf16.gmra.mxu0 %v1625
        %v3591 = vpop.f32.mrf.mxu0
        %v3592 = vadd.f32 %v3423, %v3591
        %v3593 = vpop.f32.mrf.mxu0
        %v3594 = vadd.f32 %v3425, %v3593
        %3595 = vmatmul.bf16.gmra.mxu0 %v1627
        %v3596 = vpop.f32.mrf.mxu0
        %v3597 = vadd.f32 %v3428, %v3596
        %v3598 = vpop.f32.mrf.mxu0
        %v3599 = vadd.f32 %v3430, %v3598
        %3600 = vmatmul.bf16.gmra.mxu0 %v1629
        %v3601 = vpop.f32.mrf.mxu0
        %v3602 = vadd.f32 %v3433, %v3601
        %v3603 = vpop.f32.mrf.mxu0
        %v3604 = vadd.f32 %v3435, %v3603
        %3605 = vmatmul.bf16.gmra.mxu0 %v1631
        %v3606 = vpop.f32.mrf.mxu0
        %v3607 = vadd.f32 %v3438, %v3606
        %v3608 = vpop.f32.mrf.mxu0
        %v3609 = vadd.f32 %v3440, %v3608
        %3610 = vmatmul.bf16.gmra.mxu0 %v1633
        %v3611 = vpop.f32.mrf.mxu0
        %v3612 = vadd.f32 %v3443, %v3611
        %v3613 = vpop.f32.mrf.mxu0
        %v3614 = vadd.f32 %v3445, %v3613
        %3615 = vmatmul.bf16.gmra.mxu0 %v1635
        %v3616 = vpop.f32.mrf.mxu0
        %v3617 = vadd.f32 %v3448, %v3616
        %v3618 = vpop.f32.mrf.mxu0
        %v3619 = vadd.f32 %v3450, %v3618
        %3620 = vmatmul.bf16.gmra.mxu0 %v1637
        %v3621 = vpop.f32.mrf.mxu0
        %v3622 = vadd.f32 %v3453, %v3621
        %v3623 = vpop.f32.mrf.mxu0
        %v3624 = vadd.f32 %v3455, %v3623
        %3625 = vdwg.mxu0
        %v3626 = vmax.f32 %v3467, 0.0
        %v3627 = vmax.f32 %v3469, 0.0
        %v3628 = vmax.f32 %v3472, 0.0
        %v3629 = vmax.f32 %v3474, 0.0
        %v3630 = vmax.f32 %v3477, 0.0
        %v3631 = vmax.f32 %v3479, 0.0
        %v3632 = vmax.f32 %v3482, 0.0
        %v3633 = vmax.f32 %v3484, 0.0
        %v3634 = vmax.f32 %v3487, 0.0
        %v3635 = vmax.f32 %v3489, 0.0
        %v3636 = vmax.f32 %v3492, 0.0
        %v3637 = vmax.f32 %v3494, 0.0
        %v3638 = vmax.f32 %v3497, 0.0
        %v3639 = vmax.f32 %v3499, 0.0
        %v3640 = vmax.f32 %v3502, 0.0
        %v3641 = vmax.f32 %v3504, 0.0
        %v3642 = vmax.f32 %v3507, 0.0
        %v3643 = vmax.f32 %v3509, 0.0
        %v3644 = vmax.f32 %v3512, 0.0
        %v3645 = vmax.f32 %v3514, 0.0
        %v3646 = vmax.f32 %v3517, 0.0
        %v3647 = vmax.f32 %v3519, 0.0
        %v3648 = vmax.f32 %v3522, 0.0
        %v3649 = vmax.f32 %v3524, 0.0
        %v3650 = vmax.f32 %v3527, 0.0
        %v3651 = vmax.f32 %v3529, 0.0
        %v3652 = vmax.f32 %v3532, 0.0
        %v3653 = vmax.f32 %v3534, 0.0
        %v3654 = vmax.f32 %v3537, 0.0
        %v3655 = vmax.f32 %v3539, 0.0
        %v3656 = vmax.f32 %v3542, 0.0
        %v3657 = vmax.f32 %v3544, 0.0
        %v3658 = vmax.f32 %v3547, 0.0
        %v3659 = vmax.f32 %v3549, 0.0
        %v3660 = vmax.f32 %v3552, 0.0
        %v3661 = vmax.f32 %v3554, 0.0
        %v3662 = vmax.f32 %v3557, 0.0
        %v3663 = vmax.f32 %v3559, 0.0
        %v3664 = vmax.f32 %v3562, 0.0
        %v3665 = vmax.f32 %v3564, 0.0
        %v3666 = vmax.f32 %v3567, 0.0
        %v3667 = vmax.f32 %v3569, 0.0
        %v3668 = vmax.f32 %v3572, 0.0
        %v3669 = vmax.f32 %v3574, 0.0
        %v3670 = vmax.f32 %v3577, 0.0
        %v3671 = vmax.f32 %v3579, 0.0
        %v3672 = vmax.f32 %v3582, 0.0
        %v3673 = vmax.f32 %v3584, 0.0
        %v3674 = vmax.f32 %v3587, 0.0
        %v3675 = vmax.f32 %v3589, 0.0
        %v3676 = vmax.f32 %v3592, 0.0
        %v3677 = vmax.f32 %v3594, 0.0
        %v3678 = vmax.f32 %v3597, 0.0
        %v3679 = vmax.f32 %v3599, 0.0
        %v3680 = vmax.f32 %v3602, 0.0
        %v3681 = vmax.f32 %v3604, 0.0
        %v3682 = vmax.f32 %v3607, 0.0
        %v3683 = vmax.f32 %v3609, 0.0
        %v3684 = vmax.f32 %v3612, 0.0
        %v3685 = vmax.f32 %v3614, 0.0
        %v3686 = vmax.f32 %v3617, 0.0
        %v3687 = vmax.f32 %v3619, 0.0
        %v3688 = vmax.f32 %v3622, 0.0
        %v3689 = vmax.f32 %v3624, 0.0
        %v3690 = vpack.c.bf16 %v3626, %v3626
        %v3691 = vpack.c.bf16 %v3627, %v3627
        %v3692 = vpack.c.bf16 %v3628, %v3628
        %v3693 = vpack.c.bf16 %v3629, %v3629
        %v3694 = vpack.c.bf16 %v3630, %v3630
        %v3695 = vpack.c.bf16 %v3631, %v3631
        %v3696 = vpack.c.bf16 %v3632, %v3632
        %v3697 = vpack.c.bf16 %v3633, %v3633
        %v3698 = vpack.c.bf16 %v3634, %v3634
        %v3699 = vpack.c.bf16 %v3635, %v3635
        %v3700 = vpack.c.bf16 %v3636, %v3636
        %v3701 = vpack.c.bf16 %v3637, %v3637
        %v3702 = vpack.c.bf16 %v3638, %v3638
        %v3703 = vpack.c.bf16 %v3639, %v3639
        %v3704 = vpack.c.bf16 %v3640, %v3640
        %v3705 = vpack.c.bf16 %v3641, %v3641
        %v3706 = vpack.c.bf16 %v3642, %v3642
        %v3707 = vpack.c.bf16 %v3643, %v3643
        %v3708 = vpack.c.bf16 %v3644, %v3644
        %v3709 = vpack.c.bf16 %v3645, %v3645
        %v3710 = vpack.c.bf16 %v3646, %v3646
        %v3711 = vpack.c.bf16 %v3647, %v3647
        %v3712 = vpack.c.bf16 %v3648, %v3648
        %v3713 = vpack.c.bf16 %v3649, %v3649
        %v3714 = vpack.c.bf16 %v3650, %v3650
        %v3715 = vpack.c.bf16 %v3651, %v3651
        %v3716 = vpack.c.bf16 %v3652, %v3652
        %v3717 = vpack.c.bf16 %v3653, %v3653
        %v3718 = vpack.c.bf16 %v3654, %v3654
        %v3719 = vpack.c.bf16 %v3655, %v3655
        %v3720 = vpack.c.bf16 %v3656, %v3656
        %v3721 = vpack.c.bf16 %v3657, %v3657
        %v3722 = vpack.c.bf16 %v3658, %v3658
        %v3723 = vpack.c.bf16 %v3659, %v3659
        %v3724 = vpack.c.bf16 %v3660, %v3660
        %v3725 = vpack.c.bf16 %v3661, %v3661
        %v3726 = vpack.c.bf16 %v3662, %v3662
        %v3727 = vpack.c.bf16 %v3663, %v3663
        %v3728 = vpack.c.bf16 %v3664, %v3664
        %v3729 = vpack.c.bf16 %v3665, %v3665
        %v3730 = vpack.c.bf16 %v3666, %v3666
        %v3731 = vpack.c.bf16 %v3667, %v3667
        %v3732 = vpack.c.bf16 %v3668, %v3668
        %v3733 = vpack.c.bf16 %v3669, %v3669
        %v3734 = vpack.c.bf16 %v3670, %v3670
        %v3735 = vpack.c.bf16 %v3671, %v3671
        %v3736 = vpack.c.bf16 %v3672, %v3672
        %v3737 = vpack.c.bf16 %v3673, %v3673
        %v3738 = vpack.c.bf16 %v3674, %v3674
        %v3739 = vpack.c.bf16 %v3675, %v3675
        %v3740 = vpack.c.bf16 %v3676, %v3676
        %v3741 = vpack.c.bf16 %v3677, %v3677
        %v3742 = vpack.c.bf16 %v3678, %v3678
        %v3743 = vpack.c.bf16 %v3679, %v3679
        %v3744 = vpack.c.bf16 %v3680, %v3680
        %v3745 = vpack.c.bf16 %v3681, %v3681
        %v3746 = vpack.c.bf16 %v3682, %v3682
        %v3747 = vpack.c.bf16 %v3683, %v3683
        %v3748 = vpack.c.bf16 %v3684, %v3684
        %v3749 = vpack.c.bf16 %v3685, %v3685
        %v3750 = vpack.c.bf16 %v3686, %v3686
        %v3751 = vpack.c.bf16 %v3687, %v3687
        %v3752 = vpack.c.bf16 %v3688, %v3688
        %v3753 = vpack.c.bf16 %v3689, %v3689
        %3754 = vst [vmem:[%s221] sm:$0xf] %v3690
        %3755 = vst [vmem:[%s221 + $0x4] sm:$0xf] %v3691
        %3756 = vst [vmem:[%s221 + $0x8] sm:$0xf] %v3692
        %3757 = vst [vmem:[%s221 + $0xc] sm:$0xf] %v3693
        %3758 = vst [vmem:[%s221 + $0x10] sm:$0xf] %v3694
        %3759 = vst [vmem:[%s221 + $0x14] sm:$0xf] %v3695
        %3760 = vst [vmem:[%s221 + $0x18] sm:$0xf] %v3696
        %3761 = vst [vmem:[%s221 + $0x1c] sm:$0xf] %v3697
        %3762 = vst [vmem:[%s221 + $0x20] sm:$0xf] %v3698
        %3763 = vst [vmem:[%s221 + $0x24] sm:$0xf] %v3699
        %3764 = vst [vmem:[%s221 + $0x28] sm:$0xf] %v3700
        %3765 = vst [vmem:[%s221 + $0x2c] sm:$0xf] %v3701
        %3766 = vst [vmem:[%s221 + $0x30] sm:$0xf] %v3702
        %3767 = vst [vmem:[%s221 + $0x34] sm:$0xf] %v3703
        %3768 = vst [vmem:[%s221 + $0x38] sm:$0xf] %v3704
        %3769 = vst [vmem:[%s221 + $0x3c] sm:$0xf] %v3705
        %3770 = vst [vmem:[%s221 + $0x40] sm:$0xf] %v3706
        %3771 = vst [vmem:[%s221 + $0x44] sm:$0xf] %v3707
        %3772 = vst [vmem:[%s221 + $0x48] sm:$0xf] %v3708
        %3773 = vst [vmem:[%s221 + $0x4c] sm:$0xf] %v3709
        %3774 = vst [vmem:[%s221 + $0x50] sm:$0xf] %v3710
        %3775 = vst [vmem:[%s221 + $0x54] sm:$0xf] %v3711
        %3776 = vst [vmem:[%s221 + $0x58] sm:$0xf] %v3712
        %3777 = vst [vmem:[%s221 + $0x5c] sm:$0xf] %v3713
        %3778 = vst [vmem:[%s221 + $0x60] sm:$0xf] %v3714
        %3779 = vst [vmem:[%s221 + $0x64] sm:$0xf] %v3715
        %3780 = vst [vmem:[%s221 + $0x68] sm:$0xf] %v3716
        %3781 = vst [vmem:[%s221 + $0x6c] sm:$0xf] %v3717
        %3782 = vst [vmem:[%s221 + $0x70] sm:$0xf] %v3718
        %3783 = vst [vmem:[%s221 + $0x74] sm:$0xf] %v3719
        %3784 = vst [vmem:[%s221 + $0x78] sm:$0xf] %v3720
        %3785 = vst [vmem:[%s221 + $0x7c] sm:$0xf] %v3721
        %3786 = vst [vmem:[%s221 + $0x80] sm:$0xf] %v3722
        %3787 = vst [vmem:[%s221 + $0x84] sm:$0xf] %v3723
        %3788 = vst [vmem:[%s221 + $0x88] sm:$0xf] %v3724
        %3789 = vst [vmem:[%s221 + $0x8c] sm:$0xf] %v3725
        %3790 = vst [vmem:[%s221 + $0x90] sm:$0xf] %v3726
        %3791 = vst [vmem:[%s221 + $0x94] sm:$0xf] %v3727
        %3792 = vst [vmem:[%s221 + $0x98] sm:$0xf] %v3728
        %3793 = vst [vmem:[%s221 + $0x9c] sm:$0xf] %v3729
        %3794 = vst [vmem:[%s221 + $0xa0] sm:$0xf] %v3730
        %3795 = vst [vmem:[%s221 + $0xa4] sm:$0xf] %v3731
        %3796 = vst [vmem:[%s221 + $0xa8] sm:$0xf] %v3732
        %3797 = vst [vmem:[%s221 + $0xac] sm:$0xf] %v3733
        %3798 = vst [vmem:[%s221 + $0xb0] sm:$0xf] %v3734
        %3799 = vst [vmem:[%s221 + $0xb4] sm:$0xf] %v3735
        %3800 = vst [vmem:[%s221 + $0xb8] sm:$0xf] %v3736
        %3801 = vst [vmem:[%s221 + $0xbc] sm:$0xf] %v3737
        %3802 = vst [vmem:[%s221 + $0xc0] sm:$0xf] %v3738
        %3803 = vst [vmem:[%s221 + $0xc4] sm:$0xf] %v3739
        %3804 = vst [vmem:[%s221 + $0xc8] sm:$0xf] %v3740
        %3805 = vst [vmem:[%s221 + $0xcc] sm:$0xf] %v3741
        %3806 = vst [vmem:[%s221 + $0xd0] sm:$0xf] %v3742
        %3807 = vst [vmem:[%s221 + $0xd4] sm:$0xf] %v3743
        %3808 = vst [vmem:[%s221 + $0xd8] sm:$0xf] %v3744
        %3809 = vst [vmem:[%s221 + $0xdc] sm:$0xf] %v3745
        %3810 = vst [vmem:[%s221 + $0xe0] sm:$0xf] %v3746
        %3811 = vst [vmem:[%s221 + $0xe4] sm:$0xf] %v3747
        %3812 = vst [vmem:[%s221 + $0xe8] sm:$0xf] %v3748
        %3813 = vst [vmem:[%s221 + $0xec] sm:$0xf] %v3749
        %3814 = vst [vmem:[%s221 + $0xf0] sm:$0xf] %v3750
        %3815 = vst [vmem:[%s221 + $0xf4] sm:$0xf] %v3751
        %3816 = vst [vmem:[%s221 + $0xf8] sm:$0xf] %v3752
        %3817 = vst [vmem:[%s221 + $0xfc] sm:$0xf] %v3753
        %v3818 = vld [vmem:[%s188 + $0x100] sm:$0xf]
        %v3819 = vld [vmem:[%s188 + $0x104] sm:$0xf]
        %v3820 = vld [vmem:[%s188 + $0x108] sm:$0xf]
        %v3821 = vld [vmem:[%s188 + $0x10c] sm:$0xf]
        %v3822 = vld [vmem:[%s188 + $0x110] sm:$0xf]
        %v3823 = vld [vmem:[%s188 + $0x114] sm:$0xf]
        %v3824 = vld [vmem:[%s188 + $0x118] sm:$0xf]
        %v3825 = vld [vmem:[%s188 + $0x11c] sm:$0xf]
        %v3826 = vld [vmem:[%s188 + $0x120] sm:$0xf]
        %v3827 = vld [vmem:[%s188 + $0x124] sm:$0xf]
        %v3828 = vld [vmem:[%s188 + $0x128] sm:$0xf]
        %v3829 = vld [vmem:[%s188 + $0x12c] sm:$0xf]
        %v3830 = vld [vmem:[%s188 + $0x130] sm:$0xf]
        %v3831 = vld [vmem:[%s188 + $0x134] sm:$0xf]
        %v3832 = vld [vmem:[%s188 + $0x138] sm:$0xf]
        %v3833 = vld [vmem:[%s188 + $0x13c] sm:$0xf]
        %v3834 = vld [vmem:[%s188 + $0x140] sm:$0xf]
        %v3835 = vld [vmem:[%s188 + $0x144] sm:$0xf]
        %v3836 = vld [vmem:[%s188 + $0x148] sm:$0xf]
        %v3837 = vld [vmem:[%s188 + $0x14c] sm:$0xf]
        %v3838 = vld [vmem:[%s188 + $0x150] sm:$0xf]
        %v3839 = vld [vmem:[%s188 + $0x154] sm:$0xf]
        %v3840 = vld [vmem:[%s188 + $0x158] sm:$0xf]
        %v3841 = vld [vmem:[%s188 + $0x15c] sm:$0xf]
        %v3842 = vld [vmem:[%s188 + $0x160] sm:$0xf]
        %v3843 = vld [vmem:[%s188 + $0x164] sm:$0xf]
        %v3844 = vld [vmem:[%s188 + $0x168] sm:$0xf]
        %v3845 = vld [vmem:[%s188 + $0x16c] sm:$0xf]
        %v3846 = vld [vmem:[%s188 + $0x170] sm:$0xf]
        %v3847 = vld [vmem:[%s188 + $0x174] sm:$0xf]
        %v3848 = vld [vmem:[%s188 + $0x178] sm:$0xf]
        %v3849 = vld [vmem:[%s188 + $0x17c] sm:$0xf]
        %v3850 = vld [vmem:[%s188 + $0x180] sm:$0xf]
        %v3851 = vld [vmem:[%s188 + $0x184] sm:$0xf]
        %v3852 = vld [vmem:[%s188 + $0x188] sm:$0xf]
        %v3853 = vld [vmem:[%s188 + $0x18c] sm:$0xf]
        %v3854 = vld [vmem:[%s188 + $0x190] sm:$0xf]
        %v3855 = vld [vmem:[%s188 + $0x194] sm:$0xf]
        %v3856 = vld [vmem:[%s188 + $0x198] sm:$0xf]
        %v3857 = vld [vmem:[%s188 + $0x19c] sm:$0xf]
        %v3858 = vld [vmem:[%s188 + $0x1a0] sm:$0xf]
        %v3859 = vld [vmem:[%s188 + $0x1a4] sm:$0xf]
        %v3860 = vld [vmem:[%s188 + $0x1a8] sm:$0xf]
        %v3861 = vld [vmem:[%s188 + $0x1ac] sm:$0xf]
        %v3862 = vld [vmem:[%s188 + $0x1b0] sm:$0xf]
        %v3863 = vld [vmem:[%s188 + $0x1b4] sm:$0xf]
        %v3864 = vld [vmem:[%s188 + $0x1b8] sm:$0xf]
        %v3865 = vld [vmem:[%s188 + $0x1bc] sm:$0xf]
        %v3866 = vld [vmem:[%s188 + $0x1c0] sm:$0xf]
        %v3867 = vld [vmem:[%s188 + $0x1c4] sm:$0xf]
        %v3868 = vld [vmem:[%s188 + $0x1c8] sm:$0xf]
        %v3869 = vld [vmem:[%s188 + $0x1cc] sm:$0xf]
        %v3870 = vld [vmem:[%s188 + $0x1d0] sm:$0xf]
        %v3871 = vld [vmem:[%s188 + $0x1d4] sm:$0xf]
        %v3872 = vld [vmem:[%s188 + $0x1d8] sm:$0xf]
        %v3873 = vld [vmem:[%s188 + $0x1dc] sm:$0xf]
        %v3874 = vld [vmem:[%s188 + $0x1e0] sm:$0xf]
        %v3875 = vld [vmem:[%s188 + $0x1e4] sm:$0xf]
        %v3876 = vld [vmem:[%s188 + $0x1e8] sm:$0xf]
        %v3877 = vld [vmem:[%s188 + $0x1ec] sm:$0xf]
        %v3878 = vld [vmem:[%s188 + $0x1f0] sm:$0xf]
        %v3879 = vld [vmem:[%s188 + $0x1f4] sm:$0xf]
        %v3880 = vld [vmem:[%s188 + $0x1f8] sm:$0xf]
        %v3881 = vld [vmem:[%s188 + $0x1fc] sm:$0xf]
        %v3882 = vld [vmem:[%s188 + $0x200] sm:$0x1]
        %v3883 = vld [vmem:[%s188 + $0x100] sm:$0xe]
        %v3884 = vld [vmem:[%s188 + $0x110] sm:$0xe]
        %v3885 = vld [vmem:[%s188 + $0x200] sm:$0xf]
        %v3886 = vld [vmem:[%s188 + $0x204] sm:$0xf]
        %v3887 = vld [vmem:[%s188 + $0x208] sm:$0xf]
        %v3888 = vld [vmem:[%s188 + $0x20c] sm:$0xf]
        %v3889 = vld [vmem:[%s188 + $0x210] sm:$0x1]
        %v3890 = vld [vmem:[%s188 + $0x210] sm:$0x3]
        %v3891 = vld [vmem:[%s188 + $0x110] sm:$0xc]
        %v3892 = vld [vmem:[%s188 + $0x120] sm:$0xc]
        %v3893 = vld [vmem:[%s188 + $0x210] sm:$0xf]
        %v3894 = vld [vmem:[%s188 + $0x214] sm:$0xf]
        %v3895 = vld [vmem:[%s188 + $0x218] sm:$0xf]
        %v3896 = vld [vmem:[%s188 + $0x21c] sm:$0xf]
        %v3897 = vld [vmem:[%s188 + $0x220] sm:$0x3]
        %v3898 = vld [vmem:[%s188 + $0x220] sm:$0x7]
        %v3899 = vld [vmem:[%s188 + $0x120] sm:$0x8]
        %v3964 = vunpack.c.l.b16 %v3818
        %v3965 = vunpack.c.l.b16 %v3819
        %v3966 = vunpack.c.l.b16 %v3820
        %v3967 = vunpack.c.l.b16 %v3821
        %v3968 = vunpack.c.l.b16 %v3822
        %v3969 = vunpack.c.l.b16 %v3823
        %v3970 = vunpack.c.l.b16 %v3824
        %v3971 = vunpack.c.l.b16 %v3825
        %v3972 = vunpack.c.l.b16 %v3826
        %v3973 = vunpack.c.l.b16 %v3827
        %v3974 = vunpack.c.l.b16 %v3828
        %v3975 = vunpack.c.l.b16 %v3829
        %v3976 = vunpack.c.l.b16 %v3830
        %v3977 = vunpack.c.l.b16 %v3831
        %v3978 = vunpack.c.l.b16 %v3832
        %v3979 = vunpack.c.l.b16 %v3833
        %v3980 = vunpack.c.l.b16 %v3834
        %v3981 = vunpack.c.l.b16 %v3835
        %v3982 = vunpack.c.l.b16 %v3836
        %v3983 = vunpack.c.l.b16 %v3837
        %v3984 = vunpack.c.l.b16 %v3838
        %v3985 = vunpack.c.l.b16 %v3839
        %v3986 = vunpack.c.l.b16 %v3840
        %v3987 = vunpack.c.l.b16 %v3841
        %v3988 = vunpack.c.l.b16 %v3842
        %v3989 = vunpack.c.l.b16 %v3843
        %v3990 = vunpack.c.l.b16 %v3844
        %v3991 = vunpack.c.l.b16 %v3845
        %v3992 = vunpack.c.l.b16 %v3846
        %v3993 = vunpack.c.l.b16 %v3847
        %v3994 = vunpack.c.l.b16 %v3848
        %v3995 = vunpack.c.l.b16 %v3849
        %v3996 = vunpack.c.l.b16 %v3850
        %v3997 = vunpack.c.l.b16 %v3851
        %v3998 = vunpack.c.l.b16 %v3852
        %v3999 = vunpack.c.l.b16 %v3853
        %v4000 = vunpack.c.l.b16 %v3854
        %v4001 = vunpack.c.l.b16 %v3855
        %v4002 = vunpack.c.l.b16 %v3856
        %v4003 = vunpack.c.l.b16 %v3857
        %v4004 = vunpack.c.l.b16 %v3858
        %v4005 = vunpack.c.l.b16 %v3859
        %v4006 = vunpack.c.l.b16 %v3860
        %v4007 = vunpack.c.l.b16 %v3861
        %v4008 = vunpack.c.l.b16 %v3862
        %v4009 = vunpack.c.l.b16 %v3863
        %v4010 = vunpack.c.l.b16 %v3864
        %v4011 = vunpack.c.l.b16 %v3865
        %v4012 = vunpack.c.l.b16 %v3866
        %v4013 = vunpack.c.l.b16 %v3867
        %v4014 = vunpack.c.l.b16 %v3868
        %v4015 = vunpack.c.l.b16 %v3869
        %v4016 = vunpack.c.l.b16 %v3870
        %v4017 = vunpack.c.l.b16 %v3871
        %v4018 = vunpack.c.l.b16 %v3872
        %v4019 = vunpack.c.l.b16 %v3873
        %v4020 = vunpack.c.l.b16 %v3874
        %v4021 = vunpack.c.l.b16 %v3875
        %v4022 = vunpack.c.l.b16 %v3876
        %v4023 = vunpack.c.l.b16 %v3877
        %v4024 = vunpack.c.l.b16 %v3878
        %v4025 = vunpack.c.l.b16 %v3879
        %v4026 = vunpack.c.l.b16 %v3880
        %v4027 = vunpack.c.l.b16 %v3881
        %v4028 = vpack.c.b16 %v3965, %v3964
        %v4029 = vpack.c.b16 %v3967, %v3966
        %v4030 = vpack.c.b16 %v3969, %v3968
        %v4031 = vpack.c.b16 %v3971, %v3970
        %v4032 = vpack.c.b16 %v3973, %v3972
        %v4033 = vpack.c.b16 %v3975, %v3974
        %v4034 = vpack.c.b16 %v3977, %v3976
        %v4035 = vpack.c.b16 %v3979, %v3978
        %v4036 = vpack.c.b16 %v3981, %v3980
        %v4037 = vpack.c.b16 %v3983, %v3982
        %v4038 = vpack.c.b16 %v3985, %v3984
        %v4039 = vpack.c.b16 %v3987, %v3986
        %v4040 = vpack.c.b16 %v3989, %v3988
        %v4041 = vpack.c.b16 %v3991, %v3990
        %v4042 = vpack.c.b16 %v3993, %v3992
        %v4043 = vpack.c.b16 %v3995, %v3994
        %v4044 = vpack.c.b16 %v3997, %v3996
        %v4045 = vpack.c.b16 %v3999, %v3998
        %v4046 = vpack.c.b16 %v4001, %v4000
        %v4047 = vpack.c.b16 %v4003, %v4002
        %v4048 = vpack.c.b16 %v4005, %v4004
        %v4049 = vpack.c.b16 %v4007, %v4006
        %v4050 = vpack.c.b16 %v4009, %v4008
        %v4051 = vpack.c.b16 %v4011, %v4010
        %v4052 = vpack.c.b16 %v4013, %v4012
        %v4053 = vpack.c.b16 %v4015, %v4014
        %v4054 = vpack.c.b16 %v4017, %v4016
        %v4055 = vpack.c.b16 %v4019, %v4018
        %v4056 = vpack.c.b16 %v4021, %v4020
        %v4057 = vpack.c.b16 %v4023, %v4022
        %v4058 = vpack.c.b16 %v4025, %v4024
        %v4059 = vpack.c.b16 %v4027, %v4026
        %v4093 = vunpack.c.l.b16 %v3882
        %v4094 = vpack.c.b16 %v4093, %v4093
        %v4096 = vshrl.u32 %v4028, 16
        %v4098 = vshll.u32 %v4028, 16
        %v4100 = vrot.slane %v4098, 1
        %v4101 = vor.u32 %v4096, %v4100
        %v4103 = vshll.u32 %v4029, 16
        %v4105 = vrot.slane %v4103, 1
        %v4106 = vsel %vm644, %v4101, %v4105
        %v4107 = vshrl.u32 %v4029, 16
        %v4109 = vor.u32 %v4107, %v4105
        %v4111 = vshll.u32 %v4030, 16
        %v4113 = vrot.slane %v4111, 1
        %v4114 = vsel %vm644, %v4109, %v4113
        %v4115 = vshrl.u32 %v4030, 16
        %v4117 = vor.u32 %v4115, %v4113
        %v4119 = vshll.u32 %v4031, 16
        %v4121 = vrot.slane %v4119, 1
        %v4122 = vsel %vm644, %v4117, %v4121
        %v4123 = vshrl.u32 %v4031, 16
        %v4125 = vor.u32 %v4123, %v4121
        %v4127 = vshll.u32 %v4032, 16
        %v4129 = vrot.slane %v4127, 1
        %v4130 = vsel %vm644, %v4125, %v4129
        %v4131 = vshrl.u32 %v4032, 16
        %v4133 = vor.u32 %v4131, %v4129
        %v4135 = vshll.u32 %v4033, 16
        %v4137 = vrot.slane %v4135, 1
        %v4138 = vsel %vm644, %v4133, %v4137
        %v4139 = vshrl.u32 %v4033, 16
        %v4141 = vor.u32 %v4139, %v4137
        %v4143 = vshll.u32 %v4034, 16
        %v4145 = vrot.slane %v4143, 1
        %v4146 = vsel %vm644, %v4141, %v4145
        %v4147 = vshrl.u32 %v4034, 16
        %v4149 = vor.u32 %v4147, %v4145
        %v4151 = vshll.u32 %v4035, 16
        %v4153 = vrot.slane %v4151, 1
        %v4154 = vsel %vm644, %v4149, %v4153
        %v4155 = vshrl.u32 %v4035, 16
        %v4157 = vor.u32 %v4155, %v4153
        %v4159 = vshll.u32 %v4036, 16
        %v4161 = vrot.slane %v4159, 1
        %v4162 = vsel %vm644, %v4157, %v4161
        %v4163 = vshrl.u32 %v4036, 16
        %v4165 = vor.u32 %v4163, %v4161
        %v4167 = vshll.u32 %v4037, 16
        %v4169 = vrot.slane %v4167, 1
        %v4170 = vsel %vm644, %v4165, %v4169
        %v4171 = vshrl.u32 %v4037, 16
        %v4173 = vor.u32 %v4171, %v4169
        %v4175 = vshll.u32 %v4038, 16
        %v4177 = vrot.slane %v4175, 1
        %v4178 = vsel %vm644, %v4173, %v4177
        %v4179 = vshrl.u32 %v4038, 16
        %v4181 = vor.u32 %v4179, %v4177
        %v4183 = vshll.u32 %v4039, 16
        %v4185 = vrot.slane %v4183, 1
        %v4186 = vsel %vm644, %v4181, %v4185
        %v4187 = vshrl.u32 %v4039, 16
        %v4189 = vor.u32 %v4187, %v4185
        %v4191 = vshll.u32 %v4040, 16
        %v4193 = vrot.slane %v4191, 1
        %v4194 = vsel %vm644, %v4189, %v4193
        %v4195 = vshrl.u32 %v4040, 16
        %v4197 = vor.u32 %v4195, %v4193
        %v4199 = vshll.u32 %v4041, 16
        %v4201 = vrot.slane %v4199, 1
        %v4202 = vsel %vm644, %v4197, %v4201
        %v4203 = vshrl.u32 %v4041, 16
        %v4205 = vor.u32 %v4203, %v4201
        %v4207 = vshll.u32 %v4042, 16
        %v4209 = vrot.slane %v4207, 1
        %v4210 = vsel %vm644, %v4205, %v4209
        %v4211 = vshrl.u32 %v4042, 16
        %v4213 = vor.u32 %v4211, %v4209
        %v4215 = vshll.u32 %v4043, 16
        %v4217 = vrot.slane %v4215, 1
        %v4218 = vsel %vm644, %v4213, %v4217
        %v4219 = vshrl.u32 %v4043, 16
        %v4221 = vor.u32 %v4219, %v4217
        %v4223 = vshll.u32 %v4044, 16
        %v4225 = vrot.slane %v4223, 1
        %v4226 = vsel %vm644, %v4221, %v4225
        %v4227 = vshrl.u32 %v4044, 16
        %v4229 = vor.u32 %v4227, %v4225
        %v4231 = vshll.u32 %v4045, 16
        %v4233 = vrot.slane %v4231, 1
        %v4234 = vsel %vm644, %v4229, %v4233
        %v4235 = vshrl.u32 %v4045, 16
        %v4237 = vor.u32 %v4235, %v4233
        %v4239 = vshll.u32 %v4046, 16
        %v4241 = vrot.slane %v4239, 1
        %v4242 = vsel %vm644, %v4237, %v4241
        %v4243 = vshrl.u32 %v4046, 16
        %v4245 = vor.u32 %v4243, %v4241
        %v4247 = vshll.u32 %v4047, 16
        %v4249 = vrot.slane %v4247, 1
        %v4250 = vsel %vm644, %v4245, %v4249
        %v4251 = vshrl.u32 %v4047, 16
        %v4253 = vor.u32 %v4251, %v4249
        %v4255 = vshll.u32 %v4048, 16
        %v4257 = vrot.slane %v4255, 1
        %v4258 = vsel %vm644, %v4253, %v4257
        %v4259 = vshrl.u32 %v4048, 16
        %v4261 = vor.u32 %v4259, %v4257
        %v4263 = vshll.u32 %v4049, 16
        %v4265 = vrot.slane %v4263, 1
        %v4266 = vsel %vm644, %v4261, %v4265
        %v4267 = vshrl.u32 %v4049, 16
        %v4269 = vor.u32 %v4267, %v4265
        %v4271 = vshll.u32 %v4050, 16
        %v4273 = vrot.slane %v4271, 1
        %v4274 = vsel %vm644, %v4269, %v4273
        %v4275 = vshrl.u32 %v4050, 16
        %v4277 = vor.u32 %v4275, %v4273
        %v4279 = vshll.u32 %v4051, 16
        %v4281 = vrot.slane %v4279, 1
        %v4282 = vsel %vm644, %v4277, %v4281
        %v4283 = vshrl.u32 %v4051, 16
        %v4285 = vor.u32 %v4283, %v4281
        %v4287 = vshll.u32 %v4052, 16
        %v4289 = vrot.slane %v4287, 1
        %v4290 = vsel %vm644, %v4285, %v4289
        %v4291 = vshrl.u32 %v4052, 16
        %v4293 = vor.u32 %v4291, %v4289
        %v4295 = vshll.u32 %v4053, 16
        %v4297 = vrot.slane %v4295, 1
        %v4298 = vsel %vm644, %v4293, %v4297
        %v4299 = vshrl.u32 %v4053, 16
        %v4301 = vor.u32 %v4299, %v4297
        %v4303 = vshll.u32 %v4054, 16
        %v4305 = vrot.slane %v4303, 1
        %v4306 = vsel %vm644, %v4301, %v4305
        %v4307 = vshrl.u32 %v4054, 16
        %v4309 = vor.u32 %v4307, %v4305
        %v4311 = vshll.u32 %v4055, 16
        %v4313 = vrot.slane %v4311, 1
        %v4314 = vsel %vm644, %v4309, %v4313
        %v4315 = vshrl.u32 %v4055, 16
        %v4317 = vor.u32 %v4315, %v4313
        %v4319 = vshll.u32 %v4056, 16
        %v4321 = vrot.slane %v4319, 1
        %v4322 = vsel %vm644, %v4317, %v4321
        %v4323 = vshrl.u32 %v4056, 16
        %v4325 = vor.u32 %v4323, %v4321
        %v4327 = vshll.u32 %v4057, 16
        %v4329 = vrot.slane %v4327, 1
        %v4330 = vsel %vm644, %v4325, %v4329
        %v4331 = vshrl.u32 %v4057, 16
        %v4333 = vor.u32 %v4331, %v4329
        %v4335 = vshll.u32 %v4058, 16
        %v4337 = vrot.slane %v4335, 1
        %v4338 = vsel %vm644, %v4333, %v4337
        %v4339 = vshrl.u32 %v4058, 16
        %v4341 = vor.u32 %v4339, %v4337
        %v4343 = vshll.u32 %v4059, 16
        %v4345 = vrot.slane %v4343, 1
        %v4346 = vsel %vm644, %v4341, %v4345
        %v4347 = vshrl.u32 %v4059, 16
        %v4349 = vor.u32 %v4347, %v4345
        %v4351 = vshll.u32 %v4094, 16
        %v4353 = vrot.slane %v4351, 1
        %v4354 = vsel %vm644, %v4349, %v4353
        %v4388 = vunpack.c.l.b16 %v3883
        %v4389 = vpack.c.b16 %v3965, %v4388
        %v4390 = vrot.slane %v4389, 1
        %v4391 = vrot.slane %v4029, 1
        %v4392 = vsel %vm940, %v4390, %v4391
        %v4393 = vrot.slane %v4030, 1
        %v4394 = vsel %vm940, %v4391, %v4393
        %v4395 = vrot.slane %v4031, 1
        %v4396 = vsel %vm940, %v4393, %v4395
        %v4397 = vrot.slane %v4032, 1
        %v4398 = vsel %vm940, %v4395, %v4397
        %v4399 = vrot.slane %v4033, 1
        %v4400 = vsel %vm940, %v4397, %v4399
        %v4401 = vrot.slane %v4034, 1
        %v4402 = vsel %vm940, %v4399, %v4401
        %v4403 = vrot.slane %v4035, 1
        %v4404 = vsel %vm940, %v4401, %v4403
        %v4405 = vrot.slane %v4036, 1
        %v4406 = vsel %vm940, %v4403, %v4405
        %v4407 = vrot.slane %v4037, 1
        %v4408 = vsel %vm940, %v4405, %v4407
        %v4409 = vrot.slane %v4038, 1
        %v4410 = vsel %vm940, %v4407, %v4409
        %v4411 = vrot.slane %v4039, 1
        %v4412 = vsel %vm940, %v4409, %v4411
        %v4413 = vrot.slane %v4040, 1
        %v4414 = vsel %vm940, %v4411, %v4413
        %v4415 = vrot.slane %v4041, 1
        %v4416 = vsel %vm940, %v4413, %v4415
        %v4417 = vrot.slane %v4042, 1
        %v4418 = vsel %vm940, %v4415, %v4417
        %v4419 = vrot.slane %v4043, 1
        %v4420 = vsel %vm940, %v4417, %v4419
        %v4421 = vrot.slane %v4044, 1
        %v4422 = vsel %vm940, %v4419, %v4421
        %v4423 = vrot.slane %v4045, 1
        %v4424 = vsel %vm940, %v4421, %v4423
        %v4425 = vrot.slane %v4046, 1
        %v4426 = vsel %vm940, %v4423, %v4425
        %v4427 = vrot.slane %v4047, 1
        %v4428 = vsel %vm940, %v4425, %v4427
        %v4429 = vrot.slane %v4048, 1
        %v4430 = vsel %vm940, %v4427, %v4429
        %v4431 = vrot.slane %v4049, 1
        %v4432 = vsel %vm940, %v4429, %v4431
        %v4433 = vrot.slane %v4050, 1
        %v4434 = vsel %vm940, %v4431, %v4433
        %v4435 = vrot.slane %v4051, 1
        %v4436 = vsel %vm940, %v4433, %v4435
        %v4437 = vrot.slane %v4052, 1
        %v4438 = vsel %vm940, %v4435, %v4437
        %v4439 = vrot.slane %v4053, 1
        %v4440 = vsel %vm940, %v4437, %v4439
        %v4441 = vrot.slane %v4054, 1
        %v4442 = vsel %vm940, %v4439, %v4441
        %v4443 = vrot.slane %v4055, 1
        %v4444 = vsel %vm940, %v4441, %v4443
        %v4445 = vrot.slane %v4056, 1
        %v4446 = vsel %vm940, %v4443, %v4445
        %v4447 = vrot.slane %v4057, 1
        %v4448 = vsel %vm940, %v4445, %v4447
        %v4449 = vrot.slane %v4058, 1
        %v4450 = vsel %vm940, %v4447, %v4449
        %v4451 = vrot.slane %v4059, 1
        %v4452 = vsel %vm940, %v4449, %v4451
        %v4453 = vrot.slane %v4094, 1
        %v4454 = vsel %vm940, %v4451, %v4453
        %v4493 = vunpack.c.l.b16 %v3884
        %v4494 = vunpack.c.l.b16 %v3885
        %v4495 = vunpack.c.l.b16 %v3886
        %v4496 = vunpack.c.l.b16 %v3887
        %v4497 = vunpack.c.l.b16 %v3888
        %v4498 = vunpack.c.l.b16 %v3889
        %v4499 = vpack.c.b16 %v3969, %v4493
        %v4500 = vpack.c.b16 %v4495, %v4494
        %v4501 = vpack.c.b16 %v4497, %v4496
        %v4502 = vpack.c.b16 %v4498, %v4498
        %v4503 = vrot.slane %v4499, 1
        %v4504 = vsel %vm940, %v4503, %v4395
        %v4505 = vrot.slane %v4500, 1
        %v4506 = vsel %vm940, %v4451, %v4505
        %v4507 = vrot.slane %v4501, 1
        %v4508 = vsel %vm940, %v4505, %v4507
        %v4509 = vrot.slane %v4502, 1
        %v4510 = vsel %vm940, %v4507, %v4509
        %v4516 = vunpack.c.l.b16 %v3890
        %v4517 = vpack.c.b16 %v4516, %v4516
        %v4519 = vshrl.u32 %v4499, 16
        %v4521 = vrot.slane %v4519, 1
        %v4522 = vshll.u32 %v4499, 16
        %v4524 = vrot.slane %v4522, 2
        %v4525 = vor.u32 %v4521, %v4524
        %v4526 = vrot.slane %v4123, 1
        %v4527 = vrot.slane %v4119, 2
        %v4528 = vor.u32 %v4526, %v4527
        %v4529 = vsel %vm1069, %v4525, %v4528
        %v4530 = vrot.slane %v4131, 1
        %v4531 = vrot.slane %v4127, 2
        %v4532 = vor.u32 %v4530, %v4531
        %v4533 = vsel %vm1069, %v4528, %v4532
        %v4534 = vrot.slane %v4139, 1
        %v4535 = vrot.slane %v4135, 2
        %v4536 = vor.u32 %v4534, %v4535
        %v4537 = vsel %vm1069, %v4532, %v4536
        %v4538 = vrot.slane %v4147, 1
        %v4539 = vrot.slane %v4143, 2
        %v4540 = vor.u32 %v4538, %v4539
        %v4541 = vsel %vm1069, %v4536, %v4540
        %v4542 = vrot.slane %v4155, 1
        %v4543 = vrot.slane %v4151, 2
        %v4544 = vor.u32 %v4542, %v4543
        %v4545 = vsel %vm1069, %v4540, %v4544
        %v4546 = vrot.slane %v4163, 1
        %v4547 = vrot.slane %v4159, 2
        %v4548 = vor.u32 %v4546, %v4547
        %v4549 = vsel %vm1069, %v4544, %v4548
        %v4550 = vrot.slane %v4171, 1
        %v4551 = vrot.slane %v4167, 2
        %v4552 = vor.u32 %v4550, %v4551
        %v4553 = vsel %vm1069, %v4548, %v4552
        %v4554 = vrot.slane %v4179, 1
        %v4555 = vrot.slane %v4175, 2
        %v4556 = vor.u32 %v4554, %v4555
        %v4557 = vsel %vm1069, %v4552, %v4556
        %v4558 = vrot.slane %v4187, 1
        %v4559 = vrot.slane %v4183, 2
        %v4560 = vor.u32 %v4558, %v4559
        %v4561 = vsel %vm1069, %v4556, %v4560
        %v4562 = vrot.slane %v4195, 1
        %v4563 = vrot.slane %v4191, 2
        %v4564 = vor.u32 %v4562, %v4563
        %v4565 = vsel %vm1069, %v4560, %v4564
        %v4566 = vrot.slane %v4203, 1
        %v4567 = vrot.slane %v4199, 2
        %v4568 = vor.u32 %v4566, %v4567
        %v4569 = vsel %vm1069, %v4564, %v4568
        %v4570 = vrot.slane %v4211, 1
        %v4571 = vrot.slane %v4207, 2
        %v4572 = vor.u32 %v4570, %v4571
        %v4573 = vsel %vm1069, %v4568, %v4572
        %v4574 = vrot.slane %v4219, 1
        %v4575 = vrot.slane %v4215, 2
        %v4576 = vor.u32 %v4574, %v4575
        %v4577 = vsel %vm1069, %v4572, %v4576
        %v4578 = vrot.slane %v4227, 1
        %v4579 = vrot.slane %v4223, 2
        %v4580 = vor.u32 %v4578, %v4579
        %v4581 = vsel %vm1069, %v4576, %v4580
        %v4582 = vrot.slane %v4235, 1
        %v4583 = vrot.slane %v4231, 2
        %v4584 = vor.u32 %v4582, %v4583
        %v4585 = vsel %vm1069, %v4580, %v4584
        %v4586 = vrot.slane %v4243, 1
        %v4587 = vrot.slane %v4239, 2
        %v4588 = vor.u32 %v4586, %v4587
        %v4589 = vsel %vm1069, %v4584, %v4588
        %v4590 = vrot.slane %v4251, 1
        %v4591 = vrot.slane %v4247, 2
        %v4592 = vor.u32 %v4590, %v4591
        %v4593 = vsel %vm1069, %v4588, %v4592
        %v4594 = vrot.slane %v4259, 1
        %v4595 = vrot.slane %v4255, 2
        %v4596 = vor.u32 %v4594, %v4595
        %v4597 = vsel %vm1069, %v4592, %v4596
        %v4598 = vrot.slane %v4267, 1
        %v4599 = vrot.slane %v4263, 2
        %v4600 = vor.u32 %v4598, %v4599
        %v4601 = vsel %vm1069, %v4596, %v4600
        %v4602 = vrot.slane %v4275, 1
        %v4603 = vrot.slane %v4271, 2
        %v4604 = vor.u32 %v4602, %v4603
        %v4605 = vsel %vm1069, %v4600, %v4604
        %v4606 = vrot.slane %v4283, 1
        %v4607 = vrot.slane %v4279, 2
        %v4608 = vor.u32 %v4606, %v4607
        %v4609 = vsel %vm1069, %v4604, %v4608
        %v4610 = vrot.slane %v4291, 1
        %v4611 = vrot.slane %v4287, 2
        %v4612 = vor.u32 %v4610, %v4611
        %v4613 = vsel %vm1069, %v4608, %v4612
        %v4614 = vrot.slane %v4299, 1
        %v4615 = vrot.slane %v4295, 2
        %v4616 = vor.u32 %v4614, %v4615
        %v4617 = vsel %vm1069, %v4612, %v4616
        %v4618 = vrot.slane %v4307, 1
        %v4619 = vrot.slane %v4303, 2
        %v4620 = vor.u32 %v4618, %v4619
        %v4621 = vsel %vm1069, %v4616, %v4620
        %v4622 = vrot.slane %v4315, 1
        %v4623 = vrot.slane %v4311, 2
        %v4624 = vor.u32 %v4622, %v4623
        %v4625 = vsel %vm1069, %v4620, %v4624
        %v4626 = vrot.slane %v4323, 1
        %v4627 = vrot.slane %v4319, 2
        %v4628 = vor.u32 %v4626, %v4627
        %v4629 = vsel %vm1069, %v4624, %v4628
        %v4630 = vrot.slane %v4331, 1
        %v4631 = vrot.slane %v4327, 2
        %v4632 = vor.u32 %v4630, %v4631
        %v4633 = vsel %vm1069, %v4628, %v4632
        %v4634 = vrot.slane %v4339, 1
        %v4635 = vrot.slane %v4335, 2
        %v4636 = vor.u32 %v4634, %v4635
        %v4637 = vsel %vm1069, %v4632, %v4636
        %v4638 = vrot.slane %v4347, 1
        %v4639 = vrot.slane %v4343, 2
        %v4640 = vor.u32 %v4638, %v4639
        %v4641 = vsel %vm1069, %v4636, %v4640
        %v4643 = vshrl.u32 %v4500, 16
        %v4645 = vrot.slane %v4643, 1
        %v4646 = vshll.u32 %v4500, 16
        %v4648 = vrot.slane %v4646, 2
        %v4649 = vor.u32 %v4645, %v4648
        %v4650 = vsel %vm1069, %v4640, %v4649
        %v4652 = vshrl.u32 %v4501, 16
        %v4654 = vrot.slane %v4652, 1
        %v4655 = vshll.u32 %v4501, 16
        %v4657 = vrot.slane %v4655, 2
        %v4658 = vor.u32 %v4654, %v4657
        %v4659 = vsel %vm1069, %v4649, %v4658
        %v4661 = vshrl.u32 %v4517, 16
        %v4663 = vrot.slane %v4661, 1
        %v4664 = vshll.u32 %v4517, 16
        %v4666 = vrot.slane %v4664, 2
        %v4667 = vor.u32 %v4663, %v4666
        %v4668 = vsel %vm1069, %v4658, %v4667
        %v4702 = vunpack.c.l.b16 %v3891
        %v4703 = vpack.c.b16 %v3969, %v4702
        %v4704 = vrot.slane %v4703, 2
        %v4705 = vrot.slane %v4031, 2
        %v4706 = vsel %vm1256, %v4704, %v4705
        %v4707 = vrot.slane %v4032, 2
        %v4708 = vsel %vm1256, %v4705, %v4707
        %v4709 = vrot.slane %v4033, 2
        %v4710 = vsel %vm1256, %v4707, %v4709
        %v4711 = vrot.slane %v4034, 2
        %v4712 = vsel %vm1256, %v4709, %v4711
        %v4713 = vrot.slane %v4035, 2
        %v4714 = vsel %vm1256, %v4711, %v4713
        %v4715 = vrot.slane %v4036, 2
        %v4716 = vsel %vm1256, %v4713, %v4715
        %v4717 = vrot.slane %v4037, 2
        %v4718 = vsel %vm1256, %v4715, %v4717
        %v4719 = vrot.slane %v4038, 2
        %v4720 = vsel %vm1256, %v4717, %v4719
        %v4721 = vrot.slane %v4039, 2
        %v4722 = vsel %vm1256, %v4719, %v4721
        %v4723 = vrot.slane %v4040, 2
        %v4724 = vsel %vm1256, %v4721, %v4723
        %v4725 = vrot.slane %v4041, 2
        %v4726 = vsel %vm1256, %v4723, %v4725
        %v4727 = vrot.slane %v4042, 2
        %v4728 = vsel %vm1256, %v4725, %v4727
        %v4729 = vrot.slane %v4043, 2
        %v4730 = vsel %vm1256, %v4727, %v4729
        %v4731 = vrot.slane %v4044, 2
        %v4732 = vsel %vm1256, %v4729, %v4731
        %v4733 = vrot.slane %v4045, 2
        %v4734 = vsel %vm1256, %v4731, %v4733
        %v4735 = vrot.slane %v4046, 2
        %v4736 = vsel %vm1256, %v4733, %v4735
        %v4737 = vrot.slane %v4047, 2
        %v4738 = vsel %vm1256, %v4735, %v4737
        %v4739 = vrot.slane %v4048, 2
        %v4740 = vsel %vm1256, %v4737, %v4739
        %v4741 = vrot.slane %v4049, 2
        %v4742 = vsel %vm1256, %v4739, %v4741
        %v4743 = vrot.slane %v4050, 2
        %v4744 = vsel %vm1256, %v4741, %v4743
        %v4745 = vrot.slane %v4051, 2
        %v4746 = vsel %vm1256, %v4743, %v4745
        %v4747 = vrot.slane %v4052, 2
        %v4748 = vsel %vm1256, %v4745, %v4747
        %v4749 = vrot.slane %v4053, 2
        %v4750 = vsel %vm1256, %v4747, %v4749
        %v4751 = vrot.slane %v4054, 2
        %v4752 = vsel %vm1256, %v4749, %v4751
        %v4753 = vrot.slane %v4055, 2
        %v4754 = vsel %vm1256, %v4751, %v4753
        %v4755 = vrot.slane %v4056, 2
        %v4756 = vsel %vm1256, %v4753, %v4755
        %v4757 = vrot.slane %v4057, 2
        %v4758 = vsel %vm1256, %v4755, %v4757
        %v4759 = vrot.slane %v4058, 2
        %v4760 = vsel %vm1256, %v4757, %v4759
        %v4761 = vrot.slane %v4059, 2
        %v4762 = vsel %vm1256, %v4759, %v4761
        %v4763 = vrot.slane %v4500, 2
        %v4764 = vsel %vm1256, %v4761, %v4763
        %v4765 = vrot.slane %v4501, 2
        %v4766 = vsel %vm1256, %v4763, %v4765
        %v4767 = vrot.slane %v4517, 2
        %v4768 = vsel %vm1256, %v4765, %v4767
        %v4807 = vunpack.c.l.b16 %v3892
        %v4808 = vunpack.c.l.b16 %v3893
        %v4809 = vunpack.c.l.b16 %v3894
        %v4810 = vunpack.c.l.b16 %v3895
        %v4811 = vunpack.c.l.b16 %v3896
        %v4812 = vunpack.c.l.b16 %v3897
        %v4813 = vpack.c.b16 %v3973, %v4807
        %v4814 = vpack.c.b16 %v4809, %v4808
        %v4815 = vpack.c.b16 %v4811, %v4810
        %v4816 = vpack.c.b16 %v4812, %v4812
        %v4817 = vrot.slane %v4813, 2
        %v4818 = vsel %vm1256, %v4817, %v4709
        %v4819 = vrot.slane %v4814, 2
        %v4820 = vsel %vm1256, %v4765, %v4819
        %v4821 = vrot.slane %v4815, 2
        %v4822 = vsel %vm1256, %v4819, %v4821
        %v4823 = vrot.slane %v4816, 2
        %v4824 = vsel %vm1256, %v4821, %v4823
        %v4830 = vunpack.c.l.b16 %v3898
        %v4831 = vpack.c.b16 %v4830, %v4830
        %v4833 = vshrl.u32 %v4813, 16
        %v4835 = vrot.slane %v4833, 2
        %v4836 = vshll.u32 %v4813, 16
        %v4838 = vrot.slane %v4836, 3
        %v4839 = vor.u32 %v4835, %v4838
        %v4840 = vrot.slane %v4139, 2
        %v4841 = vrot.slane %v4135, 3
        %v4842 = vor.u32 %v4840, %v4841
        %v4843 = vsel %vm1385, %v4839, %v4842
        %v4844 = vrot.slane %v4147, 2
        %v4845 = vrot.slane %v4143, 3
        %v4846 = vor.u32 %v4844, %v4845
        %v4847 = vsel %vm1385, %v4842, %v4846
        %v4848 = vrot.slane %v4155, 2
        %v4849 = vrot.slane %v4151, 3
        %v4850 = vor.u32 %v4848, %v4849
        %v4851 = vsel %vm1385, %v4846, %v4850
        %v4852 = vrot.slane %v4163, 2
        %v4853 = vrot.slane %v4159, 3
        %v4854 = vor.u32 %v4852, %v4853
        %v4855 = vsel %vm1385, %v4850, %v4854
        %v4856 = vrot.slane %v4171, 2
        %v4857 = vrot.slane %v4167, 3
        %v4858 = vor.u32 %v4856, %v4857
        %v4859 = vsel %vm1385, %v4854, %v4858
        %v4860 = vrot.slane %v4179, 2
        %v4861 = vrot.slane %v4175, 3
        %v4862 = vor.u32 %v4860, %v4861
        %v4863 = vsel %vm1385, %v4858, %v4862
        %v4864 = vrot.slane %v4187, 2
        %v4865 = vrot.slane %v4183, 3
        %v4866 = vor.u32 %v4864, %v4865
        %v4867 = vsel %vm1385, %v4862, %v4866
        %v4868 = vrot.slane %v4195, 2
        %v4869 = vrot.slane %v4191, 3
        %v4870 = vor.u32 %v4868, %v4869
        %v4871 = vsel %vm1385, %v4866, %v4870
        %v4872 = vrot.slane %v4203, 2
        %v4873 = vrot.slane %v4199, 3
        %v4874 = vor.u32 %v4872, %v4873
        %v4875 = vsel %vm1385, %v4870, %v4874
        %v4876 = vrot.slane %v4211, 2
        %v4877 = vrot.slane %v4207, 3
        %v4878 = vor.u32 %v4876, %v4877
        %v4879 = vsel %vm1385, %v4874, %v4878
        %v4880 = vrot.slane %v4219, 2
        %v4881 = vrot.slane %v4215, 3
        %v4882 = vor.u32 %v4880, %v4881
        %v4883 = vsel %vm1385, %v4878, %v4882
        %v4884 = vrot.slane %v4227, 2
        %v4885 = vrot.slane %v4223, 3
        %v4886 = vor.u32 %v4884, %v4885
        %v4887 = vsel %vm1385, %v4882, %v4886
        %v4888 = vrot.slane %v4235, 2
        %v4889 = vrot.slane %v4231, 3
        %v4890 = vor.u32 %v4888, %v4889
        %v4891 = vsel %vm1385, %v4886, %v4890
        %v4892 = vrot.slane %v4243, 2
        %v4893 = vrot.slane %v4239, 3
        %v4894 = vor.u32 %v4892, %v4893
        %v4895 = vsel %vm1385, %v4890, %v4894
        %v4896 = vrot.slane %v4251, 2
        %v4897 = vrot.slane %v4247, 3
        %v4898 = vor.u32 %v4896, %v4897
        %v4899 = vsel %vm1385, %v4894, %v4898
        %v4900 = vrot.slane %v4259, 2
        %v4901 = vrot.slane %v4255, 3
        %v4902 = vor.u32 %v4900, %v4901
        %v4903 = vsel %vm1385, %v4898, %v4902
        %v4904 = vrot.slane %v4267, 2
        %v4905 = vrot.slane %v4263, 3
        %v4906 = vor.u32 %v4904, %v4905
        %v4907 = vsel %vm1385, %v4902, %v4906
        %v4908 = vrot.slane %v4275, 2
        %v4909 = vrot.slane %v4271, 3
        %v4910 = vor.u32 %v4908, %v4909
        %v4911 = vsel %vm1385, %v4906, %v4910
        %v4912 = vrot.slane %v4283, 2
        %v4913 = vrot.slane %v4279, 3
        %v4914 = vor.u32 %v4912, %v4913
        %v4915 = vsel %vm1385, %v4910, %v4914
        %v4916 = vrot.slane %v4291, 2
        %v4917 = vrot.slane %v4287, 3
        %v4918 = vor.u32 %v4916, %v4917
        %v4919 = vsel %vm1385, %v4914, %v4918
        %v4920 = vrot.slane %v4299, 2
        %v4921 = vrot.slane %v4295, 3
        %v4922 = vor.u32 %v4920, %v4921
        %v4923 = vsel %vm1385, %v4918, %v4922
        %v4924 = vrot.slane %v4307, 2
        %v4925 = vrot.slane %v4303, 3
        %v4926 = vor.u32 %v4924, %v4925
        %v4927 = vsel %vm1385, %v4922, %v4926
        %v4928 = vrot.slane %v4315, 2
        %v4929 = vrot.slane %v4311, 3
        %v4930 = vor.u32 %v4928, %v4929
        %v4931 = vsel %vm1385, %v4926, %v4930
        %v4932 = vrot.slane %v4323, 2
        %v4933 = vrot.slane %v4319, 3
        %v4934 = vor.u32 %v4932, %v4933
        %v4935 = vsel %vm1385, %v4930, %v4934
        %v4936 = vrot.slane %v4331, 2
        %v4937 = vrot.slane %v4327, 3
        %v4938 = vor.u32 %v4936, %v4937
        %v4939 = vsel %vm1385, %v4934, %v4938
        %v4940 = vrot.slane %v4339, 2
        %v4941 = vrot.slane %v4335, 3
        %v4942 = vor.u32 %v4940, %v4941
        %v4943 = vsel %vm1385, %v4938, %v4942
        %v4944 = vrot.slane %v4347, 2
        %v4945 = vrot.slane %v4343, 3
        %v4946 = vor.u32 %v4944, %v4945
        %v4947 = vsel %vm1385, %v4942, %v4946
        %v4948 = vrot.slane %v4643, 2
        %v4949 = vrot.slane %v4646, 3
        %v4950 = vor.u32 %v4948, %v4949
        %v4951 = vsel %vm1385, %v4946, %v4950
        %v4952 = vrot.slane %v4652, 2
        %v4953 = vrot.slane %v4655, 3
        %v4954 = vor.u32 %v4952, %v4953
        %v4955 = vsel %vm1385, %v4950, %v4954
        %v4957 = vshrl.u32 %v4814, 16
        %v4959 = vrot.slane %v4957, 2
        %v4960 = vshll.u32 %v4814, 16
        %v4962 = vrot.slane %v4960, 3
        %v4963 = vor.u32 %v4959, %v4962
        %v4964 = vsel %vm1385, %v4954, %v4963
        %v4966 = vshrl.u32 %v4815, 16
        %v4968 = vrot.slane %v4966, 2
        %v4969 = vshll.u32 %v4815, 16
        %v4971 = vrot.slane %v4969, 3
        %v4972 = vor.u32 %v4968, %v4971
        %v4973 = vsel %vm1385, %v4963, %v4972
        %v4975 = vshrl.u32 %v4831, 16
        %v4977 = vrot.slane %v4975, 2
        %v4978 = vshll.u32 %v4831, 16
        %v4980 = vrot.slane %v4978, 3
        %v4981 = vor.u32 %v4977, %v4980
        %v4982 = vsel %vm1385, %v4972, %v4981
        %v5016 = vunpack.c.l.b16 %v3899
        %v5017 = vpack.c.b16 %v3973, %v5016
        %v5018 = vrot.slane %v5017, 3
        %v5019 = vrot.slane %v4033, 3
        %v5020 = vsel %vm1572, %v5018, %v5019
        %v5021 = vrot.slane %v4034, 3
        %v5022 = vsel %vm1572, %v5019, %v5021
        %v5023 = vrot.slane %v4035, 3
        %v5024 = vsel %vm1572, %v5021, %v5023
        %v5025 = vrot.slane %v4036, 3
        %v5026 = vsel %vm1572, %v5023, %v5025
        %v5027 = vrot.slane %v4037, 3
        %v5028 = vsel %vm1572, %v5025, %v5027
        %v5029 = vrot.slane %v4038, 3
        %v5030 = vsel %vm1572, %v5027, %v5029
        %v5031 = vrot.slane %v4039, 3
        %v5032 = vsel %vm1572, %v5029, %v5031
        %v5033 = vrot.slane %v4040, 3
        %v5034 = vsel %vm1572, %v5031, %v5033
        %v5035 = vrot.slane %v4041, 3
        %v5036 = vsel %vm1572, %v5033, %v5035
        %v5037 = vrot.slane %v4042, 3
        %v5038 = vsel %vm1572, %v5035, %v5037
        %v5039 = vrot.slane %v4043, 3
        %v5040 = vsel %vm1572, %v5037, %v5039
        %v5041 = vrot.slane %v4044, 3
        %v5042 = vsel %vm1572, %v5039, %v5041
        %v5043 = vrot.slane %v4045, 3
        %v5044 = vsel %vm1572, %v5041, %v5043
        %v5045 = vrot.slane %v4046, 3
        %v5046 = vsel %vm1572, %v5043, %v5045
        %v5047 = vrot.slane %v4047, 3
        %v5048 = vsel %vm1572, %v5045, %v5047
        %v5049 = vrot.slane %v4048, 3
        %v5050 = vsel %vm1572, %v5047, %v5049
        %v5051 = vrot.slane %v4049, 3
        %v5052 = vsel %vm1572, %v5049, %v5051
        %v5053 = vrot.slane %v4050, 3
        %v5054 = vsel %vm1572, %v5051, %v5053
        %v5055 = vrot.slane %v4051, 3
        %v5056 = vsel %vm1572, %v5053, %v5055
        %v5057 = vrot.slane %v4052, 3
        %v5058 = vsel %vm1572, %v5055, %v5057
        %v5059 = vrot.slane %v4053, 3
        %v5060 = vsel %vm1572, %v5057, %v5059
        %v5061 = vrot.slane %v4054, 3
        %v5062 = vsel %vm1572, %v5059, %v5061
        %v5063 = vrot.slane %v4055, 3
        %v5064 = vsel %vm1572, %v5061, %v5063
        %v5065 = vrot.slane %v4056, 3
        %v5066 = vsel %vm1572, %v5063, %v5065
        %v5067 = vrot.slane %v4057, 3
        %v5068 = vsel %vm1572, %v5065, %v5067
        %v5069 = vrot.slane %v4058, 3
        %v5070 = vsel %vm1572, %v5067, %v5069
        %v5071 = vrot.slane %v4059, 3
        %v5072 = vsel %vm1572, %v5069, %v5071
        %v5073 = vrot.slane %v4500, 3
        %v5074 = vsel %vm1572, %v5071, %v5073
        %v5075 = vrot.slane %v4501, 3
        %v5076 = vsel %vm1572, %v5073, %v5075
        %v5077 = vrot.slane %v4814, 3
        %v5078 = vsel %vm1572, %v5075, %v5077
        %v5079 = vrot.slane %v4815, 3
        %v5080 = vsel %vm1572, %v5077, %v5079
        %v5081 = vrot.slane %v4831, 3
        %v5082 = vsel %vm1572, %v5079, %v5081
        %5115 = vmatpush.bf16.msra.mxu0 %v1968
        %5116 = vmatpush.bf16.msra.mxu0 %v1967
        %5117 = vmatpush.bf16.msra.mxu0 %v1966
        %5118 = vmatpush.bf16.msra.mxu0 %v1965
        %5119 = vmatpush.bf16.msra.mxu0 %v1964
        %5120 = vmatpush.bf16.msra.mxu0 %v1963
        %5121 = vmatpush.bf16.msra.mxu0 %v1962
        %5122 = vmatpush.bf16.msra.mxu0 %v1961
        %5123 = vmatmul.bf16.gmra.mxu0 %v4028
        %v5124 = vpop.f32.mrf.mxu0
        %v5125 = vadd.f32 %v1671, %v5124
        %v5126 = vpop.f32.mrf.mxu0
        %v5127 = vadd.f32 %v1671, %v5126
        %5128 = vmatmul.bf16.gmra.mxu0 %v4029
        %v5129 = vpop.f32.mrf.mxu0
        %v5130 = vadd.f32 %v1671, %v5129
        %v5131 = vpop.f32.mrf.mxu0
        %v5132 = vadd.f32 %v1671, %v5131
        %5133 = vmatmul.bf16.gmra.mxu0 %v4030
        %v5134 = vpop.f32.mrf.mxu0
        %v5135 = vadd.f32 %v1671, %v5134
        %v5136 = vpop.f32.mrf.mxu0
        %v5137 = vadd.f32 %v1671, %v5136
        %5138 = vmatmul.bf16.gmra.mxu0 %v4031
        %v5139 = vpop.f32.mrf.mxu0
        %v5140 = vadd.f32 %v1671, %v5139
        %v5141 = vpop.f32.mrf.mxu0
        %v5142 = vadd.f32 %v1671, %v5141
        %5143 = vmatmul.bf16.gmra.mxu0 %v4032
        %v5144 = vpop.f32.mrf.mxu0
        %v5145 = vadd.f32 %v1671, %v5144
        %v5146 = vpop.f32.mrf.mxu0
        %v5147 = vadd.f32 %v1671, %v5146
        %5148 = vmatmul.bf16.gmra.mxu0 %v4033
        %v5149 = vpop.f32.mrf.mxu0
        %v5150 = vadd.f32 %v1671, %v5149
        %v5151 = vpop.f32.mrf.mxu0
        %v5152 = vadd.f32 %v1671, %v5151
        %5153 = vmatmul.bf16.gmra.mxu0 %v4034
        %v5154 = vpop.f32.mrf.mxu0
        %v5155 = vadd.f32 %v1671, %v5154
        %v5156 = vpop.f32.mrf.mxu0
        %v5157 = vadd.f32 %v1671, %v5156
        %5158 = vmatmul.bf16.gmra.mxu0 %v4035
        %v5159 = vpop.f32.mrf.mxu0
        %v5160 = vadd.f32 %v1671, %v5159
        %v5161 = vpop.f32.mrf.mxu0
        %v5162 = vadd.f32 %v1671, %v5161
        %5163 = vmatmul.bf16.gmra.mxu0 %v4036
        %v5164 = vpop.f32.mrf.mxu0
        %v5165 = vadd.f32 %v1671, %v5164
        %v5166 = vpop.f32.mrf.mxu0
        %v5167 = vadd.f32 %v1671, %v5166
        %5168 = vmatmul.bf16.gmra.mxu0 %v4037
        %v5169 = vpop.f32.mrf.mxu0
        %v5170 = vadd.f32 %v1671, %v5169
        %v5171 = vpop.f32.mrf.mxu0
        %v5172 = vadd.f32 %v1671, %v5171
        %5173 = vmatmul.bf16.gmra.mxu0 %v4038
        %v5174 = vpop.f32.mrf.mxu0
        %v5175 = vadd.f32 %v1671, %v5174
        %v5176 = vpop.f32.mrf.mxu0
        %v5177 = vadd.f32 %v1671, %v5176
        %5178 = vmatmul.bf16.gmra.mxu0 %v4039
        %v5179 = vpop.f32.mrf.mxu0
        %v5180 = vadd.f32 %v1671, %v5179
        %v5181 = vpop.f32.mrf.mxu0
        %v5182 = vadd.f32 %v1671, %v5181
        %5183 = vmatmul.bf16.gmra.mxu0 %v4040
        %v5184 = vpop.f32.mrf.mxu0
        %v5185 = vadd.f32 %v1671, %v5184
        %v5186 = vpop.f32.mrf.mxu0
        %v5187 = vadd.f32 %v1671, %v5186
        %5188 = vmatmul.bf16.gmra.mxu0 %v4041
        %v5189 = vpop.f32.mrf.mxu0
        %v5190 = vadd.f32 %v1671, %v5189
        %v5191 = vpop.f32.mrf.mxu0
        %v5192 = vadd.f32 %v1671, %v5191
        %5193 = vmatmul.bf16.gmra.mxu0 %v4042
        %v5194 = vpop.f32.mrf.mxu0
        %v5195 = vadd.f32 %v1671, %v5194
        %v5196 = vpop.f32.mrf.mxu0
        %v5197 = vadd.f32 %v1671, %v5196
        %5198 = vmatmul.bf16.gmra.mxu0 %v4043
        %v5199 = vpop.f32.mrf.mxu0
        %v5200 = vadd.f32 %v1671, %v5199
        %v5201 = vpop.f32.mrf.mxu0
        %v5202 = vadd.f32 %v1671, %v5201
        %5203 = vmatmul.bf16.gmra.mxu0 %v4044
        %v5204 = vpop.f32.mrf.mxu0
        %v5205 = vadd.f32 %v1671, %v5204
        %v5206 = vpop.f32.mrf.mxu0
        %v5207 = vadd.f32 %v1671, %v5206
        %5208 = vmatmul.bf16.gmra.mxu0 %v4045
        %v5209 = vpop.f32.mrf.mxu0
        %v5210 = vadd.f32 %v1671, %v5209
        %v5211 = vpop.f32.mrf.mxu0
        %v5212 = vadd.f32 %v1671, %v5211
        %5213 = vmatmul.bf16.gmra.mxu0 %v4046
        %v5214 = vpop.f32.mrf.mxu0
        %v5215 = vadd.f32 %v1671, %v5214
        %v5216 = vpop.f32.mrf.mxu0
        %v5217 = vadd.f32 %v1671, %v5216
        %5218 = vmatmul.bf16.gmra.mxu0 %v4047
        %v5219 = vpop.f32.mrf.mxu0
        %v5220 = vadd.f32 %v1671, %v5219
        %v5221 = vpop.f32.mrf.mxu0
        %v5222 = vadd.f32 %v1671, %v5221
        %5223 = vmatmul.bf16.gmra.mxu0 %v4048
        %v5224 = vpop.f32.mrf.mxu0
        %v5225 = vadd.f32 %v1671, %v5224
        %v5226 = vpop.f32.mrf.mxu0
        %v5227 = vadd.f32 %v1671, %v5226
        %5228 = vmatmul.bf16.gmra.mxu0 %v4049
        %v5229 = vpop.f32.mrf.mxu0
        %v5230 = vadd.f32 %v1671, %v5229
        %v5231 = vpop.f32.mrf.mxu0
        %v5232 = vadd.f32 %v1671, %v5231
        %5233 = vmatmul.bf16.gmra.mxu0 %v4050
        %v5234 = vpop.f32.mrf.mxu0
        %v5235 = vadd.f32 %v1671, %v5234
        %v5236 = vpop.f32.mrf.mxu0
        %v5237 = vadd.f32 %v1671, %v5236
        %5238 = vmatmul.bf16.gmra.mxu0 %v4051
        %v5239 = vpop.f32.mrf.mxu0
        %v5240 = vadd.f32 %v1671, %v5239
        %v5241 = vpop.f32.mrf.mxu0
        %v5242 = vadd.f32 %v1671, %v5241
        %5243 = vmatmul.bf16.gmra.mxu0 %v4052
        %v5244 = vpop.f32.mrf.mxu0
        %v5245 = vadd.f32 %v1671, %v5244
        %v5246 = vpop.f32.mrf.mxu0
        %v5247 = vadd.f32 %v1671, %v5246
        %5248 = vmatmul.bf16.gmra.mxu0 %v4053
        %v5249 = vpop.f32.mrf.mxu0
        %v5250 = vadd.f32 %v1671, %v5249
        %v5251 = vpop.f32.mrf.mxu0
        %v5252 = vadd.f32 %v1671, %v5251
        %5253 = vmatmul.bf16.gmra.mxu0 %v4054
        %v5254 = vpop.f32.mrf.mxu0
        %v5255 = vadd.f32 %v1671, %v5254
        %v5256 = vpop.f32.mrf.mxu0
        %v5257 = vadd.f32 %v1671, %v5256
        %5258 = vmatmul.bf16.gmra.mxu0 %v4055
        %v5259 = vpop.f32.mrf.mxu0
        %v5260 = vadd.f32 %v1671, %v5259
        %v5261 = vpop.f32.mrf.mxu0
        %v5262 = vadd.f32 %v1671, %v5261
        %5263 = vmatmul.bf16.gmra.mxu0 %v4056
        %v5264 = vpop.f32.mrf.mxu0
        %v5265 = vadd.f32 %v1671, %v5264
        %v5266 = vpop.f32.mrf.mxu0
        %v5267 = vadd.f32 %v1671, %v5266
        %5268 = vmatmul.bf16.gmra.mxu0 %v4057
        %v5269 = vpop.f32.mrf.mxu0
        %v5270 = vadd.f32 %v1671, %v5269
        %v5271 = vpop.f32.mrf.mxu0
        %v5272 = vadd.f32 %v1671, %v5271
        %5273 = vmatmul.bf16.gmra.mxu0 %v4058
        %v5274 = vpop.f32.mrf.mxu0
        %v5275 = vadd.f32 %v1671, %v5274
        %v5276 = vpop.f32.mrf.mxu0
        %v5277 = vadd.f32 %v1671, %v5276
        %5278 = vmatmul.bf16.gmra.mxu0 %v4059
        %v5279 = vpop.f32.mrf.mxu0
        %v5280 = vadd.f32 %v1671, %v5279
        %v5281 = vpop.f32.mrf.mxu0
        %v5282 = vadd.f32 %v1671, %v5281
        %5283 = vdwg.mxu0
        %5284 = vmatpush.bf16.msra.mxu0 %v1976
        %5285 = vmatpush.bf16.msra.mxu0 %v1975
        %5286 = vmatpush.bf16.msra.mxu0 %v1974
        %5287 = vmatpush.bf16.msra.mxu0 %v1973
        %5288 = vmatpush.bf16.msra.mxu0 %v1972
        %5289 = vmatpush.bf16.msra.mxu0 %v1971
        %5290 = vmatpush.bf16.msra.mxu0 %v1970
        %5291 = vmatpush.bf16.msra.mxu0 %v1969
        %5292 = vmatmul.bf16.gmra.mxu0 %v4106
        %v5293 = vpop.f32.mrf.mxu0
        %v5294 = vadd.f32 %v5125, %v5293
        %v5295 = vpop.f32.mrf.mxu0
        %v5296 = vadd.f32 %v5127, %v5295
        %5297 = vmatmul.bf16.gmra.mxu0 %v4114
        %v5298 = vpop.f32.mrf.mxu0
        %v5299 = vadd.f32 %v5130, %v5298
        %v5300 = vpop.f32.mrf.mxu0
        %v5301 = vadd.f32 %v5132, %v5300
        %5302 = vmatmul.bf16.gmra.mxu0 %v4122
        %v5303 = vpop.f32.mrf.mxu0
        %v5304 = vadd.f32 %v5135, %v5303
        %v5305 = vpop.f32.mrf.mxu0
        %v5306 = vadd.f32 %v5137, %v5305
        %5307 = vmatmul.bf16.gmra.mxu0 %v4130
        %v5308 = vpop.f32.mrf.mxu0
        %v5309 = vadd.f32 %v5140, %v5308
        %v5310 = vpop.f32.mrf.mxu0
        %v5311 = vadd.f32 %v5142, %v5310
        %5312 = vmatmul.bf16.gmra.mxu0 %v4138
        %v5313 = vpop.f32.mrf.mxu0
        %v5314 = vadd.f32 %v5145, %v5313
        %v5315 = vpop.f32.mrf.mxu0
        %v5316 = vadd.f32 %v5147, %v5315
        %5317 = vmatmul.bf16.gmra.mxu0 %v4146
        %v5318 = vpop.f32.mrf.mxu0
        %v5319 = vadd.f32 %v5150, %v5318
        %v5320 = vpop.f32.mrf.mxu0
        %v5321 = vadd.f32 %v5152, %v5320
        %5322 = vmatmul.bf16.gmra.mxu0 %v4154
        %v5323 = vpop.f32.mrf.mxu0
        %v5324 = vadd.f32 %v5155, %v5323
        %v5325 = vpop.f32.mrf.mxu0
        %v5326 = vadd.f32 %v5157, %v5325
        %5327 = vmatmul.bf16.gmra.mxu0 %v4162
        %v5328 = vpop.f32.mrf.mxu0
        %v5329 = vadd.f32 %v5160, %v5328
        %v5330 = vpop.f32.mrf.mxu0
        %v5331 = vadd.f32 %v5162, %v5330
        %5332 = vmatmul.bf16.gmra.mxu0 %v4170
        %v5333 = vpop.f32.mrf.mxu0
        %v5334 = vadd.f32 %v5165, %v5333
        %v5335 = vpop.f32.mrf.mxu0
        %v5336 = vadd.f32 %v5167, %v5335
        %5337 = vmatmul.bf16.gmra.mxu0 %v4178
        %v5338 = vpop.f32.mrf.mxu0
        %v5339 = vadd.f32 %v5170, %v5338
        %v5340 = vpop.f32.mrf.mxu0
        %v5341 = vadd.f32 %v5172, %v5340
        %5342 = vmatmul.bf16.gmra.mxu0 %v4186
        %v5343 = vpop.f32.mrf.mxu0
        %v5344 = vadd.f32 %v5175, %v5343
        %v5345 = vpop.f32.mrf.mxu0
        %v5346 = vadd.f32 %v5177, %v5345
        %5347 = vmatmul.bf16.gmra.mxu0 %v4194
        %v5348 = vpop.f32.mrf.mxu0
        %v5349 = vadd.f32 %v5180, %v5348
        %v5350 = vpop.f32.mrf.mxu0
        %v5351 = vadd.f32 %v5182, %v5350
        %5352 = vmatmul.bf16.gmra.mxu0 %v4202
        %v5353 = vpop.f32.mrf.mxu0
        %v5354 = vadd.f32 %v5185, %v5353
        %v5355 = vpop.f32.mrf.mxu0
        %v5356 = vadd.f32 %v5187, %v5355
        %5357 = vmatmul.bf16.gmra.mxu0 %v4210
        %v5358 = vpop.f32.mrf.mxu0
        %v5359 = vadd.f32 %v5190, %v5358
        %v5360 = vpop.f32.mrf.mxu0
        %v5361 = vadd.f32 %v5192, %v5360
        %5362 = vmatmul.bf16.gmra.mxu0 %v4218
        %v5363 = vpop.f32.mrf.mxu0
        %v5364 = vadd.f32 %v5195, %v5363
        %v5365 = vpop.f32.mrf.mxu0
        %v5366 = vadd.f32 %v5197, %v5365
        %5367 = vmatmul.bf16.gmra.mxu0 %v4226
        %v5368 = vpop.f32.mrf.mxu0
        %v5369 = vadd.f32 %v5200, %v5368
        %v5370 = vpop.f32.mrf.mxu0
        %v5371 = vadd.f32 %v5202, %v5370
        %5372 = vmatmul.bf16.gmra.mxu0 %v4234
        %v5373 = vpop.f32.mrf.mxu0
        %v5374 = vadd.f32 %v5205, %v5373
        %v5375 = vpop.f32.mrf.mxu0
        %v5376 = vadd.f32 %v5207, %v5375
        %5377 = vmatmul.bf16.gmra.mxu0 %v4242
        %v5378 = vpop.f32.mrf.mxu0
        %v5379 = vadd.f32 %v5210, %v5378
        %v5380 = vpop.f32.mrf.mxu0
        %v5381 = vadd.f32 %v5212, %v5380
        %5382 = vmatmul.bf16.gmra.mxu0 %v4250
        %v5383 = vpop.f32.mrf.mxu0
        %v5384 = vadd.f32 %v5215, %v5383
        %v5385 = vpop.f32.mrf.mxu0
        %v5386 = vadd.f32 %v5217, %v5385
        %5387 = vmatmul.bf16.gmra.mxu0 %v4258
        %v5388 = vpop.f32.mrf.mxu0
        %v5389 = vadd.f32 %v5220, %v5388
        %v5390 = vpop.f32.mrf.mxu0
        %v5391 = vadd.f32 %v5222, %v5390
        %5392 = vmatmul.bf16.gmra.mxu0 %v4266
        %v5393 = vpop.f32.mrf.mxu0
        %v5394 = vadd.f32 %v5225, %v5393
        %v5395 = vpop.f32.mrf.mxu0
        %v5396 = vadd.f32 %v5227, %v5395
        %5397 = vmatmul.bf16.gmra.mxu0 %v4274
        %v5398 = vpop.f32.mrf.mxu0
        %v5399 = vadd.f32 %v5230, %v5398
        %v5400 = vpop.f32.mrf.mxu0
        %v5401 = vadd.f32 %v5232, %v5400
        %5402 = vmatmul.bf16.gmra.mxu0 %v4282
        %v5403 = vpop.f32.mrf.mxu0
        %v5404 = vadd.f32 %v5235, %v5403
        %v5405 = vpop.f32.mrf.mxu0
        %v5406 = vadd.f32 %v5237, %v5405
        %5407 = vmatmul.bf16.gmra.mxu0 %v4290
        %v5408 = vpop.f32.mrf.mxu0
        %v5409 = vadd.f32 %v5240, %v5408
        %v5410 = vpop.f32.mrf.mxu0
        %v5411 = vadd.f32 %v5242, %v5410
        %5412 = vmatmul.bf16.gmra.mxu0 %v4298
        %v5413 = vpop.f32.mrf.mxu0
        %v5414 = vadd.f32 %v5245, %v5413
        %v5415 = vpop.f32.mrf.mxu0
        %v5416 = vadd.f32 %v5247, %v5415
        %5417 = vmatmul.bf16.gmra.mxu0 %v4306
        %v5418 = vpop.f32.mrf.mxu0
        %v5419 = vadd.f32 %v5250, %v5418
        %v5420 = vpop.f32.mrf.mxu0
        %v5421 = vadd.f32 %v5252, %v5420
        %5422 = vmatmul.bf16.gmra.mxu0 %v4314
        %v5423 = vpop.f32.mrf.mxu0
        %v5424 = vadd.f32 %v5255, %v5423
        %v5425 = vpop.f32.mrf.mxu0
        %v5426 = vadd.f32 %v5257, %v5425
        %5427 = vmatmul.bf16.gmra.mxu0 %v4322
        %v5428 = vpop.f32.mrf.mxu0
        %v5429 = vadd.f32 %v5260, %v5428
        %v5430 = vpop.f32.mrf.mxu0
        %v5431 = vadd.f32 %v5262, %v5430
        %5432 = vmatmul.bf16.gmra.mxu0 %v4330
        %v5433 = vpop.f32.mrf.mxu0
        %v5434 = vadd.f32 %v5265, %v5433
        %v5435 = vpop.f32.mrf.mxu0
        %v5436 = vadd.f32 %v5267, %v5435
        %5437 = vmatmul.bf16.gmra.mxu0 %v4338
        %v5438 = vpop.f32.mrf.mxu0
        %v5439 = vadd.f32 %v5270, %v5438
        %v5440 = vpop.f32.mrf.mxu0
        %v5441 = vadd.f32 %v5272, %v5440
        %5442 = vmatmul.bf16.gmra.mxu0 %v4346
        %v5443 = vpop.f32.mrf.mxu0
        %v5444 = vadd.f32 %v5275, %v5443
        %v5445 = vpop.f32.mrf.mxu0
        %v5446 = vadd.f32 %v5277, %v5445
        %5447 = vmatmul.bf16.gmra.mxu0 %v4354
        %v5448 = vpop.f32.mrf.mxu0
        %v5449 = vadd.f32 %v5280, %v5448
        %v5450 = vpop.f32.mrf.mxu0
        %v5451 = vadd.f32 %v5282, %v5450
        %5452 = vdwg.mxu0
        %5453 = vmatpush.bf16.msra.mxu0 %v1984
        %5454 = vmatpush.bf16.msra.mxu0 %v1983
        %5455 = vmatpush.bf16.msra.mxu0 %v1982
        %5456 = vmatpush.bf16.msra.mxu0 %v1981
        %5457 = vmatpush.bf16.msra.mxu0 %v1980
        %5458 = vmatpush.bf16.msra.mxu0 %v1979
        %5459 = vmatpush.bf16.msra.mxu0 %v1978
        %5460 = vmatpush.bf16.msra.mxu0 %v1977
        %5461 = vmatmul.bf16.gmra.mxu0 %v4392
        %v5462 = vpop.f32.mrf.mxu0
        %v5463 = vadd.f32 %v5294, %v5462
        %v5464 = vpop.f32.mrf.mxu0
        %v5465 = vadd.f32 %v5296, %v5464
        %5466 = vmatmul.bf16.gmra.mxu0 %v4394
        %v5467 = vpop.f32.mrf.mxu0
        %v5468 = vadd.f32 %v5299, %v5467
        %v5469 = vpop.f32.mrf.mxu0
        %v5470 = vadd.f32 %v5301, %v5469
        %5471 = vmatmul.bf16.gmra.mxu0 %v4396
        %v5472 = vpop.f32.mrf.mxu0
        %v5473 = vadd.f32 %v5304, %v5472
        %v5474 = vpop.f32.mrf.mxu0
        %v5475 = vadd.f32 %v5306, %v5474
        %5476 = vmatmul.bf16.gmra.mxu0 %v4398
        %v5477 = vpop.f32.mrf.mxu0
        %v5478 = vadd.f32 %v5309, %v5477
        %v5479 = vpop.f32.mrf.mxu0
        %v5480 = vadd.f32 %v5311, %v5479
        %5481 = vmatmul.bf16.gmra.mxu0 %v4400
        %v5482 = vpop.f32.mrf.mxu0
        %v5483 = vadd.f32 %v5314, %v5482
        %v5484 = vpop.f32.mrf.mxu0
        %v5485 = vadd.f32 %v5316, %v5484
        %5486 = vmatmul.bf16.gmra.mxu0 %v4402
        %v5487 = vpop.f32.mrf.mxu0
        %v5488 = vadd.f32 %v5319, %v5487
        %v5489 = vpop.f32.mrf.mxu0
        %v5490 = vadd.f32 %v5321, %v5489
        %5491 = vmatmul.bf16.gmra.mxu0 %v4404
        %v5492 = vpop.f32.mrf.mxu0
        %v5493 = vadd.f32 %v5324, %v5492
        %v5494 = vpop.f32.mrf.mxu0
        %v5495 = vadd.f32 %v5326, %v5494
        %5496 = vmatmul.bf16.gmra.mxu0 %v4406
        %v5497 = vpop.f32.mrf.mxu0
        %v5498 = vadd.f32 %v5329, %v5497
        %v5499 = vpop.f32.mrf.mxu0
        %v5500 = vadd.f32 %v5331, %v5499
        %5501 = vmatmul.bf16.gmra.mxu0 %v4408
        %v5502 = vpop.f32.mrf.mxu0
        %v5503 = vadd.f32 %v5334, %v5502
        %v5504 = vpop.f32.mrf.mxu0
        %v5505 = vadd.f32 %v5336, %v5504
        %5506 = vmatmul.bf16.gmra.mxu0 %v4410
        %v5507 = vpop.f32.mrf.mxu0
        %v5508 = vadd.f32 %v5339, %v5507
        %v5509 = vpop.f32.mrf.mxu0
        %v5510 = vadd.f32 %v5341, %v5509
        %5511 = vmatmul.bf16.gmra.mxu0 %v4412
        %v5512 = vpop.f32.mrf.mxu0
        %v5513 = vadd.f32 %v5344, %v5512
        %v5514 = vpop.f32.mrf.mxu0
        %v5515 = vadd.f32 %v5346, %v5514
        %5516 = vmatmul.bf16.gmra.mxu0 %v4414
        %v5517 = vpop.f32.mrf.mxu0
        %v5518 = vadd.f32 %v5349, %v5517
        %v5519 = vpop.f32.mrf.mxu0
        %v5520 = vadd.f32 %v5351, %v5519
        %5521 = vmatmul.bf16.gmra.mxu0 %v4416
        %v5522 = vpop.f32.mrf.mxu0
        %v5523 = vadd.f32 %v5354, %v5522
        %v5524 = vpop.f32.mrf.mxu0
        %v5525 = vadd.f32 %v5356, %v5524
        %5526 = vmatmul.bf16.gmra.mxu0 %v4418
        %v5527 = vpop.f32.mrf.mxu0
        %v5528 = vadd.f32 %v5359, %v5527
        %v5529 = vpop.f32.mrf.mxu0
        %v5530 = vadd.f32 %v5361, %v5529
        %5531 = vmatmul.bf16.gmra.mxu0 %v4420
        %v5532 = vpop.f32.mrf.mxu0
        %v5533 = vadd.f32 %v5364, %v5532
        %v5534 = vpop.f32.mrf.mxu0
        %v5535 = vadd.f32 %v5366, %v5534
        %5536 = vmatmul.bf16.gmra.mxu0 %v4422
        %v5537 = vpop.f32.mrf.mxu0
        %v5538 = vadd.f32 %v5369, %v5537
        %v5539 = vpop.f32.mrf.mxu0
        %v5540 = vadd.f32 %v5371, %v5539
        %5541 = vmatmul.bf16.gmra.mxu0 %v4424
        %v5542 = vpop.f32.mrf.mxu0
        %v5543 = vadd.f32 %v5374, %v5542
        %v5544 = vpop.f32.mrf.mxu0
        %v5545 = vadd.f32 %v5376, %v5544
        %5546 = vmatmul.bf16.gmra.mxu0 %v4426
        %v5547 = vpop.f32.mrf.mxu0
        %v5548 = vadd.f32 %v5379, %v5547
        %v5549 = vpop.f32.mrf.mxu0
        %v5550 = vadd.f32 %v5381, %v5549
        %5551 = vmatmul.bf16.gmra.mxu0 %v4428
        %v5552 = vpop.f32.mrf.mxu0
        %v5553 = vadd.f32 %v5384, %v5552
        %v5554 = vpop.f32.mrf.mxu0
        %v5555 = vadd.f32 %v5386, %v5554
        %5556 = vmatmul.bf16.gmra.mxu0 %v4430
        %v5557 = vpop.f32.mrf.mxu0
        %v5558 = vadd.f32 %v5389, %v5557
        %v5559 = vpop.f32.mrf.mxu0
        %v5560 = vadd.f32 %v5391, %v5559
        %5561 = vmatmul.bf16.gmra.mxu0 %v4432
        %v5562 = vpop.f32.mrf.mxu0
        %v5563 = vadd.f32 %v5394, %v5562
        %v5564 = vpop.f32.mrf.mxu0
        %v5565 = vadd.f32 %v5396, %v5564
        %5566 = vmatmul.bf16.gmra.mxu0 %v4434
        %v5567 = vpop.f32.mrf.mxu0
        %v5568 = vadd.f32 %v5399, %v5567
        %v5569 = vpop.f32.mrf.mxu0
        %v5570 = vadd.f32 %v5401, %v5569
        %5571 = vmatmul.bf16.gmra.mxu0 %v4436
        %v5572 = vpop.f32.mrf.mxu0
        %v5573 = vadd.f32 %v5404, %v5572
        %v5574 = vpop.f32.mrf.mxu0
        %v5575 = vadd.f32 %v5406, %v5574
        %5576 = vmatmul.bf16.gmra.mxu0 %v4438
        %v5577 = vpop.f32.mrf.mxu0
        %v5578 = vadd.f32 %v5409, %v5577
        %v5579 = vpop.f32.mrf.mxu0
        %v5580 = vadd.f32 %v5411, %v5579
        %5581 = vmatmul.bf16.gmra.mxu0 %v4440
        %v5582 = vpop.f32.mrf.mxu0
        %v5583 = vadd.f32 %v5414, %v5582
        %v5584 = vpop.f32.mrf.mxu0
        %v5585 = vadd.f32 %v5416, %v5584
        %5586 = vmatmul.bf16.gmra.mxu0 %v4442
        %v5587 = vpop.f32.mrf.mxu0
        %v5588 = vadd.f32 %v5419, %v5587
        %v5589 = vpop.f32.mrf.mxu0
        %v5590 = vadd.f32 %v5421, %v5589
        %5591 = vmatmul.bf16.gmra.mxu0 %v4444
        %v5592 = vpop.f32.mrf.mxu0
        %v5593 = vadd.f32 %v5424, %v5592
        %v5594 = vpop.f32.mrf.mxu0
        %v5595 = vadd.f32 %v5426, %v5594
        %5596 = vmatmul.bf16.gmra.mxu0 %v4446
        %v5597 = vpop.f32.mrf.mxu0
        %v5598 = vadd.f32 %v5429, %v5597
        %v5599 = vpop.f32.mrf.mxu0
        %v5600 = vadd.f32 %v5431, %v5599
        %5601 = vmatmul.bf16.gmra.mxu0 %v4448
        %v5602 = vpop.f32.mrf.mxu0
        %v5603 = vadd.f32 %v5434, %v5602
        %v5604 = vpop.f32.mrf.mxu0
        %v5605 = vadd.f32 %v5436, %v5604
        %5606 = vmatmul.bf16.gmra.mxu0 %v4450
        %v5607 = vpop.f32.mrf.mxu0
        %v5608 = vadd.f32 %v5439, %v5607
        %v5609 = vpop.f32.mrf.mxu0
        %v5610 = vadd.f32 %v5441, %v5609
        %5611 = vmatmul.bf16.gmra.mxu0 %v4452
        %v5612 = vpop.f32.mrf.mxu0
        %v5613 = vadd.f32 %v5444, %v5612
        %v5614 = vpop.f32.mrf.mxu0
        %v5615 = vadd.f32 %v5446, %v5614
        %5616 = vmatmul.bf16.gmra.mxu0 %v4454
        %v5617 = vpop.f32.mrf.mxu0
        %v5618 = vadd.f32 %v5449, %v5617
        %v5619 = vpop.f32.mrf.mxu0
        %v5620 = vadd.f32 %v5451, %v5619
        %5621 = vdwg.mxu0
        %5622 = vmatpush.bf16.msra.mxu0 %v1992
        %5623 = vmatpush.bf16.msra.mxu0 %v1991
        %5624 = vmatpush.bf16.msra.mxu0 %v1990
        %5625 = vmatpush.bf16.msra.mxu0 %v1989
        %5626 = vmatpush.bf16.msra.mxu0 %v1988
        %5627 = vmatpush.bf16.msra.mxu0 %v1987
        %5628 = vmatpush.bf16.msra.mxu0 %v1986
        %5629 = vmatpush.bf16.msra.mxu0 %v1985
        %5630 = vmatmul.bf16.gmra.mxu0 %v4504
        %v5631 = vpop.f32.mrf.mxu0
        %v5632 = vadd.f32 %v5463, %v5631
        %v5633 = vpop.f32.mrf.mxu0
        %v5634 = vadd.f32 %v5465, %v5633
        %5635 = vmatmul.bf16.gmra.mxu0 %v4398
        %v5636 = vpop.f32.mrf.mxu0
        %v5637 = vadd.f32 %v5468, %v5636
        %v5638 = vpop.f32.mrf.mxu0
        %v5639 = vadd.f32 %v5470, %v5638
        %5640 = vmatmul.bf16.gmra.mxu0 %v4400
        %v5641 = vpop.f32.mrf.mxu0
        %v5642 = vadd.f32 %v5473, %v5641
        %v5643 = vpop.f32.mrf.mxu0
        %v5644 = vadd.f32 %v5475, %v5643
        %5645 = vmatmul.bf16.gmra.mxu0 %v4402
        %v5646 = vpop.f32.mrf.mxu0
        %v5647 = vadd.f32 %v5478, %v5646
        %v5648 = vpop.f32.mrf.mxu0
        %v5649 = vadd.f32 %v5480, %v5648
        %5650 = vmatmul.bf16.gmra.mxu0 %v4404
        %v5651 = vpop.f32.mrf.mxu0
        %v5652 = vadd.f32 %v5483, %v5651
        %v5653 = vpop.f32.mrf.mxu0
        %v5654 = vadd.f32 %v5485, %v5653
        %5655 = vmatmul.bf16.gmra.mxu0 %v4406
        %v5656 = vpop.f32.mrf.mxu0
        %v5657 = vadd.f32 %v5488, %v5656
        %v5658 = vpop.f32.mrf.mxu0
        %v5659 = vadd.f32 %v5490, %v5658
        %5660 = vmatmul.bf16.gmra.mxu0 %v4408
        %v5661 = vpop.f32.mrf.mxu0
        %v5662 = vadd.f32 %v5493, %v5661
        %v5663 = vpop.f32.mrf.mxu0
        %v5664 = vadd.f32 %v5495, %v5663
        %5665 = vmatmul.bf16.gmra.mxu0 %v4410
        %v5666 = vpop.f32.mrf.mxu0
        %v5667 = vadd.f32 %v5498, %v5666
        %v5668 = vpop.f32.mrf.mxu0
        %v5669 = vadd.f32 %v5500, %v5668
        %5670 = vmatmul.bf16.gmra.mxu0 %v4412
        %v5671 = vpop.f32.mrf.mxu0
        %v5672 = vadd.f32 %v5503, %v5671
        %v5673 = vpop.f32.mrf.mxu0
        %v5674 = vadd.f32 %v5505, %v5673
        %5675 = vmatmul.bf16.gmra.mxu0 %v4414
        %v5676 = vpop.f32.mrf.mxu0
        %v5677 = vadd.f32 %v5508, %v5676
        %v5678 = vpop.f32.mrf.mxu0
        %v5679 = vadd.f32 %v5510, %v5678
        %5680 = vmatmul.bf16.gmra.mxu0 %v4416
        %v5681 = vpop.f32.mrf.mxu0
        %v5682 = vadd.f32 %v5513, %v5681
        %v5683 = vpop.f32.mrf.mxu0
        %v5684 = vadd.f32 %v5515, %v5683
        %5685 = vmatmul.bf16.gmra.mxu0 %v4418
        %v5686 = vpop.f32.mrf.mxu0
        %v5687 = vadd.f32 %v5518, %v5686
        %v5688 = vpop.f32.mrf.mxu0
        %v5689 = vadd.f32 %v5520, %v5688
        %5690 = vmatmul.bf16.gmra.mxu0 %v4420
        %v5691 = vpop.f32.mrf.mxu0
        %v5692 = vadd.f32 %v5523, %v5691
        %v5693 = vpop.f32.mrf.mxu0
        %v5694 = vadd.f32 %v5525, %v5693
        %5695 = vmatmul.bf16.gmra.mxu0 %v4422
        %v5696 = vpop.f32.mrf.mxu0
        %v5697 = vadd.f32 %v5528, %v5696
        %v5698 = vpop.f32.mrf.mxu0
        %v5699 = vadd.f32 %v5530, %v5698
        %5700 = vmatmul.bf16.gmra.mxu0 %v4424
        %v5701 = vpop.f32.mrf.mxu0
        %v5702 = vadd.f32 %v5533, %v5701
        %v5703 = vpop.f32.mrf.mxu0
        %v5704 = vadd.f32 %v5535, %v5703
        %5705 = vmatmul.bf16.gmra.mxu0 %v4426
        %v5706 = vpop.f32.mrf.mxu0
        %v5707 = vadd.f32 %v5538, %v5706
        %v5708 = vpop.f32.mrf.mxu0
        %v5709 = vadd.f32 %v5540, %v5708
        %5710 = vmatmul.bf16.gmra.mxu0 %v4428
        %v5711 = vpop.f32.mrf.mxu0
        %v5712 = vadd.f32 %v5543, %v5711
        %v5713 = vpop.f32.mrf.mxu0
        %v5714 = vadd.f32 %v5545, %v5713
        %5715 = vmatmul.bf16.gmra.mxu0 %v4430
        %v5716 = vpop.f32.mrf.mxu0
        %v5717 = vadd.f32 %v5548, %v5716
        %v5718 = vpop.f32.mrf.mxu0
        %v5719 = vadd.f32 %v5550, %v5718
        %5720 = vmatmul.bf16.gmra.mxu0 %v4432
        %v5721 = vpop.f32.mrf.mxu0
        %v5722 = vadd.f32 %v5553, %v5721
        %v5723 = vpop.f32.mrf.mxu0
        %v5724 = vadd.f32 %v5555, %v5723
        %5725 = vmatmul.bf16.gmra.mxu0 %v4434
        %v5726 = vpop.f32.mrf.mxu0
        %v5727 = vadd.f32 %v5558, %v5726
        %v5728 = vpop.f32.mrf.mxu0
        %v5729 = vadd.f32 %v5560, %v5728
        %5730 = vmatmul.bf16.gmra.mxu0 %v4436
        %v5731 = vpop.f32.mrf.mxu0
        %v5732 = vadd.f32 %v5563, %v5731
        %v5733 = vpop.f32.mrf.mxu0
        %v5734 = vadd.f32 %v5565, %v5733
        %5735 = vmatmul.bf16.gmra.mxu0 %v4438
        %v5736 = vpop.f32.mrf.mxu0
        %v5737 = vadd.f32 %v5568, %v5736
        %v5738 = vpop.f32.mrf.mxu0
        %v5739 = vadd.f32 %v5570, %v5738
        %5740 = vmatmul.bf16.gmra.mxu0 %v4440
        %v5741 = vpop.f32.mrf.mxu0
        %v5742 = vadd.f32 %v5573, %v5741
        %v5743 = vpop.f32.mrf.mxu0
        %v5744 = vadd.f32 %v5575, %v5743
        %5745 = vmatmul.bf16.gmra.mxu0 %v4442
        %v5746 = vpop.f32.mrf.mxu0
        %v5747 = vadd.f32 %v5578, %v5746
        %v5748 = vpop.f32.mrf.mxu0
        %v5749 = vadd.f32 %v5580, %v5748
        %5750 = vmatmul.bf16.gmra.mxu0 %v4444
        %v5751 = vpop.f32.mrf.mxu0
        %v5752 = vadd.f32 %v5583, %v5751
        %v5753 = vpop.f32.mrf.mxu0
        %v5754 = vadd.f32 %v5585, %v5753
        %5755 = vmatmul.bf16.gmra.mxu0 %v4446
        %v5756 = vpop.f32.mrf.mxu0
        %v5757 = vadd.f32 %v5588, %v5756
        %v5758 = vpop.f32.mrf.mxu0
        %v5759 = vadd.f32 %v5590, %v5758
        %5760 = vmatmul.bf16.gmra.mxu0 %v4448
        %v5761 = vpop.f32.mrf.mxu0
        %v5762 = vadd.f32 %v5593, %v5761
        %v5763 = vpop.f32.mrf.mxu0
        %v5764 = vadd.f32 %v5595, %v5763
        %5765 = vmatmul.bf16.gmra.mxu0 %v4450
        %v5766 = vpop.f32.mrf.mxu0
        %v5767 = vadd.f32 %v5598, %v5766
        %v5768 = vpop.f32.mrf.mxu0
        %v5769 = vadd.f32 %v5600, %v5768
        %5770 = vmatmul.bf16.gmra.mxu0 %v4452
        %v5771 = vpop.f32.mrf.mxu0
        %v5772 = vadd.f32 %v5603, %v5771
        %v5773 = vpop.f32.mrf.mxu0
        %v5774 = vadd.f32 %v5605, %v5773
        %5775 = vmatmul.bf16.gmra.mxu0 %v4506
        %v5776 = vpop.f32.mrf.mxu0
        %v5777 = vadd.f32 %v5608, %v5776
        %v5778 = vpop.f32.mrf.mxu0
        %v5779 = vadd.f32 %v5610, %v5778
        %5780 = vmatmul.bf16.gmra.mxu0 %v4508
        %v5781 = vpop.f32.mrf.mxu0
        %v5782 = vadd.f32 %v5613, %v5781
        %v5783 = vpop.f32.mrf.mxu0
        %v5784 = vadd.f32 %v5615, %v5783
        %5785 = vmatmul.bf16.gmra.mxu0 %v4510
        %v5786 = vpop.f32.mrf.mxu0
        %v5787 = vadd.f32 %v5618, %v5786
        %v5788 = vpop.f32.mrf.mxu0
        %v5789 = vadd.f32 %v5620, %v5788
        %5790 = vdwg.mxu0
        %5791 = vmatpush.bf16.msra.mxu0 %v2000
        %5792 = vmatpush.bf16.msra.mxu0 %v1999
        %5793 = vmatpush.bf16.msra.mxu0 %v1998
        %5794 = vmatpush.bf16.msra.mxu0 %v1997
        %5795 = vmatpush.bf16.msra.mxu0 %v1996
        %5796 = vmatpush.bf16.msra.mxu0 %v1995
        %5797 = vmatpush.bf16.msra.mxu0 %v1994
        %5798 = vmatpush.bf16.msra.mxu0 %v1993
        %5799 = vmatmul.bf16.gmra.mxu0 %v4529
        %v5800 = vpop.f32.mrf.mxu0
        %v5801 = vadd.f32 %v5632, %v5800
        %v5802 = vpop.f32.mrf.mxu0
        %v5803 = vadd.f32 %v5634, %v5802
        %5804 = vmatmul.bf16.gmra.mxu0 %v4533
        %v5805 = vpop.f32.mrf.mxu0
        %v5806 = vadd.f32 %v5637, %v5805
        %v5807 = vpop.f32.mrf.mxu0
        %v5808 = vadd.f32 %v5639, %v5807
        %5809 = vmatmul.bf16.gmra.mxu0 %v4537
        %v5810 = vpop.f32.mrf.mxu0
        %v5811 = vadd.f32 %v5642, %v5810
        %v5812 = vpop.f32.mrf.mxu0
        %v5813 = vadd.f32 %v5644, %v5812
        %5814 = vmatmul.bf16.gmra.mxu0 %v4541
        %v5815 = vpop.f32.mrf.mxu0
        %v5816 = vadd.f32 %v5647, %v5815
        %v5817 = vpop.f32.mrf.mxu0
        %v5818 = vadd.f32 %v5649, %v5817
        %5819 = vmatmul.bf16.gmra.mxu0 %v4545
        %v5820 = vpop.f32.mrf.mxu0
        %v5821 = vadd.f32 %v5652, %v5820
        %v5822 = vpop.f32.mrf.mxu0
        %v5823 = vadd.f32 %v5654, %v5822
        %5824 = vmatmul.bf16.gmra.mxu0 %v4549
        %v5825 = vpop.f32.mrf.mxu0
        %v5826 = vadd.f32 %v5657, %v5825
        %v5827 = vpop.f32.mrf.mxu0
        %v5828 = vadd.f32 %v5659, %v5827
        %5829 = vmatmul.bf16.gmra.mxu0 %v4553
        %v5830 = vpop.f32.mrf.mxu0
        %v5831 = vadd.f32 %v5662, %v5830
        %v5832 = vpop.f32.mrf.mxu0
        %v5833 = vadd.f32 %v5664, %v5832
        %5834 = vmatmul.bf16.gmra.mxu0 %v4557
        %v5835 = vpop.f32.mrf.mxu0
        %v5836 = vadd.f32 %v5667, %v5835
        %v5837 = vpop.f32.mrf.mxu0
        %v5838 = vadd.f32 %v5669, %v5837
        %5839 = vmatmul.bf16.gmra.mxu0 %v4561
        %v5840 = vpop.f32.mrf.mxu0
        %v5841 = vadd.f32 %v5672, %v5840
        %v5842 = vpop.f32.mrf.mxu0
        %v5843 = vadd.f32 %v5674, %v5842
        %5844 = vmatmul.bf16.gmra.mxu0 %v4565
        %v5845 = vpop.f32.mrf.mxu0
        %v5846 = vadd.f32 %v5677, %v5845
        %v5847 = vpop.f32.mrf.mxu0
        %v5848 = vadd.f32 %v5679, %v5847
        %5849 = vmatmul.bf16.gmra.mxu0 %v4569
        %v5850 = vpop.f32.mrf.mxu0
        %v5851 = vadd.f32 %v5682, %v5850
        %v5852 = vpop.f32.mrf.mxu0
        %v5853 = vadd.f32 %v5684, %v5852
        %5854 = vmatmul.bf16.gmra.mxu0 %v4573
        %v5855 = vpop.f32.mrf.mxu0
        %v5856 = vadd.f32 %v5687, %v5855
        %v5857 = vpop.f32.mrf.mxu0
        %v5858 = vadd.f32 %v5689, %v5857
        %5859 = vmatmul.bf16.gmra.mxu0 %v4577
        %v5860 = vpop.f32.mrf.mxu0
        %v5861 = vadd.f32 %v5692, %v5860
        %v5862 = vpop.f32.mrf.mxu0
        %v5863 = vadd.f32 %v5694, %v5862
        %5864 = vmatmul.bf16.gmra.mxu0 %v4581
        %v5865 = vpop.f32.mrf.mxu0
        %v5866 = vadd.f32 %v5697, %v5865
        %v5867 = vpop.f32.mrf.mxu0
        %v5868 = vadd.f32 %v5699, %v5867
        %5869 = vmatmul.bf16.gmra.mxu0 %v4585
        %v5870 = vpop.f32.mrf.mxu0
        %v5871 = vadd.f32 %v5702, %v5870
        %v5872 = vpop.f32.mrf.mxu0
        %v5873 = vadd.f32 %v5704, %v5872
        %5874 = vmatmul.bf16.gmra.mxu0 %v4589
        %v5875 = vpop.f32.mrf.mxu0
        %v5876 = vadd.f32 %v5707, %v5875
        %v5877 = vpop.f32.mrf.mxu0
        %v5878 = vadd.f32 %v5709, %v5877
        %5879 = vmatmul.bf16.gmra.mxu0 %v4593
        %v5880 = vpop.f32.mrf.mxu0
        %v5881 = vadd.f32 %v5712, %v5880
        %v5882 = vpop.f32.mrf.mxu0
        %v5883 = vadd.f32 %v5714, %v5882
        %5884 = vmatmul.bf16.gmra.mxu0 %v4597
        %v5885 = vpop.f32.mrf.mxu0
        %v5886 = vadd.f32 %v5717, %v5885
        %v5887 = vpop.f32.mrf.mxu0
        %v5888 = vadd.f32 %v5719, %v5887
        %5889 = vmatmul.bf16.gmra.mxu0 %v4601
        %v5890 = vpop.f32.mrf.mxu0
        %v5891 = vadd.f32 %v5722, %v5890
        %v5892 = vpop.f32.mrf.mxu0
        %v5893 = vadd.f32 %v5724, %v5892
        %5894 = vmatmul.bf16.gmra.mxu0 %v4605
        %v5895 = vpop.f32.mrf.mxu0
        %v5896 = vadd.f32 %v5727, %v5895
        %v5897 = vpop.f32.mrf.mxu0
        %v5898 = vadd.f32 %v5729, %v5897
        %5899 = vmatmul.bf16.gmra.mxu0 %v4609
        %v5900 = vpop.f32.mrf.mxu0
        %v5901 = vadd.f32 %v5732, %v5900
        %v5902 = vpop.f32.mrf.mxu0
        %v5903 = vadd.f32 %v5734, %v5902
        %5904 = vmatmul.bf16.gmra.mxu0 %v4613
        %v5905 = vpop.f32.mrf.mxu0
        %v5906 = vadd.f32 %v5737, %v5905
        %v5907 = vpop.f32.mrf.mxu0
        %v5908 = vadd.f32 %v5739, %v5907
        %5909 = vmatmul.bf16.gmra.mxu0 %v4617
        %v5910 = vpop.f32.mrf.mxu0
        %v5911 = vadd.f32 %v5742, %v5910
        %v5912 = vpop.f32.mrf.mxu0
        %v5913 = vadd.f32 %v5744, %v5912
        %5914 = vmatmul.bf16.gmra.mxu0 %v4621
        %v5915 = vpop.f32.mrf.mxu0
        %v5916 = vadd.f32 %v5747, %v5915
        %v5917 = vpop.f32.mrf.mxu0
        %v5918 = vadd.f32 %v5749, %v5917
        %5919 = vmatmul.bf16.gmra.mxu0 %v4625
        %v5920 = vpop.f32.mrf.mxu0
        %v5921 = vadd.f32 %v5752, %v5920
        %v5922 = vpop.f32.mrf.mxu0
        %v5923 = vadd.f32 %v5754, %v5922
        %5924 = vmatmul.bf16.gmra.mxu0 %v4629
        %v5925 = vpop.f32.mrf.mxu0
        %v5926 = vadd.f32 %v5757, %v5925
        %v5927 = vpop.f32.mrf.mxu0
        %v5928 = vadd.f32 %v5759, %v5927
        %5929 = vmatmul.bf16.gmra.mxu0 %v4633
        %v5930 = vpop.f32.mrf.mxu0
        %v5931 = vadd.f32 %v5762, %v5930
        %v5932 = vpop.f32.mrf.mxu0
        %v5933 = vadd.f32 %v5764, %v5932
        %5934 = vmatmul.bf16.gmra.mxu0 %v4637
        %v5935 = vpop.f32.mrf.mxu0
        %v5936 = vadd.f32 %v5767, %v5935
        %v5937 = vpop.f32.mrf.mxu0
        %v5938 = vadd.f32 %v5769, %v5937
        %5939 = vmatmul.bf16.gmra.mxu0 %v4641
        %v5940 = vpop.f32.mrf.mxu0
        %v5941 = vadd.f32 %v5772, %v5940
        %v5942 = vpop.f32.mrf.mxu0
        %v5943 = vadd.f32 %v5774, %v5942
        %5944 = vmatmul.bf16.gmra.mxu0 %v4650
        %v5945 = vpop.f32.mrf.mxu0
        %v5946 = vadd.f32 %v5777, %v5945
        %v5947 = vpop.f32.mrf.mxu0
        %v5948 = vadd.f32 %v5779, %v5947
        %5949 = vmatmul.bf16.gmra.mxu0 %v4659
        %v5950 = vpop.f32.mrf.mxu0
        %v5951 = vadd.f32 %v5782, %v5950
        %v5952 = vpop.f32.mrf.mxu0
        %v5953 = vadd.f32 %v5784, %v5952
        %5954 = vmatmul.bf16.gmra.mxu0 %v4668
        %v5955 = vpop.f32.mrf.mxu0
        %v5956 = vadd.f32 %v5787, %v5955
        %v5957 = vpop.f32.mrf.mxu0
        %v5958 = vadd.f32 %v5789, %v5957
        %5959 = vdwg.mxu0
        %5960 = vmatpush.bf16.msra.mxu0 %v2008
        %5961 = vmatpush.bf16.msra.mxu0 %v2007
        %5962 = vmatpush.bf16.msra.mxu0 %v2006
        %5963 = vmatpush.bf16.msra.mxu0 %v2005
        %5964 = vmatpush.bf16.msra.mxu0 %v2004
        %5965 = vmatpush.bf16.msra.mxu0 %v2003
        %5966 = vmatpush.bf16.msra.mxu0 %v2002
        %5967 = vmatpush.bf16.msra.mxu0 %v2001
        %5968 = vmatmul.bf16.gmra.mxu0 %v4706
        %v5969 = vpop.f32.mrf.mxu0
        %v5970 = vadd.f32 %v5801, %v5969
        %v5971 = vpop.f32.mrf.mxu0
        %v5972 = vadd.f32 %v5803, %v5971
        %5973 = vmatmul.bf16.gmra.mxu0 %v4708
        %v5974 = vpop.f32.mrf.mxu0
        %v5975 = vadd.f32 %v5806, %v5974
        %v5976 = vpop.f32.mrf.mxu0
        %v5977 = vadd.f32 %v5808, %v5976
        %5978 = vmatmul.bf16.gmra.mxu0 %v4710
        %v5979 = vpop.f32.mrf.mxu0
        %v5980 = vadd.f32 %v5811, %v5979
        %v5981 = vpop.f32.mrf.mxu0
        %v5982 = vadd.f32 %v5813, %v5981
        %5983 = vmatmul.bf16.gmra.mxu0 %v4712
        %v5984 = vpop.f32.mrf.mxu0
        %v5985 = vadd.f32 %v5816, %v5984
        %v5986 = vpop.f32.mrf.mxu0
        %v5987 = vadd.f32 %v5818, %v5986
        %5988 = vmatmul.bf16.gmra.mxu0 %v4714
        %v5989 = vpop.f32.mrf.mxu0
        %v5990 = vadd.f32 %v5821, %v5989
        %v5991 = vpop.f32.mrf.mxu0
        %v5992 = vadd.f32 %v5823, %v5991
        %5993 = vmatmul.bf16.gmra.mxu0 %v4716
        %v5994 = vpop.f32.mrf.mxu0
        %v5995 = vadd.f32 %v5826, %v5994
        %v5996 = vpop.f32.mrf.mxu0
        %v5997 = vadd.f32 %v5828, %v5996
        %5998 = vmatmul.bf16.gmra.mxu0 %v4718
        %v5999 = vpop.f32.mrf.mxu0
        %v6000 = vadd.f32 %v5831, %v5999
        %v6001 = vpop.f32.mrf.mxu0
        %v6002 = vadd.f32 %v5833, %v6001
        %6003 = vmatmul.bf16.gmra.mxu0 %v4720
        %v6004 = vpop.f32.mrf.mxu0
        %v6005 = vadd.f32 %v5836, %v6004
        %v6006 = vpop.f32.mrf.mxu0
        %v6007 = vadd.f32 %v5838, %v6006
        %6008 = vmatmul.bf16.gmra.mxu0 %v4722
        %v6009 = vpop.f32.mrf.mxu0
        %v6010 = vadd.f32 %v5841, %v6009
        %v6011 = vpop.f32.mrf.mxu0
        %v6012 = vadd.f32 %v5843, %v6011
        %6013 = vmatmul.bf16.gmra.mxu0 %v4724
        %v6014 = vpop.f32.mrf.mxu0
        %v6015 = vadd.f32 %v5846, %v6014
        %v6016 = vpop.f32.mrf.mxu0
        %v6017 = vadd.f32 %v5848, %v6016
        %6018 = vmatmul.bf16.gmra.mxu0 %v4726
        %v6019 = vpop.f32.mrf.mxu0
        %v6020 = vadd.f32 %v5851, %v6019
        %v6021 = vpop.f32.mrf.mxu0
        %v6022 = vadd.f32 %v5853, %v6021
        %6023 = vmatmul.bf16.gmra.mxu0 %v4728
        %v6024 = vpop.f32.mrf.mxu0
        %v6025 = vadd.f32 %v5856, %v6024
        %v6026 = vpop.f32.mrf.mxu0
        %v6027 = vadd.f32 %v5858, %v6026
        %6028 = vmatmul.bf16.gmra.mxu0 %v4730
        %v6029 = vpop.f32.mrf.mxu0
        %v6030 = vadd.f32 %v5861, %v6029
        %v6031 = vpop.f32.mrf.mxu0
        %v6032 = vadd.f32 %v5863, %v6031
        %6033 = vmatmul.bf16.gmra.mxu0 %v4732
        %v6034 = vpop.f32.mrf.mxu0
        %v6035 = vadd.f32 %v5866, %v6034
        %v6036 = vpop.f32.mrf.mxu0
        %v6037 = vadd.f32 %v5868, %v6036
        %6038 = vmatmul.bf16.gmra.mxu0 %v4734
        %v6039 = vpop.f32.mrf.mxu0
        %v6040 = vadd.f32 %v5871, %v6039
        %v6041 = vpop.f32.mrf.mxu0
        %v6042 = vadd.f32 %v5873, %v6041
        %6043 = vmatmul.bf16.gmra.mxu0 %v4736
        %v6044 = vpop.f32.mrf.mxu0
        %v6045 = vadd.f32 %v5876, %v6044
        %v6046 = vpop.f32.mrf.mxu0
        %v6047 = vadd.f32 %v5878, %v6046
        %6048 = vmatmul.bf16.gmra.mxu0 %v4738
        %v6049 = vpop.f32.mrf.mxu0
        %v6050 = vadd.f32 %v5881, %v6049
        %v6051 = vpop.f32.mrf.mxu0
        %v6052 = vadd.f32 %v5883, %v6051
        %6053 = vmatmul.bf16.gmra.mxu0 %v4740
        %v6054 = vpop.f32.mrf.mxu0
        %v6055 = vadd.f32 %v5886, %v6054
        %v6056 = vpop.f32.mrf.mxu0
        %v6057 = vadd.f32 %v5888, %v6056
        %6058 = vmatmul.bf16.gmra.mxu0 %v4742
        %v6059 = vpop.f32.mrf.mxu0
        %v6060 = vadd.f32 %v5891, %v6059
        %v6061 = vpop.f32.mrf.mxu0
        %v6062 = vadd.f32 %v5893, %v6061
        %6063 = vmatmul.bf16.gmra.mxu0 %v4744
        %v6064 = vpop.f32.mrf.mxu0
        %v6065 = vadd.f32 %v5896, %v6064
        %v6066 = vpop.f32.mrf.mxu0
        %v6067 = vadd.f32 %v5898, %v6066
        %6068 = vmatmul.bf16.gmra.mxu0 %v4746
        %v6069 = vpop.f32.mrf.mxu0
        %v6070 = vadd.f32 %v5901, %v6069
        %v6071 = vpop.f32.mrf.mxu0
        %v6072 = vadd.f32 %v5903, %v6071
        %6073 = vmatmul.bf16.gmra.mxu0 %v4748
        %v6074 = vpop.f32.mrf.mxu0
        %v6075 = vadd.f32 %v5906, %v6074
        %v6076 = vpop.f32.mrf.mxu0
        %v6077 = vadd.f32 %v5908, %v6076
        %6078 = vmatmul.bf16.gmra.mxu0 %v4750
        %v6079 = vpop.f32.mrf.mxu0
        %v6080 = vadd.f32 %v5911, %v6079
        %v6081 = vpop.f32.mrf.mxu0
        %v6082 = vadd.f32 %v5913, %v6081
        %6083 = vmatmul.bf16.gmra.mxu0 %v4752
        %v6084 = vpop.f32.mrf.mxu0
        %v6085 = vadd.f32 %v5916, %v6084
        %v6086 = vpop.f32.mrf.mxu0
        %v6087 = vadd.f32 %v5918, %v6086
        %6088 = vmatmul.bf16.gmra.mxu0 %v4754
        %v6089 = vpop.f32.mrf.mxu0
        %v6090 = vadd.f32 %v5921, %v6089
        %v6091 = vpop.f32.mrf.mxu0
        %v6092 = vadd.f32 %v5923, %v6091
        %6093 = vmatmul.bf16.gmra.mxu0 %v4756
        %v6094 = vpop.f32.mrf.mxu0
        %v6095 = vadd.f32 %v5926, %v6094
        %v6096 = vpop.f32.mrf.mxu0
        %v6097 = vadd.f32 %v5928, %v6096
        %6098 = vmatmul.bf16.gmra.mxu0 %v4758
        %v6099 = vpop.f32.mrf.mxu0
        %v6100 = vadd.f32 %v5931, %v6099
        %v6101 = vpop.f32.mrf.mxu0
        %v6102 = vadd.f32 %v5933, %v6101
        %6103 = vmatmul.bf16.gmra.mxu0 %v4760
        %v6104 = vpop.f32.mrf.mxu0
        %v6105 = vadd.f32 %v5936, %v6104
        %v6106 = vpop.f32.mrf.mxu0
        %v6107 = vadd.f32 %v5938, %v6106
        %6108 = vmatmul.bf16.gmra.mxu0 %v4762
        %v6109 = vpop.f32.mrf.mxu0
        %v6110 = vadd.f32 %v5941, %v6109
        %v6111 = vpop.f32.mrf.mxu0
        %v6112 = vadd.f32 %v5943, %v6111
        %6113 = vmatmul.bf16.gmra.mxu0 %v4764
        %v6114 = vpop.f32.mrf.mxu0
        %v6115 = vadd.f32 %v5946, %v6114
        %v6116 = vpop.f32.mrf.mxu0
        %v6117 = vadd.f32 %v5948, %v6116
        %6118 = vmatmul.bf16.gmra.mxu0 %v4766
        %v6119 = vpop.f32.mrf.mxu0
        %v6120 = vadd.f32 %v5951, %v6119
        %v6121 = vpop.f32.mrf.mxu0
        %v6122 = vadd.f32 %v5953, %v6121
        %6123 = vmatmul.bf16.gmra.mxu0 %v4768
        %v6124 = vpop.f32.mrf.mxu0
        %v6125 = vadd.f32 %v5956, %v6124
        %v6126 = vpop.f32.mrf.mxu0
        %v6127 = vadd.f32 %v5958, %v6126
        %6128 = vdwg.mxu0
        %6129 = vmatpush.bf16.msra.mxu0 %v2016
        %6130 = vmatpush.bf16.msra.mxu0 %v2015
        %6131 = vmatpush.bf16.msra.mxu0 %v2014
        %6132 = vmatpush.bf16.msra.mxu0 %v2013
        %6133 = vmatpush.bf16.msra.mxu0 %v2012
        %6134 = vmatpush.bf16.msra.mxu0 %v2011
        %6135 = vmatpush.bf16.msra.mxu0 %v2010
        %6136 = vmatpush.bf16.msra.mxu0 %v2009
        %6137 = vmatmul.bf16.gmra.mxu0 %v4818
        %v6138 = vpop.f32.mrf.mxu0
        %v6139 = vadd.f32 %v5970, %v6138
        %v6140 = vpop.f32.mrf.mxu0
        %v6141 = vadd.f32 %v5972, %v6140
        %6142 = vmatmul.bf16.gmra.mxu0 %v4712
        %v6143 = vpop.f32.mrf.mxu0
        %v6144 = vadd.f32 %v5975, %v6143
        %v6145 = vpop.f32.mrf.mxu0
        %v6146 = vadd.f32 %v5977, %v6145
        %6147 = vmatmul.bf16.gmra.mxu0 %v4714
        %v6148 = vpop.f32.mrf.mxu0
        %v6149 = vadd.f32 %v5980, %v6148
        %v6150 = vpop.f32.mrf.mxu0
        %v6151 = vadd.f32 %v5982, %v6150
        %6152 = vmatmul.bf16.gmra.mxu0 %v4716
        %v6153 = vpop.f32.mrf.mxu0
        %v6154 = vadd.f32 %v5985, %v6153
        %v6155 = vpop.f32.mrf.mxu0
        %v6156 = vadd.f32 %v5987, %v6155
        %6157 = vmatmul.bf16.gmra.mxu0 %v4718
        %v6158 = vpop.f32.mrf.mxu0
        %v6159 = vadd.f32 %v5990, %v6158
        %v6160 = vpop.f32.mrf.mxu0
        %v6161 = vadd.f32 %v5992, %v6160
        %6162 = vmatmul.bf16.gmra.mxu0 %v4720
        %v6163 = vpop.f32.mrf.mxu0
        %v6164 = vadd.f32 %v5995, %v6163
        %v6165 = vpop.f32.mrf.mxu0
        %v6166 = vadd.f32 %v5997, %v6165
        %6167 = vmatmul.bf16.gmra.mxu0 %v4722
        %v6168 = vpop.f32.mrf.mxu0
        %v6169 = vadd.f32 %v6000, %v6168
        %v6170 = vpop.f32.mrf.mxu0
        %v6171 = vadd.f32 %v6002, %v6170
        %6172 = vmatmul.bf16.gmra.mxu0 %v4724
        %v6173 = vpop.f32.mrf.mxu0
        %v6174 = vadd.f32 %v6005, %v6173
        %v6175 = vpop.f32.mrf.mxu0
        %v6176 = vadd.f32 %v6007, %v6175
        %6177 = vmatmul.bf16.gmra.mxu0 %v4726
        %v6178 = vpop.f32.mrf.mxu0
        %v6179 = vadd.f32 %v6010, %v6178
        %v6180 = vpop.f32.mrf.mxu0
        %v6181 = vadd.f32 %v6012, %v6180
        %6182 = vmatmul.bf16.gmra.mxu0 %v4728
        %v6183 = vpop.f32.mrf.mxu0
        %v6184 = vadd.f32 %v6015, %v6183
        %v6185 = vpop.f32.mrf.mxu0
        %v6186 = vadd.f32 %v6017, %v6185
        %6187 = vmatmul.bf16.gmra.mxu0 %v4730
        %v6188 = vpop.f32.mrf.mxu0
        %v6189 = vadd.f32 %v6020, %v6188
        %v6190 = vpop.f32.mrf.mxu0
        %v6191 = vadd.f32 %v6022, %v6190
        %6192 = vmatmul.bf16.gmra.mxu0 %v4732
        %v6193 = vpop.f32.mrf.mxu0
        %v6194 = vadd.f32 %v6025, %v6193
        %v6195 = vpop.f32.mrf.mxu0
        %v6196 = vadd.f32 %v6027, %v6195
        %6197 = vmatmul.bf16.gmra.mxu0 %v4734
        %v6198 = vpop.f32.mrf.mxu0
        %v6199 = vadd.f32 %v6030, %v6198
        %v6200 = vpop.f32.mrf.mxu0
        %v6201 = vadd.f32 %v6032, %v6200
        %6202 = vmatmul.bf16.gmra.mxu0 %v4736
        %v6203 = vpop.f32.mrf.mxu0
        %v6204 = vadd.f32 %v6035, %v6203
        %v6205 = vpop.f32.mrf.mxu0
        %v6206 = vadd.f32 %v6037, %v6205
        %6207 = vmatmul.bf16.gmra.mxu0 %v4738
        %v6208 = vpop.f32.mrf.mxu0
        %v6209 = vadd.f32 %v6040, %v6208
        %v6210 = vpop.f32.mrf.mxu0
        %v6211 = vadd.f32 %v6042, %v6210
        %6212 = vmatmul.bf16.gmra.mxu0 %v4740
        %v6213 = vpop.f32.mrf.mxu0
        %v6214 = vadd.f32 %v6045, %v6213
        %v6215 = vpop.f32.mrf.mxu0
        %v6216 = vadd.f32 %v6047, %v6215
        %6217 = vmatmul.bf16.gmra.mxu0 %v4742
        %v6218 = vpop.f32.mrf.mxu0
        %v6219 = vadd.f32 %v6050, %v6218
        %v6220 = vpop.f32.mrf.mxu0
        %v6221 = vadd.f32 %v6052, %v6220
        %6222 = vmatmul.bf16.gmra.mxu0 %v4744
        %v6223 = vpop.f32.mrf.mxu0
        %v6224 = vadd.f32 %v6055, %v6223
        %v6225 = vpop.f32.mrf.mxu0
        %v6226 = vadd.f32 %v6057, %v6225
        %6227 = vmatmul.bf16.gmra.mxu0 %v4746
        %v6228 = vpop.f32.mrf.mxu0
        %v6229 = vadd.f32 %v6060, %v6228
        %v6230 = vpop.f32.mrf.mxu0
        %v6231 = vadd.f32 %v6062, %v6230
        %6232 = vmatmul.bf16.gmra.mxu0 %v4748
        %v6233 = vpop.f32.mrf.mxu0
        %v6234 = vadd.f32 %v6065, %v6233
        %v6235 = vpop.f32.mrf.mxu0
        %v6236 = vadd.f32 %v6067, %v6235
        %6237 = vmatmul.bf16.gmra.mxu0 %v4750
        %v6238 = vpop.f32.mrf.mxu0
        %v6239 = vadd.f32 %v6070, %v6238
        %v6240 = vpop.f32.mrf.mxu0
        %v6241 = vadd.f32 %v6072, %v6240
        %6242 = vmatmul.bf16.gmra.mxu0 %v4752
        %v6243 = vpop.f32.mrf.mxu0
        %v6244 = vadd.f32 %v6075, %v6243
        %v6245 = vpop.f32.mrf.mxu0
        %v6246 = vadd.f32 %v6077, %v6245
        %6247 = vmatmul.bf16.gmra.mxu0 %v4754
        %v6248 = vpop.f32.mrf.mxu0
        %v6249 = vadd.f32 %v6080, %v6248
        %v6250 = vpop.f32.mrf.mxu0
        %v6251 = vadd.f32 %v6082, %v6250
        %6252 = vmatmul.bf16.gmra.mxu0 %v4756
        %v6253 = vpop.f32.mrf.mxu0
        %v6254 = vadd.f32 %v6085, %v6253
        %v6255 = vpop.f32.mrf.mxu0
        %v6256 = vadd.f32 %v6087, %v6255
        %6257 = vmatmul.bf16.gmra.mxu0 %v4758
        %v6258 = vpop.f32.mrf.mxu0
        %v6259 = vadd.f32 %v6090, %v6258
        %v6260 = vpop.f32.mrf.mxu0
        %v6261 = vadd.f32 %v6092, %v6260
        %6262 = vmatmul.bf16.gmra.mxu0 %v4760
        %v6263 = vpop.f32.mrf.mxu0
        %v6264 = vadd.f32 %v6095, %v6263
        %v6265 = vpop.f32.mrf.mxu0
        %v6266 = vadd.f32 %v6097, %v6265
        %6267 = vmatmul.bf16.gmra.mxu0 %v4762
        %v6268 = vpop.f32.mrf.mxu0
        %v6269 = vadd.f32 %v6100, %v6268
        %v6270 = vpop.f32.mrf.mxu0
        %v6271 = vadd.f32 %v6102, %v6270
        %6272 = vmatmul.bf16.gmra.mxu0 %v4764
        %v6273 = vpop.f32.mrf.mxu0
        %v6274 = vadd.f32 %v6105, %v6273
        %v6275 = vpop.f32.mrf.mxu0
        %v6276 = vadd.f32 %v6107, %v6275
        %6277 = vmatmul.bf16.gmra.mxu0 %v4766
        %v6278 = vpop.f32.mrf.mxu0
        %v6279 = vadd.f32 %v6110, %v6278
        %v6280 = vpop.f32.mrf.mxu0
        %v6281 = vadd.f32 %v6112, %v6280
        %6282 = vmatmul.bf16.gmra.mxu0 %v4820
        %v6283 = vpop.f32.mrf.mxu0
        %v6284 = vadd.f32 %v6115, %v6283
        %v6285 = vpop.f32.mrf.mxu0
        %v6286 = vadd.f32 %v6117, %v6285
        %6287 = vmatmul.bf16.gmra.mxu0 %v4822
        %v6288 = vpop.f32.mrf.mxu0
        %v6289 = vadd.f32 %v6120, %v6288
        %v6290 = vpop.f32.mrf.mxu0
        %v6291 = vadd.f32 %v6122, %v6290
        %6292 = vmatmul.bf16.gmra.mxu0 %v4824
        %v6293 = vpop.f32.mrf.mxu0
        %v6294 = vadd.f32 %v6125, %v6293
        %v6295 = vpop.f32.mrf.mxu0
        %v6296 = vadd.f32 %v6127, %v6295
        %6297 = vdwg.mxu0
        %6298 = vmatpush.bf16.msra.mxu0 %v2024
        %6299 = vmatpush.bf16.msra.mxu0 %v2023
        %6300 = vmatpush.bf16.msra.mxu0 %v2022
        %6301 = vmatpush.bf16.msra.mxu0 %v2021
        %6302 = vmatpush.bf16.msra.mxu0 %v2020
        %6303 = vmatpush.bf16.msra.mxu0 %v2019
        %6304 = vmatpush.bf16.msra.mxu0 %v2018
        %6305 = vmatpush.bf16.msra.mxu0 %v2017
        %6306 = vmatmul.bf16.gmra.mxu0 %v4843
        %v6307 = vpop.f32.mrf.mxu0
        %v6308 = vadd.f32 %v6139, %v6307
        %v6309 = vpop.f32.mrf.mxu0
        %v6310 = vadd.f32 %v6141, %v6309
        %6311 = vmatmul.bf16.gmra.mxu0 %v4847
        %v6312 = vpop.f32.mrf.mxu0
        %v6313 = vadd.f32 %v6144, %v6312
        %v6314 = vpop.f32.mrf.mxu0
        %v6315 = vadd.f32 %v6146, %v6314
        %6316 = vmatmul.bf16.gmra.mxu0 %v4851
        %v6317 = vpop.f32.mrf.mxu0
        %v6318 = vadd.f32 %v6149, %v6317
        %v6319 = vpop.f32.mrf.mxu0
        %v6320 = vadd.f32 %v6151, %v6319
        %6321 = vmatmul.bf16.gmra.mxu0 %v4855
        %v6322 = vpop.f32.mrf.mxu0
        %v6323 = vadd.f32 %v6154, %v6322
        %v6324 = vpop.f32.mrf.mxu0
        %v6325 = vadd.f32 %v6156, %v6324
        %6326 = vmatmul.bf16.gmra.mxu0 %v4859
        %v6327 = vpop.f32.mrf.mxu0
        %v6328 = vadd.f32 %v6159, %v6327
        %v6329 = vpop.f32.mrf.mxu0
        %v6330 = vadd.f32 %v6161, %v6329
        %6331 = vmatmul.bf16.gmra.mxu0 %v4863
        %v6332 = vpop.f32.mrf.mxu0
        %v6333 = vadd.f32 %v6164, %v6332
        %v6334 = vpop.f32.mrf.mxu0
        %v6335 = vadd.f32 %v6166, %v6334
        %6336 = vmatmul.bf16.gmra.mxu0 %v4867
        %v6337 = vpop.f32.mrf.mxu0
        %v6338 = vadd.f32 %v6169, %v6337
        %v6339 = vpop.f32.mrf.mxu0
        %v6340 = vadd.f32 %v6171, %v6339
        %6341 = vmatmul.bf16.gmra.mxu0 %v4871
        %v6342 = vpop.f32.mrf.mxu0
        %v6343 = vadd.f32 %v6174, %v6342
        %v6344 = vpop.f32.mrf.mxu0
        %v6345 = vadd.f32 %v6176, %v6344
        %6346 = vmatmul.bf16.gmra.mxu0 %v4875
        %v6347 = vpop.f32.mrf.mxu0
        %v6348 = vadd.f32 %v6179, %v6347
        %v6349 = vpop.f32.mrf.mxu0
        %v6350 = vadd.f32 %v6181, %v6349
        %6351 = vmatmul.bf16.gmra.mxu0 %v4879
        %v6352 = vpop.f32.mrf.mxu0
        %v6353 = vadd.f32 %v6184, %v6352
        %v6354 = vpop.f32.mrf.mxu0
        %v6355 = vadd.f32 %v6186, %v6354
        %6356 = vmatmul.bf16.gmra.mxu0 %v4883
        %v6357 = vpop.f32.mrf.mxu0
        %v6358 = vadd.f32 %v6189, %v6357
        %v6359 = vpop.f32.mrf.mxu0
        %v6360 = vadd.f32 %v6191, %v6359
        %6361 = vmatmul.bf16.gmra.mxu0 %v4887
        %v6362 = vpop.f32.mrf.mxu0
        %v6363 = vadd.f32 %v6194, %v6362
        %v6364 = vpop.f32.mrf.mxu0
        %v6365 = vadd.f32 %v6196, %v6364
        %6366 = vmatmul.bf16.gmra.mxu0 %v4891
        %v6367 = vpop.f32.mrf.mxu0
        %v6368 = vadd.f32 %v6199, %v6367
        %v6369 = vpop.f32.mrf.mxu0
        %v6370 = vadd.f32 %v6201, %v6369
        %6371 = vmatmul.bf16.gmra.mxu0 %v4895
        %v6372 = vpop.f32.mrf.mxu0
        %v6373 = vadd.f32 %v6204, %v6372
        %v6374 = vpop.f32.mrf.mxu0
        %v6375 = vadd.f32 %v6206, %v6374
        %6376 = vmatmul.bf16.gmra.mxu0 %v4899
        %v6377 = vpop.f32.mrf.mxu0
        %v6378 = vadd.f32 %v6209, %v6377
        %v6379 = vpop.f32.mrf.mxu0
        %v6380 = vadd.f32 %v6211, %v6379
        %6381 = vmatmul.bf16.gmra.mxu0 %v4903
        %v6382 = vpop.f32.mrf.mxu0
        %v6383 = vadd.f32 %v6214, %v6382
        %v6384 = vpop.f32.mrf.mxu0
        %v6385 = vadd.f32 %v6216, %v6384
        %6386 = vmatmul.bf16.gmra.mxu0 %v4907
        %v6387 = vpop.f32.mrf.mxu0
        %v6388 = vadd.f32 %v6219, %v6387
        %v6389 = vpop.f32.mrf.mxu0
        %v6390 = vadd.f32 %v6221, %v6389
        %6391 = vmatmul.bf16.gmra.mxu0 %v4911
        %v6392 = vpop.f32.mrf.mxu0
        %v6393 = vadd.f32 %v6224, %v6392
        %v6394 = vpop.f32.mrf.mxu0
        %v6395 = vadd.f32 %v6226, %v6394
        %6396 = vmatmul.bf16.gmra.mxu0 %v4915
        %v6397 = vpop.f32.mrf.mxu0
        %v6398 = vadd.f32 %v6229, %v6397
        %v6399 = vpop.f32.mrf.mxu0
        %v6400 = vadd.f32 %v6231, %v6399
        %6401 = vmatmul.bf16.gmra.mxu0 %v4919
        %v6402 = vpop.f32.mrf.mxu0
        %v6403 = vadd.f32 %v6234, %v6402
        %v6404 = vpop.f32.mrf.mxu0
        %v6405 = vadd.f32 %v6236, %v6404
        %6406 = vmatmul.bf16.gmra.mxu0 %v4923
        %v6407 = vpop.f32.mrf.mxu0
        %v6408 = vadd.f32 %v6239, %v6407
        %v6409 = vpop.f32.mrf.mxu0
        %v6410 = vadd.f32 %v6241, %v6409
        %6411 = vmatmul.bf16.gmra.mxu0 %v4927
        %v6412 = vpop.f32.mrf.mxu0
        %v6413 = vadd.f32 %v6244, %v6412
        %v6414 = vpop.f32.mrf.mxu0
        %v6415 = vadd.f32 %v6246, %v6414
        %6416 = vmatmul.bf16.gmra.mxu0 %v4931
        %v6417 = vpop.f32.mrf.mxu0
        %v6418 = vadd.f32 %v6249, %v6417
        %v6419 = vpop.f32.mrf.mxu0
        %v6420 = vadd.f32 %v6251, %v6419
        %6421 = vmatmul.bf16.gmra.mxu0 %v4935
        %v6422 = vpop.f32.mrf.mxu0
        %v6423 = vadd.f32 %v6254, %v6422
        %v6424 = vpop.f32.mrf.mxu0
        %v6425 = vadd.f32 %v6256, %v6424
        %6426 = vmatmul.bf16.gmra.mxu0 %v4939
        %v6427 = vpop.f32.mrf.mxu0
        %v6428 = vadd.f32 %v6259, %v6427
        %v6429 = vpop.f32.mrf.mxu0
        %v6430 = vadd.f32 %v6261, %v6429
        %6431 = vmatmul.bf16.gmra.mxu0 %v4943
        %v6432 = vpop.f32.mrf.mxu0
        %v6433 = vadd.f32 %v6264, %v6432
        %v6434 = vpop.f32.mrf.mxu0
        %v6435 = vadd.f32 %v6266, %v6434
        %6436 = vmatmul.bf16.gmra.mxu0 %v4947
        %v6437 = vpop.f32.mrf.mxu0
        %v6438 = vadd.f32 %v6269, %v6437
        %v6439 = vpop.f32.mrf.mxu0
        %v6440 = vadd.f32 %v6271, %v6439
        %6441 = vmatmul.bf16.gmra.mxu0 %v4951
        %v6442 = vpop.f32.mrf.mxu0
        %v6443 = vadd.f32 %v6274, %v6442
        %v6444 = vpop.f32.mrf.mxu0
        %v6445 = vadd.f32 %v6276, %v6444
        %6446 = vmatmul.bf16.gmra.mxu0 %v4955
        %v6447 = vpop.f32.mrf.mxu0
        %v6448 = vadd.f32 %v6279, %v6447
        %v6449 = vpop.f32.mrf.mxu0
        %v6450 = vadd.f32 %v6281, %v6449
        %6451 = vmatmul.bf16.gmra.mxu0 %v4964
        %v6452 = vpop.f32.mrf.mxu0
        %v6453 = vadd.f32 %v6284, %v6452
        %v6454 = vpop.f32.mrf.mxu0
        %v6455 = vadd.f32 %v6286, %v6454
        %6456 = vmatmul.bf16.gmra.mxu0 %v4973
        %v6457 = vpop.f32.mrf.mxu0
        %v6458 = vadd.f32 %v6289, %v6457
        %v6459 = vpop.f32.mrf.mxu0
        %v6460 = vadd.f32 %v6291, %v6459
        %6461 = vmatmul.bf16.gmra.mxu0 %v4982
        %v6462 = vpop.f32.mrf.mxu0
        %v6463 = vadd.f32 %v6294, %v6462
        %v6464 = vpop.f32.mrf.mxu0
        %v6465 = vadd.f32 %v6296, %v6464
        %6466 = vdwg.mxu0
        %6467 = vmatpush.bf16.msra.mxu0 %v2032
        %6468 = vmatpush.bf16.msra.mxu0 %v2031
        %6469 = vmatpush.bf16.msra.mxu0 %v2030
        %6470 = vmatpush.bf16.msra.mxu0 %v2029
        %6471 = vmatpush.bf16.msra.mxu0 %v2028
        %6472 = vmatpush.bf16.msra.mxu0 %v2027
        %6473 = vmatpush.bf16.msra.mxu0 %v2026
        %6474 = vmatpush.bf16.msra.mxu0 %v2025
        %6475 = vmatmul.bf16.gmra.mxu0 %v5020
        %v6476 = vpop.f32.mrf.mxu0
        %v6477 = vadd.f32 %v6308, %v6476
        %v6478 = vpop.f32.mrf.mxu0
        %v6479 = vadd.f32 %v6310, %v6478
        %6480 = vmatmul.bf16.gmra.mxu0 %v5022
        %v6481 = vpop.f32.mrf.mxu0
        %v6482 = vadd.f32 %v6313, %v6481
        %v6483 = vpop.f32.mrf.mxu0
        %v6484 = vadd.f32 %v6315, %v6483
        %6485 = vmatmul.bf16.gmra.mxu0 %v5024
        %v6486 = vpop.f32.mrf.mxu0
        %v6487 = vadd.f32 %v6318, %v6486
        %v6488 = vpop.f32.mrf.mxu0
        %v6489 = vadd.f32 %v6320, %v6488
        %6490 = vmatmul.bf16.gmra.mxu0 %v5026
        %v6491 = vpop.f32.mrf.mxu0
        %v6492 = vadd.f32 %v6323, %v6491
        %v6493 = vpop.f32.mrf.mxu0
        %v6494 = vadd.f32 %v6325, %v6493
        %6495 = vmatmul.bf16.gmra.mxu0 %v5028
        %v6496 = vpop.f32.mrf.mxu0
        %v6497 = vadd.f32 %v6328, %v6496
        %v6498 = vpop.f32.mrf.mxu0
        %v6499 = vadd.f32 %v6330, %v6498
        %6500 = vmatmul.bf16.gmra.mxu0 %v5030
        %v6501 = vpop.f32.mrf.mxu0
        %v6502 = vadd.f32 %v6333, %v6501
        %v6503 = vpop.f32.mrf.mxu0
        %v6504 = vadd.f32 %v6335, %v6503
        %6505 = vmatmul.bf16.gmra.mxu0 %v5032
        %v6506 = vpop.f32.mrf.mxu0
        %v6507 = vadd.f32 %v6338, %v6506
        %v6508 = vpop.f32.mrf.mxu0
        %v6509 = vadd.f32 %v6340, %v6508
        %6510 = vmatmul.bf16.gmra.mxu0 %v5034
        %v6511 = vpop.f32.mrf.mxu0
        %v6512 = vadd.f32 %v6343, %v6511
        %v6513 = vpop.f32.mrf.mxu0
        %v6514 = vadd.f32 %v6345, %v6513
        %6515 = vmatmul.bf16.gmra.mxu0 %v5036
        %v6516 = vpop.f32.mrf.mxu0
        %v6517 = vadd.f32 %v6348, %v6516
        %v6518 = vpop.f32.mrf.mxu0
        %v6519 = vadd.f32 %v6350, %v6518
        %6520 = vmatmul.bf16.gmra.mxu0 %v5038
        %v6521 = vpop.f32.mrf.mxu0
        %v6522 = vadd.f32 %v6353, %v6521
        %v6523 = vpop.f32.mrf.mxu0
        %v6524 = vadd.f32 %v6355, %v6523
        %6525 = vmatmul.bf16.gmra.mxu0 %v5040
        %v6526 = vpop.f32.mrf.mxu0
        %v6527 = vadd.f32 %v6358, %v6526
        %v6528 = vpop.f32.mrf.mxu0
        %v6529 = vadd.f32 %v6360, %v6528
        %6530 = vmatmul.bf16.gmra.mxu0 %v5042
        %v6531 = vpop.f32.mrf.mxu0
        %v6532 = vadd.f32 %v6363, %v6531
        %v6533 = vpop.f32.mrf.mxu0
        %v6534 = vadd.f32 %v6365, %v6533
        %6535 = vmatmul.bf16.gmra.mxu0 %v5044
        %v6536 = vpop.f32.mrf.mxu0
        %v6537 = vadd.f32 %v6368, %v6536
        %v6538 = vpop.f32.mrf.mxu0
        %v6539 = vadd.f32 %v6370, %v6538
        %6540 = vmatmul.bf16.gmra.mxu0 %v5046
        %v6541 = vpop.f32.mrf.mxu0
        %v6542 = vadd.f32 %v6373, %v6541
        %v6543 = vpop.f32.mrf.mxu0
        %v6544 = vadd.f32 %v6375, %v6543
        %6545 = vmatmul.bf16.gmra.mxu0 %v5048
        %v6546 = vpop.f32.mrf.mxu0
        %v6547 = vadd.f32 %v6378, %v6546
        %v6548 = vpop.f32.mrf.mxu0
        %v6549 = vadd.f32 %v6380, %v6548
        %6550 = vmatmul.bf16.gmra.mxu0 %v5050
        %v6551 = vpop.f32.mrf.mxu0
        %v6552 = vadd.f32 %v6383, %v6551
        %v6553 = vpop.f32.mrf.mxu0
        %v6554 = vadd.f32 %v6385, %v6553
        %6555 = vmatmul.bf16.gmra.mxu0 %v5052
        %v6556 = vpop.f32.mrf.mxu0
        %v6557 = vadd.f32 %v6388, %v6556
        %v6558 = vpop.f32.mrf.mxu0
        %v6559 = vadd.f32 %v6390, %v6558
        %6560 = vmatmul.bf16.gmra.mxu0 %v5054
        %v6561 = vpop.f32.mrf.mxu0
        %v6562 = vadd.f32 %v6393, %v6561
        %v6563 = vpop.f32.mrf.mxu0
        %v6564 = vadd.f32 %v6395, %v6563
        %6565 = vmatmul.bf16.gmra.mxu0 %v5056
        %v6566 = vpop.f32.mrf.mxu0
        %v6567 = vadd.f32 %v6398, %v6566
        %v6568 = vpop.f32.mrf.mxu0
        %v6569 = vadd.f32 %v6400, %v6568
        %6570 = vmatmul.bf16.gmra.mxu0 %v5058
        %v6571 = vpop.f32.mrf.mxu0
        %v6572 = vadd.f32 %v6403, %v6571
        %v6573 = vpop.f32.mrf.mxu0
        %v6574 = vadd.f32 %v6405, %v6573
        %6575 = vmatmul.bf16.gmra.mxu0 %v5060
        %v6576 = vpop.f32.mrf.mxu0
        %v6577 = vadd.f32 %v6408, %v6576
        %v6578 = vpop.f32.mrf.mxu0
        %v6579 = vadd.f32 %v6410, %v6578
        %6580 = vmatmul.bf16.gmra.mxu0 %v5062
        %v6581 = vpop.f32.mrf.mxu0
        %v6582 = vadd.f32 %v6413, %v6581
        %v6583 = vpop.f32.mrf.mxu0
        %v6584 = vadd.f32 %v6415, %v6583
        %6585 = vmatmul.bf16.gmra.mxu0 %v5064
        %v6586 = vpop.f32.mrf.mxu0
        %v6587 = vadd.f32 %v6418, %v6586
        %v6588 = vpop.f32.mrf.mxu0
        %v6589 = vadd.f32 %v6420, %v6588
        %6590 = vmatmul.bf16.gmra.mxu0 %v5066
        %v6591 = vpop.f32.mrf.mxu0
        %v6592 = vadd.f32 %v6423, %v6591
        %v6593 = vpop.f32.mrf.mxu0
        %v6594 = vadd.f32 %v6425, %v6593
        %6595 = vmatmul.bf16.gmra.mxu0 %v5068
        %v6596 = vpop.f32.mrf.mxu0
        %v6597 = vadd.f32 %v6428, %v6596
        %v6598 = vpop.f32.mrf.mxu0
        %v6599 = vadd.f32 %v6430, %v6598
        %6600 = vmatmul.bf16.gmra.mxu0 %v5070
        %v6601 = vpop.f32.mrf.mxu0
        %v6602 = vadd.f32 %v6433, %v6601
        %v6603 = vpop.f32.mrf.mxu0
        %v6604 = vadd.f32 %v6435, %v6603
        %6605 = vmatmul.bf16.gmra.mxu0 %v5072
        %v6606 = vpop.f32.mrf.mxu0
        %v6607 = vadd.f32 %v6438, %v6606
        %v6608 = vpop.f32.mrf.mxu0
        %v6609 = vadd.f32 %v6440, %v6608
        %6610 = vmatmul.bf16.gmra.mxu0 %v5074
        %v6611 = vpop.f32.mrf.mxu0
        %v6612 = vadd.f32 %v6443, %v6611
        %v6613 = vpop.f32.mrf.mxu0
        %v6614 = vadd.f32 %v6445, %v6613
        %6615 = vmatmul.bf16.gmra.mxu0 %v5076
        %v6616 = vpop.f32.mrf.mxu0
        %v6617 = vadd.f32 %v6448, %v6616
        %v6618 = vpop.f32.mrf.mxu0
        %v6619 = vadd.f32 %v6450, %v6618
        %6620 = vmatmul.bf16.gmra.mxu0 %v5078
        %v6621 = vpop.f32.mrf.mxu0
        %v6622 = vadd.f32 %v6453, %v6621
        %v6623 = vpop.f32.mrf.mxu0
        %v6624 = vadd.f32 %v6455, %v6623
        %6625 = vmatmul.bf16.gmra.mxu0 %v5080
        %v6626 = vpop.f32.mrf.mxu0
        %v6627 = vadd.f32 %v6458, %v6626
        %v6628 = vpop.f32.mrf.mxu0
        %v6629 = vadd.f32 %v6460, %v6628
        %6630 = vmatmul.bf16.gmra.mxu0 %v5082
        %v6631 = vpop.f32.mrf.mxu0
        %v6632 = vadd.f32 %v6463, %v6631
        %v6633 = vpop.f32.mrf.mxu0
        %v6634 = vadd.f32 %v6465, %v6633
        %6635 = vdwg.mxu0
        %v6636 = vmax.f32 %v6477, 0.0
        %v6637 = vmax.f32 %v6479, 0.0
        %v6638 = vmax.f32 %v6482, 0.0
        %v6639 = vmax.f32 %v6484, 0.0
        %v6640 = vmax.f32 %v6487, 0.0
        %v6641 = vmax.f32 %v6489, 0.0
        %v6642 = vmax.f32 %v6492, 0.0
        %v6643 = vmax.f32 %v6494, 0.0
        %v6644 = vmax.f32 %v6497, 0.0
        %v6645 = vmax.f32 %v6499, 0.0
        %v6646 = vmax.f32 %v6502, 0.0
        %v6647 = vmax.f32 %v6504, 0.0
        %v6648 = vmax.f32 %v6507, 0.0
        %v6649 = vmax.f32 %v6509, 0.0
        %v6650 = vmax.f32 %v6512, 0.0
        %v6651 = vmax.f32 %v6514, 0.0
        %v6652 = vmax.f32 %v6517, 0.0
        %v6653 = vmax.f32 %v6519, 0.0
        %v6654 = vmax.f32 %v6522, 0.0
        %v6655 = vmax.f32 %v6524, 0.0
        %v6656 = vmax.f32 %v6527, 0.0
        %v6657 = vmax.f32 %v6529, 0.0
        %v6658 = vmax.f32 %v6532, 0.0
        %v6659 = vmax.f32 %v6534, 0.0
        %v6660 = vmax.f32 %v6537, 0.0
        %v6661 = vmax.f32 %v6539, 0.0
        %v6662 = vmax.f32 %v6542, 0.0
        %v6663 = vmax.f32 %v6544, 0.0
        %v6664 = vmax.f32 %v6547, 0.0
        %v6665 = vmax.f32 %v6549, 0.0
        %v6666 = vmax.f32 %v6552, 0.0
        %v6667 = vmax.f32 %v6554, 0.0
        %v6668 = vmax.f32 %v6557, 0.0
        %v6669 = vmax.f32 %v6559, 0.0
        %v6670 = vmax.f32 %v6562, 0.0
        %v6671 = vmax.f32 %v6564, 0.0
        %v6672 = vmax.f32 %v6567, 0.0
        %v6673 = vmax.f32 %v6569, 0.0
        %v6674 = vmax.f32 %v6572, 0.0
        %v6675 = vmax.f32 %v6574, 0.0
        %v6676 = vmax.f32 %v6577, 0.0
        %v6677 = vmax.f32 %v6579, 0.0
        %v6678 = vmax.f32 %v6582, 0.0
        %v6679 = vmax.f32 %v6584, 0.0
        %v6680 = vmax.f32 %v6587, 0.0
        %v6681 = vmax.f32 %v6589, 0.0
        %v6682 = vmax.f32 %v6592, 0.0
        %v6683 = vmax.f32 %v6594, 0.0
        %v6684 = vmax.f32 %v6597, 0.0
        %v6685 = vmax.f32 %v6599, 0.0
        %v6686 = vmax.f32 %v6602, 0.0
        %v6687 = vmax.f32 %v6604, 0.0
        %v6688 = vmax.f32 %v6607, 0.0
        %v6689 = vmax.f32 %v6609, 0.0
        %v6690 = vmax.f32 %v6612, 0.0
        %v6691 = vmax.f32 %v6614, 0.0
        %v6692 = vmax.f32 %v6617, 0.0
        %v6693 = vmax.f32 %v6619, 0.0
        %v6694 = vmax.f32 %v6622, 0.0
        %v6695 = vmax.f32 %v6624, 0.0
        %v6696 = vmax.f32 %v6627, 0.0
        %v6697 = vmax.f32 %v6629, 0.0
        %v6698 = vmax.f32 %v6632, 0.0
        %v6699 = vmax.f32 %v6634, 0.0
        %v6700 = vpack.c.bf16 %v6636, %v6636
        %v6701 = vpack.c.bf16 %v6637, %v6637
        %v6702 = vpack.c.bf16 %v6638, %v6638
        %v6703 = vpack.c.bf16 %v6639, %v6639
        %v6704 = vpack.c.bf16 %v6640, %v6640
        %v6705 = vpack.c.bf16 %v6641, %v6641
        %v6706 = vpack.c.bf16 %v6642, %v6642
        %v6707 = vpack.c.bf16 %v6643, %v6643
        %v6708 = vpack.c.bf16 %v6644, %v6644
        %v6709 = vpack.c.bf16 %v6645, %v6645
        %v6710 = vpack.c.bf16 %v6646, %v6646
        %v6711 = vpack.c.bf16 %v6647, %v6647
        %v6712 = vpack.c.bf16 %v6648, %v6648
        %v6713 = vpack.c.bf16 %v6649, %v6649
        %v6714 = vpack.c.bf16 %v6650, %v6650
        %v6715 = vpack.c.bf16 %v6651, %v6651
        %v6716 = vpack.c.bf16 %v6652, %v6652
        %v6717 = vpack.c.bf16 %v6653, %v6653
        %v6718 = vpack.c.bf16 %v6654, %v6654
        %v6719 = vpack.c.bf16 %v6655, %v6655
        %v6720 = vpack.c.bf16 %v6656, %v6656
        %v6721 = vpack.c.bf16 %v6657, %v6657
        %v6722 = vpack.c.bf16 %v6658, %v6658
        %v6723 = vpack.c.bf16 %v6659, %v6659
        %v6724 = vpack.c.bf16 %v6660, %v6660
        %v6725 = vpack.c.bf16 %v6661, %v6661
        %v6726 = vpack.c.bf16 %v6662, %v6662
        %v6727 = vpack.c.bf16 %v6663, %v6663
        %v6728 = vpack.c.bf16 %v6664, %v6664
        %v6729 = vpack.c.bf16 %v6665, %v6665
        %v6730 = vpack.c.bf16 %v6666, %v6666
        %v6731 = vpack.c.bf16 %v6667, %v6667
        %v6732 = vpack.c.bf16 %v6668, %v6668
        %v6733 = vpack.c.bf16 %v6669, %v6669
        %v6734 = vpack.c.bf16 %v6670, %v6670
        %v6735 = vpack.c.bf16 %v6671, %v6671
        %v6736 = vpack.c.bf16 %v6672, %v6672
        %v6737 = vpack.c.bf16 %v6673, %v6673
        %v6738 = vpack.c.bf16 %v6674, %v6674
        %v6739 = vpack.c.bf16 %v6675, %v6675
        %v6740 = vpack.c.bf16 %v6676, %v6676
        %v6741 = vpack.c.bf16 %v6677, %v6677
        %v6742 = vpack.c.bf16 %v6678, %v6678
        %v6743 = vpack.c.bf16 %v6679, %v6679
        %v6744 = vpack.c.bf16 %v6680, %v6680
        %v6745 = vpack.c.bf16 %v6681, %v6681
        %v6746 = vpack.c.bf16 %v6682, %v6682
        %v6747 = vpack.c.bf16 %v6683, %v6683
        %v6748 = vpack.c.bf16 %v6684, %v6684
        %v6749 = vpack.c.bf16 %v6685, %v6685
        %v6750 = vpack.c.bf16 %v6686, %v6686
        %v6751 = vpack.c.bf16 %v6687, %v6687
        %v6752 = vpack.c.bf16 %v6688, %v6688
        %v6753 = vpack.c.bf16 %v6689, %v6689
        %v6754 = vpack.c.bf16 %v6690, %v6690
        %v6755 = vpack.c.bf16 %v6691, %v6691
        %v6756 = vpack.c.bf16 %v6692, %v6692
        %v6757 = vpack.c.bf16 %v6693, %v6693
        %v6758 = vpack.c.bf16 %v6694, %v6694
        %v6759 = vpack.c.bf16 %v6695, %v6695
        %v6760 = vpack.c.bf16 %v6696, %v6696
        %v6761 = vpack.c.bf16 %v6697, %v6697
        %v6762 = vpack.c.bf16 %v6698, %v6698
        %v6763 = vpack.c.bf16 %v6699, %v6699
        %6764 = vst [vmem:[%s221 + $0x100] sm:$0xf] %v6700
        %6765 = vst [vmem:[%s221 + $0x104] sm:$0xf] %v6701
        %6766 = vst [vmem:[%s221 + $0x108] sm:$0xf] %v6702
        %6767 = vst [vmem:[%s221 + $0x10c] sm:$0xf] %v6703
        %6768 = vst [vmem:[%s221 + $0x110] sm:$0xf] %v6704
        %6769 = vst [vmem:[%s221 + $0x114] sm:$0xf] %v6705
        %6770 = vst [vmem:[%s221 + $0x118] sm:$0xf] %v6706
        %6771 = vst [vmem:[%s221 + $0x11c] sm:$0xf] %v6707
        %6772 = vst [vmem:[%s221 + $0x120] sm:$0xf] %v6708
        %6773 = vst [vmem:[%s221 + $0x124] sm:$0xf] %v6709
        %6774 = vst [vmem:[%s221 + $0x128] sm:$0xf] %v6710
        %6775 = vst [vmem:[%s221 + $0x12c] sm:$0xf] %v6711
        %6776 = vst [vmem:[%s221 + $0x130] sm:$0xf] %v6712
        %6777 = vst [vmem:[%s221 + $0x134] sm:$0xf] %v6713
        %6778 = vst [vmem:[%s221 + $0x138] sm:$0xf] %v6714
        %6779 = vst [vmem:[%s221 + $0x13c] sm:$0xf] %v6715
        %6780 = vst [vmem:[%s221 + $0x140] sm:$0xf] %v6716
        %6781 = vst [vmem:[%s221 + $0x144] sm:$0xf] %v6717
        %6782 = vst [vmem:[%s221 + $0x148] sm:$0xf] %v6718
        %6783 = vst [vmem:[%s221 + $0x14c] sm:$0xf] %v6719
        %6784 = vst [vmem:[%s221 + $0x150] sm:$0xf] %v6720
        %6785 = vst [vmem:[%s221 + $0x154] sm:$0xf] %v6721
        %6786 = vst [vmem:[%s221 + $0x158] sm:$0xf] %v6722
        %6787 = vst [vmem:[%s221 + $0x15c] sm:$0xf] %v6723
        %6788 = vst [vmem:[%s221 + $0x160] sm:$0xf] %v6724
        %6789 = vst [vmem:[%s221 + $0x164] sm:$0xf] %v6725
        %6790 = vst [vmem:[%s221 + $0x168] sm:$0xf] %v6726
        %6791 = vst [vmem:[%s221 + $0x16c] sm:$0xf] %v6727
        %6792 = vst [vmem:[%s221 + $0x170] sm:$0xf] %v6728
        %6793 = vst [vmem:[%s221 + $0x174] sm:$0xf] %v6729
        %6794 = vst [vmem:[%s221 + $0x178] sm:$0xf] %v6730
        %6795 = vst [vmem:[%s221 + $0x17c] sm:$0xf] %v6731
        %6796 = vst [vmem:[%s221 + $0x180] sm:$0xf] %v6732
        %6797 = vst [vmem:[%s221 + $0x184] sm:$0xf] %v6733
        %6798 = vst [vmem:[%s221 + $0x188] sm:$0xf] %v6734
        %6799 = vst [vmem:[%s221 + $0x18c] sm:$0xf] %v6735
        %6800 = vst [vmem:[%s221 + $0x190] sm:$0xf] %v6736
        %6801 = vst [vmem:[%s221 + $0x194] sm:$0xf] %v6737
        %6802 = vst [vmem:[%s221 + $0x198] sm:$0xf] %v6738
        %6803 = vst [vmem:[%s221 + $0x19c] sm:$0xf] %v6739
        %6804 = vst [vmem:[%s221 + $0x1a0] sm:$0xf] %v6740
        %6805 = vst [vmem:[%s221 + $0x1a4] sm:$0xf] %v6741
        %6806 = vst [vmem:[%s221 + $0x1a8] sm:$0xf] %v6742
        %6807 = vst [vmem:[%s221 + $0x1ac] sm:$0xf] %v6743
        %6808 = vst [vmem:[%s221 + $0x1b0] sm:$0xf] %v6744
        %6809 = vst [vmem:[%s221 + $0x1b4] sm:$0xf] %v6745
        %6810 = vst [vmem:[%s221 + $0x1b8] sm:$0xf] %v6746
        %6811 = vst [vmem:[%s221 + $0x1bc] sm:$0xf] %v6747
        %6812 = vst [vmem:[%s221 + $0x1c0] sm:$0xf] %v6748
        %6813 = vst [vmem:[%s221 + $0x1c4] sm:$0xf] %v6749
        %6814 = vst [vmem:[%s221 + $0x1c8] sm:$0xf] %v6750
        %6815 = vst [vmem:[%s221 + $0x1cc] sm:$0xf] %v6751
        %6816 = vst [vmem:[%s221 + $0x1d0] sm:$0xf] %v6752
        %6817 = vst [vmem:[%s221 + $0x1d4] sm:$0xf] %v6753
        %6818 = vst [vmem:[%s221 + $0x1d8] sm:$0xf] %v6754
        %6819 = vst [vmem:[%s221 + $0x1dc] sm:$0xf] %v6755
        %6820 = vst [vmem:[%s221 + $0x1e0] sm:$0xf] %v6756
        %6821 = vst [vmem:[%s221 + $0x1e4] sm:$0xf] %v6757
        %6822 = vst [vmem:[%s221 + $0x1e8] sm:$0xf] %v6758
        %6823 = vst [vmem:[%s221 + $0x1ec] sm:$0xf] %v6759
        %6824 = vst [vmem:[%s221 + $0x1f0] sm:$0xf] %v6760
        %6825 = vst [vmem:[%s221 + $0x1f4] sm:$0xf] %v6761
        %6826 = vst [vmem:[%s221 + $0x1f8] sm:$0xf] %v6762
        %6827 = vst [vmem:[%s221 + $0x1fc] sm:$0xf] %v6763
        %v6828 = vld [vmem:[%s188 + $0x200] sm:$0xf]
        %v6829 = vld [vmem:[%s188 + $0x204] sm:$0xf]
        %v6830 = vld [vmem:[%s188 + $0x208] sm:$0xf]
        %v6831 = vld [vmem:[%s188 + $0x20c] sm:$0xf]
        %v6832 = vld [vmem:[%s188 + $0x210] sm:$0xf]
        %v6833 = vld [vmem:[%s188 + $0x214] sm:$0xf]
        %v6834 = vld [vmem:[%s188 + $0x218] sm:$0xf]
        %v6835 = vld [vmem:[%s188 + $0x21c] sm:$0xf]
        %v6836 = vld [vmem:[%s188 + $0x220] sm:$0x1]
        %v6837 = vld [vmem:[%s188 + $0x200] sm:$0xe]
        %v6838 = vld [vmem:[%s188 + $0x210] sm:$0xe]
        %v6839 = vld [vmem:[%s188 + $0x220] sm:$0xf]
        %v6840 = vld [vmem:[%s188 + $0x224] sm:$0xf]
        %v6841 = vld [vmem:[%s188 + $0x228] sm:$0xf]
        %v6842 = vld [vmem:[%s188 + $0x22c] sm:$0xf]
        %v6843 = vld [vmem:[%s188 + $0x230] sm:$0x1]
        %v6844 = vld [vmem:[%s188 + $0x230] sm:$0x3]
        %v6845 = vld [vmem:[%s188 + $0x210] sm:$0xc]
        %v6846 = vld [vmem:[%s188 + $0x220] sm:$0xc]
        %v6847 = vld [vmem:[%s188 + $0x230] sm:$0xf]
        %v6848 = vld [vmem:[%s188 + $0x234] sm:$0xf]
        %v6849 = vld [vmem:[%s188 + $0x238] sm:$0xf]
        %v6850 = vld [vmem:[%s188 + $0x23c] sm:$0xf]
        %v6851 = vld [vmem:[%s188 + $0x240] sm:$0x3]
        %v6852 = vld [vmem:[%s188 + $0x240] sm:$0x7]
        %v6853 = vld [vmem:[%s188 + $0x220] sm:$0x8]
        %v6862 = vunpack.c.l.b16 %v6828
        %v6863 = vunpack.c.l.b16 %v6829
        %v6864 = vunpack.c.l.b16 %v6830
        %v6865 = vunpack.c.l.b16 %v6831
        %v6866 = vunpack.c.l.b16 %v6832
        %v6867 = vunpack.c.l.b16 %v6833
        %v6868 = vunpack.c.l.b16 %v6834
        %v6869 = vunpack.c.l.b16 %v6835
        %v6870 = vpack.c.b16 %v6863, %v6862
        %v6871 = vpack.c.b16 %v6865, %v6864
        %v6872 = vpack.c.b16 %v6867, %v6866
        %v6873 = vpack.c.b16 %v6869, %v6868
        %v6879 = vunpack.c.l.b16 %v6836
        %v6880 = vpack.c.b16 %v6879, %v6879
        %v6882 = vshrl.u32 %v6870, 16
        %v6884 = vshll.u32 %v6870, 16
        %v6886 = vrot.slane %v6884, 1
        %v6887 = vor.u32 %v6882, %v6886
        %v6889 = vshll.u32 %v6871, 16
        %v6891 = vrot.slane %v6889, 1
        %v6892 = vsel %vm644, %v6887, %v6891
        %v6893 = vshrl.u32 %v6871, 16
        %v6895 = vor.u32 %v6893, %v6891
        %v6897 = vshll.u32 %v6872, 16
        %v6899 = vrot.slane %v6897, 1
        %v6900 = vsel %vm644, %v6895, %v6899
        %v6901 = vshrl.u32 %v6872, 16
        %v6903 = vor.u32 %v6901, %v6899
        %v6905 = vshll.u32 %v6873, 16
        %v6907 = vrot.slane %v6905, 1
        %v6908 = vsel %vm644, %v6903, %v6907
        %v6909 = vshrl.u32 %v6873, 16
        %v6911 = vor.u32 %v6909, %v6907
        %v6913 = vshll.u32 %v6880, 16
        %v6915 = vrot.slane %v6913, 1
        %v6916 = vsel %vm644, %v6911, %v6915
        %v6922 = vunpack.c.l.b16 %v6837
        %v6923 = vpack.c.b16 %v6863, %v6922
        %v6924 = vrot.slane %v6923, 1
        %v6925 = vrot.slane %v6871, 1
        %v6926 = vsel %vm940, %v6924, %v6925
        %v6927 = vrot.slane %v6872, 1
        %v6928 = vsel %vm940, %v6925, %v6927
        %v6929 = vrot.slane %v6873, 1
        %v6930 = vsel %vm940, %v6927, %v6929
        %v6931 = vrot.slane %v6880, 1
        %v6932 = vsel %vm940, %v6929, %v6931
        %v6943 = vunpack.c.l.b16 %v6838
        %v6944 = vunpack.c.l.b16 %v6839
        %v6945 = vunpack.c.l.b16 %v6840
        %v6946 = vunpack.c.l.b16 %v6841
        %v6947 = vunpack.c.l.b16 %v6842
        %v6948 = vunpack.c.l.b16 %v6843
        %v6949 = vpack.c.b16 %v6867, %v6943
        %v6950 = vpack.c.b16 %v6945, %v6944
        %v6951 = vpack.c.b16 %v6947, %v6946
        %v6952 = vpack.c.b16 %v6948, %v6948
        %v6953 = vrot.slane %v6949, 1
        %v6954 = vsel %vm940, %v6953, %v6929
        %v6955 = vrot.slane %v6950, 1
        %v6956 = vsel %vm940, %v6929, %v6955
        %v6957 = vrot.slane %v6951, 1
        %v6958 = vsel %vm940, %v6955, %v6957
        %v6959 = vrot.slane %v6952, 1
        %v6960 = vsel %vm940, %v6957, %v6959
        %v6966 = vunpack.c.l.b16 %v6844
        %v6967 = vpack.c.b16 %v6966, %v6966
        %v6969 = vshrl.u32 %v6949, 16
        %v6971 = vrot.slane %v6969, 1
        %v6972 = vshll.u32 %v6949, 16
        %v6974 = vrot.slane %v6972, 2
        %v6975 = vor.u32 %v6971, %v6974
        %v6976 = vrot.slane %v6909, 1
        %v6977 = vrot.slane %v6905, 2
        %v6978 = vor.u32 %v6976, %v6977
        %v6979 = vsel %vm1069, %v6975, %v6978
        %v6981 = vshrl.u32 %v6950, 16
        %v6983 = vrot.slane %v6981, 1
        %v6984 = vshll.u32 %v6950, 16
        %v6986 = vrot.slane %v6984, 2
        %v6987 = vor.u32 %v6983, %v6986
        %v6988 = vsel %vm1069, %v6978, %v6987
        %v6990 = vshrl.u32 %v6951, 16
        %v6992 = vrot.slane %v6990, 1
        %v6993 = vshll.u32 %v6951, 16
        %v6995 = vrot.slane %v6993, 2
        %v6996 = vor.u32 %v6992, %v6995
        %v6997 = vsel %vm1069, %v6987, %v6996
        %v6999 = vshrl.u32 %v6967, 16
        %v7001 = vrot.slane %v6999, 1
        %v7002 = vshll.u32 %v6967, 16
        %v7004 = vrot.slane %v7002, 2
        %v7005 = vor.u32 %v7001, %v7004
        %v7006 = vsel %vm1069, %v6996, %v7005
        %v7012 = vunpack.c.l.b16 %v6845
        %v7013 = vpack.c.b16 %v6867, %v7012
        %v7014 = vrot.slane %v7013, 2
        %v7015 = vrot.slane %v6873, 2
        %v7016 = vsel %vm1256, %v7014, %v7015
        %v7017 = vrot.slane %v6950, 2
        %v7018 = vsel %vm1256, %v7015, %v7017
        %v7019 = vrot.slane %v6951, 2
        %v7020 = vsel %vm1256, %v7017, %v7019
        %v7021 = vrot.slane %v6967, 2
        %v7022 = vsel %vm1256, %v7019, %v7021
        %v7033 = vunpack.c.l.b16 %v6846
        %v7034 = vunpack.c.l.b16 %v6847
        %v7035 = vunpack.c.l.b16 %v6848
        %v7036 = vunpack.c.l.b16 %v6849
        %v7037 = vunpack.c.l.b16 %v6850
        %v7038 = vunpack.c.l.b16 %v6851
        %v7039 = vpack.c.b16 %v6945, %v7033
        %v7040 = vpack.c.b16 %v7035, %v7034
        %v7041 = vpack.c.b16 %v7037, %v7036
        %v7042 = vpack.c.b16 %v7038, %v7038
        %v7043 = vrot.slane %v7039, 2
        %v7044 = vsel %vm1256, %v7043, %v7019
        %v7045 = vrot.slane %v7040, 2
        %v7046 = vsel %vm1256, %v7019, %v7045
        %v7047 = vrot.slane %v7041, 2
        %v7048 = vsel %vm1256, %v7045, %v7047
        %v7049 = vrot.slane %v7042, 2
        %v7050 = vsel %vm1256, %v7047, %v7049
        %v7056 = vunpack.c.l.b16 %v6852
        %v7057 = vpack.c.b16 %v7056, %v7056
        %v7059 = vshrl.u32 %v7039, 16
        %v7061 = vrot.slane %v7059, 2
        %v7062 = vshll.u32 %v7039, 16
        %v7064 = vrot.slane %v7062, 3
        %v7065 = vor.u32 %v7061, %v7064
        %v7066 = vrot.slane %v6990, 2
        %v7067 = vrot.slane %v6993, 3
        %v7068 = vor.u32 %v7066, %v7067
        %v7069 = vsel %vm1385, %v7065, %v7068
        %v7071 = vshrl.u32 %v7040, 16
        %v7073 = vrot.slane %v7071, 2
        %v7074 = vshll.u32 %v7040, 16
        %v7076 = vrot.slane %v7074, 3
        %v7077 = vor.u32 %v7073, %v7076
        %v7078 = vsel %vm1385, %v7068, %v7077
        %v7080 = vshrl.u32 %v7041, 16
        %v7082 = vrot.slane %v7080, 2
        %v7083 = vshll.u32 %v7041, 16
        %v7085 = vrot.slane %v7083, 3
        %v7086 = vor.u32 %v7082, %v7085
        %v7087 = vsel %vm1385, %v7077, %v7086
        %v7089 = vshrl.u32 %v7057, 16
        %v7091 = vrot.slane %v7089, 2
        %v7092 = vshll.u32 %v7057, 16
        %v7094 = vrot.slane %v7092, 3
        %v7095 = vor.u32 %v7091, %v7094
        %v7096 = vsel %vm1385, %v7086, %v7095
        %v7102 = vunpack.c.l.b16 %v6853
        %v7103 = vpack.c.b16 %v6945, %v7102
        %v7104 = vrot.slane %v7103, 3
        %v7105 = vrot.slane %v6951, 3
        %v7106 = vsel %vm1572, %v7104, %v7105
        %v7107 = vrot.slane %v7040, 3
        %v7108 = vsel %vm1572, %v7105, %v7107
        %v7109 = vrot.slane %v7041, 3
        %v7110 = vsel %vm1572, %v7107, %v7109
        %v7111 = vrot.slane %v7057, 3
        %v7112 = vsel %vm1572, %v7109, %v7111
        %7117 = vmatpush.bf16.msra.mxu0 %v1968
        %7118 = vmatpush.bf16.msra.mxu0 %v1967
        %7119 = vmatpush.bf16.msra.mxu0 %v1966
        %7120 = vmatpush.bf16.msra.mxu0 %v1965
        %7121 = vmatpush.bf16.msra.mxu0 %v1964
        %7122 = vmatpush.bf16.msra.mxu0 %v1963
        %7123 = vmatpush.bf16.msra.mxu0 %v1962
        %7124 = vmatpush.bf16.msra.mxu0 %v1961
        %7125 = vmatmul.bf16.gmra.mxu0 %v6870
        %v7126 = vpop.f32.mrf.mxu0
        %v7127 = vadd.f32 %v1671, %v7126
        %v7128 = vpop.f32.mrf.mxu0
        %v7129 = vadd.f32 %v1671, %v7128
        %7130 = vmatmul.bf16.gmra.mxu0 %v6871
        %v7131 = vpop.f32.mrf.mxu0
        %v7132 = vadd.f32 %v1671, %v7131
        %v7133 = vpop.f32.mrf.mxu0
        %v7134 = vadd.f32 %v1671, %v7133
        %7135 = vmatmul.bf16.gmra.mxu0 %v6872
        %v7136 = vpop.f32.mrf.mxu0
        %v7137 = vadd.f32 %v1671, %v7136
        %v7138 = vpop.f32.mrf.mxu0
        %v7139 = vadd.f32 %v1671, %v7138
        %7140 = vmatmul.bf16.gmra.mxu0 %v6873
        %v7141 = vpop.f32.mrf.mxu0
        %v7142 = vadd.f32 %v1671, %v7141
        %v7143 = vpop.f32.mrf.mxu0
        %v7144 = vadd.f32 %v1671, %v7143
        %7145 = vdwg.mxu0
        %7146 = vmatpush.bf16.msra.mxu0 %v1976
        %7147 = vmatpush.bf16.msra.mxu0 %v1975
        %7148 = vmatpush.bf16.msra.mxu0 %v1974
        %7149 = vmatpush.bf16.msra.mxu0 %v1973
        %7150 = vmatpush.bf16.msra.mxu0 %v1972
        %7151 = vmatpush.bf16.msra.mxu0 %v1971
        %7152 = vmatpush.bf16.msra.mxu0 %v1970
        %7153 = vmatpush.bf16.msra.mxu0 %v1969
        %7154 = vmatmul.bf16.gmra.mxu0 %v6892
        %v7155 = vpop.f32.mrf.mxu0
        %v7156 = vadd.f32 %v7127, %v7155
        %v7157 = vpop.f32.mrf.mxu0
        %v7158 = vadd.f32 %v7129, %v7157
        %7159 = vmatmul.bf16.gmra.mxu0 %v6900
        %v7160 = vpop.f32.mrf.mxu0
        %v7161 = vadd.f32 %v7132, %v7160
        %v7162 = vpop.f32.mrf.mxu0
        %v7163 = vadd.f32 %v7134, %v7162
        %7164 = vmatmul.bf16.gmra.mxu0 %v6908
        %v7165 = vpop.f32.mrf.mxu0
        %v7166 = vadd.f32 %v7137, %v7165
        %v7167 = vpop.f32.mrf.mxu0
        %v7168 = vadd.f32 %v7139, %v7167
        %7169 = vmatmul.bf16.gmra.mxu0 %v6916
        %v7170 = vpop.f32.mrf.mxu0
        %v7171 = vadd.f32 %v7142, %v7170
        %v7172 = vpop.f32.mrf.mxu0
        %v7173 = vadd.f32 %v7144, %v7172
        %7174 = vdwg.mxu0
        %7175 = vmatpush.bf16.msra.mxu0 %v1984
        %7176 = vmatpush.bf16.msra.mxu0 %v1983
        %7177 = vmatpush.bf16.msra.mxu0 %v1982
        %7178 = vmatpush.bf16.msra.mxu0 %v1981
        %7179 = vmatpush.bf16.msra.mxu0 %v1980
        %7180 = vmatpush.bf16.msra.mxu0 %v1979
        %7181 = vmatpush.bf16.msra.mxu0 %v1978
        %7182 = vmatpush.bf16.msra.mxu0 %v1977
        %7183 = vmatmul.bf16.gmra.mxu0 %v6926
        %v7184 = vpop.f32.mrf.mxu0
        %v7185 = vadd.f32 %v7156, %v7184
        %v7186 = vpop.f32.mrf.mxu0
        %v7187 = vadd.f32 %v7158, %v7186
        %7188 = vmatmul.bf16.gmra.mxu0 %v6928
        %v7189 = vpop.f32.mrf.mxu0
        %v7190 = vadd.f32 %v7161, %v7189
        %v7191 = vpop.f32.mrf.mxu0
        %v7192 = vadd.f32 %v7163, %v7191
        %7193 = vmatmul.bf16.gmra.mxu0 %v6930
        %v7194 = vpop.f32.mrf.mxu0
        %v7195 = vadd.f32 %v7166, %v7194
        %v7196 = vpop.f32.mrf.mxu0
        %v7197 = vadd.f32 %v7168, %v7196
        %7198 = vmatmul.bf16.gmra.mxu0 %v6932
        %v7199 = vpop.f32.mrf.mxu0
        %v7200 = vadd.f32 %v7171, %v7199
        %v7201 = vpop.f32.mrf.mxu0
        %v7202 = vadd.f32 %v7173, %v7201
        %7203 = vdwg.mxu0
        %7204 = vmatpush.bf16.msra.mxu0 %v1992
        %7205 = vmatpush.bf16.msra.mxu0 %v1991
        %7206 = vmatpush.bf16.msra.mxu0 %v1990
        %7207 = vmatpush.bf16.msra.mxu0 %v1989
        %7208 = vmatpush.bf16.msra.mxu0 %v1988
        %7209 = vmatpush.bf16.msra.mxu0 %v1987
        %7210 = vmatpush.bf16.msra.mxu0 %v1986
        %7211 = vmatpush.bf16.msra.mxu0 %v1985
        %7212 = vmatmul.bf16.gmra.mxu0 %v6954
        %v7213 = vpop.f32.mrf.mxu0
        %v7214 = vadd.f32 %v7185, %v7213
        %v7215 = vpop.f32.mrf.mxu0
        %v7216 = vadd.f32 %v7187, %v7215
        %7217 = vmatmul.bf16.gmra.mxu0 %v6956
        %v7218 = vpop.f32.mrf.mxu0
        %v7219 = vadd.f32 %v7190, %v7218
        %v7220 = vpop.f32.mrf.mxu0
        %v7221 = vadd.f32 %v7192, %v7220
        %7222 = vmatmul.bf16.gmra.mxu0 %v6958
        %v7223 = vpop.f32.mrf.mxu0
        %v7224 = vadd.f32 %v7195, %v7223
        %v7225 = vpop.f32.mrf.mxu0
        %v7226 = vadd.f32 %v7197, %v7225
        %7227 = vmatmul.bf16.gmra.mxu0 %v6960
        %v7228 = vpop.f32.mrf.mxu0
        %v7229 = vadd.f32 %v7200, %v7228
        %v7230 = vpop.f32.mrf.mxu0
        %v7231 = vadd.f32 %v7202, %v7230
        %7232 = vdwg.mxu0
        %7233 = vmatpush.bf16.msra.mxu0 %v2000
        %7234 = vmatpush.bf16.msra.mxu0 %v1999
        %7235 = vmatpush.bf16.msra.mxu0 %v1998
        %7236 = vmatpush.bf16.msra.mxu0 %v1997
        %7237 = vmatpush.bf16.msra.mxu0 %v1996
        %7238 = vmatpush.bf16.msra.mxu0 %v1995
        %7239 = vmatpush.bf16.msra.mxu0 %v1994
        %7240 = vmatpush.bf16.msra.mxu0 %v1993
        %7241 = vmatmul.bf16.gmra.mxu0 %v6979
        %v7242 = vpop.f32.mrf.mxu0
        %v7243 = vadd.f32 %v7214, %v7242
        %v7244 = vpop.f32.mrf.mxu0
        %v7245 = vadd.f32 %v7216, %v7244
        %7246 = vmatmul.bf16.gmra.mxu0 %v6988
        %v7247 = vpop.f32.mrf.mxu0
        %v7248 = vadd.f32 %v7219, %v7247
        %v7249 = vpop.f32.mrf.mxu0
        %v7250 = vadd.f32 %v7221, %v7249
        %7251 = vmatmul.bf16.gmra.mxu0 %v6997
        %v7252 = vpop.f32.mrf.mxu0
        %v7253 = vadd.f32 %v7224, %v7252
        %v7254 = vpop.f32.mrf.mxu0
        %v7255 = vadd.f32 %v7226, %v7254
        %7256 = vmatmul.bf16.gmra.mxu0 %v7006
        %v7257 = vpop.f32.mrf.mxu0
        %v7258 = vadd.f32 %v7229, %v7257
        %v7259 = vpop.f32.mrf.mxu0
        %v7260 = vadd.f32 %v7231, %v7259
        %7261 = vdwg.mxu0
        %7262 = vmatpush.bf16.msra.mxu0 %v2008
        %7263 = vmatpush.bf16.msra.mxu0 %v2007
        %7264 = vmatpush.bf16.msra.mxu0 %v2006
        %7265 = vmatpush.bf16.msra.mxu0 %v2005
        %7266 = vmatpush.bf16.msra.mxu0 %v2004
        %7267 = vmatpush.bf16.msra.mxu0 %v2003
        %7268 = vmatpush.bf16.msra.mxu0 %v2002
        %7269 = vmatpush.bf16.msra.mxu0 %v2001
        %7270 = vmatmul.bf16.gmra.mxu0 %v7016
        %v7271 = vpop.f32.mrf.mxu0
        %v7272 = vadd.f32 %v7243, %v7271
        %v7273 = vpop.f32.mrf.mxu0
        %v7274 = vadd.f32 %v7245, %v7273
        %7275 = vmatmul.bf16.gmra.mxu0 %v7018
        %v7276 = vpop.f32.mrf.mxu0
        %v7277 = vadd.f32 %v7248, %v7276
        %v7278 = vpop.f32.mrf.mxu0
        %v7279 = vadd.f32 %v7250, %v7278
        %7280 = vmatmul.bf16.gmra.mxu0 %v7020
        %v7281 = vpop.f32.mrf.mxu0
        %v7282 = vadd.f32 %v7253, %v7281
        %v7283 = vpop.f32.mrf.mxu0
        %v7284 = vadd.f32 %v7255, %v7283
        %7285 = vmatmul.bf16.gmra.mxu0 %v7022
        %v7286 = vpop.f32.mrf.mxu0
        %v7287 = vadd.f32 %v7258, %v7286
        %v7288 = vpop.f32.mrf.mxu0
        %v7289 = vadd.f32 %v7260, %v7288
        %7290 = vdwg.mxu0
        %7291 = vmatpush.bf16.msra.mxu0 %v2016
        %7292 = vmatpush.bf16.msra.mxu0 %v2015
        %7293 = vmatpush.bf16.msra.mxu0 %v2014
        %7294 = vmatpush.bf16.msra.mxu0 %v2013
        %7295 = vmatpush.bf16.msra.mxu0 %v2012
        %7296 = vmatpush.bf16.msra.mxu0 %v2011
        %7297 = vmatpush.bf16.msra.mxu0 %v2010
        %7298 = vmatpush.bf16.msra.mxu0 %v2009
        %7299 = vmatmul.bf16.gmra.mxu0 %v7044
        %v7300 = vpop.f32.mrf.mxu0
        %v7301 = vadd.f32 %v7272, %v7300
        %v7302 = vpop.f32.mrf.mxu0
        %v7303 = vadd.f32 %v7274, %v7302
        %7304 = vmatmul.bf16.gmra.mxu0 %v7046
        %v7305 = vpop.f32.mrf.mxu0
        %v7306 = vadd.f32 %v7277, %v7305
        %v7307 = vpop.f32.mrf.mxu0
        %v7308 = vadd.f32 %v7279, %v7307
        %7309 = vmatmul.bf16.gmra.mxu0 %v7048
        %v7310 = vpop.f32.mrf.mxu0
        %v7311 = vadd.f32 %v7282, %v7310
        %v7312 = vpop.f32.mrf.mxu0
        %v7313 = vadd.f32 %v7284, %v7312
        %7314 = vmatmul.bf16.gmra.mxu0 %v7050
        %v7315 = vpop.f32.mrf.mxu0
        %v7316 = vadd.f32 %v7287, %v7315
        %v7317 = vpop.f32.mrf.mxu0
        %v7318 = vadd.f32 %v7289, %v7317
        %7319 = vdwg.mxu0
        %7320 = vmatpush.bf16.msra.mxu0 %v2024
        %7321 = vmatpush.bf16.msra.mxu0 %v2023
        %7322 = vmatpush.bf16.msra.mxu0 %v2022
        %7323 = vmatpush.bf16.msra.mxu0 %v2021
        %7324 = vmatpush.bf16.msra.mxu0 %v2020
        %7325 = vmatpush.bf16.msra.mxu0 %v2019
        %7326 = vmatpush.bf16.msra.mxu0 %v2018
        %7327 = vmatpush.bf16.msra.mxu0 %v2017
        %7328 = vmatmul.bf16.gmra.mxu0 %v7069
        %v7329 = vpop.f32.mrf.mxu0
        %v7330 = vadd.f32 %v7301, %v7329
        %v7331 = vpop.f32.mrf.mxu0
        %v7332 = vadd.f32 %v7303, %v7331
        %7333 = vmatmul.bf16.gmra.mxu0 %v7078
        %v7334 = vpop.f32.mrf.mxu0
        %v7335 = vadd.f32 %v7306, %v7334
        %v7336 = vpop.f32.mrf.mxu0
        %v7337 = vadd.f32 %v7308, %v7336
        %7338 = vmatmul.bf16.gmra.mxu0 %v7087
        %v7339 = vpop.f32.mrf.mxu0
        %v7340 = vadd.f32 %v7311, %v7339
        %v7341 = vpop.f32.mrf.mxu0
        %v7342 = vadd.f32 %v7313, %v7341
        %7343 = vmatmul.bf16.gmra.mxu0 %v7096
        %v7344 = vpop.f32.mrf.mxu0
        %v7345 = vadd.f32 %v7316, %v7344
        %v7346 = vpop.f32.mrf.mxu0
        %v7347 = vadd.f32 %v7318, %v7346
        %7348 = vdwg.mxu0
        %7349 = vmatpush.bf16.msra.mxu0 %v2032
        %7350 = vmatpush.bf16.msra.mxu0 %v2031
        %7351 = vmatpush.bf16.msra.mxu0 %v2030
        %7352 = vmatpush.bf16.msra.mxu0 %v2029
        %7353 = vmatpush.bf16.msra.mxu0 %v2028
        %7354 = vmatpush.bf16.msra.mxu0 %v2027
        %7355 = vmatpush.bf16.msra.mxu0 %v2026
        %7356 = vmatpush.bf16.msra.mxu0 %v2025
        %7357 = vmatmul.bf16.gmra.mxu0 %v7106
        %v7358 = vpop.f32.mrf.mxu0
        %v7359 = vadd.f32 %v7330, %v7358
        %v7360 = vpop.f32.mrf.mxu0
        %v7361 = vadd.f32 %v7332, %v7360
        %7362 = vmatmul.bf16.gmra.mxu0 %v7108
        %v7363 = vpop.f32.mrf.mxu0
        %v7364 = vadd.f32 %v7335, %v7363
        %v7365 = vpop.f32.mrf.mxu0
        %v7366 = vadd.f32 %v7337, %v7365
        %7367 = vmatmul.bf16.gmra.mxu0 %v7110
        %v7368 = vpop.f32.mrf.mxu0
        %v7369 = vadd.f32 %v7340, %v7368
        %v7370 = vpop.f32.mrf.mxu0
        %v7371 = vadd.f32 %v7342, %v7370
        %7372 = vmatmul.bf16.gmra.mxu0 %v7112
        %v7373 = vpop.f32.mrf.mxu0
        %v7374 = vadd.f32 %v7345, %v7373
        %v7375 = vpop.f32.mrf.mxu0
        %v7376 = vadd.f32 %v7347, %v7375
        %7377 = vdwg.mxu0
        %v7378 = vmax.f32 %v7359, 0.0
        %v7379 = vmax.f32 %v7361, 0.0
        %v7380 = vmax.f32 %v7364, 0.0
        %v7381 = vmax.f32 %v7366, 0.0
        %v7382 = vmax.f32 %v7369, 0.0
        %v7383 = vmax.f32 %v7371, 0.0
        %v7384 = vmax.f32 %v7374, 0.0
        %v7385 = vmax.f32 %v7376, 0.0
        %v7386 = vpack.c.bf16 %v7378, %v7378
        %v7387 = vpack.c.bf16 %v7379, %v7379
        %v7388 = vpack.c.bf16 %v7380, %v7380
        %v7389 = vpack.c.bf16 %v7381, %v7381
        %v7390 = vpack.c.bf16 %v7382, %v7382
        %v7391 = vpack.c.bf16 %v7383, %v7383
        %v7392 = vpack.c.bf16 %v7384, %v7384
        %v7393 = vpack.c.bf16 %v7385, %v7385
        %7394 = vst [vmem:[%s221 + $0x200] sm:$0xf] %v7386
        %7395 = vst [vmem:[%s221 + $0x204] sm:$0xf] %v7387
        %7396 = vst [vmem:[%s221 + $0x208] sm:$0xf] %v7388
        %7397 = vst [vmem:[%s221 + $0x20c] sm:$0xf] %v7389
        %7398 = vst [vmem:[%s221 + $0x210] sm:$0xf] %v7390
        %7399 = vst [vmem:[%s221 + $0x214] sm:$0xf] %v7391
        %7400 = vst [vmem:[%s221 + $0x218] sm:$0xf] %v7392
        %7401 = vst [vmem:[%s221 + $0x21c] sm:$0xf] %v7393
        %s7402 = sand.u32 %s97, 1
        %s7403 = scalar_lea.sflag [#allocation4], %s7402
        %s7404 = sand.u32 %s97, 1
        %s7405 = smul.addr %s7404, 544
        %s7406 = scalar_lea.vmem [#allocation8], %s7405
        // Predicated region
        $region45: #{tpu_custom_call.1} parent=31 // pred_check
          %p7407 = pneg %p107
        $region46: #{tpu_custom_call.1} parent=31 // pred_check_branch
          %7409 = sbr.rel (%p7407) target = $region48
        $region47: #{tpu_custom_call.1} parent=31 // pred_region
          %7411 = vsyncadd %s7403, 0
          %s7412 = smul.addr %s21, 136
          %s7413 = smul.addr %s7412, 4
          %s7414 = scalar_lea.hbm %s3, %s7413
          %s7415 = sshll.u32 %s7406, 4
          %s7416 = int_to_ptr.vmem [resolvable:$true] %s7415
          %s7417 = sshll.u32 %s7414, 4
          %s7418 = int_to_ptr.hbm [resolvable:$true] %s7417
          %7423 = dma.vmem_to_hbm [thread:$0]  %s7416, 8704, %s7418, %s7403, 64, 64, 4
        $region48: #{tpu_custom_call.1} parent=31 // pred_fallthru
          _
      $region32: #{tpu_custom_call.1} parent=5 // pred_fallthru
        _
      %p7424 = scmp.le.s32.totalorder 2, %s16
      // Predicated region
      $region49: #{tpu_custom_call.1} parent=5 // pred_check
        %p7425 = pneg %p7424
      $region50: #{tpu_custom_call.1} parent=5 // pred_check_branch
        %7427 = sbr.rel (%p7425) target = $region52
      $region51: #{tpu_custom_call.1} parent=5 // pred_region
        %s7428 = ssub.s32 %s16, 2
        // Predicated region
        $region53: #{tpu_custom_call.1} parent=51 // pred_check
          %p7429 = pneg %p113
        $region54: #{tpu_custom_call.1} parent=51 // pred_check_branch
          %7431 = sbr.rel (%p7429) target = $region56
        $region55: #{tpu_custom_call.1} parent=51 // pred_region
          %s7432 = sand.u32 %s98, 1
          %s7433 = scalar_lea.sflag [#allocation4], %s7432
          %s7434 = sand.u32 %s98, 1
          %s7435 = smul.addr %s7434, 544
          %s7436 = scalar_lea.vmem [#allocation8], %s7435
          %7438 = dma.done %s7433, 8704
        $region56: #{tpu_custom_call.1} parent=51 // pred_fallthru
          _
      $region52: #{tpu_custom_call.1} parent=5 // pred_fallthru
        _
    $region6: #{tpu_custom_call.1} parent=1 // loop_footer
      %s20 = sadd.s32 1, %s16
    $region7: #{tpu_custom_call.1} parent=1 // loop_footer_branch
      %15 = sbr.rel target = $region3
    $region8: #{tpu_custom_call.1} parent=1 // loop_exit
      _
    %7439 = vsyncpa [#allocation3], 1
    %s7440 = scalar_lea.sflag [#allocation3], 1
    %7441 = vsyncpa %s7440, 1
    %7442 = vsyncpa [#allocation6], 1
    %7443 = vsyncpa [#allocation4], 1
    %s7444 = scalar_lea.sflag [#allocation4], 1
    %7445 = vsyncpa %s7444, 1

</llo_original>
